<compile_context>
chip_gen: v5e
topology: v5e:2x2
jax: 0.10.0
libtpu: 0.0.40
codegen_flags: <defaults>
</compile_context>

<pallas_src>
import functools

import jax
import jax.numpy as jnp
from jax.experimental import pallas as pl
from jax.experimental.pallas import tpu as pltpu

_EPS = 1e-5
_PREC = jax.lax.Precision.HIGHEST  # used only by the pure-JAX reference
_LANE = 128


def bottleneck_kernel(x_ref, row_ref, col_ref, w1_ref, b1_ref, w2_ref, b2_ref,
                      w3_ref, b3_ref, o_ref, slab_ref, *, H, W, Pp):
    """One batch tile.  x_ref: (M, Cp) f32; weights bf16; biases f32."""
    M = x_ref.shape[0]

    # ---- conv1 (1x1, BN scale folded into w1) + bias + ReLU ----------------
    h1 = jnp.dot(x_ref[...].astype(jnp.bfloat16), w1_ref[...],
                 preferred_element_type=jnp.float32)
    h1 = jnp.maximum(h1 + b1_ref[...], 0.0)            # (M, Pp) f32

    # ---- conv2 (3x3, stride 1, pad 1) as ONE im2col matmul -----------------
    # slab[:, k*Pp:(k+1)*Pp] holds h1 shifted by tap k = (dy+1)*3 + (dx+1).
    # Each tap is an XLU roll of the (M, Pp) slab by dy*W + dx; out-of-image
    # rows/columns (and the roll's circular wrap, incl. across images within
    # the batch tile) are zeroed by one combined row/col mask per tap.
    row = row_ref[...]                                  # (M, 1) int32
    col = col_ref[...]                                  # (M, 1) int32
    top = row >= 1
    bot = row <= H - 2
    left = col >= 1
    right = col <= W - 2
    mask_tab = {
        (-1, -1): top & left, (-1, 0): top, (-1, 1): top & right,
        (0, -1): left,        (0, 0): None, (0, 1): right,
        (1, -1): bot & left,  (1, 0): bot,  (1, 1): bot & right,
    }

    for dy in (-1, 0, 1):
        for dx in (-1, 0, 1):
            k = (dy + 1) * 3 + (dx + 1)
            s = dy * W + dx
            t = h1 if s == 0 else pltpu.roll(h1, shift=(-s) % M, axis=0)
            m = mask_tab[(dy, dx)]
            if m is not None:
                t = jnp.where(m, t, 0.0)                # mask in f32
            slab_ref[:, k * Pp:(k + 1) * Pp] = t.astype(jnp.bfloat16)

    h2 = jnp.dot(slab_ref[...], w2_ref[...],            # (M, 9Pp)@(9Pp, Pp)
                 preferred_element_type=jnp.float32)
    h2 = jnp.maximum(h2 + b2_ref[...], 0.0)             # (M, Pp) f32

    # ---- conv3 (1x1, BN scale folded) + bias + residual + ReLU -------------
    h3 = jnp.dot(h2.astype(jnp.bfloat16), w3_ref[...],
                 preferred_element_type=jnp.float32)    # (M, Cp) f32
    # Residual re-read here (cheap VMEM vld) instead of a live value carried
    # across all three matmuls.
    o_ref[...] = jnp.maximum(h3 + b3_ref[...] + x_ref[...], 0.0)


def _fold_bn(gamma, beta, mean, var):
    scale = gamma / jnp.sqrt(var + _EPS)
    bias = beta - mean * scale
    return scale, bias


def _round_up(v, m):
    return (v + m - 1) // m * m


def _vmem_limit_bytes():
    # Generation-aware scoped-VMEM limit (v5e/v6e: 128 MiB physical -> 96 MiB,
    # v7x: 64 MiB physical -> 48 MiB).  Conservative fallback if the query
    # is unavailable.
    try:
        cap = int(pltpu.get_tpu_info().vmem_capacity_bytes)
        return int(min(96 * 1024 * 1024, max(32 * 1024 * 1024, (cap * 3) // 4)))
    except Exception:
        return 32 * 1024 * 1024


def bottleneck_pallas(x_nchw, params, *, b_tile=None):
    """x_nchw: (N, Cin, H, W) float32.  Returns (N, Cin, H, W) float32."""
    x = jnp.transpose(x_nchw, (0, 2, 3, 1)).astype(jnp.float32)   # NHWC
    N, H, W, Cin = x.shape
    P = params["w1"].shape[0]                 # planes
    Cout = 4 * P
    assert Cin == Cout, "downsample=None requires inplanes == planes*4"
    HW = H * W

    # Pad channel dims to 128 lanes so stores/loads are lane-dense.  At real
    # ResNet channel counts (multiples of 128) this is a no-op.
    Cp = _round_up(Cin, _LANE)                # padded Cin == padded Cout
    Pp = _round_up(P, _LANE)

    # Batch tile: process several images per grid step to amortize per-step
    # overhead and keep weights resident (largest divisor of N whose f32 x
    # block stays <= ~2 MiB).
    if b_tile is None:
        b_tile = 1
        for cand in range(N, 0, -1):
            if N % cand == 0 and cand * HW * Cp * 4 <= (2 << 20):
                b_tile = cand
                break
    assert N % b_tile == 0
    M = b_tile * HW
    grid = (N // b_tile,)

    s1, b1 = _fold_bn(*params["bn1"])
    s2, b2 = _fold_bn(*params["bn2"])
    s3, b3 = _fold_bn(*params["bn3"])

    # PyTorch conv weights are OIHW.  Fold the BN scale into each weight's
    # output channels, zero-pad to lane multiples, cast to bf16 for the MXU.
    w1 = jnp.transpose(params["w1"][:, :, 0, 0], (1, 0)) * s1[None, :]  # (Cin, P)
    w1p = jnp.pad(w1, ((0, Cp - Cin), (0, Pp - P))).astype(jnp.bfloat16)

    w2_t = jnp.transpose(params["w2"], (2, 3, 1, 0)) * s2[None, None, None, :]
    w2p = jnp.pad(w2_t, ((0, 0), (0, 0), (0, Pp - P), (0, Pp - P)))
    w2p = w2p.reshape(9 * Pp, Pp).astype(jnp.bfloat16)                  # (9Pp, Pp)

    w3 = jnp.transpose(params["w3"][:, :, 0, 0], (1, 0)) * s3[None, :]  # (P, Cout)
    w3p = jnp.pad(w3, ((0, Pp - P), (0, Cp - Cout))).astype(jnp.bfloat16)

    b1p = jnp.pad(b1, (0, Pp - P)).reshape(1, Pp).astype(jnp.float32)
    b2p = jnp.pad(b2, (0, Pp - P)).reshape(1, Pp).astype(jnp.float32)
    b3p = jnp.pad(b3, (0, Cp - Cout)).reshape(1, Cp).astype(jnp.float32)

    # Lane-padded, lane-dense activation slab (N*HW, Cp).
    x2d = jnp.pad(x.reshape(N * HW, Cin), ((0, 0), (0, Cp - Cin)))

    # Per-flat-row (row, col) coordinates within the image, replicated across
    # the batch tile; used in-kernel to mask the 3x3 taps at image borders
    # (and the circular roll wrap, incl. across images in the tile).
    hw_pos = jnp.arange(HW, dtype=jnp.int32)
    row_ids = jnp.tile(hw_pos // W, (b_tile,)).reshape(M, 1)
    col_ids = jnp.tile(hw_pos % W, (b_tile,)).reshape(M, 1)

    flops = 2 * N * HW * (Cp * Pp + 9 * Pp * Pp + Pp * Cp)
    bytes_accessed = ((2 * N * HW * Cp) * 4
                      + (w1p.size + w2p.size + w3p.size) * 2
                      + (b1p.size + b2p.size + b3p.size) * 4
                      + (row_ids.size + col_ids.size) * 4)

    out2d = pl.pallas_call(
        functools.partial(bottleneck_kernel, H=H, W=W, Pp=Pp),
        out_shape=jax.ShapeDtypeStruct((N * HW, Cp), jnp.float32),
        grid=grid,
        in_specs=[
            pl.BlockSpec((M, Cp), lambda n: (n, 0)),        # x (f32, padded)
            pl.BlockSpec((M, 1), lambda n: (0, 0)),         # row ids
            pl.BlockSpec((M, 1), lambda n: (0, 0)),         # col ids
            pl.BlockSpec((Cp, Pp), lambda n: (0, 0)),       # w1 (bf16, BN folded)
            pl.BlockSpec((1, Pp), lambda n: (0, 0)),        # b1
            pl.BlockSpec((9 * Pp, Pp), lambda n: (0, 0)),   # w2 (bf16, im2col)
            pl.BlockSpec((1, Pp), lambda n: (0, 0)),        # b2
            pl.BlockSpec((Pp, Cp), lambda n: (0, 0)),       # w3 (bf16)
            pl.BlockSpec((1, Cp), lambda n: (0, 0)),        # b3
        ],
        out_specs=pl.BlockSpec((M, Cp), lambda n: (n, 0)),
        scratch_shapes=[pltpu.VMEM((M, 9 * Pp), jnp.bfloat16)],  # im2col slab
        compiler_params=pltpu.CompilerParams(
            dimension_semantics=("parallel",),
            vmem_limit_bytes=_vmem_limit_bytes()),
        cost_estimate=pl.CostEstimate(flops=flops, transcendentals=0,
                                      bytes_accessed=bytes_accessed),
    )(x2d, row_ids, col_ids, w1p, b1p, w2p, b2p, w3p, b3p)

    out = out2d[:, :Cout].reshape(N, H, W, Cout)
    return jnp.transpose(out, (0, 3, 1, 2))


# ---------------- pure-JAX reference (for correctness check) ----------------
def bottleneck_ref(x, params):
    def conv(inp, w, pad):
        return jax.lax.conv_general_dilated(
            inp, w, window_strides=(1, 1), padding=[(pad, pad), (pad, pad)],
            dimension_numbers=("NCHW", "OIHW", "NCHW"), precision=_PREC)

    def bn(inp, p):
        g, b, m, v = p
        s = g / jnp.sqrt(v + _EPS)
        return inp * s[None, :, None, None] + (b - m * s)[None, :, None, None]

    out = jax.nn.relu(bn(conv(x, params["w1"], 0), params["bn1"]))
    out = jax.nn.relu(bn(conv(out, params["w2"], 1), params["bn2"]))
    out = bn(conv(out, params["w3"], 0), params["bn3"])
    return jax.nn.relu(out + x)


def make_params(key, inplanes, planes):
    ks = jax.random.split(key, 16)

    def bn_params(k, c):
        k0, k1, k2, k3 = jax.random.split(k, 4)
        gamma = 1.0 + 0.1 * jax.random.normal(k0, (c,), jnp.float32)
        beta = 0.1 * jax.random.normal(k1, (c,), jnp.float32)
        mean = 0.1 * jax.random.normal(k2, (c,), jnp.float32)
        var = jax.random.uniform(k3, (c,), jnp.float32, 0.5, 1.5)
        return (gamma, beta, mean, var)

    return {
        "w1": 0.2 * jax.random.normal(ks[0], (planes, inplanes, 1, 1), jnp.float32),
        "w2": 0.2 * jax.random.normal(ks[1], (planes, planes, 3, 3), jnp.float32),
        "w3": 0.2 * jax.random.normal(ks[2], (4 * planes, planes, 1, 1), jnp.float32),
        "bn1": bn_params(ks[3], planes),
        "bn2": bn_params(ks[4], planes),
        "bn3": bn_params(ks[5], 4 * planes),
    }


if __name__ == "__main__":
    key = jax.random.PRNGKey(0)
    k_param, k_x = jax.random.split(key)

    N, planes, H, W = 2, 8, 16, 16
    inplanes = 4 * planes  # 32, required for residual add with downsample=None

    params = make_params(k_param, inplanes, planes)
    x = jax.random.normal(k_x, (N, inplanes, H, W), jnp.float32)

    out = jax.block_until_ready(bottleneck_pallas(x, params))
    ref = jax.block_until_ready(bottleneck_ref(x, params))

    assert out.shape == ref.shape == (N, inplanes, H, W)
    max_err = float(jnp.max(jnp.abs(out - ref)))
    # bf16 MXU matmuls (f32 accumulation) -> looser tolerance than f32.
    assert jnp.allclose(out, ref, rtol=5e-2, atol=5e-2), max_err

    print("KERNEL_OK")
</pallas_src>

<mosaic_0001>
module attributes {stable_mosaic.version = 11 : i64} {
  func.func @bottleneck_kernel(%arg0: i32, %arg1: memref<512x128xf32, #tpu.memory_space<vmem>>, %arg2: memref<512x1xi32, #tpu.memory_space<vmem>>, %arg3: memref<512x1xi32, #tpu.memory_space<vmem>>, %arg4: memref<128x128xbf16, #tpu.memory_space<vmem>>, %arg5: memref<1x128xf32, #tpu.memory_space<vmem>>, %arg6: memref<1152x128xbf16, #tpu.memory_space<vmem>>, %arg7: memref<1x128xf32, #tpu.memory_space<vmem>>, %arg8: memref<128x128xbf16, #tpu.memory_space<vmem>>, %arg9: memref<1x128xf32, #tpu.memory_space<vmem>>, %arg10: memref<512x128xf32, #tpu.memory_space<vmem>>, %arg11: memref<512x1152xbf16, #tpu.memory_space<vmem>>) attributes {dimension_semantics = [#tpu.dimension_semantics<parallel>], iteration_bounds = array<i64: 1>, scalar_prefetch = 0 : i64, scratch_operands = 1 : i64, tpu.core_type = #tpu.core_type<tc>, window_params = [{transform_indices = @transform_0, window_bounds = array<i64: 512, 128>}, {pipeline_mode = #tpu.pipeline_mode<synchronous>, transform_indices = @transform_1, window_bounds = array<i64: 512, 1>}, {pipeline_mode = #tpu.pipeline_mode<synchronous>, transform_indices = @transform_2, window_bounds = array<i64: 512, 1>}, {pipeline_mode = #tpu.pipeline_mode<synchronous>, transform_indices = @transform_3, window_bounds = array<i64: 128, 128>}, {pipeline_mode = #tpu.pipeline_mode<synchronous>, transform_indices = @transform_4, window_bounds = array<i64: 1, 128>}, {pipeline_mode = #tpu.pipeline_mode<synchronous>, transform_indices = @transform_5, window_bounds = array<i64: 1152, 128>}, {pipeline_mode = #tpu.pipeline_mode<synchronous>, transform_indices = @transform_6, window_bounds = array<i64: 1, 128>}, {pipeline_mode = #tpu.pipeline_mode<synchronous>, transform_indices = @transform_7, window_bounds = array<i64: 128, 128>}, {pipeline_mode = #tpu.pipeline_mode<synchronous>, transform_indices = @transform_8, window_bounds = array<i64: 1, 128>}, {transform_indices = @transform_9, window_bounds = array<i64: 512, 128>}]} {
    %c0 = arith.constant 0 : index
    %c0_0 = arith.constant 0 : index
    %0 = vector.load %arg1[%c0, %c0_0] : memref<512x128xf32, #tpu.memory_space<vmem>>, vector<512x128xf32>
    %1 = arith.truncf %0 : vector<512x128xf32> to vector<512x128xbf16>
    %c0_1 = arith.constant 0 : index
    %c0_2 = arith.constant 0 : index
    %2 = vector.load %arg4[%c0_1, %c0_2] : memref<128x128xbf16, #tpu.memory_space<vmem>>, vector<128x128xbf16>
    %cst = arith.constant dense<0.000000e+00> : vector<512x128xf32>
    %3 = tpu.matmul %1, %2, %cst {dimension_numbers = #tpu.dot_dimension_numbers<[1], [0], [0], [1], [0, 0, 1, 1], [], []>} : vector<512x128xbf16>, vector<128x128xbf16>, vector<512x128xf32> -> vector<512x128xf32>
    %c0_3 = arith.constant 0 : index
    %c0_4 = arith.constant 0 : index
    %4 = vector.load %arg5[%c0_3, %c0_4] : memref<1x128xf32, #tpu.memory_space<vmem>>, vector<1x128xf32>
    %5 = vector.broadcast %4 : vector<1x128xf32> to vector<512x128xf32>
    %6 = arith.addf %3, %5 : vector<512x128xf32>
    %cst_5 = arith.constant 0.000000e+00 : f32
    %7 = vector.broadcast %cst_5 : f32 to vector<512x128xf32>
    %8 = arith.maximumf %6, %7 : vector<512x128xf32>
    %c0_6 = arith.constant 0 : index
    %c0_7 = arith.constant 0 : index
    %9 = vector.load %arg2[%c0_6, %c0_7] : memref<512x1xi32, #tpu.memory_space<vmem>>, vector<512x1xi32>
    %c0_8 = arith.constant 0 : index
    %c0_9 = arith.constant 0 : index
    %10 = vector.load %arg3[%c0_8, %c0_9] : memref<512x1xi32, #tpu.memory_space<vmem>>, vector<512x1xi32>
    %c1_i32 = arith.constant 1 : i32
    %11 = vector.broadcast %c1_i32 : i32 to vector<512x1xi32>
    %12 = arith.cmpi sge, %9, %11 : vector<512x1xi32>
    %c14_i32 = arith.constant 14 : i32
    %13 = vector.broadcast %c14_i32 : i32 to vector<512x1xi32>
    %14 = arith.cmpi sle, %9, %13 : vector<512x1xi32>
    %c1_i32_10 = arith.constant 1 : i32
    %15 = vector.broadcast %c1_i32_10 : i32 to vector<512x1xi32>
    %16 = arith.cmpi sge, %10, %15 : vector<512x1xi32>
    %c14_i32_11 = arith.constant 14 : i32
    %17 = vector.broadcast %c14_i32_11 : i32 to vector<512x1xi32>
    %18 = arith.cmpi sle, %10, %17 : vector<512x1xi32>
    %19 = arith.andi %12, %16 : vector<512x1xi1>
    %20 = arith.andi %12, %18 : vector<512x1xi1>
    %21 = arith.andi %14, %16 : vector<512x1xi1>
    %22 = arith.andi %14, %18 : vector<512x1xi1>
    %c17_i32 = arith.constant 17 : i32
    %23 = tpu.dynamic_rotate %8 by %c17_i32 dim 0 : vector<512x128xf32>, i32 -> vector<512x128xf32>
    %cst_12 = arith.constant 0.000000e+00 : f32
    %24 = vector.shape_cast %19 : vector<512x1xi1> to vector<512x1xi1>
    %25 = vector.broadcast %24 : vector<512x1xi1> to vector<512x128xi1>
    %26 = vector.broadcast %cst_12 : f32 to vector<512x128xf32>
    %27 = arith.select %25, %23, %26 : vector<512x128xi1>, vector<512x128xf32>
    %28 = arith.truncf %27 : vector<512x128xf32> to vector<512x128xbf16>
    %c0_13 = arith.constant 0 : index
    %c0_14 = arith.constant 0 : index
    %29 = vector.load %arg11[%c0_13, %c0_14] : memref<512x1152xbf16, #tpu.memory_space<vmem>>, vector<512x128xbf16>
    tpu.vector_store %arg11[%c0_13, %c0_14], %28 {strides = array<i32>} : memref<512x1152xbf16, #tpu.memory_space<vmem>>, vector<512x128xbf16>,
    %c16_i32 = arith.constant 16 : i32
    %30 = tpu.dynamic_rotate %8 by %c16_i32 dim 0 : vector<512x128xf32>, i32 -> vector<512x128xf32>
    %cst_15 = arith.constant 0.000000e+00 : f32
    %31 = vector.shape_cast %12 : vector<512x1xi1> to vector<512x1xi1>
    %32 = vector.broadcast %31 : vector<512x1xi1> to vector<512x128xi1>
    %33 = vector.broadcast %cst_15 : f32 to vector<512x128xf32>
    %34 = arith.select %32, %30, %33 : vector<512x128xi1>, vector<512x128xf32>
    %35 = arith.truncf %34 : vector<512x128xf32> to vector<512x128xbf16>
    %c0_16 = arith.constant 0 : index
    %c128 = arith.constant 128 : index
    %36 = vector.load %arg11[%c0_16, %c128] : memref<512x1152xbf16, #tpu.memory_space<vmem>>, vector<512x128xbf16>
    tpu.vector_store %arg11[%c0_16, %c128], %35 {strides = array<i32>} : memref<512x1152xbf16, #tpu.memory_space<vmem>>, vector<512x128xbf16>,
    %c15_i32 = arith.constant 15 : i32
    %37 = tpu.dynamic_rotate %8 by %c15_i32 dim 0 : vector<512x128xf32>, i32 -> vector<512x128xf32>
    %cst_17 = arith.constant 0.000000e+00 : f32
    %38 = vector.shape_cast %20 : vector<512x1xi1> to vector<512x1xi1>
    %39 = vector.broadcast %38 : vector<512x1xi1> to vector<512x128xi1>
    %40 = vector.broadcast %cst_17 : f32 to vector<512x128xf32>
    %41 = arith.select %39, %37, %40 : vector<512x128xi1>, vector<512x128xf32>
    %42 = arith.truncf %41 : vector<512x128xf32> to vector<512x128xbf16>
    %c0_18 = arith.constant 0 : index
    %c256 = arith.constant 256 : index
    %43 = vector.load %arg11[%c0_18, %c256] : memref<512x1152xbf16, #tpu.memory_space<vmem>>, vector<512x128xbf16>
    tpu.vector_store %arg11[%c0_18, %c256], %42 {strides = array<i32>} : memref<512x1152xbf16, #tpu.memory_space<vmem>>, vector<512x128xbf16>,
    %c1_i32_19 = arith.constant 1 : i32
    %44 = tpu.dynamic_rotate %8 by %c1_i32_19 dim 0 : vector<512x128xf32>, i32 -> vector<512x128xf32>
    %cst_20 = arith.constant 0.000000e+00 : f32
    %45 = vector.shape_cast %16 : vector<512x1xi1> to vector<512x1xi1>
    %46 = vector.broadcast %45 : vector<512x1xi1> to vector<512x128xi1>
    %47 = vector.broadcast %cst_20 : f32 to vector<512x128xf32>
    %48 = arith.select %46, %44, %47 : vector<512x128xi1>, vector<512x128xf32>
    %49 = arith.truncf %48 : vector<512x128xf32> to vector<512x128xbf16>
    %c0_21 = arith.constant 0 : index
    %c384 = arith.constant 384 : index
    %50 = vector.load %arg11[%c0_21, %c384] : memref<512x1152xbf16, #tpu.memory_space<vmem>>, vector<512x128xbf16>
    tpu.vector_store %arg11[%c0_21, %c384], %49 {strides = array<i32>} : memref<512x1152xbf16, #tpu.memory_space<vmem>>, vector<512x128xbf16>,
    %51 = arith.truncf %8 : vector<512x128xf32> to vector<512x128xbf16>
    %c0_22 = arith.constant 0 : index
    %c512 = arith.constant 512 : index
    %52 = vector.load %arg11[%c0_22, %c512] : memref<512x1152xbf16, #tpu.memory_space<vmem>>, vector<512x128xbf16>
    tpu.vector_store %arg11[%c0_22, %c512], %51 {strides = array<i32>} : memref<512x1152xbf16, #tpu.memory_space<vmem>>, vector<512x128xbf16>,
    %c511_i32 = arith.constant 511 : i32
    %53 = tpu.dynamic_rotate %8 by %c511_i32 dim 0 : vector<512x128xf32>, i32 -> vector<512x128xf32>
    %cst_23 = arith.constant 0.000000e+00 : f32
    %54 = vector.shape_cast %18 : vector<512x1xi1> to vector<512x1xi1>
    %55 = vector.broadcast %54 : vector<512x1xi1> to vector<512x128xi1>
    %56 = vector.broadcast %cst_23 : f32 to vector<512x128xf32>
    %57 = arith.select %55, %53, %56 : vector<512x128xi1>, vector<512x128xf32>
    %58 = arith.truncf %57 : vector<512x128xf32> to vector<512x128xbf16>
    %c0_24 = arith.constant 0 : index
    %c640 = arith.constant 640 : index
    %59 = vector.load %arg11[%c0_24, %c640] : memref<512x1152xbf16, #tpu.memory_space<vmem>>, vector<512x128xbf16>
    tpu.vector_store %arg11[%c0_24, %c640], %58 {strides = array<i32>} : memref<512x1152xbf16, #tpu.memory_space<vmem>>, vector<512x128xbf16>,
    %c497_i32 = arith.constant 497 : i32
    %60 = tpu.dynamic_rotate %8 by %c497_i32 dim 0 : vector<512x128xf32>, i32 -> vector<512x128xf32>
    %cst_25 = arith.constant 0.000000e+00 : f32
    %61 = vector.shape_cast %21 : vector<512x1xi1> to vector<512x1xi1>
    %62 = vector.broadcast %61 : vector<512x1xi1> to vector<512x128xi1>
    %63 = vector.broadcast %cst_25 : f32 to vector<512x128xf32>
    %64 = arith.select %62, %60, %63 : vector<512x128xi1>, vector<512x128xf32>
    %65 = arith.truncf %64 : vector<512x128xf32> to vector<512x128xbf16>
    %c0_26 = arith.constant 0 : index
    %c768 = arith.constant 768 : index
    %66 = vector.load %arg11[%c0_26, %c768] : memref<512x1152xbf16, #tpu.memory_space<vmem>>, vector<512x128xbf16>
    tpu.vector_store %arg11[%c0_26, %c768], %65 {strides = array<i32>} : memref<512x1152xbf16, #tpu.memory_space<vmem>>, vector<512x128xbf16>,
    %c496_i32 = arith.constant 496 : i32
    %67 = tpu.dynamic_rotate %8 by %c496_i32 dim 0 : vector<512x128xf32>, i32 -> vector<512x128xf32>
    %cst_27 = arith.constant 0.000000e+00 : f32
    %68 = vector.shape_cast %14 : vector<512x1xi1> to vector<512x1xi1>
    %69 = vector.broadcast %68 : vector<512x1xi1> to vector<512x128xi1>
    %70 = vector.broadcast %cst_27 : f32 to vector<512x128xf32>
    %71 = arith.select %69, %67, %70 : vector<512x128xi1>, vector<512x128xf32>
    %72 = arith.truncf %71 : vector<512x128xf32> to vector<512x128xbf16>
    %c0_28 = arith.constant 0 : index
    %c896 = arith.constant 896 : index
    %73 = vector.load %arg11[%c0_28, %c896] : memref<512x1152xbf16, #tpu.memory_space<vmem>>, vector<512x128xbf16>
    tpu.vector_store %arg11[%c0_28, %c896], %72 {strides = array<i32>} : memref<512x1152xbf16, #tpu.memory_space<vmem>>, vector<512x128xbf16>,
    %c495_i32 = arith.constant 495 : i32
    %74 = tpu.dynamic_rotate %8 by %c495_i32 dim 0 : vector<512x128xf32>, i32 -> vector<512x128xf32>
    %cst_29 = arith.constant 0.000000e+00 : f32
    %75 = vector.shape_cast %22 : vector<512x1xi1> to vector<512x1xi1>
    %76 = vector.broadcast %75 : vector<512x1xi1> to vector<512x128xi1>
    %77 = vector.broadcast %cst_29 : f32 to vector<512x128xf32>
    %78 = arith.select %76, %74, %77 : vector<512x128xi1>, vector<512x128xf32>
    %79 = arith.truncf %78 : vector<512x128xf32> to vector<512x128xbf16>
    %c0_30 = arith.constant 0 : index
    %c1024 = arith.constant 1024 : index
    %80 = vector.load %arg11[%c0_30, %c1024] : memref<512x1152xbf16, #tpu.memory_space<vmem>>, vector<512x128xbf16>
    tpu.vector_store %arg11[%c0_30, %c1024], %79 {strides = array<i32>} : memref<512x1152xbf16, #tpu.memory_space<vmem>>, vector<512x128xbf16>,
    %c0_31 = arith.constant 0 : index
    %c0_32 = arith.constant 0 : index
    %81 = vector.load %arg11[%c0_31, %c0_32] : memref<512x1152xbf16, #tpu.memory_space<vmem>>, vector<512x1152xbf16>
    %c0_33 = arith.constant 0 : index
    %c0_34 = arith.constant 0 : index
    %82 = vector.load %arg6[%c0_33, %c0_34] : memref<1152x128xbf16, #tpu.memory_space<vmem>>, vector<1152x128xbf16>
    %cst_35 = arith.constant dense<0.000000e+00> : vector<512x128xf32>
    %83 = tpu.matmul %81, %82, %cst_35 {dimension_numbers = #tpu.dot_dimension_numbers<[1], [0], [0], [1], [0, 0, 1, 1], [], []>} : vector<512x1152xbf16>, vector<1152x128xbf16>, vector<512x128xf32> -> vector<512x128xf32>
    %c0_36 = arith.constant 0 : index
    %c0_37 = arith.constant 0 : index
    %84 = vector.load %arg7[%c0_36, %c0_37] : memref<1x128xf32, #tpu.memory_space<vmem>>, vector<1x128xf32>
    %85 = vector.broadcast %84 : vector<1x128xf32> to vector<512x128xf32>
    %86 = arith.addf %83, %85 : vector<512x128xf32>
    %cst_38 = arith.constant 0.000000e+00 : f32
    %87 = vector.broadcast %cst_38 : f32 to vector<512x128xf32>
    %88 = arith.maximumf %86, %87 : vector<512x128xf32>
    %89 = arith.truncf %88 : vector<512x128xf32> to vector<512x128xbf16>
    %c0_39 = arith.constant 0 : index
    %c0_40 = arith.constant 0 : index
    %90 = vector.load %arg8[%c0_39, %c0_40] : memref<128x128xbf16, #tpu.memory_space<vmem>>, vector<128x128xbf16>
    %cst_41 = arith.constant dense<0.000000e+00> : vector<512x128xf32>
    %91 = tpu.matmul %89, %90, %cst_41 {dimension_numbers = #tpu.dot_dimension_numbers<[1], [0], [0], [1], [0, 0, 1, 1], [], []>} : vector<512x128xbf16>, vector<128x128xbf16>, vector<512x128xf32> -> vector<512x128xf32>
    %c0_42 = arith.constant 0 : index
    %c0_43 = arith.constant 0 : index
    %92 = vector.load %arg9[%c0_42, %c0_43] : memref<1x128xf32, #tpu.memory_space<vmem>>, vector<1x128xf32>
    %93 = vector.broadcast %92 : vector<1x128xf32> to vector<512x128xf32>
    %94 = arith.addf %91, %93 : vector<512x128xf32>
    %c0_44 = arith.constant 0 : index
    %c0_45 = arith.constant 0 : index
    %95 = vector.load %arg1[%c0_44, %c0_45] : memref<512x128xf32, #tpu.memory_space<vmem>>, vector<512x128xf32>
    %96 = arith.addf %94, %95 : vector<512x128xf32>
    %cst_46 = arith.constant 0.000000e+00 : f32
    %97 = vector.broadcast %cst_46 : f32 to vector<512x128xf32>
    %98 = arith.maximumf %96, %97 : vector<512x128xf32>
    %c0_47 = arith.constant 0 : index
    %c0_48 = arith.constant 0 : index
    %99 = vector.load %arg10[%c0_47, %c0_48] : memref<512x128xf32, #tpu.memory_space<vmem>>, vector<512x128xf32>
    tpu.vector_store %arg10[%c0_47, %c0_48], %98 {strides = array<i32>} : memref<512x128xf32, #tpu.memory_space<vmem>>, vector<512x128xf32>,
    return
  }
  func.func @transform_0(%arg0: i32) -> (i32, i32) {
    %c0_i32 = arith.constant 0 : i32
    %c0_i32_0 = arith.constant 0 : i32
    return %arg0, %c0_i32 : i32, i32
  }
  func.func @transform_1(%arg0: i32) -> (i32, i32) {
    %c0_i32 = arith.constant 0 : i32
    %c0_i32_0 = arith.constant 0 : i32
    %c0_i32_1 = arith.constant 0 : i32
    return %c0_i32, %c0_i32_0 : i32, i32
  }
  func.func @transform_2(%arg0: i32) -> (i32, i32) {
    %c0_i32 = arith.constant 0 : i32
    %c0_i32_0 = arith.constant 0 : i32
    %c0_i32_1 = arith.constant 0 : i32
    return %c0_i32, %c0_i32_0 : i32, i32
  }
  func.func @transform_3(%arg0: i32) -> (i32, i32) {
    %c0_i32 = arith.constant 0 : i32
    %c0_i32_0 = arith.constant 0 : i32
    %c0_i32_1 = arith.constant 0 : i32
    return %c0_i32, %c0_i32_0 : i32, i32
  }
  func.func @transform_4(%arg0: i32) -> (i32, i32) {
    %c0_i32 = arith.constant 0 : i32
    %c0_i32_0 = arith.constant 0 : i32
    %c0_i32_1 = arith.constant 0 : i32
    return %c0_i32, %c0_i32_0 : i32, i32
  }
  func.func @transform_5(%arg0: i32) -> (i32, i32) {
    %c0_i32 = arith.constant 0 : i32
    %c0_i32_0 = arith.constant 0 : i32
    %c0_i32_1 = arith.constant 0 : i32
    return %c0_i32, %c0_i32_0 : i32, i32
  }
  func.func @transform_6(%arg0: i32) -> (i32, i32) {
    %c0_i32 = arith.constant 0 : i32
    %c0_i32_0 = arith.constant 0 : i32
    %c0_i32_1 = arith.constant 0 : i32
    return %c0_i32, %c0_i32_0 : i32, i32
  }
  func.func @transform_7(%arg0: i32) -> (i32, i32) {
    %c0_i32 = arith.constant 0 : i32
    %c0_i32_0 = arith.constant 0 : i32
    %c0_i32_1 = arith.constant 0 : i32
    return %c0_i32, %c0_i32_0 : i32, i32
  }
  func.func @transform_8(%arg0: i32) -> (i32, i32) {
    %c0_i32 = arith.constant 0 : i32
    %c0_i32_0 = arith.constant 0 : i32
    %c0_i32_1 = arith.constant 0 : i32
    return %c0_i32, %c0_i32_0 : i32, i32
  }
  func.func @transform_9(%arg0: i32) -> (i32, i32) {
    %c0_i32 = arith.constant 0 : i32
    %c0_i32_0 = arith.constant 0 : i32
    return %arg0, %c0_i32 : i32, i32
  }
}

</mosaic_0001>

<llo_original>
// kernel: tpu_custom_call.1
$region0: #{tpu_custom_call.1}
  #allocation0 [shape = 'u32[]', space=smem, size = 0x4, offset = 0x4, fixed_abs, tag = 'smem constant byte address 0x4 - core index']
  #allocation1 [shape = 'u32[72,128]{1,0:T(1,128)}', space=vmem, size = 0x9000, scoped, tag = 'internal scratch']
  #allocation2 [shape = 'bf16[512,1152]{1,0:T(8,128)(2,1)}', space=vmem, size = 0x120000, scoped, tag = 'scratch operand']
  %s0 = inlined_call_operand.hbm [shape: f32[512,128], index: 0, kind: input, shape index: {}]
  %s1 = inlined_call_operand.vmem [shape: s32[512,1], index: 1, kind: input, shape index: {}]
  %s2 = inlined_call_operand.vmem [shape: s32[512,1], index: 2, kind: input, shape index: {}]
  %s3 = inlined_call_operand.vmem [shape: bf16[128,128], index: 3, kind: input, shape index: {}]
  %s4 = inlined_call_operand.vmem [shape: f32[1,128], index: 4, kind: input, shape index: {}]
  %s5 = inlined_call_operand.vmem [shape: bf16[1152,128], index: 5, kind: input, shape index: {}]
  %s6 = inlined_call_operand.vmem [shape: f32[1,128], index: 6, kind: input, shape index: {}]
  %s7 = inlined_call_operand.vmem [shape: bf16[128,128], index: 7, kind: input, shape index: {}]
  %s8 = inlined_call_operand.vmem [shape: f32[1,128], index: 8, kind: input, shape index: {}]
  %s9 = inlined_call_operand.hbm [shape: f32[512,128], index: 9, kind: output, shape index: {}]
  %s10 = sld [smem:[#allocation0]]
  $region50: #{tpu_custom_call.1} parent=0
    _
  %s12 = ssub.s32 1, %s10
  %s13 = scalar_select 0, %s12, %s10
  $region1: #{tpu_custom_call.1} parent=0
    #allocation3 [shape = 'u8[262144]{0}', space=vmem, size = 0x40000, scoped, tag = 'input window, operand 0, single buffered']
    #allocation4 [shape = 's32[1]{0}', space=sflag, size = 0x4, scoped, tag = 'scoped memory for tpu_custom_call.1']
    #allocation5 [shape = 's32[1]{0}', space=sflag, size = 0x4, scoped, tag = 'scoped memory for tpu_custom_call.1']
    #allocation6 [shape = 'u8[262144]{0}', space=vmem, size = 0x40000, scoped, tag = 'output window, operand 0, single buffered']
    %14 = vsyncpa [#allocation4], 0
    %15 = vsyncpa [#allocation5], 0
    // Predicated region
    $region2: #{tpu_custom_call.1} parent=1 // pred_check
      _
    $region3: #{tpu_custom_call.1} parent=1 // pred_check_branch
      %17 = sbr.rel (0) target = $region5
    $region4: #{tpu_custom_call.1} parent=1 // pred_region
      %19 = vsyncadd [#allocation4], 0
      %s20 = sshll.u32 %s0, 4
      %s21 = int_to_ptr.hbm [resolvable:$true] %s20
      %s22 = sshll.u32 [#allocation3], 4
      %s23 = int_to_ptr.vmem [resolvable:$true] %s22
      %28 = dma.hbm_to_vmem [thread:$0]  %s21, 8192, %s23, [#allocation4], 128, 128, 8
    $region5: #{tpu_custom_call.1} parent=1 // pred_fallthru
      _
    // Predicated region
    $region6: #{tpu_custom_call.1} parent=1 // pred_check
      _
    $region7: #{tpu_custom_call.1} parent=1 // pred_check_branch
      %30 = sbr.rel (0) target = $region9
    $region8: #{tpu_custom_call.1} parent=1 // pred_region
      _
    $region9: #{tpu_custom_call.1} parent=1 // pred_fallthru
      _
    // Predicated region
    $region10: #{tpu_custom_call.1} parent=1 // pred_check
      _
    $region11: #{tpu_custom_call.1} parent=1 // pred_check_branch
      %32 = sbr.rel (0) target = $region13
    $region12: #{tpu_custom_call.1} parent=1 // pred_region
      _
    $region13: #{tpu_custom_call.1} parent=1 // pred_fallthru
      _
    // Predicated region
    $region14: #{tpu_custom_call.1} parent=1 // pred_check
      _
    $region15: #{tpu_custom_call.1} parent=1 // pred_check_branch
      %34 = sbr.rel (0) target = $region17
    $region16: #{tpu_custom_call.1} parent=1 // pred_region
      _
    $region17: #{tpu_custom_call.1} parent=1 // pred_fallthru
      _
    // Predicated region
    $region18: #{tpu_custom_call.1} parent=1 // pred_check
      _
    $region19: #{tpu_custom_call.1} parent=1 // pred_check_branch
      %36 = sbr.rel (0) target = $region21
    $region20: #{tpu_custom_call.1} parent=1 // pred_region
      _
    $region21: #{tpu_custom_call.1} parent=1 // pred_fallthru
      _
    // Predicated region
    $region22: #{tpu_custom_call.1} parent=1 // pred_check
      _
    $region23: #{tpu_custom_call.1} parent=1 // pred_check_branch
      %38 = sbr.rel (0) target = $region25
    $region24: #{tpu_custom_call.1} parent=1 // pred_region
      _
    $region25: #{tpu_custom_call.1} parent=1 // pred_fallthru
      _
    // Predicated region
    $region26: #{tpu_custom_call.1} parent=1 // pred_check
      _
    $region27: #{tpu_custom_call.1} parent=1 // pred_check_branch
      %40 = sbr.rel (0) target = $region29
    $region28: #{tpu_custom_call.1} parent=1 // pred_region
      _
    $region29: #{tpu_custom_call.1} parent=1 // pred_fallthru
      _
    // Predicated region
    $region30: #{tpu_custom_call.1} parent=1 // pred_check
      _
    $region31: #{tpu_custom_call.1} parent=1 // pred_check_branch
      %42 = sbr.rel (0) target = $region33
    $region32: #{tpu_custom_call.1} parent=1 // pred_region
      _
    $region33: #{tpu_custom_call.1} parent=1 // pred_fallthru
      _
    // Predicated region
    $region34: #{tpu_custom_call.1} parent=1 // pred_check
      _
    $region35: #{tpu_custom_call.1} parent=1 // pred_check_branch
      %44 = sbr.rel (0) target = $region37
    $region36: #{tpu_custom_call.1} parent=1 // pred_region
      _
    $region37: #{tpu_custom_call.1} parent=1 // pred_fallthru
      _
    // Predicated region
    $region38: #{tpu_custom_call.1} parent=1 // pred_check
      _
    $region39: #{tpu_custom_call.1} parent=1 // pred_check_branch
      %46 = sbr.rel (0) target = $region41
    $region40: #{tpu_custom_call.1} parent=1 // pred_region
      %48 = dma.done [#allocation4], 8192
    $region41: #{tpu_custom_call.1} parent=1 // pred_fallthru
      _
    %v49 = vld [vmem:[#allocation3] sm:$0xff]
    %v50 = vld [vmem:[#allocation3 + $0x8] sm:$0xff]
    %v51 = vld [vmem:[#allocation3 + $0x10] sm:$0xff]
    %v52 = vld [vmem:[#allocation3 + $0x18] sm:$0xff]
    %v53 = vld [vmem:[#allocation3 + $0x20] sm:$0xff]
    %v54 = vld [vmem:[#allocation3 + $0x28] sm:$0xff]
    %v55 = vld [vmem:[#allocation3 + $0x30] sm:$0xff]
    %v56 = vld [vmem:[#allocation3 + $0x38] sm:$0xff]
    %v57 = vld [vmem:[#allocation3 + $0x40] sm:$0xff]
    %v58 = vld [vmem:[#allocation3 + $0x48] sm:$0xff]
    %v59 = vld [vmem:[#allocation3 + $0x50] sm:$0xff]
    %v60 = vld [vmem:[#allocation3 + $0x58] sm:$0xff]
    %v61 = vld [vmem:[#allocation3 + $0x60] sm:$0xff]
    %v62 = vld [vmem:[#allocation3 + $0x68] sm:$0xff]
    %v63 = vld [vmem:[#allocation3 + $0x70] sm:$0xff]
    %v64 = vld [vmem:[#allocation3 + $0x78] sm:$0xff]
    %v65 = vld [vmem:[#allocation3 + $0x80] sm:$0xff]
    %v66 = vld [vmem:[#allocation3 + $0x88] sm:$0xff]
    %v67 = vld [vmem:[#allocation3 + $0x90] sm:$0xff]
    %v68 = vld [vmem:[#allocation3 + $0x98] sm:$0xff]
    %v69 = vld [vmem:[#allocation3 + $0xa0] sm:$0xff]
    %v70 = vld [vmem:[#allocation3 + $0xa8] sm:$0xff]
    %v71 = vld [vmem:[#allocation3 + $0xb0] sm:$0xff]
    %v72 = vld [vmem:[#allocation3 + $0xb8] sm:$0xff]
    %v73 = vld [vmem:[#allocation3 + $0xc0] sm:$0xff]
    %v74 = vld [vmem:[#allocation3 + $0xc8] sm:$0xff]
    %v75 = vld [vmem:[#allocation3 + $0xd0] sm:$0xff]
    %v76 = vld [vmem:[#allocation3 + $0xd8] sm:$0xff]
    %v77 = vld [vmem:[#allocation3 + $0xe0] sm:$0xff]
    %v78 = vld [vmem:[#allocation3 + $0xe8] sm:$0xff]
    %v79 = vld [vmem:[#allocation3 + $0xf0] sm:$0xff]
    %v80 = vld [vmem:[#allocation3 + $0xf8] sm:$0xff]
    %v81 = vld [vmem:[#allocation3 + $0x100] sm:$0xff]
    %v82 = vld [vmem:[#allocation3 + $0x108] sm:$0xff]
    %v83 = vld [vmem:[#allocation3 + $0x110] sm:$0xff]
    %v84 = vld [vmem:[#allocation3 + $0x118] sm:$0xff]
    %v85 = vld [vmem:[#allocation3 + $0x120] sm:$0xff]
    %v86 = vld [vmem:[#allocation3 + $0x128] sm:$0xff]
    %v87 = vld [vmem:[#allocation3 + $0x130] sm:$0xff]
    %v88 = vld [vmem:[#allocation3 + $0x138] sm:$0xff]
    %v89 = vld [vmem:[#allocation3 + $0x140] sm:$0xff]
    %v90 = vld [vmem:[#allocation3 + $0x148] sm:$0xff]
    %v91 = vld [vmem:[#allocation3 + $0x150] sm:$0xff]
    %v92 = vld [vmem:[#allocation3 + $0x158] sm:$0xff]
    %v93 = vld [vmem:[#allocation3 + $0x160] sm:$0xff]
    %v94 = vld [vmem:[#allocation3 + $0x168] sm:$0xff]
    %v95 = vld [vmem:[#allocation3 + $0x170] sm:$0xff]
    %v96 = vld [vmem:[#allocation3 + $0x178] sm:$0xff]
    %v97 = vld [vmem:[#allocation3 + $0x180] sm:$0xff]
    %v98 = vld [vmem:[#allocation3 + $0x188] sm:$0xff]
    %v99 = vld [vmem:[#allocation3 + $0x190] sm:$0xff]
    %v100 = vld [vmem:[#allocation3 + $0x198] sm:$0xff]
    %v101 = vld [vmem:[#allocation3 + $0x1a0] sm:$0xff]
    %v102 = vld [vmem:[#allocation3 + $0x1a8] sm:$0xff]
    %v103 = vld [vmem:[#allocation3 + $0x1b0] sm:$0xff]
    %v104 = vld [vmem:[#allocation3 + $0x1b8] sm:$0xff]
    %v105 = vld [vmem:[#allocation3 + $0x1c0] sm:$0xff]
    %v106 = vld [vmem:[#allocation3 + $0x1c8] sm:$0xff]
    %v107 = vld [vmem:[#allocation3 + $0x1d0] sm:$0xff]
    %v108 = vld [vmem:[#allocation3 + $0x1d8] sm:$0xff]
    %v109 = vld [vmem:[#allocation3 + $0x1e0] sm:$0xff]
    %v110 = vld [vmem:[#allocation3 + $0x1e8] sm:$0xff]
    %v111 = vld [vmem:[#allocation3 + $0x1f0] sm:$0xff]
    %v112 = vld [vmem:[#allocation3 + $0x1f8] sm:$0xff]
    %v113 = vpack.c.bf16 %v50, %v49
    %v114 = vpack.c.bf16 %v52, %v51
    %v115 = vpack.c.bf16 %v54, %v53
    %v116 = vpack.c.bf16 %v56, %v55
    %v117 = vpack.c.bf16 %v58, %v57
    %v118 = vpack.c.bf16 %v60, %v59
    %v119 = vpack.c.bf16 %v62, %v61
    %v120 = vpack.c.bf16 %v64, %v63
    %v121 = vpack.c.bf16 %v66, %v65
    %v122 = vpack.c.bf16 %v68, %v67
    %v123 = vpack.c.bf16 %v70, %v69
    %v124 = vpack.c.bf16 %v72, %v71
    %v125 = vpack.c.bf16 %v74, %v73
    %v126 = vpack.c.bf16 %v76, %v75
    %v127 = vpack.c.bf16 %v78, %v77
    %v128 = vpack.c.bf16 %v80, %v79
    %v129 = vpack.c.bf16 %v82, %v81
    %v130 = vpack.c.bf16 %v84, %v83
    %v131 = vpack.c.bf16 %v86, %v85
    %v132 = vpack.c.bf16 %v88, %v87
    %v133 = vpack.c.bf16 %v90, %v89
    %v134 = vpack.c.bf16 %v92, %v91
    %v135 = vpack.c.bf16 %v94, %v93
    %v136 = vpack.c.bf16 %v96, %v95
    %v137 = vpack.c.bf16 %v98, %v97
    %v138 = vpack.c.bf16 %v100, %v99
    %v139 = vpack.c.bf16 %v102, %v101
    %v140 = vpack.c.bf16 %v104, %v103
    %v141 = vpack.c.bf16 %v106, %v105
    %v142 = vpack.c.bf16 %v108, %v107
    %v143 = vpack.c.bf16 %v110, %v109
    %v144 = vpack.c.bf16 %v112, %v111
    %v145 = vld [vmem:[%s3] sm:$0xf]
    %v146 = vld [vmem:[%s3 + $0x4] sm:$0xf]
    %v147 = vld [vmem:[%s3 + $0x8] sm:$0xf]
    %v148 = vld [vmem:[%s3 + $0xc] sm:$0xf]
    %v149 = vld [vmem:[%s3 + $0x10] sm:$0xf]
    %v150 = vld [vmem:[%s3 + $0x14] sm:$0xf]
    %v151 = vld [vmem:[%s3 + $0x18] sm:$0xf]
    %v152 = vld [vmem:[%s3 + $0x1c] sm:$0xf]
    %v153 = vld [vmem:[%s3 + $0x20] sm:$0xf]
    %v154 = vld [vmem:[%s3 + $0x24] sm:$0xf]
    %v155 = vld [vmem:[%s3 + $0x28] sm:$0xf]
    %v156 = vld [vmem:[%s3 + $0x2c] sm:$0xf]
    %v157 = vld [vmem:[%s3 + $0x30] sm:$0xf]
    %v158 = vld [vmem:[%s3 + $0x34] sm:$0xf]
    %v159 = vld [vmem:[%s3 + $0x38] sm:$0xf]
    %v160 = vld [vmem:[%s3 + $0x3c] sm:$0xf]
    %v161 = vld [vmem:[%s4] sm:$0x1]
    %v163 = vperm.slane %v161, 0
    %v181 = vunpack.c.l.b16 %v145
    %v182 = vunpack.c.l.b16 %v146
    %v183 = vunpack.c.l.b16 %v147
    %v184 = vunpack.c.l.b16 %v148
    %v185 = vunpack.c.l.b16 %v149
    %v186 = vunpack.c.l.b16 %v150
    %v187 = vunpack.c.l.b16 %v151
    %v188 = vunpack.c.l.b16 %v152
    %v189 = vunpack.c.l.b16 %v153
    %v190 = vunpack.c.l.b16 %v154
    %v191 = vunpack.c.l.b16 %v155
    %v192 = vunpack.c.l.b16 %v156
    %v193 = vunpack.c.l.b16 %v157
    %v194 = vunpack.c.l.b16 %v158
    %v195 = vunpack.c.l.b16 %v159
    %v196 = vunpack.c.l.b16 %v160
    %v197 = vpack.c.b16 %v182, %v181
    %v198 = vpack.c.b16 %v184, %v183
    %v199 = vpack.c.b16 %v186, %v185
    %v200 = vpack.c.b16 %v188, %v187
    %v201 = vpack.c.b16 %v190, %v189
    %v202 = vpack.c.b16 %v192, %v191
    %v203 = vpack.c.b16 %v194, %v193
    %v204 = vpack.c.b16 %v196, %v195
    %213 = vmatpush.bf16.msra.mxu0 %v204
    %214 = vmatpush.bf16.msra.mxu0 %v203
    %215 = vmatpush.bf16.msra.mxu0 %v202
    %216 = vmatpush.bf16.msra.mxu0 %v201
    %217 = vmatpush.bf16.msra.mxu0 %v200
    %218 = vmatpush.bf16.msra.mxu0 %v199
    %219 = vmatpush.bf16.msra.mxu0 %v198
    %220 = vmatpush.bf16.msra.mxu0 %v197
    %221 = vmatmul.bf16.gmra.mxu0 %v113
    %v222 = vpop.f32.mrf.mxu0
    %v223 = vadd.f32 %v163, %v222
    %v224 = vpop.f32.mrf.mxu0
    %v225 = vadd.f32 %v163, %v224
    %226 = vmatmul.bf16.gmra.mxu0 %v114
    %v227 = vpop.f32.mrf.mxu0
    %v228 = vadd.f32 %v163, %v227
    %v229 = vpop.f32.mrf.mxu0
    %v230 = vadd.f32 %v163, %v229
    %231 = vmatmul.bf16.gmra.mxu0 %v115
    %v232 = vpop.f32.mrf.mxu0
    %v233 = vadd.f32 %v163, %v232
    %v234 = vpop.f32.mrf.mxu0
    %v235 = vadd.f32 %v163, %v234
    %236 = vmatmul.bf16.gmra.mxu0 %v116
    %v237 = vpop.f32.mrf.mxu0
    %v238 = vadd.f32 %v163, %v237
    %v239 = vpop.f32.mrf.mxu0
    %v240 = vadd.f32 %v163, %v239
    %241 = vmatmul.bf16.gmra.mxu0 %v117
    %v242 = vpop.f32.mrf.mxu0
    %v243 = vadd.f32 %v163, %v242
    %v244 = vpop.f32.mrf.mxu0
    %v245 = vadd.f32 %v163, %v244
    %246 = vmatmul.bf16.gmra.mxu0 %v118
    %v247 = vpop.f32.mrf.mxu0
    %v248 = vadd.f32 %v163, %v247
    %v249 = vpop.f32.mrf.mxu0
    %v250 = vadd.f32 %v163, %v249
    %251 = vmatmul.bf16.gmra.mxu0 %v119
    %v252 = vpop.f32.mrf.mxu0
    %v253 = vadd.f32 %v163, %v252
    %v254 = vpop.f32.mrf.mxu0
    %v255 = vadd.f32 %v163, %v254
    %256 = vmatmul.bf16.gmra.mxu0 %v120
    %v257 = vpop.f32.mrf.mxu0
    %v258 = vadd.f32 %v163, %v257
    %v259 = vpop.f32.mrf.mxu0
    %v260 = vadd.f32 %v163, %v259
    %261 = vmatmul.bf16.gmra.mxu0 %v121
    %v262 = vpop.f32.mrf.mxu0
    %v263 = vadd.f32 %v163, %v262
    %v264 = vpop.f32.mrf.mxu0
    %v265 = vadd.f32 %v163, %v264
    %266 = vmatmul.bf16.gmra.mxu0 %v122
    %v267 = vpop.f32.mrf.mxu0
    %v268 = vadd.f32 %v163, %v267
    %v269 = vpop.f32.mrf.mxu0
    %v270 = vadd.f32 %v163, %v269
    %271 = vmatmul.bf16.gmra.mxu0 %v123
    %v272 = vpop.f32.mrf.mxu0
    %v273 = vadd.f32 %v163, %v272
    %v274 = vpop.f32.mrf.mxu0
    %v275 = vadd.f32 %v163, %v274
    %276 = vmatmul.bf16.gmra.mxu0 %v124
    %v277 = vpop.f32.mrf.mxu0
    %v278 = vadd.f32 %v163, %v277
    %v279 = vpop.f32.mrf.mxu0
    %v280 = vadd.f32 %v163, %v279
    %281 = vmatmul.bf16.gmra.mxu0 %v125
    %v282 = vpop.f32.mrf.mxu0
    %v283 = vadd.f32 %v163, %v282
    %v284 = vpop.f32.mrf.mxu0
    %v285 = vadd.f32 %v163, %v284
    %286 = vmatmul.bf16.gmra.mxu0 %v126
    %v287 = vpop.f32.mrf.mxu0
    %v288 = vadd.f32 %v163, %v287
    %v289 = vpop.f32.mrf.mxu0
    %v290 = vadd.f32 %v163, %v289
    %291 = vmatmul.bf16.gmra.mxu0 %v127
    %v292 = vpop.f32.mrf.mxu0
    %v293 = vadd.f32 %v163, %v292
    %v294 = vpop.f32.mrf.mxu0
    %v295 = vadd.f32 %v163, %v294
    %296 = vmatmul.bf16.gmra.mxu0 %v128
    %v297 = vpop.f32.mrf.mxu0
    %v298 = vadd.f32 %v163, %v297
    %v299 = vpop.f32.mrf.mxu0
    %v300 = vadd.f32 %v163, %v299
    %301 = vmatmul.bf16.gmra.mxu0 %v129
    %v302 = vpop.f32.mrf.mxu0
    %v303 = vadd.f32 %v163, %v302
    %v304 = vpop.f32.mrf.mxu0
    %v305 = vadd.f32 %v163, %v304
    %306 = vmatmul.bf16.gmra.mxu0 %v130
    %v307 = vpop.f32.mrf.mxu0
    %v308 = vadd.f32 %v163, %v307
    %v309 = vpop.f32.mrf.mxu0
    %v310 = vadd.f32 %v163, %v309
    %311 = vmatmul.bf16.gmra.mxu0 %v131
    %v312 = vpop.f32.mrf.mxu0
    %v313 = vadd.f32 %v163, %v312
    %v314 = vpop.f32.mrf.mxu0
    %v315 = vadd.f32 %v163, %v314
    %316 = vmatmul.bf16.gmra.mxu0 %v132
    %v317 = vpop.f32.mrf.mxu0
    %v318 = vadd.f32 %v163, %v317
    %v319 = vpop.f32.mrf.mxu0
    %v320 = vadd.f32 %v163, %v319
    %321 = vmatmul.bf16.gmra.mxu0 %v133
    %v322 = vpop.f32.mrf.mxu0
    %v323 = vadd.f32 %v163, %v322
    %v324 = vpop.f32.mrf.mxu0
    %v325 = vadd.f32 %v163, %v324
    %326 = vmatmul.bf16.gmra.mxu0 %v134
    %v327 = vpop.f32.mrf.mxu0
    %v328 = vadd.f32 %v163, %v327
    %v329 = vpop.f32.mrf.mxu0
    %v330 = vadd.f32 %v163, %v329
    %331 = vmatmul.bf16.gmra.mxu0 %v135
    %v332 = vpop.f32.mrf.mxu0
    %v333 = vadd.f32 %v163, %v332
    %v334 = vpop.f32.mrf.mxu0
    %v335 = vadd.f32 %v163, %v334
    %336 = vmatmul.bf16.gmra.mxu0 %v136
    %v337 = vpop.f32.mrf.mxu0
    %v338 = vadd.f32 %v163, %v337
    %v339 = vpop.f32.mrf.mxu0
    %v340 = vadd.f32 %v163, %v339
    %341 = vmatmul.bf16.gmra.mxu0 %v137
    %v342 = vpop.f32.mrf.mxu0
    %v343 = vadd.f32 %v163, %v342
    %v344 = vpop.f32.mrf.mxu0
    %v345 = vadd.f32 %v163, %v344
    %346 = vmatmul.bf16.gmra.mxu0 %v138
    %v347 = vpop.f32.mrf.mxu0
    %v348 = vadd.f32 %v163, %v347
    %v349 = vpop.f32.mrf.mxu0
    %v350 = vadd.f32 %v163, %v349
    %351 = vmatmul.bf16.gmra.mxu0 %v139
    %v352 = vpop.f32.mrf.mxu0
    %v353 = vadd.f32 %v163, %v352
    %v354 = vpop.f32.mrf.mxu0
    %v355 = vadd.f32 %v163, %v354
    %356 = vmatmul.bf16.gmra.mxu0 %v140
    %v357 = vpop.f32.mrf.mxu0
    %v358 = vadd.f32 %v163, %v357
    %v359 = vpop.f32.mrf.mxu0
    %v360 = vadd.f32 %v163, %v359
    %361 = vmatmul.bf16.gmra.mxu0 %v141
    %v362 = vpop.f32.mrf.mxu0
    %v363 = vadd.f32 %v163, %v362
    %v364 = vpop.f32.mrf.mxu0
    %v365 = vadd.f32 %v163, %v364
    %366 = vmatmul.bf16.gmra.mxu0 %v142
    %v367 = vpop.f32.mrf.mxu0
    %v368 = vadd.f32 %v163, %v367
    %v369 = vpop.f32.mrf.mxu0
    %v370 = vadd.f32 %v163, %v369
    %371 = vmatmul.bf16.gmra.mxu0 %v143
    %v372 = vpop.f32.mrf.mxu0
    %v373 = vadd.f32 %v163, %v372
    %v374 = vpop.f32.mrf.mxu0
    %v375 = vadd.f32 %v163, %v374
    %376 = vmatmul.bf16.gmra.mxu0 %v144
    %v377 = vpop.f32.mrf.mxu0
    %v378 = vadd.f32 %v163, %v377
    %v379 = vpop.f32.mrf.mxu0
    %v380 = vadd.f32 %v163, %v379
    %381 = vdwg.mxu0
    %v382 = vmax.f32 %v223, 0.0
    %v383 = vmax.f32 %v225, 0.0
    %v384 = vmax.f32 %v228, 0.0
    %v385 = vmax.f32 %v230, 0.0
    %v386 = vmax.f32 %v233, 0.0
    %v387 = vmax.f32 %v235, 0.0
    %v388 = vmax.f32 %v238, 0.0
    %v389 = vmax.f32 %v240, 0.0
    %v390 = vmax.f32 %v243, 0.0
    %v391 = vmax.f32 %v245, 0.0
    %v392 = vmax.f32 %v248, 0.0
    %v393 = vmax.f32 %v250, 0.0
    %v394 = vmax.f32 %v253, 0.0
    %v395 = vmax.f32 %v255, 0.0
    %v396 = vmax.f32 %v258, 0.0
    %v397 = vmax.f32 %v260, 0.0
    %v398 = vmax.f32 %v263, 0.0
    %v399 = vmax.f32 %v265, 0.0
    %v400 = vmax.f32 %v268, 0.0
    %v401 = vmax.f32 %v270, 0.0
    %v402 = vmax.f32 %v273, 0.0
    %v403 = vmax.f32 %v275, 0.0
    %v404 = vmax.f32 %v278, 0.0
    %v405 = vmax.f32 %v280, 0.0
    %v406 = vmax.f32 %v283, 0.0
    %v407 = vmax.f32 %v285, 0.0
    %v408 = vmax.f32 %v288, 0.0
    %v409 = vmax.f32 %v290, 0.0
    %v410 = vmax.f32 %v293, 0.0
    %v411 = vmax.f32 %v295, 0.0
    %v412 = vmax.f32 %v298, 0.0
    %v413 = vmax.f32 %v300, 0.0
    %v414 = vmax.f32 %v303, 0.0
    %v415 = vmax.f32 %v305, 0.0
    %v416 = vmax.f32 %v308, 0.0
    %v417 = vmax.f32 %v310, 0.0
    %v418 = vmax.f32 %v313, 0.0
    %v419 = vmax.f32 %v315, 0.0
    %v420 = vmax.f32 %v318, 0.0
    %v421 = vmax.f32 %v320, 0.0
    %v422 = vmax.f32 %v323, 0.0
    %v423 = vmax.f32 %v325, 0.0
    %v424 = vmax.f32 %v328, 0.0
    %v425 = vmax.f32 %v330, 0.0
    %v426 = vmax.f32 %v333, 0.0
    %v427 = vmax.f32 %v335, 0.0
    %v428 = vmax.f32 %v338, 0.0
    %v429 = vmax.f32 %v340, 0.0
    %v430 = vmax.f32 %v343, 0.0
    %v431 = vmax.f32 %v345, 0.0
    %v432 = vmax.f32 %v348, 0.0
    %v433 = vmax.f32 %v350, 0.0
    %v434 = vmax.f32 %v353, 0.0
    %v435 = vmax.f32 %v355, 0.0
    %v436 = vmax.f32 %v358, 0.0
    %v437 = vmax.f32 %v360, 0.0
    %v438 = vmax.f32 %v363, 0.0
    %v439 = vmax.f32 %v365, 0.0
    %v440 = vmax.f32 %v368, 0.0
    %v441 = vmax.f32 %v370, 0.0
    %v442 = vmax.f32 %v373, 0.0
    %v443 = vmax.f32 %v375, 0.0
    %v444 = vmax.f32 %v378, 0.0
    %v445 = vmax.f32 %v380, 0.0
    %v446 = vld [vmem:[%s1] sm:$0xff]
    %v447 = vld [vmem:[%s1 + $0x8] sm:$0xff]
    %v448 = vld [vmem:[%s1 + $0x10] sm:$0xff]
    %v449 = vld [vmem:[%s1 + $0x18] sm:$0xff]
    %v450 = vld [vmem:[%s1 + $0x20] sm:$0xff]
    %v451 = vld [vmem:[%s1 + $0x28] sm:$0xff]
    %v452 = vld [vmem:[%s1 + $0x30] sm:$0xff]
    %v453 = vld [vmem:[%s1 + $0x38] sm:$0xff]
    %v454 = vld [vmem:[%s1 + $0x40] sm:$0xff]
    %v455 = vld [vmem:[%s1 + $0x48] sm:$0xff]
    %v456 = vld [vmem:[%s1 + $0x50] sm:$0xff]
    %v457 = vld [vmem:[%s1 + $0x58] sm:$0xff]
    %v458 = vld [vmem:[%s1 + $0x60] sm:$0xff]
    %v459 = vld [vmem:[%s1 + $0x68] sm:$0xff]
    %v460 = vld [vmem:[%s1 + $0x70] sm:$0xff]
    %v461 = vld [vmem:[%s1 + $0x78] sm:$0xff]
    %v462 = vld [vmem:[%s1 + $0x80] sm:$0xff]
    %v463 = vld [vmem:[%s1 + $0x88] sm:$0xff]
    %v464 = vld [vmem:[%s1 + $0x90] sm:$0xff]
    %v465 = vld [vmem:[%s1 + $0x98] sm:$0xff]
    %v466 = vld [vmem:[%s1 + $0xa0] sm:$0xff]
    %v467 = vld [vmem:[%s1 + $0xa8] sm:$0xff]
    %v468 = vld [vmem:[%s1 + $0xb0] sm:$0xff]
    %v469 = vld [vmem:[%s1 + $0xb8] sm:$0xff]
    %v470 = vld [vmem:[%s1 + $0xc0] sm:$0xff]
    %v471 = vld [vmem:[%s1 + $0xc8] sm:$0xff]
    %v472 = vld [vmem:[%s1 + $0xd0] sm:$0xff]
    %v473 = vld [vmem:[%s1 + $0xd8] sm:$0xff]
    %v474 = vld [vmem:[%s1 + $0xe0] sm:$0xff]
    %v475 = vld [vmem:[%s1 + $0xe8] sm:$0xff]
    %v476 = vld [vmem:[%s1 + $0xf0] sm:$0xff]
    %v477 = vld [vmem:[%s1 + $0xf8] sm:$0xff]
    %v478 = vld [vmem:[%s1 + $0x100] sm:$0xff]
    %v479 = vld [vmem:[%s1 + $0x108] sm:$0xff]
    %v480 = vld [vmem:[%s1 + $0x110] sm:$0xff]
    %v481 = vld [vmem:[%s1 + $0x118] sm:$0xff]
    %v482 = vld [vmem:[%s1 + $0x120] sm:$0xff]
    %v483 = vld [vmem:[%s1 + $0x128] sm:$0xff]
    %v484 = vld [vmem:[%s1 + $0x130] sm:$0xff]
    %v485 = vld [vmem:[%s1 + $0x138] sm:$0xff]
    %v486 = vld [vmem:[%s1 + $0x140] sm:$0xff]
    %v487 = vld [vmem:[%s1 + $0x148] sm:$0xff]
    %v488 = vld [vmem:[%s1 + $0x150] sm:$0xff]
    %v489 = vld [vmem:[%s1 + $0x158] sm:$0xff]
    %v490 = vld [vmem:[%s1 + $0x160] sm:$0xff]
    %v491 = vld [vmem:[%s1 + $0x168] sm:$0xff]
    %v492 = vld [vmem:[%s1 + $0x170] sm:$0xff]
    %v493 = vld [vmem:[%s1 + $0x178] sm:$0xff]
    %v494 = vld [vmem:[%s1 + $0x180] sm:$0xff]
    %v495 = vld [vmem:[%s1 + $0x188] sm:$0xff]
    %v496 = vld [vmem:[%s1 + $0x190] sm:$0xff]
    %v497 = vld [vmem:[%s1 + $0x198] sm:$0xff]
    %v498 = vld [vmem:[%s1 + $0x1a0] sm:$0xff]
    %v499 = vld [vmem:[%s1 + $0x1a8] sm:$0xff]
    %v500 = vld [vmem:[%s1 + $0x1b0] sm:$0xff]
    %v501 = vld [vmem:[%s1 + $0x1b8] sm:$0xff]
    %v502 = vld [vmem:[%s1 + $0x1c0] sm:$0xff]
    %v503 = vld [vmem:[%s1 + $0x1c8] sm:$0xff]
    %v504 = vld [vmem:[%s1 + $0x1d0] sm:$0xff]
    %v505 = vld [vmem:[%s1 + $0x1d8] sm:$0xff]
    %v506 = vld [vmem:[%s1 + $0x1e0] sm:$0xff]
    %v507 = vld [vmem:[%s1 + $0x1e8] sm:$0xff]
    %v508 = vld [vmem:[%s1 + $0x1f0] sm:$0xff]
    %v509 = vld [vmem:[%s1 + $0x1f8] sm:$0xff]
    %v510 = vld [vmem:[%s2] sm:$0xff]
    %v511 = vld [vmem:[%s2 + $0x8] sm:$0xff]
    %v512 = vld [vmem:[%s2 + $0x10] sm:$0xff]
    %v513 = vld [vmem:[%s2 + $0x18] sm:$0xff]
    %v514 = vld [vmem:[%s2 + $0x20] sm:$0xff]
    %v515 = vld [vmem:[%s2 + $0x28] sm:$0xff]
    %v516 = vld [vmem:[%s2 + $0x30] sm:$0xff]
    %v517 = vld [vmem:[%s2 + $0x38] sm:$0xff]
    %v518 = vld [vmem:[%s2 + $0x40] sm:$0xff]
    %v519 = vld [vmem:[%s2 + $0x48] sm:$0xff]
    %v520 = vld [vmem:[%s2 + $0x50] sm:$0xff]
    %v521 = vld [vmem:[%s2 + $0x58] sm:$0xff]
    %v522 = vld [vmem:[%s2 + $0x60] sm:$0xff]
    %v523 = vld [vmem:[%s2 + $0x68] sm:$0xff]
    %v524 = vld [vmem:[%s2 + $0x70] sm:$0xff]
    %v525 = vld [vmem:[%s2 + $0x78] sm:$0xff]
    %v526 = vld [vmem:[%s2 + $0x80] sm:$0xff]
    %v527 = vld [vmem:[%s2 + $0x88] sm:$0xff]
    %v528 = vld [vmem:[%s2 + $0x90] sm:$0xff]
    %v529 = vld [vmem:[%s2 + $0x98] sm:$0xff]
    %v530 = vld [vmem:[%s2 + $0xa0] sm:$0xff]
    %v531 = vld [vmem:[%s2 + $0xa8] sm:$0xff]
    %v532 = vld [vmem:[%s2 + $0xb0] sm:$0xff]
    %v533 = vld [vmem:[%s2 + $0xb8] sm:$0xff]
    %v534 = vld [vmem:[%s2 + $0xc0] sm:$0xff]
    %v535 = vld [vmem:[%s2 + $0xc8] sm:$0xff]
    %v536 = vld [vmem:[%s2 + $0xd0] sm:$0xff]
    %v537 = vld [vmem:[%s2 + $0xd8] sm:$0xff]
    %v538 = vld [vmem:[%s2 + $0xe0] sm:$0xff]
    %v539 = vld [vmem:[%s2 + $0xe8] sm:$0xff]
    %v540 = vld [vmem:[%s2 + $0xf0] sm:$0xff]
    %v541 = vld [vmem:[%s2 + $0xf8] sm:$0xff]
    %v542 = vld [vmem:[%s2 + $0x100] sm:$0xff]
    %v543 = vld [vmem:[%s2 + $0x108] sm:$0xff]
    %v544 = vld [vmem:[%s2 + $0x110] sm:$0xff]
    %v545 = vld [vmem:[%s2 + $0x118] sm:$0xff]
    %v546 = vld [vmem:[%s2 + $0x120] sm:$0xff]
    %v547 = vld [vmem:[%s2 + $0x128] sm:$0xff]
    %v548 = vld [vmem:[%s2 + $0x130] sm:$0xff]
    %v549 = vld [vmem:[%s2 + $0x138] sm:$0xff]
    %v550 = vld [vmem:[%s2 + $0x140] sm:$0xff]
    %v551 = vld [vmem:[%s2 + $0x148] sm:$0xff]
    %v552 = vld [vmem:[%s2 + $0x150] sm:$0xff]
    %v553 = vld [vmem:[%s2 + $0x158] sm:$0xff]
    %v554 = vld [vmem:[%s2 + $0x160] sm:$0xff]
    %v555 = vld [vmem:[%s2 + $0x168] sm:$0xff]
    %v556 = vld [vmem:[%s2 + $0x170] sm:$0xff]
    %v557 = vld [vmem:[%s2 + $0x178] sm:$0xff]
    %v558 = vld [vmem:[%s2 + $0x180] sm:$0xff]
    %v559 = vld [vmem:[%s2 + $0x188] sm:$0xff]
    %v560 = vld [vmem:[%s2 + $0x190] sm:$0xff]
    %v561 = vld [vmem:[%s2 + $0x198] sm:$0xff]
    %v562 = vld [vmem:[%s2 + $0x1a0] sm:$0xff]
    %v563 = vld [vmem:[%s2 + $0x1a8] sm:$0xff]
    %v564 = vld [vmem:[%s2 + $0x1b0] sm:$0xff]
    %v565 = vld [vmem:[%s2 + $0x1b8] sm:$0xff]
    %v566 = vld [vmem:[%s2 + $0x1c0] sm:$0xff]
    %v567 = vld [vmem:[%s2 + $0x1c8] sm:$0xff]
    %v568 = vld [vmem:[%s2 + $0x1d0] sm:$0xff]
    %v569 = vld [vmem:[%s2 + $0x1d8] sm:$0xff]
    %v570 = vld [vmem:[%s2 + $0x1e0] sm:$0xff]
    %v571 = vld [vmem:[%s2 + $0x1e8] sm:$0xff]
    %v572 = vld [vmem:[%s2 + $0x1f0] sm:$0xff]
    %v573 = vld [vmem:[%s2 + $0x1f8] sm:$0xff]
    %vm574 = vcmp.ge.s32.totalorder %v446, 1
    %vm575 = vcmp.ge.s32.totalorder %v447, 1
    %vm576 = vcmp.ge.s32.totalorder %v448, 1
    %vm577 = vcmp.ge.s32.totalorder %v449, 1
    %vm578 = vcmp.ge.s32.totalorder %v450, 1
    %vm579 = vcmp.ge.s32.totalorder %v451, 1
    %vm580 = vcmp.ge.s32.totalorder %v452, 1
    %vm581 = vcmp.ge.s32.totalorder %v453, 1
    %vm582 = vcmp.ge.s32.totalorder %v454, 1
    %vm583 = vcmp.ge.s32.totalorder %v455, 1
    %vm584 = vcmp.ge.s32.totalorder %v456, 1
    %vm585 = vcmp.ge.s32.totalorder %v457, 1
    %vm586 = vcmp.ge.s32.totalorder %v458, 1
    %vm587 = vcmp.ge.s32.totalorder %v459, 1
    %vm588 = vcmp.ge.s32.totalorder %v460, 1
    %vm589 = vcmp.ge.s32.totalorder %v461, 1
    %vm590 = vcmp.ge.s32.totalorder %v462, 1
    %vm591 = vcmp.ge.s32.totalorder %v463, 1
    %vm592 = vcmp.ge.s32.totalorder %v464, 1
    %vm593 = vcmp.ge.s32.totalorder %v465, 1
    %vm594 = vcmp.ge.s32.totalorder %v466, 1
    %vm595 = vcmp.ge.s32.totalorder %v467, 1
    %vm596 = vcmp.ge.s32.totalorder %v468, 1
    %vm597 = vcmp.ge.s32.totalorder %v469, 1
    %vm598 = vcmp.ge.s32.totalorder %v470, 1
    %vm599 = vcmp.ge.s32.totalorder %v471, 1
    %vm600 = vcmp.ge.s32.totalorder %v472, 1
    %vm601 = vcmp.ge.s32.totalorder %v473, 1
    %vm602 = vcmp.ge.s32.totalorder %v474, 1
    %vm603 = vcmp.ge.s32.totalorder %v475, 1
    %vm604 = vcmp.ge.s32.totalorder %v476, 1
    %vm605 = vcmp.ge.s32.totalorder %v477, 1
    %vm606 = vcmp.ge.s32.totalorder %v478, 1
    %vm607 = vcmp.ge.s32.totalorder %v479, 1
    %vm608 = vcmp.ge.s32.totalorder %v480, 1
    %vm609 = vcmp.ge.s32.totalorder %v481, 1
    %vm610 = vcmp.ge.s32.totalorder %v482, 1
    %vm611 = vcmp.ge.s32.totalorder %v483, 1
    %vm612 = vcmp.ge.s32.totalorder %v484, 1
    %vm613 = vcmp.ge.s32.totalorder %v485, 1
    %vm614 = vcmp.ge.s32.totalorder %v486, 1
    %vm615 = vcmp.ge.s32.totalorder %v487, 1
    %vm616 = vcmp.ge.s32.totalorder %v488, 1
    %vm617 = vcmp.ge.s32.totalorder %v489, 1
    %vm618 = vcmp.ge.s32.totalorder %v490, 1
    %vm619 = vcmp.ge.s32.totalorder %v491, 1
    %vm620 = vcmp.ge.s32.totalorder %v492, 1
    %vm621 = vcmp.ge.s32.totalorder %v493, 1
    %vm622 = vcmp.ge.s32.totalorder %v494, 1
    %vm623 = vcmp.ge.s32.totalorder %v495, 1
    %vm624 = vcmp.ge.s32.totalorder %v496, 1
    %vm625 = vcmp.ge.s32.totalorder %v497, 1
    %vm626 = vcmp.ge.s32.totalorder %v498, 1
    %vm627 = vcmp.ge.s32.totalorder %v499, 1
    %vm628 = vcmp.ge.s32.totalorder %v500, 1
    %vm629 = vcmp.ge.s32.totalorder %v501, 1
    %vm630 = vcmp.ge.s32.totalorder %v502, 1
    %vm631 = vcmp.ge.s32.totalorder %v503, 1
    %vm632 = vcmp.ge.s32.totalorder %v504, 1
    %vm633 = vcmp.ge.s32.totalorder %v505, 1
    %vm634 = vcmp.ge.s32.totalorder %v506, 1
    %vm635 = vcmp.ge.s32.totalorder %v507, 1
    %vm636 = vcmp.ge.s32.totalorder %v508, 1
    %vm637 = vcmp.ge.s32.totalorder %v509, 1
    %vm638 = vcmp.le.s32.totalorder %v446, 14
    %vm639 = vcmp.le.s32.totalorder %v447, 14
    %vm640 = vcmp.le.s32.totalorder %v448, 14
    %vm641 = vcmp.le.s32.totalorder %v449, 14
    %vm642 = vcmp.le.s32.totalorder %v450, 14
    %vm643 = vcmp.le.s32.totalorder %v451, 14
    %vm644 = vcmp.le.s32.totalorder %v452, 14
    %vm645 = vcmp.le.s32.totalorder %v453, 14
    %vm646 = vcmp.le.s32.totalorder %v454, 14
    %vm647 = vcmp.le.s32.totalorder %v455, 14
    %vm648 = vcmp.le.s32.totalorder %v456, 14
    %vm649 = vcmp.le.s32.totalorder %v457, 14
    %vm650 = vcmp.le.s32.totalorder %v458, 14
    %vm651 = vcmp.le.s32.totalorder %v459, 14
    %vm652 = vcmp.le.s32.totalorder %v460, 14
    %vm653 = vcmp.le.s32.totalorder %v461, 14
    %vm654 = vcmp.le.s32.totalorder %v462, 14
    %vm655 = vcmp.le.s32.totalorder %v463, 14
    %vm656 = vcmp.le.s32.totalorder %v464, 14
    %vm657 = vcmp.le.s32.totalorder %v465, 14
    %vm658 = vcmp.le.s32.totalorder %v466, 14
    %vm659 = vcmp.le.s32.totalorder %v467, 14
    %vm660 = vcmp.le.s32.totalorder %v468, 14
    %vm661 = vcmp.le.s32.totalorder %v469, 14
    %vm662 = vcmp.le.s32.totalorder %v470, 14
    %vm663 = vcmp.le.s32.totalorder %v471, 14
    %vm664 = vcmp.le.s32.totalorder %v472, 14
    %vm665 = vcmp.le.s32.totalorder %v473, 14
    %vm666 = vcmp.le.s32.totalorder %v474, 14
    %vm667 = vcmp.le.s32.totalorder %v475, 14
    %vm668 = vcmp.le.s32.totalorder %v476, 14
    %vm669 = vcmp.le.s32.totalorder %v477, 14
    %vm670 = vcmp.le.s32.totalorder %v478, 14
    %vm671 = vcmp.le.s32.totalorder %v479, 14
    %vm672 = vcmp.le.s32.totalorder %v480, 14
    %vm673 = vcmp.le.s32.totalorder %v481, 14
    %vm674 = vcmp.le.s32.totalorder %v482, 14
    %vm675 = vcmp.le.s32.totalorder %v483, 14
    %vm676 = vcmp.le.s32.totalorder %v484, 14
    %vm677 = vcmp.le.s32.totalorder %v485, 14
    %vm678 = vcmp.le.s32.totalorder %v486, 14
    %vm679 = vcmp.le.s32.totalorder %v487, 14
    %vm680 = vcmp.le.s32.totalorder %v488, 14
    %vm681 = vcmp.le.s32.totalorder %v489, 14
    %vm682 = vcmp.le.s32.totalorder %v490, 14
    %vm683 = vcmp.le.s32.totalorder %v491, 14
    %vm684 = vcmp.le.s32.totalorder %v492, 14
    %vm685 = vcmp.le.s32.totalorder %v493, 14
    %vm686 = vcmp.le.s32.totalorder %v494, 14
    %vm687 = vcmp.le.s32.totalorder %v495, 14
    %vm688 = vcmp.le.s32.totalorder %v496, 14
    %vm689 = vcmp.le.s32.totalorder %v497, 14
    %vm690 = vcmp.le.s32.totalorder %v498, 14
    %vm691 = vcmp.le.s32.totalorder %v499, 14
    %vm692 = vcmp.le.s32.totalorder %v500, 14
    %vm693 = vcmp.le.s32.totalorder %v501, 14
    %vm694 = vcmp.le.s32.totalorder %v502, 14
    %vm695 = vcmp.le.s32.totalorder %v503, 14
    %vm696 = vcmp.le.s32.totalorder %v504, 14
    %vm697 = vcmp.le.s32.totalorder %v505, 14
    %vm698 = vcmp.le.s32.totalorder %v506, 14
    %vm699 = vcmp.le.s32.totalorder %v507, 14
    %vm700 = vcmp.le.s32.totalorder %v508, 14
    %vm701 = vcmp.le.s32.totalorder %v509, 14
    %vm702 = vcmp.ge.s32.totalorder %v510, 1
    %vm703 = vcmp.ge.s32.totalorder %v511, 1
    %vm704 = vcmp.ge.s32.totalorder %v512, 1
    %vm705 = vcmp.ge.s32.totalorder %v513, 1
    %vm706 = vcmp.ge.s32.totalorder %v514, 1
    %vm707 = vcmp.ge.s32.totalorder %v515, 1
    %vm708 = vcmp.ge.s32.totalorder %v516, 1
    %vm709 = vcmp.ge.s32.totalorder %v517, 1
    %vm710 = vcmp.ge.s32.totalorder %v518, 1
    %vm711 = vcmp.ge.s32.totalorder %v519, 1
    %vm712 = vcmp.ge.s32.totalorder %v520, 1
    %vm713 = vcmp.ge.s32.totalorder %v521, 1
    %vm714 = vcmp.ge.s32.totalorder %v522, 1
    %vm715 = vcmp.ge.s32.totalorder %v523, 1
    %vm716 = vcmp.ge.s32.totalorder %v524, 1
    %vm717 = vcmp.ge.s32.totalorder %v525, 1
    %vm718 = vcmp.ge.s32.totalorder %v526, 1
    %vm719 = vcmp.ge.s32.totalorder %v527, 1
    %vm720 = vcmp.ge.s32.totalorder %v528, 1
    %vm721 = vcmp.ge.s32.totalorder %v529, 1
    %vm722 = vcmp.ge.s32.totalorder %v530, 1
    %vm723 = vcmp.ge.s32.totalorder %v531, 1
    %vm724 = vcmp.ge.s32.totalorder %v532, 1
    %vm725 = vcmp.ge.s32.totalorder %v533, 1
    %vm726 = vcmp.ge.s32.totalorder %v534, 1
    %vm727 = vcmp.ge.s32.totalorder %v535, 1
    %vm728 = vcmp.ge.s32.totalorder %v536, 1
    %vm729 = vcmp.ge.s32.totalorder %v537, 1
    %vm730 = vcmp.ge.s32.totalorder %v538, 1
    %vm731 = vcmp.ge.s32.totalorder %v539, 1
    %vm732 = vcmp.ge.s32.totalorder %v540, 1
    %vm733 = vcmp.ge.s32.totalorder %v541, 1
    %vm734 = vcmp.ge.s32.totalorder %v542, 1
    %vm735 = vcmp.ge.s32.totalorder %v543, 1
    %vm736 = vcmp.ge.s32.totalorder %v544, 1
    %vm737 = vcmp.ge.s32.totalorder %v545, 1
    %vm738 = vcmp.ge.s32.totalorder %v546, 1
    %vm739 = vcmp.ge.s32.totalorder %v547, 1
    %vm740 = vcmp.ge.s32.totalorder %v548, 1
    %vm741 = vcmp.ge.s32.totalorder %v549, 1
    %vm742 = vcmp.ge.s32.totalorder %v550, 1
    %vm743 = vcmp.ge.s32.totalorder %v551, 1
    %vm744 = vcmp.ge.s32.totalorder %v552, 1
    %vm745 = vcmp.ge.s32.totalorder %v553, 1
    %vm746 = vcmp.ge.s32.totalorder %v554, 1
    %vm747 = vcmp.ge.s32.totalorder %v555, 1
    %vm748 = vcmp.ge.s32.totalorder %v556, 1
    %vm749 = vcmp.ge.s32.totalorder %v557, 1
    %vm750 = vcmp.ge.s32.totalorder %v558, 1
    %vm751 = vcmp.ge.s32.totalorder %v559, 1
    %vm752 = vcmp.ge.s32.totalorder %v560, 1
    %vm753 = vcmp.ge.s32.totalorder %v561, 1
    %vm754 = vcmp.ge.s32.totalorder %v562, 1
    %vm755 = vcmp.ge.s32.totalorder %v563, 1
    %vm756 = vcmp.ge.s32.totalorder %v564, 1
    %vm757 = vcmp.ge.s32.totalorder %v565, 1
    %vm758 = vcmp.ge.s32.totalorder %v566, 1
    %vm759 = vcmp.ge.s32.totalorder %v567, 1
    %vm760 = vcmp.ge.s32.totalorder %v568, 1
    %vm761 = vcmp.ge.s32.totalorder %v569, 1
    %vm762 = vcmp.ge.s32.totalorder %v570, 1
    %vm763 = vcmp.ge.s32.totalorder %v571, 1
    %vm764 = vcmp.ge.s32.totalorder %v572, 1
    %vm765 = vcmp.ge.s32.totalorder %v573, 1
    %vm766 = vcmp.le.s32.totalorder %v510, 14
    %vm767 = vcmp.le.s32.totalorder %v511, 14
    %vm768 = vcmp.le.s32.totalorder %v512, 14
    %vm769 = vcmp.le.s32.totalorder %v513, 14
    %vm770 = vcmp.le.s32.totalorder %v514, 14
    %vm771 = vcmp.le.s32.totalorder %v515, 14
    %vm772 = vcmp.le.s32.totalorder %v516, 14
    %vm773 = vcmp.le.s32.totalorder %v517, 14
    %vm774 = vcmp.le.s32.totalorder %v518, 14
    %vm775 = vcmp.le.s32.totalorder %v519, 14
    %vm776 = vcmp.le.s32.totalorder %v520, 14
    %vm777 = vcmp.le.s32.totalorder %v521, 14
    %vm778 = vcmp.le.s32.totalorder %v522, 14
    %vm779 = vcmp.le.s32.totalorder %v523, 14
    %vm780 = vcmp.le.s32.totalorder %v524, 14
    %vm781 = vcmp.le.s32.totalorder %v525, 14
    %vm782 = vcmp.le.s32.totalorder %v526, 14
    %vm783 = vcmp.le.s32.totalorder %v527, 14
    %vm784 = vcmp.le.s32.totalorder %v528, 14
    %vm785 = vcmp.le.s32.totalorder %v529, 14
    %vm786 = vcmp.le.s32.totalorder %v530, 14
    %vm787 = vcmp.le.s32.totalorder %v531, 14
    %vm788 = vcmp.le.s32.totalorder %v532, 14
    %vm789 = vcmp.le.s32.totalorder %v533, 14
    %vm790 = vcmp.le.s32.totalorder %v534, 14
    %vm791 = vcmp.le.s32.totalorder %v535, 14
    %vm792 = vcmp.le.s32.totalorder %v536, 14
    %vm793 = vcmp.le.s32.totalorder %v537, 14
    %vm794 = vcmp.le.s32.totalorder %v538, 14
    %vm795 = vcmp.le.s32.totalorder %v539, 14
    %vm796 = vcmp.le.s32.totalorder %v540, 14
    %vm797 = vcmp.le.s32.totalorder %v541, 14
    %vm798 = vcmp.le.s32.totalorder %v542, 14
    %vm799 = vcmp.le.s32.totalorder %v543, 14
    %vm800 = vcmp.le.s32.totalorder %v544, 14
    %vm801 = vcmp.le.s32.totalorder %v545, 14
    %vm802 = vcmp.le.s32.totalorder %v546, 14
    %vm803 = vcmp.le.s32.totalorder %v547, 14
    %vm804 = vcmp.le.s32.totalorder %v548, 14
    %vm805 = vcmp.le.s32.totalorder %v549, 14
    %vm806 = vcmp.le.s32.totalorder %v550, 14
    %vm807 = vcmp.le.s32.totalorder %v551, 14
    %vm808 = vcmp.le.s32.totalorder %v552, 14
    %vm809 = vcmp.le.s32.totalorder %v553, 14
    %vm810 = vcmp.le.s32.totalorder %v554, 14
    %vm811 = vcmp.le.s32.totalorder %v555, 14
    %vm812 = vcmp.le.s32.totalorder %v556, 14
    %vm813 = vcmp.le.s32.totalorder %v557, 14
    %vm814 = vcmp.le.s32.totalorder %v558, 14
    %vm815 = vcmp.le.s32.totalorder %v559, 14
    %vm816 = vcmp.le.s32.totalorder %v560, 14
    %vm817 = vcmp.le.s32.totalorder %v561, 14
    %vm818 = vcmp.le.s32.totalorder %v562, 14
    %vm819 = vcmp.le.s32.totalorder %v563, 14
    %vm820 = vcmp.le.s32.totalorder %v564, 14
    %vm821 = vcmp.le.s32.totalorder %v565, 14
    %vm822 = vcmp.le.s32.totalorder %v566, 14
    %vm823 = vcmp.le.s32.totalorder %v567, 14
    %vm824 = vcmp.le.s32.totalorder %v568, 14
    %vm825 = vcmp.le.s32.totalorder %v569, 14
    %vm826 = vcmp.le.s32.totalorder %v570, 14
    %vm827 = vcmp.le.s32.totalorder %v571, 14
    %vm828 = vcmp.le.s32.totalorder %v572, 14
    %vm829 = vcmp.le.s32.totalorder %v573, 14
    %vm830 = vmand %vm574, %vm702
    %vm831 = vmand %vm575, %vm703
    %vm832 = vmand %vm576, %vm704
    %vm833 = vmand %vm577, %vm705
    %vm834 = vmand %vm578, %vm706
    %vm835 = vmand %vm579, %vm707
    %vm836 = vmand %vm580, %vm708
    %vm837 = vmand %vm581, %vm709
    %vm838 = vmand %vm582, %vm710
    %vm839 = vmand %vm583, %vm711
    %vm840 = vmand %vm584, %vm712
    %vm841 = vmand %vm585, %vm713
    %vm842 = vmand %vm586, %vm714
    %vm843 = vmand %vm587, %vm715
    %vm844 = vmand %vm588, %vm716
    %vm845 = vmand %vm589, %vm717
    %vm846 = vmand %vm590, %vm718
    %vm847 = vmand %vm591, %vm719
    %vm848 = vmand %vm592, %vm720
    %vm849 = vmand %vm593, %vm721
    %vm850 = vmand %vm594, %vm722
    %vm851 = vmand %vm595, %vm723
    %vm852 = vmand %vm596, %vm724
    %vm853 = vmand %vm597, %vm725
    %vm854 = vmand %vm598, %vm726
    %vm855 = vmand %vm599, %vm727
    %vm856 = vmand %vm600, %vm728
    %vm857 = vmand %vm601, %vm729
    %vm858 = vmand %vm602, %vm730
    %vm859 = vmand %vm603, %vm731
    %vm860 = vmand %vm604, %vm732
    %vm861 = vmand %vm605, %vm733
    %vm862 = vmand %vm606, %vm734
    %vm863 = vmand %vm607, %vm735
    %vm864 = vmand %vm608, %vm736
    %vm865 = vmand %vm609, %vm737
    %vm866 = vmand %vm610, %vm738
    %vm867 = vmand %vm611, %vm739
    %vm868 = vmand %vm612, %vm740
    %vm869 = vmand %vm613, %vm741
    %vm870 = vmand %vm614, %vm742
    %vm871 = vmand %vm615, %vm743
    %vm872 = vmand %vm616, %vm744
    %vm873 = vmand %vm617, %vm745
    %vm874 = vmand %vm618, %vm746
    %vm875 = vmand %vm619, %vm747
    %vm876 = vmand %vm620, %vm748
    %vm877 = vmand %vm621, %vm749
    %vm878 = vmand %vm622, %vm750
    %vm879 = vmand %vm623, %vm751
    %vm880 = vmand %vm624, %vm752
    %vm881 = vmand %vm625, %vm753
    %vm882 = vmand %vm626, %vm754
    %vm883 = vmand %vm627, %vm755
    %vm884 = vmand %vm628, %vm756
    %vm885 = vmand %vm629, %vm757
    %vm886 = vmand %vm630, %vm758
    %vm887 = vmand %vm631, %vm759
    %vm888 = vmand %vm632, %vm760
    %vm889 = vmand %vm633, %vm761
    %vm890 = vmand %vm634, %vm762
    %vm891 = vmand %vm635, %vm763
    %vm892 = vmand %vm636, %vm764
    %vm893 = vmand %vm637, %vm765
    %vm894 = vmand %vm574, %vm766
    %vm895 = vmand %vm575, %vm767
    %vm896 = vmand %vm576, %vm768
    %vm897 = vmand %vm577, %vm769
    %vm898 = vmand %vm578, %vm770
    %vm899 = vmand %vm579, %vm771
    %vm900 = vmand %vm580, %vm772
    %vm901 = vmand %vm581, %vm773
    %vm902 = vmand %vm582, %vm774
    %vm903 = vmand %vm583, %vm775
    %vm904 = vmand %vm584, %vm776
    %vm905 = vmand %vm585, %vm777
    %vm906 = vmand %vm586, %vm778
    %vm907 = vmand %vm587, %vm779
    %vm908 = vmand %vm588, %vm780
    %vm909 = vmand %vm589, %vm781
    %vm910 = vmand %vm590, %vm782
    %vm911 = vmand %vm591, %vm783
    %vm912 = vmand %vm592, %vm784
    %vm913 = vmand %vm593, %vm785
    %vm914 = vmand %vm594, %vm786
    %vm915 = vmand %vm595, %vm787
    %vm916 = vmand %vm596, %vm788
    %vm917 = vmand %vm597, %vm789
    %vm918 = vmand %vm598, %vm790
    %vm919 = vmand %vm599, %vm791
    %vm920 = vmand %vm600, %vm792
    %vm921 = vmand %vm601, %vm793
    %vm922 = vmand %vm602, %vm794
    %vm923 = vmand %vm603, %vm795
    %vm924 = vmand %vm604, %vm796
    %vm925 = vmand %vm605, %vm797
    %vm926 = vmand %vm606, %vm798
    %vm927 = vmand %vm607, %vm799
    %vm928 = vmand %vm608, %vm800
    %vm929 = vmand %vm609, %vm801
    %vm930 = vmand %vm610, %vm802
    %vm931 = vmand %vm611, %vm803
    %vm932 = vmand %vm612, %vm804
    %vm933 = vmand %vm613, %vm805
    %vm934 = vmand %vm614, %vm806
    %vm935 = vmand %vm615, %vm807
    %vm936 = vmand %vm616, %vm808
    %vm937 = vmand %vm617, %vm809
    %vm938 = vmand %vm618, %vm810
    %vm939 = vmand %vm619, %vm811
    %vm940 = vmand %vm620, %vm812
    %vm941 = vmand %vm621, %vm813
    %vm942 = vmand %vm622, %vm814
    %vm943 = vmand %vm623, %vm815
    %vm944 = vmand %vm624, %vm816
    %vm945 = vmand %vm625, %vm817
    %vm946 = vmand %vm626, %vm818
    %vm947 = vmand %vm627, %vm819
    %vm948 = vmand %vm628, %vm820
    %vm949 = vmand %vm629, %vm821
    %vm950 = vmand %vm630, %vm822
    %vm951 = vmand %vm631, %vm823
    %vm952 = vmand %vm632, %vm824
    %vm953 = vmand %vm633, %vm825
    %vm954 = vmand %vm634, %vm826
    %vm955 = vmand %vm635, %vm827
    %vm956 = vmand %vm636, %vm828
    %vm957 = vmand %vm637, %vm829
    %vm958 = vmand %vm638, %vm702
    %vm959 = vmand %vm639, %vm703
    %vm960 = vmand %vm640, %vm704
    %vm961 = vmand %vm641, %vm705
    %vm962 = vmand %vm642, %vm706
    %vm963 = vmand %vm643, %vm707
    %vm964 = vmand %vm644, %vm708
    %vm965 = vmand %vm645, %vm709
    %vm966 = vmand %vm646, %vm710
    %vm967 = vmand %vm647, %vm711
    %vm968 = vmand %vm648, %vm712
    %vm969 = vmand %vm649, %vm713
    %vm970 = vmand %vm650, %vm714
    %vm971 = vmand %vm651, %vm715
    %vm972 = vmand %vm652, %vm716
    %vm973 = vmand %vm653, %vm717
    %vm974 = vmand %vm654, %vm718
    %vm975 = vmand %vm655, %vm719
    %vm976 = vmand %vm656, %vm720
    %vm977 = vmand %vm657, %vm721
    %vm978 = vmand %vm658, %vm722
    %vm979 = vmand %vm659, %vm723
    %vm980 = vmand %vm660, %vm724
    %vm981 = vmand %vm661, %vm725
    %vm982 = vmand %vm662, %vm726
    %vm983 = vmand %vm663, %vm727
    %vm984 = vmand %vm664, %vm728
    %vm985 = vmand %vm665, %vm729
    %vm986 = vmand %vm666, %vm730
    %vm987 = vmand %vm667, %vm731
    %vm988 = vmand %vm668, %vm732
    %vm989 = vmand %vm669, %vm733
    %vm990 = vmand %vm670, %vm734
    %vm991 = vmand %vm671, %vm735
    %vm992 = vmand %vm672, %vm736
    %vm993 = vmand %vm673, %vm737
    %vm994 = vmand %vm674, %vm738
    %vm995 = vmand %vm675, %vm739
    %vm996 = vmand %vm676, %vm740
    %vm997 = vmand %vm677, %vm741
    %vm998 = vmand %vm678, %vm742
    %vm999 = vmand %vm679, %vm743
    %vm1000 = vmand %vm680, %vm744
    %vm1001 = vmand %vm681, %vm745
    %vm1002 = vmand %vm682, %vm746
    %vm1003 = vmand %vm683, %vm747
    %vm1004 = vmand %vm684, %vm748
    %vm1005 = vmand %vm685, %vm749
    %vm1006 = vmand %vm686, %vm750
    %vm1007 = vmand %vm687, %vm751
    %vm1008 = vmand %vm688, %vm752
    %vm1009 = vmand %vm689, %vm753
    %vm1010 = vmand %vm690, %vm754
    %vm1011 = vmand %vm691, %vm755
    %vm1012 = vmand %vm692, %vm756
    %vm1013 = vmand %vm693, %vm757
    %vm1014 = vmand %vm694, %vm758
    %vm1015 = vmand %vm695, %vm759
    %vm1016 = vmand %vm696, %vm760
    %vm1017 = vmand %vm697, %vm761
    %vm1018 = vmand %vm698, %vm762
    %vm1019 = vmand %vm699, %vm763
    %vm1020 = vmand %vm700, %vm764
    %vm1021 = vmand %vm701, %vm765
    %vm1022 = vmand %vm638, %vm766
    %vm1023 = vmand %vm639, %vm767
    %vm1024 = vmand %vm640, %vm768
    %vm1025 = vmand %vm641, %vm769
    %vm1026 = vmand %vm642, %vm770
    %vm1027 = vmand %vm643, %vm771
    %vm1028 = vmand %vm644, %vm772
    %vm1029 = vmand %vm645, %vm773
    %vm1030 = vmand %vm646, %vm774
    %vm1031 = vmand %vm647, %vm775
    %vm1032 = vmand %vm648, %vm776
    %vm1033 = vmand %vm649, %vm777
    %vm1034 = vmand %vm650, %vm778
    %vm1035 = vmand %vm651, %vm779
    %vm1036 = vmand %vm652, %vm780
    %vm1037 = vmand %vm653, %vm781
    %vm1038 = vmand %vm654, %vm782
    %vm1039 = vmand %vm655, %vm783
    %vm1040 = vmand %vm656, %vm784
    %vm1041 = vmand %vm657, %vm785
    %vm1042 = vmand %vm658, %vm786
    %vm1043 = vmand %vm659, %vm787
    %vm1044 = vmand %vm660, %vm788
    %vm1045 = vmand %vm661, %vm789
    %vm1046 = vmand %vm662, %vm790
    %vm1047 = vmand %vm663, %vm791
    %vm1048 = vmand %vm664, %vm792
    %vm1049 = vmand %vm665, %vm793
    %vm1050 = vmand %vm666, %vm794
    %vm1051 = vmand %vm667, %vm795
    %vm1052 = vmand %vm668, %vm796
    %vm1053 = vmand %vm669, %vm797
    %vm1054 = vmand %vm670, %vm798
    %vm1055 = vmand %vm671, %vm799
    %vm1056 = vmand %vm672, %vm800
    %vm1057 = vmand %vm673, %vm801
    %vm1058 = vmand %vm674, %vm802
    %vm1059 = vmand %vm675, %vm803
    %vm1060 = vmand %vm676, %vm804
    %vm1061 = vmand %vm677, %vm805
    %vm1062 = vmand %vm678, %vm806
    %vm1063 = vmand %vm679, %vm807
    %vm1064 = vmand %vm680, %vm808
    %vm1065 = vmand %vm681, %vm809
    %vm1066 = vmand %vm682, %vm810
    %vm1067 = vmand %vm683, %vm811
    %vm1068 = vmand %vm684, %vm812
    %vm1069 = vmand %vm685, %vm813
    %vm1070 = vmand %vm686, %vm814
    %vm1071 = vmand %vm687, %vm815
    %vm1072 = vmand %vm688, %vm816
    %vm1073 = vmand %vm689, %vm817
    %vm1074 = vmand %vm690, %vm818
    %vm1075 = vmand %vm691, %vm819
    %vm1076 = vmand %vm692, %vm820
    %vm1077 = vmand %vm693, %vm821
    %vm1078 = vmand %vm694, %vm822
    %vm1079 = vmand %vm695, %vm823
    %vm1080 = vmand %vm696, %vm824
    %vm1081 = vmand %vm697, %vm825
    %vm1082 = vmand %vm698, %vm826
    %vm1083 = vmand %vm699, %vm827
    %vm1084 = vmand %vm700, %vm828
    %vm1085 = vmand %vm701, %vm829
    %v1086 = vrot.slane %v382, 7
    %v1087 = vrot.slane %v383, 7
    %v1088 = vrot.slane %v384, 7
    %v1089 = vrot.slane %v385, 7
    %v1090 = vrot.slane %v386, 7
    %v1091 = vrot.slane %v387, 7
    %v1092 = vrot.slane %v388, 7
    %v1093 = vrot.slane %v389, 7
    %v1094 = vrot.slane %v390, 7
    %v1095 = vrot.slane %v391, 7
    %v1096 = vrot.slane %v392, 7
    %v1097 = vrot.slane %v393, 7
    %v1098 = vrot.slane %v394, 7
    %v1099 = vrot.slane %v395, 7
    %v1100 = vrot.slane %v396, 7
    %v1101 = vrot.slane %v397, 7
    %v1102 = vrot.slane %v398, 7
    %v1103 = vrot.slane %v399, 7
    %v1104 = vrot.slane %v400, 7
    %v1105 = vrot.slane %v401, 7
    %v1106 = vrot.slane %v402, 7
    %v1107 = vrot.slane %v403, 7
    %v1108 = vrot.slane %v404, 7
    %v1109 = vrot.slane %v405, 7
    %v1110 = vrot.slane %v406, 7
    %v1111 = vrot.slane %v407, 7
    %v1112 = vrot.slane %v408, 7
    %v1113 = vrot.slane %v409, 7
    %v1114 = vrot.slane %v410, 7
    %v1115 = vrot.slane %v411, 7
    %v1116 = vrot.slane %v412, 7
    %v1117 = vrot.slane %v413, 7
    %v1118 = vrot.slane %v414, 7
    %v1119 = vrot.slane %v415, 7
    %v1120 = vrot.slane %v416, 7
    %v1121 = vrot.slane %v417, 7
    %v1122 = vrot.slane %v418, 7
    %v1123 = vrot.slane %v419, 7
    %v1124 = vrot.slane %v420, 7
    %v1125 = vrot.slane %v421, 7
    %v1126 = vrot.slane %v422, 7
    %v1127 = vrot.slane %v423, 7
    %v1128 = vrot.slane %v424, 7
    %v1129 = vrot.slane %v425, 7
    %v1130 = vrot.slane %v426, 7
    %v1131 = vrot.slane %v427, 7
    %v1132 = vrot.slane %v428, 7
    %v1133 = vrot.slane %v429, 7
    %v1134 = vrot.slane %v430, 7
    %v1135 = vrot.slane %v431, 7
    %v1136 = vrot.slane %v432, 7
    %v1137 = vrot.slane %v433, 7
    %v1138 = vrot.slane %v434, 7
    %v1139 = vrot.slane %v435, 7
    %v1140 = vrot.slane %v436, 7
    %v1141 = vrot.slane %v437, 7
    %v1142 = vrot.slane %v438, 7
    %v1143 = vrot.slane %v439, 7
    %v1144 = vrot.slane %v440, 7
    %v1145 = vrot.slane %v441, 7
    %v1146 = vrot.slane %v442, 7
    %v1147 = vrot.slane %v443, 7
    %v1148 = vrot.slane %v444, 7
    %v1149 = vrot.slane %v445, 7
    %v1150 = vlaneseq
    %v1151 = vshrl.u32 %v1150, 7
    %vm1152 = vcmp.lt.s32.totalorder %v1151, 1
    %v1153 = vsel %vm1152, %v1148, %v1149
    %v1154 = vsel %vm1152, %v1147, %v1148
    %v1155 = vsel %vm1152, %v1146, %v1147
    %v1156 = vsel %vm1152, %v1145, %v1146
    %v1157 = vsel %vm1152, %v1144, %v1145
    %v1158 = vsel %vm1152, %v1143, %v1144
    %v1159 = vsel %vm1152, %v1142, %v1143
    %v1160 = vsel %vm1152, %v1141, %v1142
    %v1161 = vsel %vm1152, %v1140, %v1141
    %v1162 = vsel %vm1152, %v1139, %v1140
    %v1163 = vsel %vm1152, %v1138, %v1139
    %v1164 = vsel %vm1152, %v1137, %v1138
    %v1165 = vsel %vm1152, %v1136, %v1137
    %v1166 = vsel %vm1152, %v1135, %v1136
    %v1167 = vsel %vm1152, %v1134, %v1135
    %v1168 = vsel %vm1152, %v1133, %v1134
    %v1169 = vsel %vm1152, %v1132, %v1133
    %v1170 = vsel %vm1152, %v1131, %v1132
    %v1171 = vsel %vm1152, %v1130, %v1131
    %v1172 = vsel %vm1152, %v1129, %v1130
    %v1173 = vsel %vm1152, %v1128, %v1129
    %v1174 = vsel %vm1152, %v1127, %v1128
    %v1175 = vsel %vm1152, %v1126, %v1127
    %v1176 = vsel %vm1152, %v1125, %v1126
    %v1177 = vsel %vm1152, %v1124, %v1125
    %v1178 = vsel %vm1152, %v1123, %v1124
    %v1179 = vsel %vm1152, %v1122, %v1123
    %v1180 = vsel %vm1152, %v1121, %v1122
    %v1181 = vsel %vm1152, %v1120, %v1121
    %v1182 = vsel %vm1152, %v1119, %v1120
    %v1183 = vsel %vm1152, %v1118, %v1119
    %v1184 = vsel %vm1152, %v1117, %v1118
    %v1185 = vsel %vm1152, %v1116, %v1117
    %v1186 = vsel %vm1152, %v1115, %v1116
    %v1187 = vsel %vm1152, %v1114, %v1115
    %v1188 = vsel %vm1152, %v1113, %v1114
    %v1189 = vsel %vm1152, %v1112, %v1113
    %v1190 = vsel %vm1152, %v1111, %v1112
    %v1191 = vsel %vm1152, %v1110, %v1111
    %v1192 = vsel %vm1152, %v1109, %v1110
    %v1193 = vsel %vm1152, %v1108, %v1109
    %v1194 = vsel %vm1152, %v1107, %v1108
    %v1195 = vsel %vm1152, %v1106, %v1107
    %v1196 = vsel %vm1152, %v1105, %v1106
    %v1197 = vsel %vm1152, %v1104, %v1105
    %v1198 = vsel %vm1152, %v1103, %v1104
    %v1199 = vsel %vm1152, %v1102, %v1103
    %v1200 = vsel %vm1152, %v1101, %v1102
    %v1201 = vsel %vm1152, %v1100, %v1101
    %v1202 = vsel %vm1152, %v1099, %v1100
    %v1203 = vsel %vm1152, %v1098, %v1099
    %v1204 = vsel %vm1152, %v1097, %v1098
    %v1205 = vsel %vm1152, %v1096, %v1097
    %v1206 = vsel %vm1152, %v1095, %v1096
    %v1207 = vsel %vm1152, %v1094, %v1095
    %v1208 = vsel %vm1152, %v1093, %v1094
    %v1209 = vsel %vm1152, %v1092, %v1093
    %v1210 = vsel %vm1152, %v1091, %v1092
    %v1211 = vsel %vm1152, %v1090, %v1091
    %v1212 = vsel %vm1152, %v1089, %v1090
    %v1213 = vsel %vm1152, %v1088, %v1089
    %v1214 = vsel %vm1152, %v1087, %v1088
    %v1215 = vsel %vm1152, %v1086, %v1087
    %v1216 = vsel %vm1152, %v1149, %v1086
    %v1217 = vsel %vm830, 1, 0
    %v1218 = vsel %vm831, 1, 0
    %v1219 = vsel %vm832, 1, 0
    %v1220 = vsel %vm833, 1, 0
    %v1221 = vsel %vm834, 1, 0
    %v1222 = vsel %vm835, 1, 0
    %v1223 = vsel %vm836, 1, 0
    %v1224 = vsel %vm837, 1, 0
    %v1225 = vsel %vm838, 1, 0
    %v1226 = vsel %vm839, 1, 0
    %v1227 = vsel %vm840, 1, 0
    %v1228 = vsel %vm841, 1, 0
    %v1229 = vsel %vm842, 1, 0
    %v1230 = vsel %vm843, 1, 0
    %v1231 = vsel %vm844, 1, 0
    %v1232 = vsel %vm845, 1, 0
    %v1233 = vsel %vm846, 1, 0
    %v1234 = vsel %vm847, 1, 0
    %v1235 = vsel %vm848, 1, 0
    %v1236 = vsel %vm849, 1, 0
    %v1237 = vsel %vm850, 1, 0
    %v1238 = vsel %vm851, 1, 0
    %v1239 = vsel %vm852, 1, 0
    %v1240 = vsel %vm853, 1, 0
    %v1241 = vsel %vm854, 1, 0
    %v1242 = vsel %vm855, 1, 0
    %v1243 = vsel %vm856, 1, 0
    %v1244 = vsel %vm857, 1, 0
    %v1245 = vsel %vm858, 1, 0
    %v1246 = vsel %vm859, 1, 0
    %v1247 = vsel %vm860, 1, 0
    %v1248 = vsel %vm861, 1, 0
    %v1249 = vsel %vm862, 1, 0
    %v1250 = vsel %vm863, 1, 0
    %v1251 = vsel %vm864, 1, 0
    %v1252 = vsel %vm865, 1, 0
    %v1253 = vsel %vm866, 1, 0
    %v1254 = vsel %vm867, 1, 0
    %v1255 = vsel %vm868, 1, 0
    %v1256 = vsel %vm869, 1, 0
    %v1257 = vsel %vm870, 1, 0
    %v1258 = vsel %vm871, 1, 0
    %v1259 = vsel %vm872, 1, 0
    %v1260 = vsel %vm873, 1, 0
    %v1261 = vsel %vm874, 1, 0
    %v1262 = vsel %vm875, 1, 0
    %v1263 = vsel %vm876, 1, 0
    %v1264 = vsel %vm877, 1, 0
    %v1265 = vsel %vm878, 1, 0
    %v1266 = vsel %vm879, 1, 0
    %v1267 = vsel %vm880, 1, 0
    %v1268 = vsel %vm881, 1, 0
    %v1269 = vsel %vm882, 1, 0
    %v1270 = vsel %vm883, 1, 0
    %v1271 = vsel %vm884, 1, 0
    %v1272 = vsel %vm885, 1, 0
    %v1273 = vsel %vm886, 1, 0
    %v1274 = vsel %vm887, 1, 0
    %v1275 = vsel %vm888, 1, 0
    %v1276 = vsel %vm889, 1, 0
    %v1277 = vsel %vm890, 1, 0
    %v1278 = vsel %vm891, 1, 0
    %v1279 = vsel %vm892, 1, 0
    %v1280 = vsel %vm893, 1, 0
    %1281 = vset.pattern.permute.xlu0 0
    %1282 = vperm.xlu0 %1281, %v1217
    %v1283 = vpop.permute.xlu0 %1282
    %1284 = vset.pattern.permute.xlu0 0
    %1285 = vperm.xlu0 %1284, %v1218
    %v1286 = vpop.permute.xlu0 %1285
    %1287 = vset.pattern.permute.xlu0 0
    %1288 = vperm.xlu0 %1287, %v1219
    %v1289 = vpop.permute.xlu0 %1288
    %1290 = vset.pattern.permute.xlu0 0
    %1291 = vperm.xlu0 %1290, %v1220
    %v1292 = vpop.permute.xlu0 %1291
    %1293 = vset.pattern.permute.xlu0 0
    %1294 = vperm.xlu0 %1293, %v1221
    %v1295 = vpop.permute.xlu0 %1294
    %1296 = vset.pattern.permute.xlu0 0
    %1297 = vperm.xlu0 %1296, %v1222
    %v1298 = vpop.permute.xlu0 %1297
    %1299 = vset.pattern.permute.xlu0 0
    %1300 = vperm.xlu0 %1299, %v1223
    %v1301 = vpop.permute.xlu0 %1300
    %1302 = vset.pattern.permute.xlu0 0
    %1303 = vperm.xlu0 %1302, %v1224
    %v1304 = vpop.permute.xlu0 %1303
    %1305 = vset.pattern.permute.xlu0 0
    %1306 = vperm.xlu0 %1305, %v1225
    %v1307 = vpop.permute.xlu0 %1306
    %1308 = vset.pattern.permute.xlu0 0
    %1309 = vperm.xlu0 %1308, %v1226
    %v1310 = vpop.permute.xlu0 %1309
    %1311 = vset.pattern.permute.xlu0 0
    %1312 = vperm.xlu0 %1311, %v1227
    %v1313 = vpop.permute.xlu0 %1312
    %1314 = vset.pattern.permute.xlu0 0
    %1315 = vperm.xlu0 %1314, %v1228
    %v1316 = vpop.permute.xlu0 %1315
    %1317 = vset.pattern.permute.xlu0 0
    %1318 = vperm.xlu0 %1317, %v1229
    %v1319 = vpop.permute.xlu0 %1318
    %1320 = vset.pattern.permute.xlu0 0
    %1321 = vperm.xlu0 %1320, %v1230
    %v1322 = vpop.permute.xlu0 %1321
    %1323 = vset.pattern.permute.xlu0 0
    %1324 = vperm.xlu0 %1323, %v1231
    %v1325 = vpop.permute.xlu0 %1324
    %1326 = vset.pattern.permute.xlu0 0
    %1327 = vperm.xlu0 %1326, %v1232
    %v1328 = vpop.permute.xlu0 %1327
    %1329 = vset.pattern.permute.xlu0 0
    %1330 = vperm.xlu0 %1329, %v1233
    %v1331 = vpop.permute.xlu0 %1330
    %1332 = vset.pattern.permute.xlu0 0
    %1333 = vperm.xlu0 %1332, %v1234
    %v1334 = vpop.permute.xlu0 %1333
    %1335 = vset.pattern.permute.xlu0 0
    %1336 = vperm.xlu0 %1335, %v1235
    %v1337 = vpop.permute.xlu0 %1336
    %1338 = vset.pattern.permute.xlu0 0
    %1339 = vperm.xlu0 %1338, %v1236
    %v1340 = vpop.permute.xlu0 %1339
    %1341 = vset.pattern.permute.xlu0 0
    %1342 = vperm.xlu0 %1341, %v1237
    %v1343 = vpop.permute.xlu0 %1342
    %1344 = vset.pattern.permute.xlu0 0
    %1345 = vperm.xlu0 %1344, %v1238
    %v1346 = vpop.permute.xlu0 %1345
    %1347 = vset.pattern.permute.xlu0 0
    %1348 = vperm.xlu0 %1347, %v1239
    %v1349 = vpop.permute.xlu0 %1348
    %1350 = vset.pattern.permute.xlu0 0
    %1351 = vperm.xlu0 %1350, %v1240
    %v1352 = vpop.permute.xlu0 %1351
    %1353 = vset.pattern.permute.xlu0 0
    %1354 = vperm.xlu0 %1353, %v1241
    %v1355 = vpop.permute.xlu0 %1354
    %1356 = vset.pattern.permute.xlu0 0
    %1357 = vperm.xlu0 %1356, %v1242
    %v1358 = vpop.permute.xlu0 %1357
    %1359 = vset.pattern.permute.xlu0 0
    %1360 = vperm.xlu0 %1359, %v1243
    %v1361 = vpop.permute.xlu0 %1360
    %1362 = vset.pattern.permute.xlu0 0
    %1363 = vperm.xlu0 %1362, %v1244
    %v1364 = vpop.permute.xlu0 %1363
    %1365 = vset.pattern.permute.xlu0 0
    %1366 = vperm.xlu0 %1365, %v1245
    %v1367 = vpop.permute.xlu0 %1366
    %1368 = vset.pattern.permute.xlu0 0
    %1369 = vperm.xlu0 %1368, %v1246
    %v1370 = vpop.permute.xlu0 %1369
    %1371 = vset.pattern.permute.xlu0 0
    %1372 = vperm.xlu0 %1371, %v1247
    %v1373 = vpop.permute.xlu0 %1372
    %1374 = vset.pattern.permute.xlu0 0
    %1375 = vperm.xlu0 %1374, %v1248
    %v1376 = vpop.permute.xlu0 %1375
    %1377 = vset.pattern.permute.xlu0 0
    %1378 = vperm.xlu0 %1377, %v1249
    %v1379 = vpop.permute.xlu0 %1378
    %1380 = vset.pattern.permute.xlu0 0
    %1381 = vperm.xlu0 %1380, %v1250
    %v1382 = vpop.permute.xlu0 %1381
    %1383 = vset.pattern.permute.xlu0 0
    %1384 = vperm.xlu0 %1383, %v1251
    %v1385 = vpop.permute.xlu0 %1384
    %1386 = vset.pattern.permute.xlu0 0
    %1387 = vperm.xlu0 %1386, %v1252
    %v1388 = vpop.permute.xlu0 %1387
    %1389 = vset.pattern.permute.xlu0 0
    %1390 = vperm.xlu0 %1389, %v1253
    %v1391 = vpop.permute.xlu0 %1390
    %1392 = vset.pattern.permute.xlu0 0
    %1393 = vperm.xlu0 %1392, %v1254
    %v1394 = vpop.permute.xlu0 %1393
    %1395 = vset.pattern.permute.xlu0 0
    %1396 = vperm.xlu0 %1395, %v1255
    %v1397 = vpop.permute.xlu0 %1396
    %1398 = vset.pattern.permute.xlu0 0
    %1399 = vperm.xlu0 %1398, %v1256
    %v1400 = vpop.permute.xlu0 %1399
    %1401 = vset.pattern.permute.xlu0 0
    %1402 = vperm.xlu0 %1401, %v1257
    %v1403 = vpop.permute.xlu0 %1402
    %1404 = vset.pattern.permute.xlu0 0
    %1405 = vperm.xlu0 %1404, %v1258
    %v1406 = vpop.permute.xlu0 %1405
    %1407 = vset.pattern.permute.xlu0 0
    %1408 = vperm.xlu0 %1407, %v1259
    %v1409 = vpop.permute.xlu0 %1408
    %1410 = vset.pattern.permute.xlu0 0
    %1411 = vperm.xlu0 %1410, %v1260
    %v1412 = vpop.permute.xlu0 %1411
    %1413 = vset.pattern.permute.xlu0 0
    %1414 = vperm.xlu0 %1413, %v1261
    %v1415 = vpop.permute.xlu0 %1414
    %1416 = vset.pattern.permute.xlu0 0
    %1417 = vperm.xlu0 %1416, %v1262
    %v1418 = vpop.permute.xlu0 %1417
    %1419 = vset.pattern.permute.xlu0 0
    %1420 = vperm.xlu0 %1419, %v1263
    %v1421 = vpop.permute.xlu0 %1420
    %1422 = vset.pattern.permute.xlu0 0
    %1423 = vperm.xlu0 %1422, %v1264
    %v1424 = vpop.permute.xlu0 %1423
    %1425 = vset.pattern.permute.xlu0 0
    %1426 = vperm.xlu0 %1425, %v1265
    %v1427 = vpop.permute.xlu0 %1426
    %1428 = vset.pattern.permute.xlu0 0
    %1429 = vperm.xlu0 %1428, %v1266
    %v1430 = vpop.permute.xlu0 %1429
    %1431 = vset.pattern.permute.xlu0 0
    %1432 = vperm.xlu0 %1431, %v1267
    %v1433 = vpop.permute.xlu0 %1432
    %1434 = vset.pattern.permute.xlu0 0
    %1435 = vperm.xlu0 %1434, %v1268
    %v1436 = vpop.permute.xlu0 %1435
    %1437 = vset.pattern.permute.xlu0 0
    %1438 = vperm.xlu0 %1437, %v1269
    %v1439 = vpop.permute.xlu0 %1438
    %1440 = vset.pattern.permute.xlu0 0
    %1441 = vperm.xlu0 %1440, %v1270
    %v1442 = vpop.permute.xlu0 %1441
    %1443 = vset.pattern.permute.xlu0 0
    %1444 = vperm.xlu0 %1443, %v1271
    %v1445 = vpop.permute.xlu0 %1444
    %1446 = vset.pattern.permute.xlu0 0
    %1447 = vperm.xlu0 %1446, %v1272
    %v1448 = vpop.permute.xlu0 %1447
    %1449 = vset.pattern.permute.xlu0 0
    %1450 = vperm.xlu0 %1449, %v1273
    %v1451 = vpop.permute.xlu0 %1450
    %1452 = vset.pattern.permute.xlu0 0
    %1453 = vperm.xlu0 %1452, %v1274
    %v1454 = vpop.permute.xlu0 %1453
    %1455 = vset.pattern.permute.xlu0 0
    %1456 = vperm.xlu0 %1455, %v1275
    %v1457 = vpop.permute.xlu0 %1456
    %1458 = vset.pattern.permute.xlu0 0
    %1459 = vperm.xlu0 %1458, %v1276
    %v1460 = vpop.permute.xlu0 %1459
    %1461 = vset.pattern.permute.xlu0 0
    %1462 = vperm.xlu0 %1461, %v1277
    %v1463 = vpop.permute.xlu0 %1462
    %1464 = vset.pattern.permute.xlu0 0
    %1465 = vperm.xlu0 %1464, %v1278
    %v1466 = vpop.permute.xlu0 %1465
    %1467 = vset.pattern.permute.xlu0 0
    %1468 = vperm.xlu0 %1467, %v1279
    %v1469 = vpop.permute.xlu0 %1468
    %1470 = vset.pattern.permute.xlu0 0
    %1471 = vperm.xlu0 %1470, %v1280
    %v1472 = vpop.permute.xlu0 %1471
    %vm1473 = vcmp.eq.s32.totalorder %v1283, 1
    %vm1474 = vcmp.eq.s32.totalorder %v1286, 1
    %vm1475 = vcmp.eq.s32.totalorder %v1289, 1
    %vm1476 = vcmp.eq.s32.totalorder %v1292, 1
    %vm1477 = vcmp.eq.s32.totalorder %v1295, 1
    %vm1478 = vcmp.eq.s32.totalorder %v1298, 1
    %vm1479 = vcmp.eq.s32.totalorder %v1301, 1
    %vm1480 = vcmp.eq.s32.totalorder %v1304, 1
    %vm1481 = vcmp.eq.s32.totalorder %v1307, 1
    %vm1482 = vcmp.eq.s32.totalorder %v1310, 1
    %vm1483 = vcmp.eq.s32.totalorder %v1313, 1
    %vm1484 = vcmp.eq.s32.totalorder %v1316, 1
    %vm1485 = vcmp.eq.s32.totalorder %v1319, 1
    %vm1486 = vcmp.eq.s32.totalorder %v1322, 1
    %vm1487 = vcmp.eq.s32.totalorder %v1325, 1
    %vm1488 = vcmp.eq.s32.totalorder %v1328, 1
    %vm1489 = vcmp.eq.s32.totalorder %v1331, 1
    %vm1490 = vcmp.eq.s32.totalorder %v1334, 1
    %vm1491 = vcmp.eq.s32.totalorder %v1337, 1
    %vm1492 = vcmp.eq.s32.totalorder %v1340, 1
    %vm1493 = vcmp.eq.s32.totalorder %v1343, 1
    %vm1494 = vcmp.eq.s32.totalorder %v1346, 1
    %vm1495 = vcmp.eq.s32.totalorder %v1349, 1
    %vm1496 = vcmp.eq.s32.totalorder %v1352, 1
    %vm1497 = vcmp.eq.s32.totalorder %v1355, 1
    %vm1498 = vcmp.eq.s32.totalorder %v1358, 1
    %vm1499 = vcmp.eq.s32.totalorder %v1361, 1
    %vm1500 = vcmp.eq.s32.totalorder %v1364, 1
    %vm1501 = vcmp.eq.s32.totalorder %v1367, 1
    %vm1502 = vcmp.eq.s32.totalorder %v1370, 1
    %vm1503 = vcmp.eq.s32.totalorder %v1373, 1
    %vm1504 = vcmp.eq.s32.totalorder %v1376, 1
    %vm1505 = vcmp.eq.s32.totalorder %v1379, 1
    %vm1506 = vcmp.eq.s32.totalorder %v1382, 1
    %vm1507 = vcmp.eq.s32.totalorder %v1385, 1
    %vm1508 = vcmp.eq.s32.totalorder %v1388, 1
    %vm1509 = vcmp.eq.s32.totalorder %v1391, 1
    %vm1510 = vcmp.eq.s32.totalorder %v1394, 1
    %vm1511 = vcmp.eq.s32.totalorder %v1397, 1
    %vm1512 = vcmp.eq.s32.totalorder %v1400, 1
    %vm1513 = vcmp.eq.s32.totalorder %v1403, 1
    %vm1514 = vcmp.eq.s32.totalorder %v1406, 1
    %vm1515 = vcmp.eq.s32.totalorder %v1409, 1
    %vm1516 = vcmp.eq.s32.totalorder %v1412, 1
    %vm1517 = vcmp.eq.s32.totalorder %v1415, 1
    %vm1518 = vcmp.eq.s32.totalorder %v1418, 1
    %vm1519 = vcmp.eq.s32.totalorder %v1421, 1
    %vm1520 = vcmp.eq.s32.totalorder %v1424, 1
    %vm1521 = vcmp.eq.s32.totalorder %v1427, 1
    %vm1522 = vcmp.eq.s32.totalorder %v1430, 1
    %vm1523 = vcmp.eq.s32.totalorder %v1433, 1
    %vm1524 = vcmp.eq.s32.totalorder %v1436, 1
    %vm1525 = vcmp.eq.s32.totalorder %v1439, 1
    %vm1526 = vcmp.eq.s32.totalorder %v1442, 1
    %vm1527 = vcmp.eq.s32.totalorder %v1445, 1
    %vm1528 = vcmp.eq.s32.totalorder %v1448, 1
    %vm1529 = vcmp.eq.s32.totalorder %v1451, 1
    %vm1530 = vcmp.eq.s32.totalorder %v1454, 1
    %vm1531 = vcmp.eq.s32.totalorder %v1457, 1
    %vm1532 = vcmp.eq.s32.totalorder %v1460, 1
    %vm1533 = vcmp.eq.s32.totalorder %v1463, 1
    %vm1534 = vcmp.eq.s32.totalorder %v1466, 1
    %vm1535 = vcmp.eq.s32.totalorder %v1469, 1
    %vm1536 = vcmp.eq.s32.totalorder %v1472, 1
    %v1537 = vsel %vm1473, %v1154, 0.0
    %v1538 = vsel %vm1474, %v1153, 0.0
    %v1539 = vsel %vm1475, %v1216, 0.0
    %v1540 = vsel %vm1476, %v1215, 0.0
    %v1541 = vsel %vm1477, %v1214, 0.0
    %v1542 = vsel %vm1478, %v1213, 0.0
    %v1543 = vsel %vm1479, %v1212, 0.0
    %v1544 = vsel %vm1480, %v1211, 0.0
    %v1545 = vsel %vm1481, %v1210, 0.0
    %v1546 = vsel %vm1482, %v1209, 0.0
    %v1547 = vsel %vm1483, %v1208, 0.0
    %v1548 = vsel %vm1484, %v1207, 0.0
    %v1549 = vsel %vm1485, %v1206, 0.0
    %v1550 = vsel %vm1486, %v1205, 0.0
    %v1551 = vsel %vm1487, %v1204, 0.0
    %v1552 = vsel %vm1488, %v1203, 0.0
    %v1553 = vsel %vm1489, %v1202, 0.0
    %v1554 = vsel %vm1490, %v1201, 0.0
    %v1555 = vsel %vm1491, %v1200, 0.0
    %v1556 = vsel %vm1492, %v1199, 0.0
    %v1557 = vsel %vm1493, %v1198, 0.0
    %v1558 = vsel %vm1494, %v1197, 0.0
    %v1559 = vsel %vm1495, %v1196, 0.0
    %v1560 = vsel %vm1496, %v1195, 0.0
    %v1561 = vsel %vm1497, %v1194, 0.0
    %v1562 = vsel %vm1498, %v1193, 0.0
    %v1563 = vsel %vm1499, %v1192, 0.0
    %v1564 = vsel %vm1500, %v1191, 0.0
    %v1565 = vsel %vm1501, %v1190, 0.0
    %v1566 = vsel %vm1502, %v1189, 0.0
    %v1567 = vsel %vm1503, %v1188, 0.0
    %v1568 = vsel %vm1504, %v1187, 0.0
    %v1569 = vsel %vm1505, %v1186, 0.0
    %v1570 = vsel %vm1506, %v1185, 0.0
    %v1571 = vsel %vm1507, %v1184, 0.0
    %v1572 = vsel %vm1508, %v1183, 0.0
    %v1573 = vsel %vm1509, %v1182, 0.0
    %v1574 = vsel %vm1510, %v1181, 0.0
    %v1575 = vsel %vm1511, %v1180, 0.0
    %v1576 = vsel %vm1512, %v1179, 0.0
    %v1577 = vsel %vm1513, %v1178, 0.0
    %v1578 = vsel %vm1514, %v1177, 0.0
    %v1579 = vsel %vm1515, %v1176, 0.0
    %v1580 = vsel %vm1516, %v1175, 0.0
    %v1581 = vsel %vm1517, %v1174, 0.0
    %v1582 = vsel %vm1518, %v1173, 0.0
    %v1583 = vsel %vm1519, %v1172, 0.0
    %v1584 = vsel %vm1520, %v1171, 0.0
    %v1585 = vsel %vm1521, %v1170, 0.0
    %v1586 = vsel %vm1522, %v1169, 0.0
    %v1587 = vsel %vm1523, %v1168, 0.0
    %v1588 = vsel %vm1524, %v1167, 0.0
    %v1589 = vsel %vm1525, %v1166, 0.0
    %v1590 = vsel %vm1526, %v1165, 0.0
    %v1591 = vsel %vm1527, %v1164, 0.0
    %v1592 = vsel %vm1528, %v1163, 0.0
    %v1593 = vsel %vm1529, %v1162, 0.0
    %v1594 = vsel %vm1530, %v1161, 0.0
    %v1595 = vsel %vm1531, %v1160, 0.0
    %v1596 = vsel %vm1532, %v1159, 0.0
    %v1597 = vsel %vm1533, %v1158, 0.0
    %v1598 = vsel %vm1534, %v1157, 0.0
    %v1599 = vsel %vm1535, %v1156, 0.0
    %v1600 = vsel %vm1536, %v1155, 0.0
    %v1601 = vpack.c.bf16 %v1537, %v1537
    %v1602 = vpack.c.bf16 %v1538, %v1538
    %v1603 = vpack.c.bf16 %v1539, %v1539
    %v1604 = vpack.c.bf16 %v1540, %v1540
    %v1605 = vpack.c.bf16 %v1541, %v1541
    %v1606 = vpack.c.bf16 %v1542, %v1542
    %v1607 = vpack.c.bf16 %v1543, %v1543
    %v1608 = vpack.c.bf16 %v1544, %v1544
    %v1609 = vpack.c.bf16 %v1545, %v1545
    %v1610 = vpack.c.bf16 %v1546, %v1546
    %v1611 = vpack.c.bf16 %v1547, %v1547
    %v1612 = vpack.c.bf16 %v1548, %v1548
    %v1613 = vpack.c.bf16 %v1549, %v1549
    %v1614 = vpack.c.bf16 %v1550, %v1550
    %v1615 = vpack.c.bf16 %v1551, %v1551
    %v1616 = vpack.c.bf16 %v1552, %v1552
    %v1617 = vpack.c.bf16 %v1553, %v1553
    %v1618 = vpack.c.bf16 %v1554, %v1554
    %v1619 = vpack.c.bf16 %v1555, %v1555
    %v1620 = vpack.c.bf16 %v1556, %v1556
    %v1621 = vpack.c.bf16 %v1557, %v1557
    %v1622 = vpack.c.bf16 %v1558, %v1558
    %v1623 = vpack.c.bf16 %v1559, %v1559
    %v1624 = vpack.c.bf16 %v1560, %v1560
    %v1625 = vpack.c.bf16 %v1561, %v1561
    %v1626 = vpack.c.bf16 %v1562, %v1562
    %v1627 = vpack.c.bf16 %v1563, %v1563
    %v1628 = vpack.c.bf16 %v1564, %v1564
    %v1629 = vpack.c.bf16 %v1565, %v1565
    %v1630 = vpack.c.bf16 %v1566, %v1566
    %v1631 = vpack.c.bf16 %v1567, %v1567
    %v1632 = vpack.c.bf16 %v1568, %v1568
    %v1633 = vpack.c.bf16 %v1569, %v1569
    %v1634 = vpack.c.bf16 %v1570, %v1570
    %v1635 = vpack.c.bf16 %v1571, %v1571
    %v1636 = vpack.c.bf16 %v1572, %v1572
    %v1637 = vpack.c.bf16 %v1573, %v1573
    %v1638 = vpack.c.bf16 %v1574, %v1574
    %v1639 = vpack.c.bf16 %v1575, %v1575
    %v1640 = vpack.c.bf16 %v1576, %v1576
    %v1641 = vpack.c.bf16 %v1577, %v1577
    %v1642 = vpack.c.bf16 %v1578, %v1578
    %v1643 = vpack.c.bf16 %v1579, %v1579
    %v1644 = vpack.c.bf16 %v1580, %v1580
    %v1645 = vpack.c.bf16 %v1581, %v1581
    %v1646 = vpack.c.bf16 %v1582, %v1582
    %v1647 = vpack.c.bf16 %v1583, %v1583
    %v1648 = vpack.c.bf16 %v1584, %v1584
    %v1649 = vpack.c.bf16 %v1585, %v1585
    %v1650 = vpack.c.bf16 %v1586, %v1586
    %v1651 = vpack.c.bf16 %v1587, %v1587
    %v1652 = vpack.c.bf16 %v1588, %v1588
    %v1653 = vpack.c.bf16 %v1589, %v1589
    %v1654 = vpack.c.bf16 %v1590, %v1590
    %v1655 = vpack.c.bf16 %v1591, %v1591
    %v1656 = vpack.c.bf16 %v1592, %v1592
    %v1657 = vpack.c.bf16 %v1593, %v1593
    %v1658 = vpack.c.bf16 %v1594, %v1594
    %v1659 = vpack.c.bf16 %v1595, %v1595
    %v1660 = vpack.c.bf16 %v1596, %v1596
    %v1661 = vpack.c.bf16 %v1597, %v1597
    %v1662 = vpack.c.bf16 %v1598, %v1598
    %v1663 = vpack.c.bf16 %v1599, %v1599
    %v1664 = vpack.c.bf16 %v1600, %v1600
    %1665 = vst [vmem:[#allocation2] sm:$0xf] %v1601
    %1666 = vst [vmem:[#allocation2 + $0x24] sm:$0xf] %v1602
    %1667 = vst [vmem:[#allocation2 + $0x48] sm:$0xf] %v1603
    %1668 = vst [vmem:[#allocation2 + $0x6c] sm:$0xf] %v1604
    %1669 = vst [vmem:[#allocation2 + $0x90] sm:$0xf] %v1605
    %1670 = vst [vmem:[#allocation2 + $0xb4] sm:$0xf] %v1606
    %1671 = vst [vmem:[#allocation2 + $0xd8] sm:$0xf] %v1607
    %1672 = vst [vmem:[#allocation2 + $0xfc] sm:$0xf] %v1608
    %1673 = vst [vmem:[#allocation2 + $0x120] sm:$0xf] %v1609
    %1674 = vst [vmem:[#allocation2 + $0x144] sm:$0xf] %v1610
    %1675 = vst [vmem:[#allocation2 + $0x168] sm:$0xf] %v1611
    %1676 = vst [vmem:[#allocation2 + $0x18c] sm:$0xf] %v1612
    %1677 = vst [vmem:[#allocation2 + $0x1b0] sm:$0xf] %v1613
    %1678 = vst [vmem:[#allocation2 + $0x1d4] sm:$0xf] %v1614
    %1679 = vst [vmem:[#allocation2 + $0x1f8] sm:$0xf] %v1615
    %1680 = vst [vmem:[#allocation2 + $0x21c] sm:$0xf] %v1616
    %1681 = vst [vmem:[#allocation2 + $0x240] sm:$0xf] %v1617
    %1682 = vst [vmem:[#allocation2 + $0x264] sm:$0xf] %v1618
    %1683 = vst [vmem:[#allocation2 + $0x288] sm:$0xf] %v1619
    %1684 = vst [vmem:[#allocation2 + $0x2ac] sm:$0xf] %v1620
    %1685 = vst [vmem:[#allocation2 + $0x2d0] sm:$0xf] %v1621
    %1686 = vst [vmem:[#allocation2 + $0x2f4] sm:$0xf] %v1622
    %1687 = vst [vmem:[#allocation2 + $0x318] sm:$0xf] %v1623
    %1688 = vst [vmem:[#allocation2 + $0x33c] sm:$0xf] %v1624
    %1689 = vst [vmem:[#allocation2 + $0x360] sm:$0xf] %v1625
    %1690 = vst [vmem:[#allocation2 + $0x384] sm:$0xf] %v1626
    %1691 = vst [vmem:[#allocation2 + $0x3a8] sm:$0xf] %v1627
    %1692 = vst [vmem:[#allocation2 + $0x3cc] sm:$0xf] %v1628
    %1693 = vst [vmem:[#allocation2 + $0x3f0] sm:$0xf] %v1629
    %1694 = vst [vmem:[#allocation2 + $0x414] sm:$0xf] %v1630
    %1695 = vst [vmem:[#allocation2 + $0x438] sm:$0xf] %v1631
    %1696 = vst [vmem:[#allocation2 + $0x45c] sm:$0xf] %v1632
    %1697 = vst [vmem:[#allocation2 + $0x480] sm:$0xf] %v1633
    %1698 = vst [vmem:[#allocation2 + $0x4a4] sm:$0xf] %v1634
    %1699 = vst [vmem:[#allocation2 + $0x4c8] sm:$0xf] %v1635
    %1700 = vst [vmem:[#allocation2 + $0x4ec] sm:$0xf] %v1636
    %1701 = vst [vmem:[#allocation2 + $0x510] sm:$0xf] %v1637
    %1702 = vst [vmem:[#allocation2 + $0x534] sm:$0xf] %v1638
    %1703 = vst [vmem:[#allocation2 + $0x558] sm:$0xf] %v1639
    %1704 = vst [vmem:[#allocation2 + $0x57c] sm:$0xf] %v1640
    %1705 = vst [vmem:[#allocation2 + $0x5a0] sm:$0xf] %v1641
    %1706 = vst [vmem:[#allocation2 + $0x5c4] sm:$0xf] %v1642
    %1707 = vst [vmem:[#allocation2 + $0x5e8] sm:$0xf] %v1643
    %1708 = vst [vmem:[#allocation2 + $0x60c] sm:$0xf] %v1644
    %1709 = vst [vmem:[#allocation2 + $0x630] sm:$0xf] %v1645
    %1710 = vst [vmem:[#allocation2 + $0x654] sm:$0xf] %v1646
    %1711 = vst [vmem:[#allocation2 + $0x678] sm:$0xf] %v1647
    %1712 = vst [vmem:[#allocation2 + $0x69c] sm:$0xf] %v1648
    %1713 = vst [vmem:[#allocation2 + $0x6c0] sm:$0xf] %v1649
    %1714 = vst [vmem:[#allocation2 + $0x6e4] sm:$0xf] %v1650
    %1715 = vst [vmem:[#allocation2 + $0x708] sm:$0xf] %v1651
    %1716 = vst [vmem:[#allocation2 + $0x72c] sm:$0xf] %v1652
    %1717 = vst [vmem:[#allocation2 + $0x750] sm:$0xf] %v1653
    %1718 = vst [vmem:[#allocation2 + $0x774] sm:$0xf] %v1654
    %1719 = vst [vmem:[#allocation2 + $0x798] sm:$0xf] %v1655
    %1720 = vst [vmem:[#allocation2 + $0x7bc] sm:$0xf] %v1656
    %1721 = vst [vmem:[#allocation2 + $0x7e0] sm:$0xf] %v1657
    %1722 = vst [vmem:[#allocation2 + $0x804] sm:$0xf] %v1658
    %1723 = vst [vmem:[#allocation2 + $0x828] sm:$0xf] %v1659
    %1724 = vst [vmem:[#allocation2 + $0x84c] sm:$0xf] %v1660
    %1725 = vst [vmem:[#allocation2 + $0x870] sm:$0xf] %v1661
    %1726 = vst [vmem:[#allocation2 + $0x894] sm:$0xf] %v1662
    %1727 = vst [vmem:[#allocation2 + $0x8b8] sm:$0xf] %v1663
    %1728 = vst [vmem:[#allocation2 + $0x8dc] sm:$0xf] %v1664
    %v1729 = vsel %vm574, 1, 0
    %v1730 = vsel %vm575, 1, 0
    %v1731 = vsel %vm576, 1, 0
    %v1732 = vsel %vm577, 1, 0
    %v1733 = vsel %vm578, 1, 0
    %v1734 = vsel %vm579, 1, 0
    %v1735 = vsel %vm580, 1, 0
    %v1736 = vsel %vm581, 1, 0
    %v1737 = vsel %vm582, 1, 0
    %v1738 = vsel %vm583, 1, 0
    %v1739 = vsel %vm584, 1, 0
    %v1740 = vsel %vm585, 1, 0
    %v1741 = vsel %vm586, 1, 0
    %v1742 = vsel %vm587, 1, 0
    %v1743 = vsel %vm588, 1, 0
    %v1744 = vsel %vm589, 1, 0
    %v1745 = vsel %vm590, 1, 0
    %v1746 = vsel %vm591, 1, 0
    %v1747 = vsel %vm592, 1, 0
    %v1748 = vsel %vm593, 1, 0
    %v1749 = vsel %vm594, 1, 0
    %v1750 = vsel %vm595, 1, 0
    %v1751 = vsel %vm596, 1, 0
    %v1752 = vsel %vm597, 1, 0
    %v1753 = vsel %vm598, 1, 0
    %v1754 = vsel %vm599, 1, 0
    %v1755 = vsel %vm600, 1, 0
    %v1756 = vsel %vm601, 1, 0
    %v1757 = vsel %vm602, 1, 0
    %v1758 = vsel %vm603, 1, 0
    %v1759 = vsel %vm604, 1, 0
    %v1760 = vsel %vm605, 1, 0
    %v1761 = vsel %vm606, 1, 0
    %v1762 = vsel %vm607, 1, 0
    %v1763 = vsel %vm608, 1, 0
    %v1764 = vsel %vm609, 1, 0
    %v1765 = vsel %vm610, 1, 0
    %v1766 = vsel %vm611, 1, 0
    %v1767 = vsel %vm612, 1, 0
    %v1768 = vsel %vm613, 1, 0
    %v1769 = vsel %vm614, 1, 0
    %v1770 = vsel %vm615, 1, 0
    %v1771 = vsel %vm616, 1, 0
    %v1772 = vsel %vm617, 1, 0
    %v1773 = vsel %vm618, 1, 0
    %v1774 = vsel %vm619, 1, 0
    %v1775 = vsel %vm620, 1, 0
    %v1776 = vsel %vm621, 1, 0
    %v1777 = vsel %vm622, 1, 0
    %v1778 = vsel %vm623, 1, 0
    %v1779 = vsel %vm624, 1, 0
    %v1780 = vsel %vm625, 1, 0
    %v1781 = vsel %vm626, 1, 0
    %v1782 = vsel %vm627, 1, 0
    %v1783 = vsel %vm628, 1, 0
    %v1784 = vsel %vm629, 1, 0
    %v1785 = vsel %vm630, 1, 0
    %v1786 = vsel %vm631, 1, 0
    %v1787 = vsel %vm632, 1, 0
    %v1788 = vsel %vm633, 1, 0
    %v1789 = vsel %vm634, 1, 0
    %v1790 = vsel %vm635, 1, 0
    %v1791 = vsel %vm636, 1, 0
    %v1792 = vsel %vm637, 1, 0
    %1793 = vset.pattern.permute.xlu0 0
    %1794 = vperm.xlu0 %1793, %v1729
    %v1795 = vpop.permute.xlu0 %1794
    %1796 = vset.pattern.permute.xlu0 0
    %1797 = vperm.xlu0 %1796, %v1730
    %v1798 = vpop.permute.xlu0 %1797
    %1799 = vset.pattern.permute.xlu0 0
    %1800 = vperm.xlu0 %1799, %v1731
    %v1801 = vpop.permute.xlu0 %1800
    %1802 = vset.pattern.permute.xlu0 0
    %1803 = vperm.xlu0 %1802, %v1732
    %v1804 = vpop.permute.xlu0 %1803
    %1805 = vset.pattern.permute.xlu0 0
    %1806 = vperm.xlu0 %1805, %v1733
    %v1807 = vpop.permute.xlu0 %1806
    %1808 = vset.pattern.permute.xlu0 0
    %1809 = vperm.xlu0 %1808, %v1734
    %v1810 = vpop.permute.xlu0 %1809
    %1811 = vset.pattern.permute.xlu0 0
    %1812 = vperm.xlu0 %1811, %v1735
    %v1813 = vpop.permute.xlu0 %1812
    %1814 = vset.pattern.permute.xlu0 0
    %1815 = vperm.xlu0 %1814, %v1736
    %v1816 = vpop.permute.xlu0 %1815
    %1817 = vset.pattern.permute.xlu0 0
    %1818 = vperm.xlu0 %1817, %v1737
    %v1819 = vpop.permute.xlu0 %1818
    %1820 = vset.pattern.permute.xlu0 0
    %1821 = vperm.xlu0 %1820, %v1738
    %v1822 = vpop.permute.xlu0 %1821
    %1823 = vset.pattern.permute.xlu0 0
    %1824 = vperm.xlu0 %1823, %v1739
    %v1825 = vpop.permute.xlu0 %1824
    %1826 = vset.pattern.permute.xlu0 0
    %1827 = vperm.xlu0 %1826, %v1740
    %v1828 = vpop.permute.xlu0 %1827
    %1829 = vset.pattern.permute.xlu0 0
    %1830 = vperm.xlu0 %1829, %v1741
    %v1831 = vpop.permute.xlu0 %1830
    %1832 = vset.pattern.permute.xlu0 0
    %1833 = vperm.xlu0 %1832, %v1742
    %v1834 = vpop.permute.xlu0 %1833
    %1835 = vset.pattern.permute.xlu0 0
    %1836 = vperm.xlu0 %1835, %v1743
    %v1837 = vpop.permute.xlu0 %1836
    %1838 = vset.pattern.permute.xlu0 0
    %1839 = vperm.xlu0 %1838, %v1744
    %v1840 = vpop.permute.xlu0 %1839
    %1841 = vset.pattern.permute.xlu0 0
    %1842 = vperm.xlu0 %1841, %v1745
    %v1843 = vpop.permute.xlu0 %1842
    %1844 = vset.pattern.permute.xlu0 0
    %1845 = vperm.xlu0 %1844, %v1746
    %v1846 = vpop.permute.xlu0 %1845
    %1847 = vset.pattern.permute.xlu0 0
    %1848 = vperm.xlu0 %1847, %v1747
    %v1849 = vpop.permute.xlu0 %1848
    %1850 = vset.pattern.permute.xlu0 0
    %1851 = vperm.xlu0 %1850, %v1748
    %v1852 = vpop.permute.xlu0 %1851
    %1853 = vset.pattern.permute.xlu0 0
    %1854 = vperm.xlu0 %1853, %v1749
    %v1855 = vpop.permute.xlu0 %1854
    %1856 = vset.pattern.permute.xlu0 0
    %1857 = vperm.xlu0 %1856, %v1750
    %v1858 = vpop.permute.xlu0 %1857
    %1859 = vset.pattern.permute.xlu0 0
    %1860 = vperm.xlu0 %1859, %v1751
    %v1861 = vpop.permute.xlu0 %1860
    %1862 = vset.pattern.permute.xlu0 0
    %1863 = vperm.xlu0 %1862, %v1752
    %v1864 = vpop.permute.xlu0 %1863
    %1865 = vset.pattern.permute.xlu0 0
    %1866 = vperm.xlu0 %1865, %v1753
    %v1867 = vpop.permute.xlu0 %1866
    %1868 = vset.pattern.permute.xlu0 0
    %1869 = vperm.xlu0 %1868, %v1754
    %v1870 = vpop.permute.xlu0 %1869
    %1871 = vset.pattern.permute.xlu0 0
    %1872 = vperm.xlu0 %1871, %v1755
    %v1873 = vpop.permute.xlu0 %1872
    %1874 = vset.pattern.permute.xlu0 0
    %1875 = vperm.xlu0 %1874, %v1756
    %v1876 = vpop.permute.xlu0 %1875
    %1877 = vset.pattern.permute.xlu0 0
    %1878 = vperm.xlu0 %1877, %v1757
    %v1879 = vpop.permute.xlu0 %1878
    %1880 = vset.pattern.permute.xlu0 0
    %1881 = vperm.xlu0 %1880, %v1758
    %v1882 = vpop.permute.xlu0 %1881
    %1883 = vset.pattern.permute.xlu0 0
    %1884 = vperm.xlu0 %1883, %v1759
    %v1885 = vpop.permute.xlu0 %1884
    %1886 = vset.pattern.permute.xlu0 0
    %1887 = vperm.xlu0 %1886, %v1760
    %v1888 = vpop.permute.xlu0 %1887
    %1889 = vset.pattern.permute.xlu0 0
    %1890 = vperm.xlu0 %1889, %v1761
    %v1891 = vpop.permute.xlu0 %1890
    %1892 = vset.pattern.permute.xlu0 0
    %1893 = vperm.xlu0 %1892, %v1762
    %v1894 = vpop.permute.xlu0 %1893
    %1895 = vset.pattern.permute.xlu0 0
    %1896 = vperm.xlu0 %1895, %v1763
    %v1897 = vpop.permute.xlu0 %1896
    %1898 = vset.pattern.permute.xlu0 0
    %1899 = vperm.xlu0 %1898, %v1764
    %v1900 = vpop.permute.xlu0 %1899
    %1901 = vset.pattern.permute.xlu0 0
    %1902 = vperm.xlu0 %1901, %v1765
    %v1903 = vpop.permute.xlu0 %1902
    %1904 = vset.pattern.permute.xlu0 0
    %1905 = vperm.xlu0 %1904, %v1766
    %v1906 = vpop.permute.xlu0 %1905
    %1907 = vset.pattern.permute.xlu0 0
    %1908 = vperm.xlu0 %1907, %v1767
    %v1909 = vpop.permute.xlu0 %1908
    %1910 = vset.pattern.permute.xlu0 0
    %1911 = vperm.xlu0 %1910, %v1768
    %v1912 = vpop.permute.xlu0 %1911
    %1913 = vset.pattern.permute.xlu0 0
    %1914 = vperm.xlu0 %1913, %v1769
    %v1915 = vpop.permute.xlu0 %1914
    %1916 = vset.pattern.permute.xlu0 0
    %1917 = vperm.xlu0 %1916, %v1770
    %v1918 = vpop.permute.xlu0 %1917
    %1919 = vset.pattern.permute.xlu0 0
    %1920 = vperm.xlu0 %1919, %v1771
    %v1921 = vpop.permute.xlu0 %1920
    %1922 = vset.pattern.permute.xlu0 0
    %1923 = vperm.xlu0 %1922, %v1772
    %v1924 = vpop.permute.xlu0 %1923
    %1925 = vset.pattern.permute.xlu0 0
    %1926 = vperm.xlu0 %1925, %v1773
    %v1927 = vpop.permute.xlu0 %1926
    %1928 = vset.pattern.permute.xlu0 0
    %1929 = vperm.xlu0 %1928, %v1774
    %v1930 = vpop.permute.xlu0 %1929
    %1931 = vset.pattern.permute.xlu0 0
    %1932 = vperm.xlu0 %1931, %v1775
    %v1933 = vpop.permute.xlu0 %1932
    %1934 = vset.pattern.permute.xlu0 0
    %1935 = vperm.xlu0 %1934, %v1776
    %v1936 = vpop.permute.xlu0 %1935
    %1937 = vset.pattern.permute.xlu0 0
    %1938 = vperm.xlu0 %1937, %v1777
    %v1939 = vpop.permute.xlu0 %1938
    %1940 = vset.pattern.permute.xlu0 0
    %1941 = vperm.xlu0 %1940, %v1778
    %v1942 = vpop.permute.xlu0 %1941
    %1943 = vset.pattern.permute.xlu0 0
    %1944 = vperm.xlu0 %1943, %v1779
    %v1945 = vpop.permute.xlu0 %1944
    %1946 = vset.pattern.permute.xlu0 0
    %1947 = vperm.xlu0 %1946, %v1780
    %v1948 = vpop.permute.xlu0 %1947
    %1949 = vset.pattern.permute.xlu0 0
    %1950 = vperm.xlu0 %1949, %v1781
    %v1951 = vpop.permute.xlu0 %1950
    %1952 = vset.pattern.permute.xlu0 0
    %1953 = vperm.xlu0 %1952, %v1782
    %v1954 = vpop.permute.xlu0 %1953
    %1955 = vset.pattern.permute.xlu0 0
    %1956 = vperm.xlu0 %1955, %v1783
    %v1957 = vpop.permute.xlu0 %1956
    %1958 = vset.pattern.permute.xlu0 0
    %1959 = vperm.xlu0 %1958, %v1784
    %v1960 = vpop.permute.xlu0 %1959
    %1961 = vset.pattern.permute.xlu0 0
    %1962 = vperm.xlu0 %1961, %v1785
    %v1963 = vpop.permute.xlu0 %1962
    %1964 = vset.pattern.permute.xlu0 0
    %1965 = vperm.xlu0 %1964, %v1786
    %v1966 = vpop.permute.xlu0 %1965
    %1967 = vset.pattern.permute.xlu0 0
    %1968 = vperm.xlu0 %1967, %v1787
    %v1969 = vpop.permute.xlu0 %1968
    %1970 = vset.pattern.permute.xlu0 0
    %1971 = vperm.xlu0 %1970, %v1788
    %v1972 = vpop.permute.xlu0 %1971
    %1973 = vset.pattern.permute.xlu0 0
    %1974 = vperm.xlu0 %1973, %v1789
    %v1975 = vpop.permute.xlu0 %1974
    %1976 = vset.pattern.permute.xlu0 0
    %1977 = vperm.xlu0 %1976, %v1790
    %v1978 = vpop.permute.xlu0 %1977
    %1979 = vset.pattern.permute.xlu0 0
    %1980 = vperm.xlu0 %1979, %v1791
    %v1981 = vpop.permute.xlu0 %1980
    %1982 = vset.pattern.permute.xlu0 0
    %1983 = vperm.xlu0 %1982, %v1792
    %v1984 = vpop.permute.xlu0 %1983
    %vm1985 = vcmp.eq.s32.totalorder %v1795, 1
    %vm1986 = vcmp.eq.s32.totalorder %v1798, 1
    %vm1987 = vcmp.eq.s32.totalorder %v1801, 1
    %vm1988 = vcmp.eq.s32.totalorder %v1804, 1
    %vm1989 = vcmp.eq.s32.totalorder %v1807, 1
    %vm1990 = vcmp.eq.s32.totalorder %v1810, 1
    %vm1991 = vcmp.eq.s32.totalorder %v1813, 1
    %vm1992 = vcmp.eq.s32.totalorder %v1816, 1
    %vm1993 = vcmp.eq.s32.totalorder %v1819, 1
    %vm1994 = vcmp.eq.s32.totalorder %v1822, 1
    %vm1995 = vcmp.eq.s32.totalorder %v1825, 1
    %vm1996 = vcmp.eq.s32.totalorder %v1828, 1
    %vm1997 = vcmp.eq.s32.totalorder %v1831, 1
    %vm1998 = vcmp.eq.s32.totalorder %v1834, 1
    %vm1999 = vcmp.eq.s32.totalorder %v1837, 1
    %vm2000 = vcmp.eq.s32.totalorder %v1840, 1
    %vm2001 = vcmp.eq.s32.totalorder %v1843, 1
    %vm2002 = vcmp.eq.s32.totalorder %v1846, 1
    %vm2003 = vcmp.eq.s32.totalorder %v1849, 1
    %vm2004 = vcmp.eq.s32.totalorder %v1852, 1
    %vm2005 = vcmp.eq.s32.totalorder %v1855, 1
    %vm2006 = vcmp.eq.s32.totalorder %v1858, 1
    %vm2007 = vcmp.eq.s32.totalorder %v1861, 1
    %vm2008 = vcmp.eq.s32.totalorder %v1864, 1
    %vm2009 = vcmp.eq.s32.totalorder %v1867, 1
    %vm2010 = vcmp.eq.s32.totalorder %v1870, 1
    %vm2011 = vcmp.eq.s32.totalorder %v1873, 1
    %vm2012 = vcmp.eq.s32.totalorder %v1876, 1
    %vm2013 = vcmp.eq.s32.totalorder %v1879, 1
    %vm2014 = vcmp.eq.s32.totalorder %v1882, 1
    %vm2015 = vcmp.eq.s32.totalorder %v1885, 1
    %vm2016 = vcmp.eq.s32.totalorder %v1888, 1
    %vm2017 = vcmp.eq.s32.totalorder %v1891, 1
    %vm2018 = vcmp.eq.s32.totalorder %v1894, 1
    %vm2019 = vcmp.eq.s32.totalorder %v1897, 1
    %vm2020 = vcmp.eq.s32.totalorder %v1900, 1
    %vm2021 = vcmp.eq.s32.totalorder %v1903, 1
    %vm2022 = vcmp.eq.s32.totalorder %v1906, 1
    %vm2023 = vcmp.eq.s32.totalorder %v1909, 1
    %vm2024 = vcmp.eq.s32.totalorder %v1912, 1
    %vm2025 = vcmp.eq.s32.totalorder %v1915, 1
    %vm2026 = vcmp.eq.s32.totalorder %v1918, 1
    %vm2027 = vcmp.eq.s32.totalorder %v1921, 1
    %vm2028 = vcmp.eq.s32.totalorder %v1924, 1
    %vm2029 = vcmp.eq.s32.totalorder %v1927, 1
    %vm2030 = vcmp.eq.s32.totalorder %v1930, 1
    %vm2031 = vcmp.eq.s32.totalorder %v1933, 1
    %vm2032 = vcmp.eq.s32.totalorder %v1936, 1
    %vm2033 = vcmp.eq.s32.totalorder %v1939, 1
    %vm2034 = vcmp.eq.s32.totalorder %v1942, 1
    %vm2035 = vcmp.eq.s32.totalorder %v1945, 1
    %vm2036 = vcmp.eq.s32.totalorder %v1948, 1
    %vm2037 = vcmp.eq.s32.totalorder %v1951, 1
    %vm2038 = vcmp.eq.s32.totalorder %v1954, 1
    %vm2039 = vcmp.eq.s32.totalorder %v1957, 1
    %vm2040 = vcmp.eq.s32.totalorder %v1960, 1
    %vm2041 = vcmp.eq.s32.totalorder %v1963, 1
    %vm2042 = vcmp.eq.s32.totalorder %v1966, 1
    %vm2043 = vcmp.eq.s32.totalorder %v1969, 1
    %vm2044 = vcmp.eq.s32.totalorder %v1972, 1
    %vm2045 = vcmp.eq.s32.totalorder %v1975, 1
    %vm2046 = vcmp.eq.s32.totalorder %v1978, 1
    %vm2047 = vcmp.eq.s32.totalorder %v1981, 1
    %vm2048 = vcmp.eq.s32.totalorder %v1984, 1
    %v2049 = vsel %vm1985, %v444, 0.0
    %v2050 = vsel %vm1986, %v445, 0.0
    %v2051 = vsel %vm1987, %v382, 0.0
    %v2052 = vsel %vm1988, %v383, 0.0
    %v2053 = vsel %vm1989, %v384, 0.0
    %v2054 = vsel %vm1990, %v385, 0.0
    %v2055 = vsel %vm1991, %v386, 0.0
    %v2056 = vsel %vm1992, %v387, 0.0
    %v2057 = vsel %vm1993, %v388, 0.0
    %v2058 = vsel %vm1994, %v389, 0.0
    %v2059 = vsel %vm1995, %v390, 0.0
    %v2060 = vsel %vm1996, %v391, 0.0
    %v2061 = vsel %vm1997, %v392, 0.0
    %v2062 = vsel %vm1998, %v393, 0.0
    %v2063 = vsel %vm1999, %v394, 0.0
    %v2064 = vsel %vm2000, %v395, 0.0
    %v2065 = vsel %vm2001, %v396, 0.0
    %v2066 = vsel %vm2002, %v397, 0.0
    %v2067 = vsel %vm2003, %v398, 0.0
    %v2068 = vsel %vm2004, %v399, 0.0
    %v2069 = vsel %vm2005, %v400, 0.0
    %v2070 = vsel %vm2006, %v401, 0.0
    %v2071 = vsel %vm2007, %v402, 0.0
    %v2072 = vsel %vm2008, %v403, 0.0
    %v2073 = vsel %vm2009, %v404, 0.0
    %v2074 = vsel %vm2010, %v405, 0.0
    %v2075 = vsel %vm2011, %v406, 0.0
    %v2076 = vsel %vm2012, %v407, 0.0
    %v2077 = vsel %vm2013, %v408, 0.0
    %v2078 = vsel %vm2014, %v409, 0.0
    %v2079 = vsel %vm2015, %v410, 0.0
    %v2080 = vsel %vm2016, %v411, 0.0
    %v2081 = vsel %vm2017, %v412, 0.0
    %v2082 = vsel %vm2018, %v413, 0.0
    %v2083 = vsel %vm2019, %v414, 0.0
    %v2084 = vsel %vm2020, %v415, 0.0
    %v2085 = vsel %vm2021, %v416, 0.0
    %v2086 = vsel %vm2022, %v417, 0.0
    %v2087 = vsel %vm2023, %v418, 0.0
    %v2088 = vsel %vm2024, %v419, 0.0
    %v2089 = vsel %vm2025, %v420, 0.0
    %v2090 = vsel %vm2026, %v421, 0.0
    %v2091 = vsel %vm2027, %v422, 0.0
    %v2092 = vsel %vm2028, %v423, 0.0
    %v2093 = vsel %vm2029, %v424, 0.0
    %v2094 = vsel %vm2030, %v425, 0.0
    %v2095 = vsel %vm2031, %v426, 0.0
    %v2096 = vsel %vm2032, %v427, 0.0
    %v2097 = vsel %vm2033, %v428, 0.0
    %v2098 = vsel %vm2034, %v429, 0.0
    %v2099 = vsel %vm2035, %v430, 0.0
    %v2100 = vsel %vm2036, %v431, 0.0
    %v2101 = vsel %vm2037, %v432, 0.0
    %v2102 = vsel %vm2038, %v433, 0.0
    %v2103 = vsel %vm2039, %v434, 0.0
    %v2104 = vsel %vm2040, %v435, 0.0
    %v2105 = vsel %vm2041, %v436, 0.0
    %v2106 = vsel %vm2042, %v437, 0.0
    %v2107 = vsel %vm2043, %v438, 0.0
    %v2108 = vsel %vm2044, %v439, 0.0
    %v2109 = vsel %vm2045, %v440, 0.0
    %v2110 = vsel %vm2046, %v441, 0.0
    %v2111 = vsel %vm2047, %v442, 0.0
    %v2112 = vsel %vm2048, %v443, 0.0
    %v2113 = vpack.c.bf16 %v2049, %v2049
    %v2114 = vpack.c.bf16 %v2050, %v2050
    %v2115 = vpack.c.bf16 %v2051, %v2051
    %v2116 = vpack.c.bf16 %v2052, %v2052
    %v2117 = vpack.c.bf16 %v2053, %v2053
    %v2118 = vpack.c.bf16 %v2054, %v2054
    %v2119 = vpack.c.bf16 %v2055, %v2055
    %v2120 = vpack.c.bf16 %v2056, %v2056
    %v2121 = vpack.c.bf16 %v2057, %v2057
    %v2122 = vpack.c.bf16 %v2058, %v2058
    %v2123 = vpack.c.bf16 %v2059, %v2059
    %v2124 = vpack.c.bf16 %v2060, %v2060
    %v2125 = vpack.c.bf16 %v2061, %v2061
    %v2126 = vpack.c.bf16 %v2062, %v2062
    %v2127 = vpack.c.bf16 %v2063, %v2063
    %v2128 = vpack.c.bf16 %v2064, %v2064
    %v2129 = vpack.c.bf16 %v2065, %v2065
    %v2130 = vpack.c.bf16 %v2066, %v2066
    %v2131 = vpack.c.bf16 %v2067, %v2067
    %v2132 = vpack.c.bf16 %v2068, %v2068
    %v2133 = vpack.c.bf16 %v2069, %v2069
    %v2134 = vpack.c.bf16 %v2070, %v2070
    %v2135 = vpack.c.bf16 %v2071, %v2071
    %v2136 = vpack.c.bf16 %v2072, %v2072
    %v2137 = vpack.c.bf16 %v2073, %v2073
    %v2138 = vpack.c.bf16 %v2074, %v2074
    %v2139 = vpack.c.bf16 %v2075, %v2075
    %v2140 = vpack.c.bf16 %v2076, %v2076
    %v2141 = vpack.c.bf16 %v2077, %v2077
    %v2142 = vpack.c.bf16 %v2078, %v2078
    %v2143 = vpack.c.bf16 %v2079, %v2079
    %v2144 = vpack.c.bf16 %v2080, %v2080
    %v2145 = vpack.c.bf16 %v2081, %v2081
    %v2146 = vpack.c.bf16 %v2082, %v2082
    %v2147 = vpack.c.bf16 %v2083, %v2083
    %v2148 = vpack.c.bf16 %v2084, %v2084
    %v2149 = vpack.c.bf16 %v2085, %v2085
    %v2150 = vpack.c.bf16 %v2086, %v2086
    %v2151 = vpack.c.bf16 %v2087, %v2087
    %v2152 = vpack.c.bf16 %v2088, %v2088
    %v2153 = vpack.c.bf16 %v2089, %v2089
    %v2154 = vpack.c.bf16 %v2090, %v2090
    %v2155 = vpack.c.bf16 %v2091, %v2091
    %v2156 = vpack.c.bf16 %v2092, %v2092
    %v2157 = vpack.c.bf16 %v2093, %v2093
    %v2158 = vpack.c.bf16 %v2094, %v2094
    %v2159 = vpack.c.bf16 %v2095, %v2095
    %v2160 = vpack.c.bf16 %v2096, %v2096
    %v2161 = vpack.c.bf16 %v2097, %v2097
    %v2162 = vpack.c.bf16 %v2098, %v2098
    %v2163 = vpack.c.bf16 %v2099, %v2099
    %v2164 = vpack.c.bf16 %v2100, %v2100
    %v2165 = vpack.c.bf16 %v2101, %v2101
    %v2166 = vpack.c.bf16 %v2102, %v2102
    %v2167 = vpack.c.bf16 %v2103, %v2103
    %v2168 = vpack.c.bf16 %v2104, %v2104
    %v2169 = vpack.c.bf16 %v2105, %v2105
    %v2170 = vpack.c.bf16 %v2106, %v2106
    %v2171 = vpack.c.bf16 %v2107, %v2107
    %v2172 = vpack.c.bf16 %v2108, %v2108
    %v2173 = vpack.c.bf16 %v2109, %v2109
    %v2174 = vpack.c.bf16 %v2110, %v2110
    %v2175 = vpack.c.bf16 %v2111, %v2111
    %v2176 = vpack.c.bf16 %v2112, %v2112
    %2177 = vst [vmem:[#allocation2 + $0x4] sm:$0xf] %v2113
    %2178 = vst [vmem:[#allocation2 + $0x28] sm:$0xf] %v2114
    %2179 = vst [vmem:[#allocation2 + $0x4c] sm:$0xf] %v2115
    %2180 = vst [vmem:[#allocation2 + $0x70] sm:$0xf] %v2116
    %2181 = vst [vmem:[#allocation2 + $0x94] sm:$0xf] %v2117
    %2182 = vst [vmem:[#allocation2 + $0xb8] sm:$0xf] %v2118
    %2183 = vst [vmem:[#allocation2 + $0xdc] sm:$0xf] %v2119
    %2184 = vst [vmem:[#allocation2 + $0x100] sm:$0xf] %v2120
    %2185 = vst [vmem:[#allocation2 + $0x124] sm:$0xf] %v2121
    %2186 = vst [vmem:[#allocation2 + $0x148] sm:$0xf] %v2122
    %2187 = vst [vmem:[#allocation2 + $0x16c] sm:$0xf] %v2123
    %2188 = vst [vmem:[#allocation2 + $0x190] sm:$0xf] %v2124
    %2189 = vst [vmem:[#allocation2 + $0x1b4] sm:$0xf] %v2125
    %2190 = vst [vmem:[#allocation2 + $0x1d8] sm:$0xf] %v2126
    %2191 = vst [vmem:[#allocation2 + $0x1fc] sm:$0xf] %v2127
    %2192 = vst [vmem:[#allocation2 + $0x220] sm:$0xf] %v2128
    %2193 = vst [vmem:[#allocation2 + $0x244] sm:$0xf] %v2129
    %2194 = vst [vmem:[#allocation2 + $0x268] sm:$0xf] %v2130
    %2195 = vst [vmem:[#allocation2 + $0x28c] sm:$0xf] %v2131
    %2196 = vst [vmem:[#allocation2 + $0x2b0] sm:$0xf] %v2132
    %2197 = vst [vmem:[#allocation2 + $0x2d4] sm:$0xf] %v2133
    %2198 = vst [vmem:[#allocation2 + $0x2f8] sm:$0xf] %v2134
    %2199 = vst [vmem:[#allocation2 + $0x31c] sm:$0xf] %v2135
    %2200 = vst [vmem:[#allocation2 + $0x340] sm:$0xf] %v2136
    %2201 = vst [vmem:[#allocation2 + $0x364] sm:$0xf] %v2137
    %2202 = vst [vmem:[#allocation2 + $0x388] sm:$0xf] %v2138
    %2203 = vst [vmem:[#allocation2 + $0x3ac] sm:$0xf] %v2139
    %2204 = vst [vmem:[#allocation2 + $0x3d0] sm:$0xf] %v2140
    %2205 = vst [vmem:[#allocation2 + $0x3f4] sm:$0xf] %v2141
    %2206 = vst [vmem:[#allocation2 + $0x418] sm:$0xf] %v2142
    %2207 = vst [vmem:[#allocation2 + $0x43c] sm:$0xf] %v2143
    %2208 = vst [vmem:[#allocation2 + $0x460] sm:$0xf] %v2144
    %2209 = vst [vmem:[#allocation2 + $0x484] sm:$0xf] %v2145
    %2210 = vst [vmem:[#allocation2 + $0x4a8] sm:$0xf] %v2146
    %2211 = vst [vmem:[#allocation2 + $0x4cc] sm:$0xf] %v2147
    %2212 = vst [vmem:[#allocation2 + $0x4f0] sm:$0xf] %v2148
    %2213 = vst [vmem:[#allocation2 + $0x514] sm:$0xf] %v2149
    %2214 = vst [vmem:[#allocation2 + $0x538] sm:$0xf] %v2150
    %2215 = vst [vmem:[#allocation2 + $0x55c] sm:$0xf] %v2151
    %2216 = vst [vmem:[#allocation2 + $0x580] sm:$0xf] %v2152
    %2217 = vst [vmem:[#allocation2 + $0x5a4] sm:$0xf] %v2153
    %2218 = vst [vmem:[#allocation2 + $0x5c8] sm:$0xf] %v2154
    %2219 = vst [vmem:[#allocation2 + $0x5ec] sm:$0xf] %v2155
    %2220 = vst [vmem:[#allocation2 + $0x610] sm:$0xf] %v2156
    %2221 = vst [vmem:[#allocation2 + $0x634] sm:$0xf] %v2157
    %2222 = vst [vmem:[#allocation2 + $0x658] sm:$0xf] %v2158
    %2223 = vst [vmem:[#allocation2 + $0x67c] sm:$0xf] %v2159
    %2224 = vst [vmem:[#allocation2 + $0x6a0] sm:$0xf] %v2160
    %2225 = vst [vmem:[#allocation2 + $0x6c4] sm:$0xf] %v2161
    %2226 = vst [vmem:[#allocation2 + $0x6e8] sm:$0xf] %v2162
    %2227 = vst [vmem:[#allocation2 + $0x70c] sm:$0xf] %v2163
    %2228 = vst [vmem:[#allocation2 + $0x730] sm:$0xf] %v2164
    %2229 = vst [vmem:[#allocation2 + $0x754] sm:$0xf] %v2165
    %2230 = vst [vmem:[#allocation2 + $0x778] sm:$0xf] %v2166
    %2231 = vst [vmem:[#allocation2 + $0x79c] sm:$0xf] %v2167
    %2232 = vst [vmem:[#allocation2 + $0x7c0] sm:$0xf] %v2168
    %2233 = vst [vmem:[#allocation2 + $0x7e4] sm:$0xf] %v2169
    %2234 = vst [vmem:[#allocation2 + $0x808] sm:$0xf] %v2170
    %2235 = vst [vmem:[#allocation2 + $0x82c] sm:$0xf] %v2171
    %2236 = vst [vmem:[#allocation2 + $0x850] sm:$0xf] %v2172
    %2237 = vst [vmem:[#allocation2 + $0x874] sm:$0xf] %v2173
    %2238 = vst [vmem:[#allocation2 + $0x898] sm:$0xf] %v2174
    %2239 = vst [vmem:[#allocation2 + $0x8bc] sm:$0xf] %v2175
    %2240 = vst [vmem:[#allocation2 + $0x8e0] sm:$0xf] %v2176
    %v2241 = vrot.slane %v382, 1
    %v2242 = vrot.slane %v383, 1
    %v2243 = vrot.slane %v384, 1
    %v2244 = vrot.slane %v385, 1
    %v2245 = vrot.slane %v386, 1
    %v2246 = vrot.slane %v387, 1
    %v2247 = vrot.slane %v388, 1
    %v2248 = vrot.slane %v389, 1
    %v2249 = vrot.slane %v390, 1
    %v2250 = vrot.slane %v391, 1
    %v2251 = vrot.slane %v392, 1
    %v2252 = vrot.slane %v393, 1
    %v2253 = vrot.slane %v394, 1
    %v2254 = vrot.slane %v395, 1
    %v2255 = vrot.slane %v396, 1
    %v2256 = vrot.slane %v397, 1
    %v2257 = vrot.slane %v398, 1
    %v2258 = vrot.slane %v399, 1
    %v2259 = vrot.slane %v400, 1
    %v2260 = vrot.slane %v401, 1
    %v2261 = vrot.slane %v402, 1
    %v2262 = vrot.slane %v403, 1
    %v2263 = vrot.slane %v404, 1
    %v2264 = vrot.slane %v405, 1
    %v2265 = vrot.slane %v406, 1
    %v2266 = vrot.slane %v407, 1
    %v2267 = vrot.slane %v408, 1
    %v2268 = vrot.slane %v409, 1
    %v2269 = vrot.slane %v410, 1
    %v2270 = vrot.slane %v411, 1
    %v2271 = vrot.slane %v412, 1
    %v2272 = vrot.slane %v413, 1
    %v2273 = vrot.slane %v414, 1
    %v2274 = vrot.slane %v415, 1
    %v2275 = vrot.slane %v416, 1
    %v2276 = vrot.slane %v417, 1
    %v2277 = vrot.slane %v418, 1
    %v2278 = vrot.slane %v419, 1
    %v2279 = vrot.slane %v420, 1
    %v2280 = vrot.slane %v421, 1
    %v2281 = vrot.slane %v422, 1
    %v2282 = vrot.slane %v423, 1
    %v2283 = vrot.slane %v424, 1
    %v2284 = vrot.slane %v425, 1
    %v2285 = vrot.slane %v426, 1
    %v2286 = vrot.slane %v427, 1
    %v2287 = vrot.slane %v428, 1
    %v2288 = vrot.slane %v429, 1
    %v2289 = vrot.slane %v430, 1
    %v2290 = vrot.slane %v431, 1
    %v2291 = vrot.slane %v432, 1
    %v2292 = vrot.slane %v433, 1
    %v2293 = vrot.slane %v434, 1
    %v2294 = vrot.slane %v435, 1
    %v2295 = vrot.slane %v436, 1
    %v2296 = vrot.slane %v437, 1
    %v2297 = vrot.slane %v438, 1
    %v2298 = vrot.slane %v439, 1
    %v2299 = vrot.slane %v440, 1
    %v2300 = vrot.slane %v441, 1
    %v2301 = vrot.slane %v442, 1
    %v2302 = vrot.slane %v443, 1
    %v2303 = vrot.slane %v444, 1
    %v2304 = vrot.slane %v445, 1
    %vm2305 = vcmp.lt.s32.totalorder %v1151, 7
    %v2306 = vsel %vm2305, %v2303, %v2304
    %v2307 = vsel %vm2305, %v2302, %v2303
    %v2308 = vsel %vm2305, %v2301, %v2302
    %v2309 = vsel %vm2305, %v2300, %v2301
    %v2310 = vsel %vm2305, %v2299, %v2300
    %v2311 = vsel %vm2305, %v2298, %v2299
    %v2312 = vsel %vm2305, %v2297, %v2298
    %v2313 = vsel %vm2305, %v2296, %v2297
    %v2314 = vsel %vm2305, %v2295, %v2296
    %v2315 = vsel %vm2305, %v2294, %v2295
    %v2316 = vsel %vm2305, %v2293, %v2294
    %v2317 = vsel %vm2305, %v2292, %v2293
    %v2318 = vsel %vm2305, %v2291, %v2292
    %v2319 = vsel %vm2305, %v2290, %v2291
    %v2320 = vsel %vm2305, %v2289, %v2290
    %v2321 = vsel %vm2305, %v2288, %v2289
    %v2322 = vsel %vm2305, %v2287, %v2288
    %v2323 = vsel %vm2305, %v2286, %v2287
    %v2324 = vsel %vm2305, %v2285, %v2286
    %v2325 = vsel %vm2305, %v2284, %v2285
    %v2326 = vsel %vm2305, %v2283, %v2284
    %v2327 = vsel %vm2305, %v2282, %v2283
    %v2328 = vsel %vm2305, %v2281, %v2282
    %v2329 = vsel %vm2305, %v2280, %v2281
    %v2330 = vsel %vm2305, %v2279, %v2280
    %v2331 = vsel %vm2305, %v2278, %v2279
    %v2332 = vsel %vm2305, %v2277, %v2278
    %v2333 = vsel %vm2305, %v2276, %v2277
    %v2334 = vsel %vm2305, %v2275, %v2276
    %v2335 = vsel %vm2305, %v2274, %v2275
    %v2336 = vsel %vm2305, %v2273, %v2274
    %v2337 = vsel %vm2305, %v2272, %v2273
    %v2338 = vsel %vm2305, %v2271, %v2272
    %v2339 = vsel %vm2305, %v2270, %v2271
    %v2340 = vsel %vm2305, %v2269, %v2270
    %v2341 = vsel %vm2305, %v2268, %v2269
    %v2342 = vsel %vm2305, %v2267, %v2268
    %v2343 = vsel %vm2305, %v2266, %v2267
    %v2344 = vsel %vm2305, %v2265, %v2266
    %v2345 = vsel %vm2305, %v2264, %v2265
    %v2346 = vsel %vm2305, %v2263, %v2264
    %v2347 = vsel %vm2305, %v2262, %v2263
    %v2348 = vsel %vm2305, %v2261, %v2262
    %v2349 = vsel %vm2305, %v2260, %v2261
    %v2350 = vsel %vm2305, %v2259, %v2260
    %v2351 = vsel %vm2305, %v2258, %v2259
    %v2352 = vsel %vm2305, %v2257, %v2258
    %v2353 = vsel %vm2305, %v2256, %v2257
    %v2354 = vsel %vm2305, %v2255, %v2256
    %v2355 = vsel %vm2305, %v2254, %v2255
    %v2356 = vsel %vm2305, %v2253, %v2254
    %v2357 = vsel %vm2305, %v2252, %v2253
    %v2358 = vsel %vm2305, %v2251, %v2252
    %v2359 = vsel %vm2305, %v2250, %v2251
    %v2360 = vsel %vm2305, %v2249, %v2250
    %v2361 = vsel %vm2305, %v2248, %v2249
    %v2362 = vsel %vm2305, %v2247, %v2248
    %v2363 = vsel %vm2305, %v2246, %v2247
    %v2364 = vsel %vm2305, %v2245, %v2246
    %v2365 = vsel %vm2305, %v2244, %v2245
    %v2366 = vsel %vm2305, %v2243, %v2244
    %v2367 = vsel %vm2305, %v2242, %v2243
    %v2368 = vsel %vm2305, %v2241, %v2242
    %v2369 = vsel %vm2305, %v2304, %v2241
    %v2370 = vsel %vm894, 1, 0
    %v2371 = vsel %vm895, 1, 0
    %v2372 = vsel %vm896, 1, 0
    %v2373 = vsel %vm897, 1, 0
    %v2374 = vsel %vm898, 1, 0
    %v2375 = vsel %vm899, 1, 0
    %v2376 = vsel %vm900, 1, 0
    %v2377 = vsel %vm901, 1, 0
    %v2378 = vsel %vm902, 1, 0
    %v2379 = vsel %vm903, 1, 0
    %v2380 = vsel %vm904, 1, 0
    %v2381 = vsel %vm905, 1, 0
    %v2382 = vsel %vm906, 1, 0
    %v2383 = vsel %vm907, 1, 0
    %v2384 = vsel %vm908, 1, 0
    %v2385 = vsel %vm909, 1, 0
    %v2386 = vsel %vm910, 1, 0
    %v2387 = vsel %vm911, 1, 0
    %v2388 = vsel %vm912, 1, 0
    %v2389 = vsel %vm913, 1, 0
    %v2390 = vsel %vm914, 1, 0
    %v2391 = vsel %vm915, 1, 0
    %v2392 = vsel %vm916, 1, 0
    %v2393 = vsel %vm917, 1, 0
    %v2394 = vsel %vm918, 1, 0
    %v2395 = vsel %vm919, 1, 0
    %v2396 = vsel %vm920, 1, 0
    %v2397 = vsel %vm921, 1, 0
    %v2398 = vsel %vm922, 1, 0
    %v2399 = vsel %vm923, 1, 0
    %v2400 = vsel %vm924, 1, 0
    %v2401 = vsel %vm925, 1, 0
    %v2402 = vsel %vm926, 1, 0
    %v2403 = vsel %vm927, 1, 0
    %v2404 = vsel %vm928, 1, 0
    %v2405 = vsel %vm929, 1, 0
    %v2406 = vsel %vm930, 1, 0
    %v2407 = vsel %vm931, 1, 0
    %v2408 = vsel %vm932, 1, 0
    %v2409 = vsel %vm933, 1, 0
    %v2410 = vsel %vm934, 1, 0
    %v2411 = vsel %vm935, 1, 0
    %v2412 = vsel %vm936, 1, 0
    %v2413 = vsel %vm937, 1, 0
    %v2414 = vsel %vm938, 1, 0
    %v2415 = vsel %vm939, 1, 0
    %v2416 = vsel %vm940, 1, 0
    %v2417 = vsel %vm941, 1, 0
    %v2418 = vsel %vm942, 1, 0
    %v2419 = vsel %vm943, 1, 0
    %v2420 = vsel %vm944, 1, 0
    %v2421 = vsel %vm945, 1, 0
    %v2422 = vsel %vm946, 1, 0
    %v2423 = vsel %vm947, 1, 0
    %v2424 = vsel %vm948, 1, 0
    %v2425 = vsel %vm949, 1, 0
    %v2426 = vsel %vm950, 1, 0
    %v2427 = vsel %vm951, 1, 0
    %v2428 = vsel %vm952, 1, 0
    %v2429 = vsel %vm953, 1, 0
    %v2430 = vsel %vm954, 1, 0
    %v2431 = vsel %vm955, 1, 0
    %v2432 = vsel %vm956, 1, 0
    %v2433 = vsel %vm957, 1, 0
    %2434 = vset.pattern.permute.xlu0 0
    %2435 = vperm.xlu0 %2434, %v2370
    %v2436 = vpop.permute.xlu0 %2435
    %2437 = vset.pattern.permute.xlu0 0
    %2438 = vperm.xlu0 %2437, %v2371
    %v2439 = vpop.permute.xlu0 %2438
    %2440 = vset.pattern.permute.xlu0 0
    %2441 = vperm.xlu0 %2440, %v2372
    %v2442 = vpop.permute.xlu0 %2441
    %2443 = vset.pattern.permute.xlu0 0
    %2444 = vperm.xlu0 %2443, %v2373
    %v2445 = vpop.permute.xlu0 %2444
    %2446 = vset.pattern.permute.xlu0 0
    %2447 = vperm.xlu0 %2446, %v2374
    %v2448 = vpop.permute.xlu0 %2447
    %2449 = vset.pattern.permute.xlu0 0
    %2450 = vperm.xlu0 %2449, %v2375
    %v2451 = vpop.permute.xlu0 %2450
    %2452 = vset.pattern.permute.xlu0 0
    %2453 = vperm.xlu0 %2452, %v2376
    %v2454 = vpop.permute.xlu0 %2453
    %2455 = vset.pattern.permute.xlu0 0
    %2456 = vperm.xlu0 %2455, %v2377
    %v2457 = vpop.permute.xlu0 %2456
    %2458 = vset.pattern.permute.xlu0 0
    %2459 = vperm.xlu0 %2458, %v2378
    %v2460 = vpop.permute.xlu0 %2459
    %2461 = vset.pattern.permute.xlu0 0
    %2462 = vperm.xlu0 %2461, %v2379
    %v2463 = vpop.permute.xlu0 %2462
    %2464 = vset.pattern.permute.xlu0 0
    %2465 = vperm.xlu0 %2464, %v2380
    %v2466 = vpop.permute.xlu0 %2465
    %2467 = vset.pattern.permute.xlu0 0
    %2468 = vperm.xlu0 %2467, %v2381
    %v2469 = vpop.permute.xlu0 %2468
    %2470 = vset.pattern.permute.xlu0 0
    %2471 = vperm.xlu0 %2470, %v2382
    %v2472 = vpop.permute.xlu0 %2471
    %2473 = vset.pattern.permute.xlu0 0
    %2474 = vperm.xlu0 %2473, %v2383
    %v2475 = vpop.permute.xlu0 %2474
    %2476 = vset.pattern.permute.xlu0 0
    %2477 = vperm.xlu0 %2476, %v2384
    %v2478 = vpop.permute.xlu0 %2477
    %2479 = vset.pattern.permute.xlu0 0
    %2480 = vperm.xlu0 %2479, %v2385
    %v2481 = vpop.permute.xlu0 %2480
    %2482 = vset.pattern.permute.xlu0 0
    %2483 = vperm.xlu0 %2482, %v2386
    %v2484 = vpop.permute.xlu0 %2483
    %2485 = vset.pattern.permute.xlu0 0
    %2486 = vperm.xlu0 %2485, %v2387
    %v2487 = vpop.permute.xlu0 %2486
    %2488 = vset.pattern.permute.xlu0 0
    %2489 = vperm.xlu0 %2488, %v2388
    %v2490 = vpop.permute.xlu0 %2489
    %2491 = vset.pattern.permute.xlu0 0
    %2492 = vperm.xlu0 %2491, %v2389
    %v2493 = vpop.permute.xlu0 %2492
    %2494 = vset.pattern.permute.xlu0 0
    %2495 = vperm.xlu0 %2494, %v2390
    %v2496 = vpop.permute.xlu0 %2495
    %2497 = vset.pattern.permute.xlu0 0
    %2498 = vperm.xlu0 %2497, %v2391
    %v2499 = vpop.permute.xlu0 %2498
    %2500 = vset.pattern.permute.xlu0 0
    %2501 = vperm.xlu0 %2500, %v2392
    %v2502 = vpop.permute.xlu0 %2501
    %2503 = vset.pattern.permute.xlu0 0
    %2504 = vperm.xlu0 %2503, %v2393
    %v2505 = vpop.permute.xlu0 %2504
    %2506 = vset.pattern.permute.xlu0 0
    %2507 = vperm.xlu0 %2506, %v2394
    %v2508 = vpop.permute.xlu0 %2507
    %2509 = vset.pattern.permute.xlu0 0
    %2510 = vperm.xlu0 %2509, %v2395
    %v2511 = vpop.permute.xlu0 %2510
    %2512 = vset.pattern.permute.xlu0 0
    %2513 = vperm.xlu0 %2512, %v2396
    %v2514 = vpop.permute.xlu0 %2513
    %2515 = vset.pattern.permute.xlu0 0
    %2516 = vperm.xlu0 %2515, %v2397
    %v2517 = vpop.permute.xlu0 %2516
    %2518 = vset.pattern.permute.xlu0 0
    %2519 = vperm.xlu0 %2518, %v2398
    %v2520 = vpop.permute.xlu0 %2519
    %2521 = vset.pattern.permute.xlu0 0
    %2522 = vperm.xlu0 %2521, %v2399
    %v2523 = vpop.permute.xlu0 %2522
    %2524 = vset.pattern.permute.xlu0 0
    %2525 = vperm.xlu0 %2524, %v2400
    %v2526 = vpop.permute.xlu0 %2525
    %2527 = vset.pattern.permute.xlu0 0
    %2528 = vperm.xlu0 %2527, %v2401
    %v2529 = vpop.permute.xlu0 %2528
    %2530 = vset.pattern.permute.xlu0 0
    %2531 = vperm.xlu0 %2530, %v2402
    %v2532 = vpop.permute.xlu0 %2531
    %2533 = vset.pattern.permute.xlu0 0
    %2534 = vperm.xlu0 %2533, %v2403
    %v2535 = vpop.permute.xlu0 %2534
    %2536 = vset.pattern.permute.xlu0 0
    %2537 = vperm.xlu0 %2536, %v2404
    %v2538 = vpop.permute.xlu0 %2537
    %2539 = vset.pattern.permute.xlu0 0
    %2540 = vperm.xlu0 %2539, %v2405
    %v2541 = vpop.permute.xlu0 %2540
    %2542 = vset.pattern.permute.xlu0 0
    %2543 = vperm.xlu0 %2542, %v2406
    %v2544 = vpop.permute.xlu0 %2543
    %2545 = vset.pattern.permute.xlu0 0
    %2546 = vperm.xlu0 %2545, %v2407
    %v2547 = vpop.permute.xlu0 %2546
    %2548 = vset.pattern.permute.xlu0 0
    %2549 = vperm.xlu0 %2548, %v2408
    %v2550 = vpop.permute.xlu0 %2549
    %2551 = vset.pattern.permute.xlu0 0
    %2552 = vperm.xlu0 %2551, %v2409
    %v2553 = vpop.permute.xlu0 %2552
    %2554 = vset.pattern.permute.xlu0 0
    %2555 = vperm.xlu0 %2554, %v2410
    %v2556 = vpop.permute.xlu0 %2555
    %2557 = vset.pattern.permute.xlu0 0
    %2558 = vperm.xlu0 %2557, %v2411
    %v2559 = vpop.permute.xlu0 %2558
    %2560 = vset.pattern.permute.xlu0 0
    %2561 = vperm.xlu0 %2560, %v2412
    %v2562 = vpop.permute.xlu0 %2561
    %2563 = vset.pattern.permute.xlu0 0
    %2564 = vperm.xlu0 %2563, %v2413
    %v2565 = vpop.permute.xlu0 %2564
    %2566 = vset.pattern.permute.xlu0 0
    %2567 = vperm.xlu0 %2566, %v2414
    %v2568 = vpop.permute.xlu0 %2567
    %2569 = vset.pattern.permute.xlu0 0
    %2570 = vperm.xlu0 %2569, %v2415
    %v2571 = vpop.permute.xlu0 %2570
    %2572 = vset.pattern.permute.xlu0 0
    %2573 = vperm.xlu0 %2572, %v2416
    %v2574 = vpop.permute.xlu0 %2573
    %2575 = vset.pattern.permute.xlu0 0
    %2576 = vperm.xlu0 %2575, %v2417
    %v2577 = vpop.permute.xlu0 %2576
    %2578 = vset.pattern.permute.xlu0 0
    %2579 = vperm.xlu0 %2578, %v2418
    %v2580 = vpop.permute.xlu0 %2579
    %2581 = vset.pattern.permute.xlu0 0
    %2582 = vperm.xlu0 %2581, %v2419
    %v2583 = vpop.permute.xlu0 %2582
    %2584 = vset.pattern.permute.xlu0 0
    %2585 = vperm.xlu0 %2584, %v2420
    %v2586 = vpop.permute.xlu0 %2585
    %2587 = vset.pattern.permute.xlu0 0
    %2588 = vperm.xlu0 %2587, %v2421
    %v2589 = vpop.permute.xlu0 %2588
    %2590 = vset.pattern.permute.xlu0 0
    %2591 = vperm.xlu0 %2590, %v2422
    %v2592 = vpop.permute.xlu0 %2591
    %2593 = vset.pattern.permute.xlu0 0
    %2594 = vperm.xlu0 %2593, %v2423
    %v2595 = vpop.permute.xlu0 %2594
    %2596 = vset.pattern.permute.xlu0 0
    %2597 = vperm.xlu0 %2596, %v2424
    %v2598 = vpop.permute.xlu0 %2597
    %2599 = vset.pattern.permute.xlu0 0
    %2600 = vperm.xlu0 %2599, %v2425
    %v2601 = vpop.permute.xlu0 %2600
    %2602 = vset.pattern.permute.xlu0 0
    %2603 = vperm.xlu0 %2602, %v2426
    %v2604 = vpop.permute.xlu0 %2603
    %2605 = vset.pattern.permute.xlu0 0
    %2606 = vperm.xlu0 %2605, %v2427
    %v2607 = vpop.permute.xlu0 %2606
    %2608 = vset.pattern.permute.xlu0 0
    %2609 = vperm.xlu0 %2608, %v2428
    %v2610 = vpop.permute.xlu0 %2609
    %2611 = vset.pattern.permute.xlu0 0
    %2612 = vperm.xlu0 %2611, %v2429
    %v2613 = vpop.permute.xlu0 %2612
    %2614 = vset.pattern.permute.xlu0 0
    %2615 = vperm.xlu0 %2614, %v2430
    %v2616 = vpop.permute.xlu0 %2615
    %2617 = vset.pattern.permute.xlu0 0
    %2618 = vperm.xlu0 %2617, %v2431
    %v2619 = vpop.permute.xlu0 %2618
    %2620 = vset.pattern.permute.xlu0 0
    %2621 = vperm.xlu0 %2620, %v2432
    %v2622 = vpop.permute.xlu0 %2621
    %2623 = vset.pattern.permute.xlu0 0
    %2624 = vperm.xlu0 %2623, %v2433
    %v2625 = vpop.permute.xlu0 %2624
    %vm2626 = vcmp.eq.s32.totalorder %v2436, 1
    %vm2627 = vcmp.eq.s32.totalorder %v2439, 1
    %vm2628 = vcmp.eq.s32.totalorder %v2442, 1
    %vm2629 = vcmp.eq.s32.totalorder %v2445, 1
    %vm2630 = vcmp.eq.s32.totalorder %v2448, 1
    %vm2631 = vcmp.eq.s32.totalorder %v2451, 1
    %vm2632 = vcmp.eq.s32.totalorder %v2454, 1
    %vm2633 = vcmp.eq.s32.totalorder %v2457, 1
    %vm2634 = vcmp.eq.s32.totalorder %v2460, 1
    %vm2635 = vcmp.eq.s32.totalorder %v2463, 1
    %vm2636 = vcmp.eq.s32.totalorder %v2466, 1
    %vm2637 = vcmp.eq.s32.totalorder %v2469, 1
    %vm2638 = vcmp.eq.s32.totalorder %v2472, 1
    %vm2639 = vcmp.eq.s32.totalorder %v2475, 1
    %vm2640 = vcmp.eq.s32.totalorder %v2478, 1
    %vm2641 = vcmp.eq.s32.totalorder %v2481, 1
    %vm2642 = vcmp.eq.s32.totalorder %v2484, 1
    %vm2643 = vcmp.eq.s32.totalorder %v2487, 1
    %vm2644 = vcmp.eq.s32.totalorder %v2490, 1
    %vm2645 = vcmp.eq.s32.totalorder %v2493, 1
    %vm2646 = vcmp.eq.s32.totalorder %v2496, 1
    %vm2647 = vcmp.eq.s32.totalorder %v2499, 1
    %vm2648 = vcmp.eq.s32.totalorder %v2502, 1
    %vm2649 = vcmp.eq.s32.totalorder %v2505, 1
    %vm2650 = vcmp.eq.s32.totalorder %v2508, 1
    %vm2651 = vcmp.eq.s32.totalorder %v2511, 1
    %vm2652 = vcmp.eq.s32.totalorder %v2514, 1
    %vm2653 = vcmp.eq.s32.totalorder %v2517, 1
    %vm2654 = vcmp.eq.s32.totalorder %v2520, 1
    %vm2655 = vcmp.eq.s32.totalorder %v2523, 1
    %vm2656 = vcmp.eq.s32.totalorder %v2526, 1
    %vm2657 = vcmp.eq.s32.totalorder %v2529, 1
    %vm2658 = vcmp.eq.s32.totalorder %v2532, 1
    %vm2659 = vcmp.eq.s32.totalorder %v2535, 1
    %vm2660 = vcmp.eq.s32.totalorder %v2538, 1
    %vm2661 = vcmp.eq.s32.totalorder %v2541, 1
    %vm2662 = vcmp.eq.s32.totalorder %v2544, 1
    %vm2663 = vcmp.eq.s32.totalorder %v2547, 1
    %vm2664 = vcmp.eq.s32.totalorder %v2550, 1
    %vm2665 = vcmp.eq.s32.totalorder %v2553, 1
    %vm2666 = vcmp.eq.s32.totalorder %v2556, 1
    %vm2667 = vcmp.eq.s32.totalorder %v2559, 1
    %vm2668 = vcmp.eq.s32.totalorder %v2562, 1
    %vm2669 = vcmp.eq.s32.totalorder %v2565, 1
    %vm2670 = vcmp.eq.s32.totalorder %v2568, 1
    %vm2671 = vcmp.eq.s32.totalorder %v2571, 1
    %vm2672 = vcmp.eq.s32.totalorder %v2574, 1
    %vm2673 = vcmp.eq.s32.totalorder %v2577, 1
    %vm2674 = vcmp.eq.s32.totalorder %v2580, 1
    %vm2675 = vcmp.eq.s32.totalorder %v2583, 1
    %vm2676 = vcmp.eq.s32.totalorder %v2586, 1
    %vm2677 = vcmp.eq.s32.totalorder %v2589, 1
    %vm2678 = vcmp.eq.s32.totalorder %v2592, 1
    %vm2679 = vcmp.eq.s32.totalorder %v2595, 1
    %vm2680 = vcmp.eq.s32.totalorder %v2598, 1
    %vm2681 = vcmp.eq.s32.totalorder %v2601, 1
    %vm2682 = vcmp.eq.s32.totalorder %v2604, 1
    %vm2683 = vcmp.eq.s32.totalorder %v2607, 1
    %vm2684 = vcmp.eq.s32.totalorder %v2610, 1
    %vm2685 = vcmp.eq.s32.totalorder %v2613, 1
    %vm2686 = vcmp.eq.s32.totalorder %v2616, 1
    %vm2687 = vcmp.eq.s32.totalorder %v2619, 1
    %vm2688 = vcmp.eq.s32.totalorder %v2622, 1
    %vm2689 = vcmp.eq.s32.totalorder %v2625, 1
    %v2690 = vsel %vm2626, %v2306, 0.0
    %v2691 = vsel %vm2627, %v2369, 0.0
    %v2692 = vsel %vm2628, %v2368, 0.0
    %v2693 = vsel %vm2629, %v2367, 0.0
    %v2694 = vsel %vm2630, %v2366, 0.0
    %v2695 = vsel %vm2631, %v2365, 0.0
    %v2696 = vsel %vm2632, %v2364, 0.0
    %v2697 = vsel %vm2633, %v2363, 0.0
    %v2698 = vsel %vm2634, %v2362, 0.0
    %v2699 = vsel %vm2635, %v2361, 0.0
    %v2700 = vsel %vm2636, %v2360, 0.0
    %v2701 = vsel %vm2637, %v2359, 0.0
    %v2702 = vsel %vm2638, %v2358, 0.0
    %v2703 = vsel %vm2639, %v2357, 0.0
    %v2704 = vsel %vm2640, %v2356, 0.0
    %v2705 = vsel %vm2641, %v2355, 0.0
    %v2706 = vsel %vm2642, %v2354, 0.0
    %v2707 = vsel %vm2643, %v2353, 0.0
    %v2708 = vsel %vm2644, %v2352, 0.0
    %v2709 = vsel %vm2645, %v2351, 0.0
    %v2710 = vsel %vm2646, %v2350, 0.0
    %v2711 = vsel %vm2647, %v2349, 0.0
    %v2712 = vsel %vm2648, %v2348, 0.0
    %v2713 = vsel %vm2649, %v2347, 0.0
    %v2714 = vsel %vm2650, %v2346, 0.0
    %v2715 = vsel %vm2651, %v2345, 0.0
    %v2716 = vsel %vm2652, %v2344, 0.0
    %v2717 = vsel %vm2653, %v2343, 0.0
    %v2718 = vsel %vm2654, %v2342, 0.0
    %v2719 = vsel %vm2655, %v2341, 0.0
    %v2720 = vsel %vm2656, %v2340, 0.0
    %v2721 = vsel %vm2657, %v2339, 0.0
    %v2722 = vsel %vm2658, %v2338, 0.0
    %v2723 = vsel %vm2659, %v2337, 0.0
    %v2724 = vsel %vm2660, %v2336, 0.0
    %v2725 = vsel %vm2661, %v2335, 0.0
    %v2726 = vsel %vm2662, %v2334, 0.0
    %v2727 = vsel %vm2663, %v2333, 0.0
    %v2728 = vsel %vm2664, %v2332, 0.0
    %v2729 = vsel %vm2665, %v2331, 0.0
    %v2730 = vsel %vm2666, %v2330, 0.0
    %v2731 = vsel %vm2667, %v2329, 0.0
    %v2732 = vsel %vm2668, %v2328, 0.0
    %v2733 = vsel %vm2669, %v2327, 0.0
    %v2734 = vsel %vm2670, %v2326, 0.0
    %v2735 = vsel %vm2671, %v2325, 0.0
    %v2736 = vsel %vm2672, %v2324, 0.0
    %v2737 = vsel %vm2673, %v2323, 0.0
    %v2738 = vsel %vm2674, %v2322, 0.0
    %v2739 = vsel %vm2675, %v2321, 0.0
    %v2740 = vsel %vm2676, %v2320, 0.0
    %v2741 = vsel %vm2677, %v2319, 0.0
    %v2742 = vsel %vm2678, %v2318, 0.0
    %v2743 = vsel %vm2679, %v2317, 0.0
    %v2744 = vsel %vm2680, %v2316, 0.0
    %v2745 = vsel %vm2681, %v2315, 0.0
    %v2746 = vsel %vm2682, %v2314, 0.0
    %v2747 = vsel %vm2683, %v2313, 0.0
    %v2748 = vsel %vm2684, %v2312, 0.0
    %v2749 = vsel %vm2685, %v2311, 0.0
    %v2750 = vsel %vm2686, %v2310, 0.0
    %v2751 = vsel %vm2687, %v2309, 0.0
    %v2752 = vsel %vm2688, %v2308, 0.0
    %v2753 = vsel %vm2689, %v2307, 0.0
    %v2754 = vpack.c.bf16 %v2690, %v2690
    %v2755 = vpack.c.bf16 %v2691, %v2691
    %v2756 = vpack.c.bf16 %v2692, %v2692
    %v2757 = vpack.c.bf16 %v2693, %v2693
    %v2758 = vpack.c.bf16 %v2694, %v2694
    %v2759 = vpack.c.bf16 %v2695, %v2695
    %v2760 = vpack.c.bf16 %v2696, %v2696
    %v2761 = vpack.c.bf16 %v2697, %v2697
    %v2762 = vpack.c.bf16 %v2698, %v2698
    %v2763 = vpack.c.bf16 %v2699, %v2699
    %v2764 = vpack.c.bf16 %v2700, %v2700
    %v2765 = vpack.c.bf16 %v2701, %v2701
    %v2766 = vpack.c.bf16 %v2702, %v2702
    %v2767 = vpack.c.bf16 %v2703, %v2703
    %v2768 = vpack.c.bf16 %v2704, %v2704
    %v2769 = vpack.c.bf16 %v2705, %v2705
    %v2770 = vpack.c.bf16 %v2706, %v2706
    %v2771 = vpack.c.bf16 %v2707, %v2707
    %v2772 = vpack.c.bf16 %v2708, %v2708
    %v2773 = vpack.c.bf16 %v2709, %v2709
    %v2774 = vpack.c.bf16 %v2710, %v2710
    %v2775 = vpack.c.bf16 %v2711, %v2711
    %v2776 = vpack.c.bf16 %v2712, %v2712
    %v2777 = vpack.c.bf16 %v2713, %v2713
    %v2778 = vpack.c.bf16 %v2714, %v2714
    %v2779 = vpack.c.bf16 %v2715, %v2715
    %v2780 = vpack.c.bf16 %v2716, %v2716
    %v2781 = vpack.c.bf16 %v2717, %v2717
    %v2782 = vpack.c.bf16 %v2718, %v2718
    %v2783 = vpack.c.bf16 %v2719, %v2719
    %v2784 = vpack.c.bf16 %v2720, %v2720
    %v2785 = vpack.c.bf16 %v2721, %v2721
    %v2786 = vpack.c.bf16 %v2722, %v2722
    %v2787 = vpack.c.bf16 %v2723, %v2723
    %v2788 = vpack.c.bf16 %v2724, %v2724
    %v2789 = vpack.c.bf16 %v2725, %v2725
    %v2790 = vpack.c.bf16 %v2726, %v2726
    %v2791 = vpack.c.bf16 %v2727, %v2727
    %v2792 = vpack.c.bf16 %v2728, %v2728
    %v2793 = vpack.c.bf16 %v2729, %v2729
    %v2794 = vpack.c.bf16 %v2730, %v2730
    %v2795 = vpack.c.bf16 %v2731, %v2731
    %v2796 = vpack.c.bf16 %v2732, %v2732
    %v2797 = vpack.c.bf16 %v2733, %v2733
    %v2798 = vpack.c.bf16 %v2734, %v2734
    %v2799 = vpack.c.bf16 %v2735, %v2735
    %v2800 = vpack.c.bf16 %v2736, %v2736
    %v2801 = vpack.c.bf16 %v2737, %v2737
    %v2802 = vpack.c.bf16 %v2738, %v2738
    %v2803 = vpack.c.bf16 %v2739, %v2739
    %v2804 = vpack.c.bf16 %v2740, %v2740
    %v2805 = vpack.c.bf16 %v2741, %v2741
    %v2806 = vpack.c.bf16 %v2742, %v2742
    %v2807 = vpack.c.bf16 %v2743, %v2743
    %v2808 = vpack.c.bf16 %v2744, %v2744
    %v2809 = vpack.c.bf16 %v2745, %v2745
    %v2810 = vpack.c.bf16 %v2746, %v2746
    %v2811 = vpack.c.bf16 %v2747, %v2747
    %v2812 = vpack.c.bf16 %v2748, %v2748
    %v2813 = vpack.c.bf16 %v2749, %v2749
    %v2814 = vpack.c.bf16 %v2750, %v2750
    %v2815 = vpack.c.bf16 %v2751, %v2751
    %v2816 = vpack.c.bf16 %v2752, %v2752
    %v2817 = vpack.c.bf16 %v2753, %v2753
    %2818 = vst [vmem:[#allocation2 + $0x8] sm:$0xf] %v2754
    %2819 = vst [vmem:[#allocation2 + $0x2c] sm:$0xf] %v2755
    %2820 = vst [vmem:[#allocation2 + $0x50] sm:$0xf] %v2756
    %2821 = vst [vmem:[#allocation2 + $0x74] sm:$0xf] %v2757
    %2822 = vst [vmem:[#allocation2 + $0x98] sm:$0xf] %v2758
    %2823 = vst [vmem:[#allocation2 + $0xbc] sm:$0xf] %v2759
    %2824 = vst [vmem:[#allocation2 + $0xe0] sm:$0xf] %v2760
    %2825 = vst [vmem:[#allocation2 + $0x104] sm:$0xf] %v2761
    %2826 = vst [vmem:[#allocation2 + $0x128] sm:$0xf] %v2762
    %2827 = vst [vmem:[#allocation2 + $0x14c] sm:$0xf] %v2763
    %2828 = vst [vmem:[#allocation2 + $0x170] sm:$0xf] %v2764
    %2829 = vst [vmem:[#allocation2 + $0x194] sm:$0xf] %v2765
    %2830 = vst [vmem:[#allocation2 + $0x1b8] sm:$0xf] %v2766
    %2831 = vst [vmem:[#allocation2 + $0x1dc] sm:$0xf] %v2767
    %2832 = vst [vmem:[#allocation2 + $0x200] sm:$0xf] %v2768
    %2833 = vst [vmem:[#allocation2 + $0x224] sm:$0xf] %v2769
    %2834 = vst [vmem:[#allocation2 + $0x248] sm:$0xf] %v2770
    %2835 = vst [vmem:[#allocation2 + $0x26c] sm:$0xf] %v2771
    %2836 = vst [vmem:[#allocation2 + $0x290] sm:$0xf] %v2772
    %2837 = vst [vmem:[#allocation2 + $0x2b4] sm:$0xf] %v2773
    %2838 = vst [vmem:[#allocation2 + $0x2d8] sm:$0xf] %v2774
    %2839 = vst [vmem:[#allocation2 + $0x2fc] sm:$0xf] %v2775
    %2840 = vst [vmem:[#allocation2 + $0x320] sm:$0xf] %v2776
    %2841 = vst [vmem:[#allocation2 + $0x344] sm:$0xf] %v2777
    %2842 = vst [vmem:[#allocation2 + $0x368] sm:$0xf] %v2778
    %2843 = vst [vmem:[#allocation2 + $0x38c] sm:$0xf] %v2779
    %2844 = vst [vmem:[#allocation2 + $0x3b0] sm:$0xf] %v2780
    %2845 = vst [vmem:[#allocation2 + $0x3d4] sm:$0xf] %v2781
    %2846 = vst [vmem:[#allocation2 + $0x3f8] sm:$0xf] %v2782
    %2847 = vst [vmem:[#allocation2 + $0x41c] sm:$0xf] %v2783
    %2848 = vst [vmem:[#allocation2 + $0x440] sm:$0xf] %v2784
    %2849 = vst [vmem:[#allocation2 + $0x464] sm:$0xf] %v2785
    %2850 = vst [vmem:[#allocation2 + $0x488] sm:$0xf] %v2786
    %2851 = vst [vmem:[#allocation2 + $0x4ac] sm:$0xf] %v2787
    %2852 = vst [vmem:[#allocation2 + $0x4d0] sm:$0xf] %v2788
    %2853 = vst [vmem:[#allocation2 + $0x4f4] sm:$0xf] %v2789
    %2854 = vst [vmem:[#allocation2 + $0x518] sm:$0xf] %v2790
    %2855 = vst [vmem:[#allocation2 + $0x53c] sm:$0xf] %v2791
    %2856 = vst [vmem:[#allocation2 + $0x560] sm:$0xf] %v2792
    %2857 = vst [vmem:[#allocation2 + $0x584] sm:$0xf] %v2793
    %2858 = vst [vmem:[#allocation2 + $0x5a8] sm:$0xf] %v2794
    %2859 = vst [vmem:[#allocation2 + $0x5cc] sm:$0xf] %v2795
    %2860 = vst [vmem:[#allocation2 + $0x5f0] sm:$0xf] %v2796
    %2861 = vst [vmem:[#allocation2 + $0x614] sm:$0xf] %v2797
    %2862 = vst [vmem:[#allocation2 + $0x638] sm:$0xf] %v2798
    %2863 = vst [vmem:[#allocation2 + $0x65c] sm:$0xf] %v2799
    %2864 = vst [vmem:[#allocation2 + $0x680] sm:$0xf] %v2800
    %2865 = vst [vmem:[#allocation2 + $0x6a4] sm:$0xf] %v2801
    %2866 = vst [vmem:[#allocation2 + $0x6c8] sm:$0xf] %v2802
    %2867 = vst [vmem:[#allocation2 + $0x6ec] sm:$0xf] %v2803
    %2868 = vst [vmem:[#allocation2 + $0x710] sm:$0xf] %v2804
    %2869 = vst [vmem:[#allocation2 + $0x734] sm:$0xf] %v2805
    %2870 = vst [vmem:[#allocation2 + $0x758] sm:$0xf] %v2806
    %2871 = vst [vmem:[#allocation2 + $0x77c] sm:$0xf] %v2807
    %2872 = vst [vmem:[#allocation2 + $0x7a0] sm:$0xf] %v2808
    %2873 = vst [vmem:[#allocation2 + $0x7c4] sm:$0xf] %v2809
    %2874 = vst [vmem:[#allocation2 + $0x7e8] sm:$0xf] %v2810
    %2875 = vst [vmem:[#allocation2 + $0x80c] sm:$0xf] %v2811
    %2876 = vst [vmem:[#allocation2 + $0x830] sm:$0xf] %v2812
    %2877 = vst [vmem:[#allocation2 + $0x854] sm:$0xf] %v2813
    %2878 = vst [vmem:[#allocation2 + $0x878] sm:$0xf] %v2814
    %2879 = vst [vmem:[#allocation2 + $0x89c] sm:$0xf] %v2815
    %2880 = vst [vmem:[#allocation2 + $0x8c0] sm:$0xf] %v2816
    %2881 = vst [vmem:[#allocation2 + $0x8e4] sm:$0xf] %v2817
    %v2882 = vsel %vm702, 1, 0
    %v2883 = vsel %vm703, 1, 0
    %v2884 = vsel %vm704, 1, 0
    %v2885 = vsel %vm705, 1, 0
    %v2886 = vsel %vm706, 1, 0
    %v2887 = vsel %vm707, 1, 0
    %v2888 = vsel %vm708, 1, 0
    %v2889 = vsel %vm709, 1, 0
    %v2890 = vsel %vm710, 1, 0
    %v2891 = vsel %vm711, 1, 0
    %v2892 = vsel %vm712, 1, 0
    %v2893 = vsel %vm713, 1, 0
    %v2894 = vsel %vm714, 1, 0
    %v2895 = vsel %vm715, 1, 0
    %v2896 = vsel %vm716, 1, 0
    %v2897 = vsel %vm717, 1, 0
    %v2898 = vsel %vm718, 1, 0
    %v2899 = vsel %vm719, 1, 0
    %v2900 = vsel %vm720, 1, 0
    %v2901 = vsel %vm721, 1, 0
    %v2902 = vsel %vm722, 1, 0
    %v2903 = vsel %vm723, 1, 0
    %v2904 = vsel %vm724, 1, 0
    %v2905 = vsel %vm725, 1, 0
    %v2906 = vsel %vm726, 1, 0
    %v2907 = vsel %vm727, 1, 0
    %v2908 = vsel %vm728, 1, 0
    %v2909 = vsel %vm729, 1, 0
    %v2910 = vsel %vm730, 1, 0
    %v2911 = vsel %vm731, 1, 0
    %v2912 = vsel %vm732, 1, 0
    %v2913 = vsel %vm733, 1, 0
    %v2914 = vsel %vm734, 1, 0
    %v2915 = vsel %vm735, 1, 0
    %v2916 = vsel %vm736, 1, 0
    %v2917 = vsel %vm737, 1, 0
    %v2918 = vsel %vm738, 1, 0
    %v2919 = vsel %vm739, 1, 0
    %v2920 = vsel %vm740, 1, 0
    %v2921 = vsel %vm741, 1, 0
    %v2922 = vsel %vm742, 1, 0
    %v2923 = vsel %vm743, 1, 0
    %v2924 = vsel %vm744, 1, 0
    %v2925 = vsel %vm745, 1, 0
    %v2926 = vsel %vm746, 1, 0
    %v2927 = vsel %vm747, 1, 0
    %v2928 = vsel %vm748, 1, 0
    %v2929 = vsel %vm749, 1, 0
    %v2930 = vsel %vm750, 1, 0
    %v2931 = vsel %vm751, 1, 0
    %v2932 = vsel %vm752, 1, 0
    %v2933 = vsel %vm753, 1, 0
    %v2934 = vsel %vm754, 1, 0
    %v2935 = vsel %vm755, 1, 0
    %v2936 = vsel %vm756, 1, 0
    %v2937 = vsel %vm757, 1, 0
    %v2938 = vsel %vm758, 1, 0
    %v2939 = vsel %vm759, 1, 0
    %v2940 = vsel %vm760, 1, 0
    %v2941 = vsel %vm761, 1, 0
    %v2942 = vsel %vm762, 1, 0
    %v2943 = vsel %vm763, 1, 0
    %v2944 = vsel %vm764, 1, 0
    %v2945 = vsel %vm765, 1, 0
    %2946 = vset.pattern.permute.xlu0 0
    %2947 = vperm.xlu0 %2946, %v2882
    %v2948 = vpop.permute.xlu0 %2947
    %2949 = vset.pattern.permute.xlu0 0
    %2950 = vperm.xlu0 %2949, %v2883
    %v2951 = vpop.permute.xlu0 %2950
    %2952 = vset.pattern.permute.xlu0 0
    %2953 = vperm.xlu0 %2952, %v2884
    %v2954 = vpop.permute.xlu0 %2953
    %2955 = vset.pattern.permute.xlu0 0
    %2956 = vperm.xlu0 %2955, %v2885
    %v2957 = vpop.permute.xlu0 %2956
    %2958 = vset.pattern.permute.xlu0 0
    %2959 = vperm.xlu0 %2958, %v2886
    %v2960 = vpop.permute.xlu0 %2959
    %2961 = vset.pattern.permute.xlu0 0
    %2962 = vperm.xlu0 %2961, %v2887
    %v2963 = vpop.permute.xlu0 %2962
    %2964 = vset.pattern.permute.xlu0 0
    %2965 = vperm.xlu0 %2964, %v2888
    %v2966 = vpop.permute.xlu0 %2965
    %2967 = vset.pattern.permute.xlu0 0
    %2968 = vperm.xlu0 %2967, %v2889
    %v2969 = vpop.permute.xlu0 %2968
    %2970 = vset.pattern.permute.xlu0 0
    %2971 = vperm.xlu0 %2970, %v2890
    %v2972 = vpop.permute.xlu0 %2971
    %2973 = vset.pattern.permute.xlu0 0
    %2974 = vperm.xlu0 %2973, %v2891
    %v2975 = vpop.permute.xlu0 %2974
    %2976 = vset.pattern.permute.xlu0 0
    %2977 = vperm.xlu0 %2976, %v2892
    %v2978 = vpop.permute.xlu0 %2977
    %2979 = vset.pattern.permute.xlu0 0
    %2980 = vperm.xlu0 %2979, %v2893
    %v2981 = vpop.permute.xlu0 %2980
    %2982 = vset.pattern.permute.xlu0 0
    %2983 = vperm.xlu0 %2982, %v2894
    %v2984 = vpop.permute.xlu0 %2983
    %2985 = vset.pattern.permute.xlu0 0
    %2986 = vperm.xlu0 %2985, %v2895
    %v2987 = vpop.permute.xlu0 %2986
    %2988 = vset.pattern.permute.xlu0 0
    %2989 = vperm.xlu0 %2988, %v2896
    %v2990 = vpop.permute.xlu0 %2989
    %2991 = vset.pattern.permute.xlu0 0
    %2992 = vperm.xlu0 %2991, %v2897
    %v2993 = vpop.permute.xlu0 %2992
    %2994 = vset.pattern.permute.xlu0 0
    %2995 = vperm.xlu0 %2994, %v2898
    %v2996 = vpop.permute.xlu0 %2995
    %2997 = vset.pattern.permute.xlu0 0
    %2998 = vperm.xlu0 %2997, %v2899
    %v2999 = vpop.permute.xlu0 %2998
    %3000 = vset.pattern.permute.xlu0 0
    %3001 = vperm.xlu0 %3000, %v2900
    %v3002 = vpop.permute.xlu0 %3001
    %3003 = vset.pattern.permute.xlu0 0
    %3004 = vperm.xlu0 %3003, %v2901
    %v3005 = vpop.permute.xlu0 %3004
    %3006 = vset.pattern.permute.xlu0 0
    %3007 = vperm.xlu0 %3006, %v2902
    %v3008 = vpop.permute.xlu0 %3007
    %3009 = vset.pattern.permute.xlu0 0
    %3010 = vperm.xlu0 %3009, %v2903
    %v3011 = vpop.permute.xlu0 %3010
    %3012 = vset.pattern.permute.xlu0 0
    %3013 = vperm.xlu0 %3012, %v2904
    %v3014 = vpop.permute.xlu0 %3013
    %3015 = vset.pattern.permute.xlu0 0
    %3016 = vperm.xlu0 %3015, %v2905
    %v3017 = vpop.permute.xlu0 %3016
    %3018 = vset.pattern.permute.xlu0 0
    %3019 = vperm.xlu0 %3018, %v2906
    %v3020 = vpop.permute.xlu0 %3019
    %3021 = vset.pattern.permute.xlu0 0
    %3022 = vperm.xlu0 %3021, %v2907
    %v3023 = vpop.permute.xlu0 %3022
    %3024 = vset.pattern.permute.xlu0 0
    %3025 = vperm.xlu0 %3024, %v2908
    %v3026 = vpop.permute.xlu0 %3025
    %3027 = vset.pattern.permute.xlu0 0
    %3028 = vperm.xlu0 %3027, %v2909
    %v3029 = vpop.permute.xlu0 %3028
    %3030 = vset.pattern.permute.xlu0 0
    %3031 = vperm.xlu0 %3030, %v2910
    %v3032 = vpop.permute.xlu0 %3031
    %3033 = vset.pattern.permute.xlu0 0
    %3034 = vperm.xlu0 %3033, %v2911
    %v3035 = vpop.permute.xlu0 %3034
    %3036 = vset.pattern.permute.xlu0 0
    %3037 = vperm.xlu0 %3036, %v2912
    %v3038 = vpop.permute.xlu0 %3037
    %3039 = vset.pattern.permute.xlu0 0
    %3040 = vperm.xlu0 %3039, %v2913
    %v3041 = vpop.permute.xlu0 %3040
    %3042 = vset.pattern.permute.xlu0 0
    %3043 = vperm.xlu0 %3042, %v2914
    %v3044 = vpop.permute.xlu0 %3043
    %3045 = vset.pattern.permute.xlu0 0
    %3046 = vperm.xlu0 %3045, %v2915
    %v3047 = vpop.permute.xlu0 %3046
    %3048 = vset.pattern.permute.xlu0 0
    %3049 = vperm.xlu0 %3048, %v2916
    %v3050 = vpop.permute.xlu0 %3049
    %3051 = vset.pattern.permute.xlu0 0
    %3052 = vperm.xlu0 %3051, %v2917
    %v3053 = vpop.permute.xlu0 %3052
    %3054 = vset.pattern.permute.xlu0 0
    %3055 = vperm.xlu0 %3054, %v2918
    %v3056 = vpop.permute.xlu0 %3055
    %3057 = vset.pattern.permute.xlu0 0
    %3058 = vperm.xlu0 %3057, %v2919
    %v3059 = vpop.permute.xlu0 %3058
    %3060 = vset.pattern.permute.xlu0 0
    %3061 = vperm.xlu0 %3060, %v2920
    %v3062 = vpop.permute.xlu0 %3061
    %3063 = vset.pattern.permute.xlu0 0
    %3064 = vperm.xlu0 %3063, %v2921
    %v3065 = vpop.permute.xlu0 %3064
    %3066 = vset.pattern.permute.xlu0 0
    %3067 = vperm.xlu0 %3066, %v2922
    %v3068 = vpop.permute.xlu0 %3067
    %3069 = vset.pattern.permute.xlu0 0
    %3070 = vperm.xlu0 %3069, %v2923
    %v3071 = vpop.permute.xlu0 %3070
    %3072 = vset.pattern.permute.xlu0 0
    %3073 = vperm.xlu0 %3072, %v2924
    %v3074 = vpop.permute.xlu0 %3073
    %3075 = vset.pattern.permute.xlu0 0
    %3076 = vperm.xlu0 %3075, %v2925
    %v3077 = vpop.permute.xlu0 %3076
    %3078 = vset.pattern.permute.xlu0 0
    %3079 = vperm.xlu0 %3078, %v2926
    %v3080 = vpop.permute.xlu0 %3079
    %3081 = vset.pattern.permute.xlu0 0
    %3082 = vperm.xlu0 %3081, %v2927
    %v3083 = vpop.permute.xlu0 %3082
    %3084 = vset.pattern.permute.xlu0 0
    %3085 = vperm.xlu0 %3084, %v2928
    %v3086 = vpop.permute.xlu0 %3085
    %3087 = vset.pattern.permute.xlu0 0
    %3088 = vperm.xlu0 %3087, %v2929
    %v3089 = vpop.permute.xlu0 %3088
    %3090 = vset.pattern.permute.xlu0 0
    %3091 = vperm.xlu0 %3090, %v2930
    %v3092 = vpop.permute.xlu0 %3091
    %3093 = vset.pattern.permute.xlu0 0
    %3094 = vperm.xlu0 %3093, %v2931
    %v3095 = vpop.permute.xlu0 %3094
    %3096 = vset.pattern.permute.xlu0 0
    %3097 = vperm.xlu0 %3096, %v2932
    %v3098 = vpop.permute.xlu0 %3097
    %3099 = vset.pattern.permute.xlu0 0
    %3100 = vperm.xlu0 %3099, %v2933
    %v3101 = vpop.permute.xlu0 %3100
    %3102 = vset.pattern.permute.xlu0 0
    %3103 = vperm.xlu0 %3102, %v2934
    %v3104 = vpop.permute.xlu0 %3103
    %3105 = vset.pattern.permute.xlu0 0
    %3106 = vperm.xlu0 %3105, %v2935
    %v3107 = vpop.permute.xlu0 %3106
    %3108 = vset.pattern.permute.xlu0 0
    %3109 = vperm.xlu0 %3108, %v2936
    %v3110 = vpop.permute.xlu0 %3109
    %3111 = vset.pattern.permute.xlu0 0
    %3112 = vperm.xlu0 %3111, %v2937
    %v3113 = vpop.permute.xlu0 %3112
    %3114 = vset.pattern.permute.xlu0 0
    %3115 = vperm.xlu0 %3114, %v2938
    %v3116 = vpop.permute.xlu0 %3115
    %3117 = vset.pattern.permute.xlu0 0
    %3118 = vperm.xlu0 %3117, %v2939
    %v3119 = vpop.permute.xlu0 %3118
    %3120 = vset.pattern.permute.xlu0 0
    %3121 = vperm.xlu0 %3120, %v2940
    %v3122 = vpop.permute.xlu0 %3121
    %3123 = vset.pattern.permute.xlu0 0
    %3124 = vperm.xlu0 %3123, %v2941
    %v3125 = vpop.permute.xlu0 %3124
    %3126 = vset.pattern.permute.xlu0 0
    %3127 = vperm.xlu0 %3126, %v2942
    %v3128 = vpop.permute.xlu0 %3127
    %3129 = vset.pattern.permute.xlu0 0
    %3130 = vperm.xlu0 %3129, %v2943
    %v3131 = vpop.permute.xlu0 %3130
    %3132 = vset.pattern.permute.xlu0 0
    %3133 = vperm.xlu0 %3132, %v2944
    %v3134 = vpop.permute.xlu0 %3133
    %3135 = vset.pattern.permute.xlu0 0
    %3136 = vperm.xlu0 %3135, %v2945
    %v3137 = vpop.permute.xlu0 %3136
    %vm3138 = vcmp.eq.s32.totalorder %v2948, 1
    %vm3139 = vcmp.eq.s32.totalorder %v2951, 1
    %vm3140 = vcmp.eq.s32.totalorder %v2954, 1
    %vm3141 = vcmp.eq.s32.totalorder %v2957, 1
    %vm3142 = vcmp.eq.s32.totalorder %v2960, 1
    %vm3143 = vcmp.eq.s32.totalorder %v2963, 1
    %vm3144 = vcmp.eq.s32.totalorder %v2966, 1
    %vm3145 = vcmp.eq.s32.totalorder %v2969, 1
    %vm3146 = vcmp.eq.s32.totalorder %v2972, 1
    %vm3147 = vcmp.eq.s32.totalorder %v2975, 1
    %vm3148 = vcmp.eq.s32.totalorder %v2978, 1
    %vm3149 = vcmp.eq.s32.totalorder %v2981, 1
    %vm3150 = vcmp.eq.s32.totalorder %v2984, 1
    %vm3151 = vcmp.eq.s32.totalorder %v2987, 1
    %vm3152 = vcmp.eq.s32.totalorder %v2990, 1
    %vm3153 = vcmp.eq.s32.totalorder %v2993, 1
    %vm3154 = vcmp.eq.s32.totalorder %v2996, 1
    %vm3155 = vcmp.eq.s32.totalorder %v2999, 1
    %vm3156 = vcmp.eq.s32.totalorder %v3002, 1
    %vm3157 = vcmp.eq.s32.totalorder %v3005, 1
    %vm3158 = vcmp.eq.s32.totalorder %v3008, 1
    %vm3159 = vcmp.eq.s32.totalorder %v3011, 1
    %vm3160 = vcmp.eq.s32.totalorder %v3014, 1
    %vm3161 = vcmp.eq.s32.totalorder %v3017, 1
    %vm3162 = vcmp.eq.s32.totalorder %v3020, 1
    %vm3163 = vcmp.eq.s32.totalorder %v3023, 1
    %vm3164 = vcmp.eq.s32.totalorder %v3026, 1
    %vm3165 = vcmp.eq.s32.totalorder %v3029, 1
    %vm3166 = vcmp.eq.s32.totalorder %v3032, 1
    %vm3167 = vcmp.eq.s32.totalorder %v3035, 1
    %vm3168 = vcmp.eq.s32.totalorder %v3038, 1
    %vm3169 = vcmp.eq.s32.totalorder %v3041, 1
    %vm3170 = vcmp.eq.s32.totalorder %v3044, 1
    %vm3171 = vcmp.eq.s32.totalorder %v3047, 1
    %vm3172 = vcmp.eq.s32.totalorder %v3050, 1
    %vm3173 = vcmp.eq.s32.totalorder %v3053, 1
    %vm3174 = vcmp.eq.s32.totalorder %v3056, 1
    %vm3175 = vcmp.eq.s32.totalorder %v3059, 1
    %vm3176 = vcmp.eq.s32.totalorder %v3062, 1
    %vm3177 = vcmp.eq.s32.totalorder %v3065, 1
    %vm3178 = vcmp.eq.s32.totalorder %v3068, 1
    %vm3179 = vcmp.eq.s32.totalorder %v3071, 1
    %vm3180 = vcmp.eq.s32.totalorder %v3074, 1
    %vm3181 = vcmp.eq.s32.totalorder %v3077, 1
    %vm3182 = vcmp.eq.s32.totalorder %v3080, 1
    %vm3183 = vcmp.eq.s32.totalorder %v3083, 1
    %vm3184 = vcmp.eq.s32.totalorder %v3086, 1
    %vm3185 = vcmp.eq.s32.totalorder %v3089, 1
    %vm3186 = vcmp.eq.s32.totalorder %v3092, 1
    %vm3187 = vcmp.eq.s32.totalorder %v3095, 1
    %vm3188 = vcmp.eq.s32.totalorder %v3098, 1
    %vm3189 = vcmp.eq.s32.totalorder %v3101, 1
    %vm3190 = vcmp.eq.s32.totalorder %v3104, 1
    %vm3191 = vcmp.eq.s32.totalorder %v3107, 1
    %vm3192 = vcmp.eq.s32.totalorder %v3110, 1
    %vm3193 = vcmp.eq.s32.totalorder %v3113, 1
    %vm3194 = vcmp.eq.s32.totalorder %v3116, 1
    %vm3195 = vcmp.eq.s32.totalorder %v3119, 1
    %vm3196 = vcmp.eq.s32.totalorder %v3122, 1
    %vm3197 = vcmp.eq.s32.totalorder %v3125, 1
    %vm3198 = vcmp.eq.s32.totalorder %v3128, 1
    %vm3199 = vcmp.eq.s32.totalorder %v3131, 1
    %vm3200 = vcmp.eq.s32.totalorder %v3134, 1
    %vm3201 = vcmp.eq.s32.totalorder %v3137, 1
    %v3202 = vsel %vm3138, %v1216, 0.0
    %v3203 = vsel %vm3139, %v1215, 0.0
    %v3204 = vsel %vm3140, %v1214, 0.0
    %v3205 = vsel %vm3141, %v1213, 0.0
    %v3206 = vsel %vm3142, %v1212, 0.0
    %v3207 = vsel %vm3143, %v1211, 0.0
    %v3208 = vsel %vm3144, %v1210, 0.0
    %v3209 = vsel %vm3145, %v1209, 0.0
    %v3210 = vsel %vm3146, %v1208, 0.0
    %v3211 = vsel %vm3147, %v1207, 0.0
    %v3212 = vsel %vm3148, %v1206, 0.0
    %v3213 = vsel %vm3149, %v1205, 0.0
    %v3214 = vsel %vm3150, %v1204, 0.0
    %v3215 = vsel %vm3151, %v1203, 0.0
    %v3216 = vsel %vm3152, %v1202, 0.0
    %v3217 = vsel %vm3153, %v1201, 0.0
    %v3218 = vsel %vm3154, %v1200, 0.0
    %v3219 = vsel %vm3155, %v1199, 0.0
    %v3220 = vsel %vm3156, %v1198, 0.0
    %v3221 = vsel %vm3157, %v1197, 0.0
    %v3222 = vsel %vm3158, %v1196, 0.0
    %v3223 = vsel %vm3159, %v1195, 0.0
    %v3224 = vsel %vm3160, %v1194, 0.0
    %v3225 = vsel %vm3161, %v1193, 0.0
    %v3226 = vsel %vm3162, %v1192, 0.0
    %v3227 = vsel %vm3163, %v1191, 0.0
    %v3228 = vsel %vm3164, %v1190, 0.0
    %v3229 = vsel %vm3165, %v1189, 0.0
    %v3230 = vsel %vm3166, %v1188, 0.0
    %v3231 = vsel %vm3167, %v1187, 0.0
    %v3232 = vsel %vm3168, %v1186, 0.0
    %v3233 = vsel %vm3169, %v1185, 0.0
    %v3234 = vsel %vm3170, %v1184, 0.0
    %v3235 = vsel %vm3171, %v1183, 0.0
    %v3236 = vsel %vm3172, %v1182, 0.0
    %v3237 = vsel %vm3173, %v1181, 0.0
    %v3238 = vsel %vm3174, %v1180, 0.0
    %v3239 = vsel %vm3175, %v1179, 0.0
    %v3240 = vsel %vm3176, %v1178, 0.0
    %v3241 = vsel %vm3177, %v1177, 0.0
    %v3242 = vsel %vm3178, %v1176, 0.0
    %v3243 = vsel %vm3179, %v1175, 0.0
    %v3244 = vsel %vm3180, %v1174, 0.0
    %v3245 = vsel %vm3181, %v1173, 0.0
    %v3246 = vsel %vm3182, %v1172, 0.0
    %v3247 = vsel %vm3183, %v1171, 0.0
    %v3248 = vsel %vm3184, %v1170, 0.0
    %v3249 = vsel %vm3185, %v1169, 0.0
    %v3250 = vsel %vm3186, %v1168, 0.0
    %v3251 = vsel %vm3187, %v1167, 0.0
    %v3252 = vsel %vm3188, %v1166, 0.0
    %v3253 = vsel %vm3189, %v1165, 0.0
    %v3254 = vsel %vm3190, %v1164, 0.0
    %v3255 = vsel %vm3191, %v1163, 0.0
    %v3256 = vsel %vm3192, %v1162, 0.0
    %v3257 = vsel %vm3193, %v1161, 0.0
    %v3258 = vsel %vm3194, %v1160, 0.0
    %v3259 = vsel %vm3195, %v1159, 0.0
    %v3260 = vsel %vm3196, %v1158, 0.0
    %v3261 = vsel %vm3197, %v1157, 0.0
    %v3262 = vsel %vm3198, %v1156, 0.0
    %v3263 = vsel %vm3199, %v1155, 0.0
    %v3264 = vsel %vm3200, %v1154, 0.0
    %v3265 = vsel %vm3201, %v1153, 0.0
    %v3266 = vpack.c.bf16 %v3202, %v3202
    %v3267 = vpack.c.bf16 %v3203, %v3203
    %v3268 = vpack.c.bf16 %v3204, %v3204
    %v3269 = vpack.c.bf16 %v3205, %v3205
    %v3270 = vpack.c.bf16 %v3206, %v3206
    %v3271 = vpack.c.bf16 %v3207, %v3207
    %v3272 = vpack.c.bf16 %v3208, %v3208
    %v3273 = vpack.c.bf16 %v3209, %v3209
    %v3274 = vpack.c.bf16 %v3210, %v3210
    %v3275 = vpack.c.bf16 %v3211, %v3211
    %v3276 = vpack.c.bf16 %v3212, %v3212
    %v3277 = vpack.c.bf16 %v3213, %v3213
    %v3278 = vpack.c.bf16 %v3214, %v3214
    %v3279 = vpack.c.bf16 %v3215, %v3215
    %v3280 = vpack.c.bf16 %v3216, %v3216
    %v3281 = vpack.c.bf16 %v3217, %v3217
    %v3282 = vpack.c.bf16 %v3218, %v3218
    %v3283 = vpack.c.bf16 %v3219, %v3219
    %v3284 = vpack.c.bf16 %v3220, %v3220
    %v3285 = vpack.c.bf16 %v3221, %v3221
    %v3286 = vpack.c.bf16 %v3222, %v3222
    %v3287 = vpack.c.bf16 %v3223, %v3223
    %v3288 = vpack.c.bf16 %v3224, %v3224
    %v3289 = vpack.c.bf16 %v3225, %v3225
    %v3290 = vpack.c.bf16 %v3226, %v3226
    %v3291 = vpack.c.bf16 %v3227, %v3227
    %v3292 = vpack.c.bf16 %v3228, %v3228
    %v3293 = vpack.c.bf16 %v3229, %v3229
    %v3294 = vpack.c.bf16 %v3230, %v3230
    %v3295 = vpack.c.bf16 %v3231, %v3231
    %v3296 = vpack.c.bf16 %v3232, %v3232
    %v3297 = vpack.c.bf16 %v3233, %v3233
    %v3298 = vpack.c.bf16 %v3234, %v3234
    %v3299 = vpack.c.bf16 %v3235, %v3235
    %v3300 = vpack.c.bf16 %v3236, %v3236
    %v3301 = vpack.c.bf16 %v3237, %v3237
    %v3302 = vpack.c.bf16 %v3238, %v3238
    %v3303 = vpack.c.bf16 %v3239, %v3239
    %v3304 = vpack.c.bf16 %v3240, %v3240
    %v3305 = vpack.c.bf16 %v3241, %v3241
    %v3306 = vpack.c.bf16 %v3242, %v3242
    %v3307 = vpack.c.bf16 %v3243, %v3243
    %v3308 = vpack.c.bf16 %v3244, %v3244
    %v3309 = vpack.c.bf16 %v3245, %v3245
    %v3310 = vpack.c.bf16 %v3246, %v3246
    %v3311 = vpack.c.bf16 %v3247, %v3247
    %v3312 = vpack.c.bf16 %v3248, %v3248
    %v3313 = vpack.c.bf16 %v3249, %v3249
    %v3314 = vpack.c.bf16 %v3250, %v3250
    %v3315 = vpack.c.bf16 %v3251, %v3251
    %v3316 = vpack.c.bf16 %v3252, %v3252
    %v3317 = vpack.c.bf16 %v3253, %v3253
    %v3318 = vpack.c.bf16 %v3254, %v3254
    %v3319 = vpack.c.bf16 %v3255, %v3255
    %v3320 = vpack.c.bf16 %v3256, %v3256
    %v3321 = vpack.c.bf16 %v3257, %v3257
    %v3322 = vpack.c.bf16 %v3258, %v3258
    %v3323 = vpack.c.bf16 %v3259, %v3259
    %v3324 = vpack.c.bf16 %v3260, %v3260
    %v3325 = vpack.c.bf16 %v3261, %v3261
    %v3326 = vpack.c.bf16 %v3262, %v3262
    %v3327 = vpack.c.bf16 %v3263, %v3263
    %v3328 = vpack.c.bf16 %v3264, %v3264
    %v3329 = vpack.c.bf16 %v3265, %v3265
    %3330 = vst [vmem:[#allocation2 + $0xc] sm:$0xf] %v3266
    %3331 = vst [vmem:[#allocation2 + $0x30] sm:$0xf] %v3267
    %3332 = vst [vmem:[#allocation2 + $0x54] sm:$0xf] %v3268
    %3333 = vst [vmem:[#allocation2 + $0x78] sm:$0xf] %v3269
    %3334 = vst [vmem:[#allocation2 + $0x9c] sm:$0xf] %v3270
    %3335 = vst [vmem:[#allocation2 + $0xc0] sm:$0xf] %v3271
    %3336 = vst [vmem:[#allocation2 + $0xe4] sm:$0xf] %v3272
    %3337 = vst [vmem:[#allocation2 + $0x108] sm:$0xf] %v3273
    %3338 = vst [vmem:[#allocation2 + $0x12c] sm:$0xf] %v3274
    %3339 = vst [vmem:[#allocation2 + $0x150] sm:$0xf] %v3275
    %3340 = vst [vmem:[#allocation2 + $0x174] sm:$0xf] %v3276
    %3341 = vst [vmem:[#allocation2 + $0x198] sm:$0xf] %v3277
    %3342 = vst [vmem:[#allocation2 + $0x1bc] sm:$0xf] %v3278
    %3343 = vst [vmem:[#allocation2 + $0x1e0] sm:$0xf] %v3279
    %3344 = vst [vmem:[#allocation2 + $0x204] sm:$0xf] %v3280
    %3345 = vst [vmem:[#allocation2 + $0x228] sm:$0xf] %v3281
    %3346 = vst [vmem:[#allocation2 + $0x24c] sm:$0xf] %v3282
    %3347 = vst [vmem:[#allocation2 + $0x270] sm:$0xf] %v3283
    %3348 = vst [vmem:[#allocation2 + $0x294] sm:$0xf] %v3284
    %3349 = vst [vmem:[#allocation2 + $0x2b8] sm:$0xf] %v3285
    %3350 = vst [vmem:[#allocation2 + $0x2dc] sm:$0xf] %v3286
    %3351 = vst [vmem:[#allocation2 + $0x300] sm:$0xf] %v3287
    %3352 = vst [vmem:[#allocation2 + $0x324] sm:$0xf] %v3288
    %3353 = vst [vmem:[#allocation2 + $0x348] sm:$0xf] %v3289
    %3354 = vst [vmem:[#allocation2 + $0x36c] sm:$0xf] %v3290
    %3355 = vst [vmem:[#allocation2 + $0x390] sm:$0xf] %v3291
    %3356 = vst [vmem:[#allocation2 + $0x3b4] sm:$0xf] %v3292
    %3357 = vst [vmem:[#allocation2 + $0x3d8] sm:$0xf] %v3293
    %3358 = vst [vmem:[#allocation2 + $0x3fc] sm:$0xf] %v3294
    %3359 = vst [vmem:[#allocation2 + $0x420] sm:$0xf] %v3295
    %3360 = vst [vmem:[#allocation2 + $0x444] sm:$0xf] %v3296
    %3361 = vst [vmem:[#allocation2 + $0x468] sm:$0xf] %v3297
    %3362 = vst [vmem:[#allocation2 + $0x48c] sm:$0xf] %v3298
    %3363 = vst [vmem:[#allocation2 + $0x4b0] sm:$0xf] %v3299
    %3364 = vst [vmem:[#allocation2 + $0x4d4] sm:$0xf] %v3300
    %3365 = vst [vmem:[#allocation2 + $0x4f8] sm:$0xf] %v3301
    %3366 = vst [vmem:[#allocation2 + $0x51c] sm:$0xf] %v3302
    %3367 = vst [vmem:[#allocation2 + $0x540] sm:$0xf] %v3303
    %3368 = vst [vmem:[#allocation2 + $0x564] sm:$0xf] %v3304
    %3369 = vst [vmem:[#allocation2 + $0x588] sm:$0xf] %v3305
    %3370 = vst [vmem:[#allocation2 + $0x5ac] sm:$0xf] %v3306
    %3371 = vst [vmem:[#allocation2 + $0x5d0] sm:$0xf] %v3307
    %3372 = vst [vmem:[#allocation2 + $0x5f4] sm:$0xf] %v3308
    %3373 = vst [vmem:[#allocation2 + $0x618] sm:$0xf] %v3309
    %3374 = vst [vmem:[#allocation2 + $0x63c] sm:$0xf] %v3310
    %3375 = vst [vmem:[#allocation2 + $0x660] sm:$0xf] %v3311
    %3376 = vst [vmem:[#allocation2 + $0x684] sm:$0xf] %v3312
    %3377 = vst [vmem:[#allocation2 + $0x6a8] sm:$0xf] %v3313
    %3378 = vst [vmem:[#allocation2 + $0x6cc] sm:$0xf] %v3314
    %3379 = vst [vmem:[#allocation2 + $0x6f0] sm:$0xf] %v3315
    %3380 = vst [vmem:[#allocation2 + $0x714] sm:$0xf] %v3316
    %3381 = vst [vmem:[#allocation2 + $0x738] sm:$0xf] %v3317
    %3382 = vst [vmem:[#allocation2 + $0x75c] sm:$0xf] %v3318
    %3383 = vst [vmem:[#allocation2 + $0x780] sm:$0xf] %v3319
    %3384 = vst [vmem:[#allocation2 + $0x7a4] sm:$0xf] %v3320
    %3385 = vst [vmem:[#allocation2 + $0x7c8] sm:$0xf] %v3321
    %3386 = vst [vmem:[#allocation2 + $0x7ec] sm:$0xf] %v3322
    %3387 = vst [vmem:[#allocation2 + $0x810] sm:$0xf] %v3323
    %3388 = vst [vmem:[#allocation2 + $0x834] sm:$0xf] %v3324
    %3389 = vst [vmem:[#allocation2 + $0x858] sm:$0xf] %v3325
    %3390 = vst [vmem:[#allocation2 + $0x87c] sm:$0xf] %v3326
    %3391 = vst [vmem:[#allocation2 + $0x8a0] sm:$0xf] %v3327
    %3392 = vst [vmem:[#allocation2 + $0x8c4] sm:$0xf] %v3328
    %3393 = vst [vmem:[#allocation2 + $0x8e8] sm:$0xf] %v3329
    %v3394 = vpack.c.bf16 %v382, %v382
    %v3395 = vpack.c.bf16 %v383, %v383
    %v3396 = vpack.c.bf16 %v384, %v384
    %v3397 = vpack.c.bf16 %v385, %v385
    %v3398 = vpack.c.bf16 %v386, %v386
    %v3399 = vpack.c.bf16 %v387, %v387
    %v3400 = vpack.c.bf16 %v388, %v388
    %v3401 = vpack.c.bf16 %v389, %v389
    %v3402 = vpack.c.bf16 %v390, %v390
    %v3403 = vpack.c.bf16 %v391, %v391
    %v3404 = vpack.c.bf16 %v392, %v392
    %v3405 = vpack.c.bf16 %v393, %v393
    %v3406 = vpack.c.bf16 %v394, %v394
    %v3407 = vpack.c.bf16 %v395, %v395
    %v3408 = vpack.c.bf16 %v396, %v396
    %v3409 = vpack.c.bf16 %v397, %v397
    %v3410 = vpack.c.bf16 %v398, %v398
    %v3411 = vpack.c.bf16 %v399, %v399
    %v3412 = vpack.c.bf16 %v400, %v400
    %v3413 = vpack.c.bf16 %v401, %v401
    %v3414 = vpack.c.bf16 %v402, %v402
    %v3415 = vpack.c.bf16 %v403, %v403
    %v3416 = vpack.c.bf16 %v404, %v404
    %v3417 = vpack.c.bf16 %v405, %v405
    %v3418 = vpack.c.bf16 %v406, %v406
    %v3419 = vpack.c.bf16 %v407, %v407
    %v3420 = vpack.c.bf16 %v408, %v408
    %v3421 = vpack.c.bf16 %v409, %v409
    %v3422 = vpack.c.bf16 %v410, %v410
    %v3423 = vpack.c.bf16 %v411, %v411
    %v3424 = vpack.c.bf16 %v412, %v412
    %v3425 = vpack.c.bf16 %v413, %v413
    %v3426 = vpack.c.bf16 %v414, %v414
    %v3427 = vpack.c.bf16 %v415, %v415
    %v3428 = vpack.c.bf16 %v416, %v416
    %v3429 = vpack.c.bf16 %v417, %v417
    %v3430 = vpack.c.bf16 %v418, %v418
    %v3431 = vpack.c.bf16 %v419, %v419
    %v3432 = vpack.c.bf16 %v420, %v420
    %v3433 = vpack.c.bf16 %v421, %v421
    %v3434 = vpack.c.bf16 %v422, %v422
    %v3435 = vpack.c.bf16 %v423, %v423
    %v3436 = vpack.c.bf16 %v424, %v424
    %v3437 = vpack.c.bf16 %v425, %v425
    %v3438 = vpack.c.bf16 %v426, %v426
    %v3439 = vpack.c.bf16 %v427, %v427
    %v3440 = vpack.c.bf16 %v428, %v428
    %v3441 = vpack.c.bf16 %v429, %v429
    %v3442 = vpack.c.bf16 %v430, %v430
    %v3443 = vpack.c.bf16 %v431, %v431
    %v3444 = vpack.c.bf16 %v432, %v432
    %v3445 = vpack.c.bf16 %v433, %v433
    %v3446 = vpack.c.bf16 %v434, %v434
    %v3447 = vpack.c.bf16 %v435, %v435
    %v3448 = vpack.c.bf16 %v436, %v436
    %v3449 = vpack.c.bf16 %v437, %v437
    %v3450 = vpack.c.bf16 %v438, %v438
    %v3451 = vpack.c.bf16 %v439, %v439
    %v3452 = vpack.c.bf16 %v440, %v440
    %v3453 = vpack.c.bf16 %v441, %v441
    %v3454 = vpack.c.bf16 %v442, %v442
    %v3455 = vpack.c.bf16 %v443, %v443
    %v3456 = vpack.c.bf16 %v444, %v444
    %v3457 = vpack.c.bf16 %v445, %v445
    %3458 = vst [vmem:[#allocation2 + $0x10] sm:$0xf] %v3394
    %3459 = vst [vmem:[#allocation2 + $0x34] sm:$0xf] %v3395
    %3460 = vst [vmem:[#allocation2 + $0x58] sm:$0xf] %v3396
    %3461 = vst [vmem:[#allocation2 + $0x7c] sm:$0xf] %v3397
    %3462 = vst [vmem:[#allocation2 + $0xa0] sm:$0xf] %v3398
    %3463 = vst [vmem:[#allocation2 + $0xc4] sm:$0xf] %v3399
    %3464 = vst [vmem:[#allocation2 + $0xe8] sm:$0xf] %v3400
    %3465 = vst [vmem:[#allocation2 + $0x10c] sm:$0xf] %v3401
    %3466 = vst [vmem:[#allocation2 + $0x130] sm:$0xf] %v3402
    %3467 = vst [vmem:[#allocation2 + $0x154] sm:$0xf] %v3403
    %3468 = vst [vmem:[#allocation2 + $0x178] sm:$0xf] %v3404
    %3469 = vst [vmem:[#allocation2 + $0x19c] sm:$0xf] %v3405
    %3470 = vst [vmem:[#allocation2 + $0x1c0] sm:$0xf] %v3406
    %3471 = vst [vmem:[#allocation2 + $0x1e4] sm:$0xf] %v3407
    %3472 = vst [vmem:[#allocation2 + $0x208] sm:$0xf] %v3408
    %3473 = vst [vmem:[#allocation2 + $0x22c] sm:$0xf] %v3409
    %3474 = vst [vmem:[#allocation2 + $0x250] sm:$0xf] %v3410
    %3475 = vst [vmem:[#allocation2 + $0x274] sm:$0xf] %v3411
    %3476 = vst [vmem:[#allocation2 + $0x298] sm:$0xf] %v3412
    %3477 = vst [vmem:[#allocation2 + $0x2bc] sm:$0xf] %v3413
    %3478 = vst [vmem:[#allocation2 + $0x2e0] sm:$0xf] %v3414
    %3479 = vst [vmem:[#allocation2 + $0x304] sm:$0xf] %v3415
    %3480 = vst [vmem:[#allocation2 + $0x328] sm:$0xf] %v3416
    %3481 = vst [vmem:[#allocation2 + $0x34c] sm:$0xf] %v3417
    %3482 = vst [vmem:[#allocation2 + $0x370] sm:$0xf] %v3418
    %3483 = vst [vmem:[#allocation2 + $0x394] sm:$0xf] %v3419
    %3484 = vst [vmem:[#allocation2 + $0x3b8] sm:$0xf] %v3420
    %3485 = vst [vmem:[#allocation2 + $0x3dc] sm:$0xf] %v3421
    %3486 = vst [vmem:[#allocation2 + $0x400] sm:$0xf] %v3422
    %3487 = vst [vmem:[#allocation2 + $0x424] sm:$0xf] %v3423
    %3488 = vst [vmem:[#allocation2 + $0x448] sm:$0xf] %v3424
    %3489 = vst [vmem:[#allocation2 + $0x46c] sm:$0xf] %v3425
    %3490 = vst [vmem:[#allocation2 + $0x490] sm:$0xf] %v3426
    %3491 = vst [vmem:[#allocation2 + $0x4b4] sm:$0xf] %v3427
    %3492 = vst [vmem:[#allocation2 + $0x4d8] sm:$0xf] %v3428
    %3493 = vst [vmem:[#allocation2 + $0x4fc] sm:$0xf] %v3429
    %3494 = vst [vmem:[#allocation2 + $0x520] sm:$0xf] %v3430
    %3495 = vst [vmem:[#allocation2 + $0x544] sm:$0xf] %v3431
    %3496 = vst [vmem:[#allocation2 + $0x568] sm:$0xf] %v3432
    %3497 = vst [vmem:[#allocation2 + $0x58c] sm:$0xf] %v3433
    %3498 = vst [vmem:[#allocation2 + $0x5b0] sm:$0xf] %v3434
    %3499 = vst [vmem:[#allocation2 + $0x5d4] sm:$0xf] %v3435
    %3500 = vst [vmem:[#allocation2 + $0x5f8] sm:$0xf] %v3436
    %3501 = vst [vmem:[#allocation2 + $0x61c] sm:$0xf] %v3437
    %3502 = vst [vmem:[#allocation2 + $0x640] sm:$0xf] %v3438
    %3503 = vst [vmem:[#allocation2 + $0x664] sm:$0xf] %v3439
    %3504 = vst [vmem:[#allocation2 + $0x688] sm:$0xf] %v3440
    %3505 = vst [vmem:[#allocation2 + $0x6ac] sm:$0xf] %v3441
    %3506 = vst [vmem:[#allocation2 + $0x6d0] sm:$0xf] %v3442
    %3507 = vst [vmem:[#allocation2 + $0x6f4] sm:$0xf] %v3443
    %3508 = vst [vmem:[#allocation2 + $0x718] sm:$0xf] %v3444
    %3509 = vst [vmem:[#allocation2 + $0x73c] sm:$0xf] %v3445
    %3510 = vst [vmem:[#allocation2 + $0x760] sm:$0xf] %v3446
    %3511 = vst [vmem:[#allocation2 + $0x784] sm:$0xf] %v3447
    %3512 = vst [vmem:[#allocation2 + $0x7a8] sm:$0xf] %v3448
    %3513 = vst [vmem:[#allocation2 + $0x7cc] sm:$0xf] %v3449
    %3514 = vst [vmem:[#allocation2 + $0x7f0] sm:$0xf] %v3450
    %3515 = vst [vmem:[#allocation2 + $0x814] sm:$0xf] %v3451
    %3516 = vst [vmem:[#allocation2 + $0x838] sm:$0xf] %v3452
    %3517 = vst [vmem:[#allocation2 + $0x85c] sm:$0xf] %v3453
    %3518 = vst [vmem:[#allocation2 + $0x880] sm:$0xf] %v3454
    %3519 = vst [vmem:[#allocation2 + $0x8a4] sm:$0xf] %v3455
    %3520 = vst [vmem:[#allocation2 + $0x8c8] sm:$0xf] %v3456
    %3521 = vst [vmem:[#allocation2 + $0x8ec] sm:$0xf] %v3457
    %v3522 = vsel %vm766, 1, 0
    %v3523 = vsel %vm767, 1, 0
    %v3524 = vsel %vm768, 1, 0
    %v3525 = vsel %vm769, 1, 0
    %v3526 = vsel %vm770, 1, 0
    %v3527 = vsel %vm771, 1, 0
    %v3528 = vsel %vm772, 1, 0
    %v3529 = vsel %vm773, 1, 0
    %v3530 = vsel %vm774, 1, 0
    %v3531 = vsel %vm775, 1, 0
    %v3532 = vsel %vm776, 1, 0
    %v3533 = vsel %vm777, 1, 0
    %v3534 = vsel %vm778, 1, 0
    %v3535 = vsel %vm779, 1, 0
    %v3536 = vsel %vm780, 1, 0
    %v3537 = vsel %vm781, 1, 0
    %v3538 = vsel %vm782, 1, 0
    %v3539 = vsel %vm783, 1, 0
    %v3540 = vsel %vm784, 1, 0
    %v3541 = vsel %vm785, 1, 0
    %v3542 = vsel %vm786, 1, 0
    %v3543 = vsel %vm787, 1, 0
    %v3544 = vsel %vm788, 1, 0
    %v3545 = vsel %vm789, 1, 0
    %v3546 = vsel %vm790, 1, 0
    %v3547 = vsel %vm791, 1, 0
    %v3548 = vsel %vm792, 1, 0
    %v3549 = vsel %vm793, 1, 0
    %v3550 = vsel %vm794, 1, 0
    %v3551 = vsel %vm795, 1, 0
    %v3552 = vsel %vm796, 1, 0
    %v3553 = vsel %vm797, 1, 0
    %v3554 = vsel %vm798, 1, 0
    %v3555 = vsel %vm799, 1, 0
    %v3556 = vsel %vm800, 1, 0
    %v3557 = vsel %vm801, 1, 0
    %v3558 = vsel %vm802, 1, 0
    %v3559 = vsel %vm803, 1, 0
    %v3560 = vsel %vm804, 1, 0
    %v3561 = vsel %vm805, 1, 0
    %v3562 = vsel %vm806, 1, 0
    %v3563 = vsel %vm807, 1, 0
    %v3564 = vsel %vm808, 1, 0
    %v3565 = vsel %vm809, 1, 0
    %v3566 = vsel %vm810, 1, 0
    %v3567 = vsel %vm811, 1, 0
    %v3568 = vsel %vm812, 1, 0
    %v3569 = vsel %vm813, 1, 0
    %v3570 = vsel %vm814, 1, 0
    %v3571 = vsel %vm815, 1, 0
    %v3572 = vsel %vm816, 1, 0
    %v3573 = vsel %vm817, 1, 0
    %v3574 = vsel %vm818, 1, 0
    %v3575 = vsel %vm819, 1, 0
    %v3576 = vsel %vm820, 1, 0
    %v3577 = vsel %vm821, 1, 0
    %v3578 = vsel %vm822, 1, 0
    %v3579 = vsel %vm823, 1, 0
    %v3580 = vsel %vm824, 1, 0
    %v3581 = vsel %vm825, 1, 0
    %v3582 = vsel %vm826, 1, 0
    %v3583 = vsel %vm827, 1, 0
    %v3584 = vsel %vm828, 1, 0
    %v3585 = vsel %vm829, 1, 0
    %3586 = vset.pattern.permute.xlu0 0
    %3587 = vperm.xlu0 %3586, %v3522
    %v3588 = vpop.permute.xlu0 %3587
    %3589 = vset.pattern.permute.xlu0 0
    %3590 = vperm.xlu0 %3589, %v3523
    %v3591 = vpop.permute.xlu0 %3590
    %3592 = vset.pattern.permute.xlu0 0
    %3593 = vperm.xlu0 %3592, %v3524
    %v3594 = vpop.permute.xlu0 %3593
    %3595 = vset.pattern.permute.xlu0 0
    %3596 = vperm.xlu0 %3595, %v3525
    %v3597 = vpop.permute.xlu0 %3596
    %3598 = vset.pattern.permute.xlu0 0
    %3599 = vperm.xlu0 %3598, %v3526
    %v3600 = vpop.permute.xlu0 %3599
    %3601 = vset.pattern.permute.xlu0 0
    %3602 = vperm.xlu0 %3601, %v3527
    %v3603 = vpop.permute.xlu0 %3602
    %3604 = vset.pattern.permute.xlu0 0
    %3605 = vperm.xlu0 %3604, %v3528
    %v3606 = vpop.permute.xlu0 %3605
    %3607 = vset.pattern.permute.xlu0 0
    %3608 = vperm.xlu0 %3607, %v3529
    %v3609 = vpop.permute.xlu0 %3608
    %3610 = vset.pattern.permute.xlu0 0
    %3611 = vperm.xlu0 %3610, %v3530
    %v3612 = vpop.permute.xlu0 %3611
    %3613 = vset.pattern.permute.xlu0 0
    %3614 = vperm.xlu0 %3613, %v3531
    %v3615 = vpop.permute.xlu0 %3614
    %3616 = vset.pattern.permute.xlu0 0
    %3617 = vperm.xlu0 %3616, %v3532
    %v3618 = vpop.permute.xlu0 %3617
    %3619 = vset.pattern.permute.xlu0 0
    %3620 = vperm.xlu0 %3619, %v3533
    %v3621 = vpop.permute.xlu0 %3620
    %3622 = vset.pattern.permute.xlu0 0
    %3623 = vperm.xlu0 %3622, %v3534
    %v3624 = vpop.permute.xlu0 %3623
    %3625 = vset.pattern.permute.xlu0 0
    %3626 = vperm.xlu0 %3625, %v3535
    %v3627 = vpop.permute.xlu0 %3626
    %3628 = vset.pattern.permute.xlu0 0
    %3629 = vperm.xlu0 %3628, %v3536
    %v3630 = vpop.permute.xlu0 %3629
    %3631 = vset.pattern.permute.xlu0 0
    %3632 = vperm.xlu0 %3631, %v3537
    %v3633 = vpop.permute.xlu0 %3632
    %3634 = vset.pattern.permute.xlu0 0
    %3635 = vperm.xlu0 %3634, %v3538
    %v3636 = vpop.permute.xlu0 %3635
    %3637 = vset.pattern.permute.xlu0 0
    %3638 = vperm.xlu0 %3637, %v3539
    %v3639 = vpop.permute.xlu0 %3638
    %3640 = vset.pattern.permute.xlu0 0
    %3641 = vperm.xlu0 %3640, %v3540
    %v3642 = vpop.permute.xlu0 %3641
    %3643 = vset.pattern.permute.xlu0 0
    %3644 = vperm.xlu0 %3643, %v3541
    %v3645 = vpop.permute.xlu0 %3644
    %3646 = vset.pattern.permute.xlu0 0
    %3647 = vperm.xlu0 %3646, %v3542
    %v3648 = vpop.permute.xlu0 %3647
    %3649 = vset.pattern.permute.xlu0 0
    %3650 = vperm.xlu0 %3649, %v3543
    %v3651 = vpop.permute.xlu0 %3650
    %3652 = vset.pattern.permute.xlu0 0
    %3653 = vperm.xlu0 %3652, %v3544
    %v3654 = vpop.permute.xlu0 %3653
    %3655 = vset.pattern.permute.xlu0 0
    %3656 = vperm.xlu0 %3655, %v3545
    %v3657 = vpop.permute.xlu0 %3656
    %3658 = vset.pattern.permute.xlu0 0
    %3659 = vperm.xlu0 %3658, %v3546
    %v3660 = vpop.permute.xlu0 %3659
    %3661 = vset.pattern.permute.xlu0 0
    %3662 = vperm.xlu0 %3661, %v3547
    %v3663 = vpop.permute.xlu0 %3662
    %3664 = vset.pattern.permute.xlu0 0
    %3665 = vperm.xlu0 %3664, %v3548
    %v3666 = vpop.permute.xlu0 %3665
    %3667 = vset.pattern.permute.xlu0 0
    %3668 = vperm.xlu0 %3667, %v3549
    %v3669 = vpop.permute.xlu0 %3668
    %3670 = vset.pattern.permute.xlu0 0
    %3671 = vperm.xlu0 %3670, %v3550
    %v3672 = vpop.permute.xlu0 %3671
    %3673 = vset.pattern.permute.xlu0 0
    %3674 = vperm.xlu0 %3673, %v3551
    %v3675 = vpop.permute.xlu0 %3674
    %3676 = vset.pattern.permute.xlu0 0
    %3677 = vperm.xlu0 %3676, %v3552
    %v3678 = vpop.permute.xlu0 %3677
    %3679 = vset.pattern.permute.xlu0 0
    %3680 = vperm.xlu0 %3679, %v3553
    %v3681 = vpop.permute.xlu0 %3680
    %3682 = vset.pattern.permute.xlu0 0
    %3683 = vperm.xlu0 %3682, %v3554
    %v3684 = vpop.permute.xlu0 %3683
    %3685 = vset.pattern.permute.xlu0 0
    %3686 = vperm.xlu0 %3685, %v3555
    %v3687 = vpop.permute.xlu0 %3686
    %3688 = vset.pattern.permute.xlu0 0
    %3689 = vperm.xlu0 %3688, %v3556
    %v3690 = vpop.permute.xlu0 %3689
    %3691 = vset.pattern.permute.xlu0 0
    %3692 = vperm.xlu0 %3691, %v3557
    %v3693 = vpop.permute.xlu0 %3692
    %3694 = vset.pattern.permute.xlu0 0
    %3695 = vperm.xlu0 %3694, %v3558
    %v3696 = vpop.permute.xlu0 %3695
    %3697 = vset.pattern.permute.xlu0 0
    %3698 = vperm.xlu0 %3697, %v3559
    %v3699 = vpop.permute.xlu0 %3698
    %3700 = vset.pattern.permute.xlu0 0
    %3701 = vperm.xlu0 %3700, %v3560
    %v3702 = vpop.permute.xlu0 %3701
    %3703 = vset.pattern.permute.xlu0 0
    %3704 = vperm.xlu0 %3703, %v3561
    %v3705 = vpop.permute.xlu0 %3704
    %3706 = vset.pattern.permute.xlu0 0
    %3707 = vperm.xlu0 %3706, %v3562
    %v3708 = vpop.permute.xlu0 %3707
    %3709 = vset.pattern.permute.xlu0 0
    %3710 = vperm.xlu0 %3709, %v3563
    %v3711 = vpop.permute.xlu0 %3710
    %3712 = vset.pattern.permute.xlu0 0
    %3713 = vperm.xlu0 %3712, %v3564
    %v3714 = vpop.permute.xlu0 %3713
    %3715 = vset.pattern.permute.xlu0 0
    %3716 = vperm.xlu0 %3715, %v3565
    %v3717 = vpop.permute.xlu0 %3716
    %3718 = vset.pattern.permute.xlu0 0
    %3719 = vperm.xlu0 %3718, %v3566
    %v3720 = vpop.permute.xlu0 %3719
    %3721 = vset.pattern.permute.xlu0 0
    %3722 = vperm.xlu0 %3721, %v3567
    %v3723 = vpop.permute.xlu0 %3722
    %3724 = vset.pattern.permute.xlu0 0
    %3725 = vperm.xlu0 %3724, %v3568
    %v3726 = vpop.permute.xlu0 %3725
    %3727 = vset.pattern.permute.xlu0 0
    %3728 = vperm.xlu0 %3727, %v3569
    %v3729 = vpop.permute.xlu0 %3728
    %3730 = vset.pattern.permute.xlu0 0
    %3731 = vperm.xlu0 %3730, %v3570
    %v3732 = vpop.permute.xlu0 %3731
    %3733 = vset.pattern.permute.xlu0 0
    %3734 = vperm.xlu0 %3733, %v3571
    %v3735 = vpop.permute.xlu0 %3734
    %3736 = vset.pattern.permute.xlu0 0
    %3737 = vperm.xlu0 %3736, %v3572
    %v3738 = vpop.permute.xlu0 %3737
    %3739 = vset.pattern.permute.xlu0 0
    %3740 = vperm.xlu0 %3739, %v3573
    %v3741 = vpop.permute.xlu0 %3740
    %3742 = vset.pattern.permute.xlu0 0
    %3743 = vperm.xlu0 %3742, %v3574
    %v3744 = vpop.permute.xlu0 %3743
    %3745 = vset.pattern.permute.xlu0 0
    %3746 = vperm.xlu0 %3745, %v3575
    %v3747 = vpop.permute.xlu0 %3746
    %3748 = vset.pattern.permute.xlu0 0
    %3749 = vperm.xlu0 %3748, %v3576
    %v3750 = vpop.permute.xlu0 %3749
    %3751 = vset.pattern.permute.xlu0 0
    %3752 = vperm.xlu0 %3751, %v3577
    %v3753 = vpop.permute.xlu0 %3752
    %3754 = vset.pattern.permute.xlu0 0
    %3755 = vperm.xlu0 %3754, %v3578
    %v3756 = vpop.permute.xlu0 %3755
    %3757 = vset.pattern.permute.xlu0 0
    %3758 = vperm.xlu0 %3757, %v3579
    %v3759 = vpop.permute.xlu0 %3758
    %3760 = vset.pattern.permute.xlu0 0
    %3761 = vperm.xlu0 %3760, %v3580
    %v3762 = vpop.permute.xlu0 %3761
    %3763 = vset.pattern.permute.xlu0 0
    %3764 = vperm.xlu0 %3763, %v3581
    %v3765 = vpop.permute.xlu0 %3764
    %3766 = vset.pattern.permute.xlu0 0
    %3767 = vperm.xlu0 %3766, %v3582
    %v3768 = vpop.permute.xlu0 %3767
    %3769 = vset.pattern.permute.xlu0 0
    %3770 = vperm.xlu0 %3769, %v3583
    %v3771 = vpop.permute.xlu0 %3770
    %3772 = vset.pattern.permute.xlu0 0
    %3773 = vperm.xlu0 %3772, %v3584
    %v3774 = vpop.permute.xlu0 %3773
    %3775 = vset.pattern.permute.xlu0 0
    %3776 = vperm.xlu0 %3775, %v3585
    %v3777 = vpop.permute.xlu0 %3776
    %vm3778 = vcmp.eq.s32.totalorder %v3588, 1
    %vm3779 = vcmp.eq.s32.totalorder %v3591, 1
    %vm3780 = vcmp.eq.s32.totalorder %v3594, 1
    %vm3781 = vcmp.eq.s32.totalorder %v3597, 1
    %vm3782 = vcmp.eq.s32.totalorder %v3600, 1
    %vm3783 = vcmp.eq.s32.totalorder %v3603, 1
    %vm3784 = vcmp.eq.s32.totalorder %v3606, 1
    %vm3785 = vcmp.eq.s32.totalorder %v3609, 1
    %vm3786 = vcmp.eq.s32.totalorder %v3612, 1
    %vm3787 = vcmp.eq.s32.totalorder %v3615, 1
    %vm3788 = vcmp.eq.s32.totalorder %v3618, 1
    %vm3789 = vcmp.eq.s32.totalorder %v3621, 1
    %vm3790 = vcmp.eq.s32.totalorder %v3624, 1
    %vm3791 = vcmp.eq.s32.totalorder %v3627, 1
    %vm3792 = vcmp.eq.s32.totalorder %v3630, 1
    %vm3793 = vcmp.eq.s32.totalorder %v3633, 1
    %vm3794 = vcmp.eq.s32.totalorder %v3636, 1
    %vm3795 = vcmp.eq.s32.totalorder %v3639, 1
    %vm3796 = vcmp.eq.s32.totalorder %v3642, 1
    %vm3797 = vcmp.eq.s32.totalorder %v3645, 1
    %vm3798 = vcmp.eq.s32.totalorder %v3648, 1
    %vm3799 = vcmp.eq.s32.totalorder %v3651, 1
    %vm3800 = vcmp.eq.s32.totalorder %v3654, 1
    %vm3801 = vcmp.eq.s32.totalorder %v3657, 1
    %vm3802 = vcmp.eq.s32.totalorder %v3660, 1
    %vm3803 = vcmp.eq.s32.totalorder %v3663, 1
    %vm3804 = vcmp.eq.s32.totalorder %v3666, 1
    %vm3805 = vcmp.eq.s32.totalorder %v3669, 1
    %vm3806 = vcmp.eq.s32.totalorder %v3672, 1
    %vm3807 = vcmp.eq.s32.totalorder %v3675, 1
    %vm3808 = vcmp.eq.s32.totalorder %v3678, 1
    %vm3809 = vcmp.eq.s32.totalorder %v3681, 1
    %vm3810 = vcmp.eq.s32.totalorder %v3684, 1
    %vm3811 = vcmp.eq.s32.totalorder %v3687, 1
    %vm3812 = vcmp.eq.s32.totalorder %v3690, 1
    %vm3813 = vcmp.eq.s32.totalorder %v3693, 1
    %vm3814 = vcmp.eq.s32.totalorder %v3696, 1
    %vm3815 = vcmp.eq.s32.totalorder %v3699, 1
    %vm3816 = vcmp.eq.s32.totalorder %v3702, 1
    %vm3817 = vcmp.eq.s32.totalorder %v3705, 1
    %vm3818 = vcmp.eq.s32.totalorder %v3708, 1
    %vm3819 = vcmp.eq.s32.totalorder %v3711, 1
    %vm3820 = vcmp.eq.s32.totalorder %v3714, 1
    %vm3821 = vcmp.eq.s32.totalorder %v3717, 1
    %vm3822 = vcmp.eq.s32.totalorder %v3720, 1
    %vm3823 = vcmp.eq.s32.totalorder %v3723, 1
    %vm3824 = vcmp.eq.s32.totalorder %v3726, 1
    %vm3825 = vcmp.eq.s32.totalorder %v3729, 1
    %vm3826 = vcmp.eq.s32.totalorder %v3732, 1
    %vm3827 = vcmp.eq.s32.totalorder %v3735, 1
    %vm3828 = vcmp.eq.s32.totalorder %v3738, 1
    %vm3829 = vcmp.eq.s32.totalorder %v3741, 1
    %vm3830 = vcmp.eq.s32.totalorder %v3744, 1
    %vm3831 = vcmp.eq.s32.totalorder %v3747, 1
    %vm3832 = vcmp.eq.s32.totalorder %v3750, 1
    %vm3833 = vcmp.eq.s32.totalorder %v3753, 1
    %vm3834 = vcmp.eq.s32.totalorder %v3756, 1
    %vm3835 = vcmp.eq.s32.totalorder %v3759, 1
    %vm3836 = vcmp.eq.s32.totalorder %v3762, 1
    %vm3837 = vcmp.eq.s32.totalorder %v3765, 1
    %vm3838 = vcmp.eq.s32.totalorder %v3768, 1
    %vm3839 = vcmp.eq.s32.totalorder %v3771, 1
    %vm3840 = vcmp.eq.s32.totalorder %v3774, 1
    %vm3841 = vcmp.eq.s32.totalorder %v3777, 1
    %v3842 = vsel %vm3778, %v2368, 0.0
    %v3843 = vsel %vm3779, %v2367, 0.0
    %v3844 = vsel %vm3780, %v2366, 0.0
    %v3845 = vsel %vm3781, %v2365, 0.0
    %v3846 = vsel %vm3782, %v2364, 0.0
    %v3847 = vsel %vm3783, %v2363, 0.0
    %v3848 = vsel %vm3784, %v2362, 0.0
    %v3849 = vsel %vm3785, %v2361, 0.0
    %v3850 = vsel %vm3786, %v2360, 0.0
    %v3851 = vsel %vm3787, %v2359, 0.0
    %v3852 = vsel %vm3788, %v2358, 0.0
    %v3853 = vsel %vm3789, %v2357, 0.0
    %v3854 = vsel %vm3790, %v2356, 0.0
    %v3855 = vsel %vm3791, %v2355, 0.0
    %v3856 = vsel %vm3792, %v2354, 0.0
    %v3857 = vsel %vm3793, %v2353, 0.0
    %v3858 = vsel %vm3794, %v2352, 0.0
    %v3859 = vsel %vm3795, %v2351, 0.0
    %v3860 = vsel %vm3796, %v2350, 0.0
    %v3861 = vsel %vm3797, %v2349, 0.0
    %v3862 = vsel %vm3798, %v2348, 0.0
    %v3863 = vsel %vm3799, %v2347, 0.0
    %v3864 = vsel %vm3800, %v2346, 0.0
    %v3865 = vsel %vm3801, %v2345, 0.0
    %v3866 = vsel %vm3802, %v2344, 0.0
    %v3867 = vsel %vm3803, %v2343, 0.0
    %v3868 = vsel %vm3804, %v2342, 0.0
    %v3869 = vsel %vm3805, %v2341, 0.0
    %v3870 = vsel %vm3806, %v2340, 0.0
    %v3871 = vsel %vm3807, %v2339, 0.0
    %v3872 = vsel %vm3808, %v2338, 0.0
    %v3873 = vsel %vm3809, %v2337, 0.0
    %v3874 = vsel %vm3810, %v2336, 0.0
    %v3875 = vsel %vm3811, %v2335, 0.0
    %v3876 = vsel %vm3812, %v2334, 0.0
    %v3877 = vsel %vm3813, %v2333, 0.0
    %v3878 = vsel %vm3814, %v2332, 0.0
    %v3879 = vsel %vm3815, %v2331, 0.0
    %v3880 = vsel %vm3816, %v2330, 0.0
    %v3881 = vsel %vm3817, %v2329, 0.0
    %v3882 = vsel %vm3818, %v2328, 0.0
    %v3883 = vsel %vm3819, %v2327, 0.0
    %v3884 = vsel %vm3820, %v2326, 0.0
    %v3885 = vsel %vm3821, %v2325, 0.0
    %v3886 = vsel %vm3822, %v2324, 0.0
    %v3887 = vsel %vm3823, %v2323, 0.0
    %v3888 = vsel %vm3824, %v2322, 0.0
    %v3889 = vsel %vm3825, %v2321, 0.0
    %v3890 = vsel %vm3826, %v2320, 0.0
    %v3891 = vsel %vm3827, %v2319, 0.0
    %v3892 = vsel %vm3828, %v2318, 0.0
    %v3893 = vsel %vm3829, %v2317, 0.0
    %v3894 = vsel %vm3830, %v2316, 0.0
    %v3895 = vsel %vm3831, %v2315, 0.0
    %v3896 = vsel %vm3832, %v2314, 0.0
    %v3897 = vsel %vm3833, %v2313, 0.0
    %v3898 = vsel %vm3834, %v2312, 0.0
    %v3899 = vsel %vm3835, %v2311, 0.0
    %v3900 = vsel %vm3836, %v2310, 0.0
    %v3901 = vsel %vm3837, %v2309, 0.0
    %v3902 = vsel %vm3838, %v2308, 0.0
    %v3903 = vsel %vm3839, %v2307, 0.0
    %v3904 = vsel %vm3840, %v2306, 0.0
    %v3905 = vsel %vm3841, %v2369, 0.0
    %v3906 = vpack.c.bf16 %v3842, %v3842
    %v3907 = vpack.c.bf16 %v3843, %v3843
    %v3908 = vpack.c.bf16 %v3844, %v3844
    %v3909 = vpack.c.bf16 %v3845, %v3845
    %v3910 = vpack.c.bf16 %v3846, %v3846
    %v3911 = vpack.c.bf16 %v3847, %v3847
    %v3912 = vpack.c.bf16 %v3848, %v3848
    %v3913 = vpack.c.bf16 %v3849, %v3849
    %v3914 = vpack.c.bf16 %v3850, %v3850
    %v3915 = vpack.c.bf16 %v3851, %v3851
    %v3916 = vpack.c.bf16 %v3852, %v3852
    %v3917 = vpack.c.bf16 %v3853, %v3853
    %v3918 = vpack.c.bf16 %v3854, %v3854
    %v3919 = vpack.c.bf16 %v3855, %v3855
    %v3920 = vpack.c.bf16 %v3856, %v3856
    %v3921 = vpack.c.bf16 %v3857, %v3857
    %v3922 = vpack.c.bf16 %v3858, %v3858
    %v3923 = vpack.c.bf16 %v3859, %v3859
    %v3924 = vpack.c.bf16 %v3860, %v3860
    %v3925 = vpack.c.bf16 %v3861, %v3861
    %v3926 = vpack.c.bf16 %v3862, %v3862
    %v3927 = vpack.c.bf16 %v3863, %v3863
    %v3928 = vpack.c.bf16 %v3864, %v3864
    %v3929 = vpack.c.bf16 %v3865, %v3865
    %v3930 = vpack.c.bf16 %v3866, %v3866
    %v3931 = vpack.c.bf16 %v3867, %v3867
    %v3932 = vpack.c.bf16 %v3868, %v3868
    %v3933 = vpack.c.bf16 %v3869, %v3869
    %v3934 = vpack.c.bf16 %v3870, %v3870
    %v3935 = vpack.c.bf16 %v3871, %v3871
    %v3936 = vpack.c.bf16 %v3872, %v3872
    %v3937 = vpack.c.bf16 %v3873, %v3873
    %v3938 = vpack.c.bf16 %v3874, %v3874
    %v3939 = vpack.c.bf16 %v3875, %v3875
    %v3940 = vpack.c.bf16 %v3876, %v3876
    %v3941 = vpack.c.bf16 %v3877, %v3877
    %v3942 = vpack.c.bf16 %v3878, %v3878
    %v3943 = vpack.c.bf16 %v3879, %v3879
    %v3944 = vpack.c.bf16 %v3880, %v3880
    %v3945 = vpack.c.bf16 %v3881, %v3881
    %v3946 = vpack.c.bf16 %v3882, %v3882
    %v3947 = vpack.c.bf16 %v3883, %v3883
    %v3948 = vpack.c.bf16 %v3884, %v3884
    %v3949 = vpack.c.bf16 %v3885, %v3885
    %v3950 = vpack.c.bf16 %v3886, %v3886
    %v3951 = vpack.c.bf16 %v3887, %v3887
    %v3952 = vpack.c.bf16 %v3888, %v3888
    %v3953 = vpack.c.bf16 %v3889, %v3889
    %v3954 = vpack.c.bf16 %v3890, %v3890
    %v3955 = vpack.c.bf16 %v3891, %v3891
    %v3956 = vpack.c.bf16 %v3892, %v3892
    %v3957 = vpack.c.bf16 %v3893, %v3893
    %v3958 = vpack.c.bf16 %v3894, %v3894
    %v3959 = vpack.c.bf16 %v3895, %v3895
    %v3960 = vpack.c.bf16 %v3896, %v3896
    %v3961 = vpack.c.bf16 %v3897, %v3897
    %v3962 = vpack.c.bf16 %v3898, %v3898
    %v3963 = vpack.c.bf16 %v3899, %v3899
    %v3964 = vpack.c.bf16 %v3900, %v3900
    %v3965 = vpack.c.bf16 %v3901, %v3901
    %v3966 = vpack.c.bf16 %v3902, %v3902
    %v3967 = vpack.c.bf16 %v3903, %v3903
    %v3968 = vpack.c.bf16 %v3904, %v3904
    %v3969 = vpack.c.bf16 %v3905, %v3905
    %3970 = vst [vmem:[#allocation2 + $0x14] sm:$0xf] %v3906
    %3971 = vst [vmem:[#allocation2 + $0x38] sm:$0xf] %v3907
    %3972 = vst [vmem:[#allocation2 + $0x5c] sm:$0xf] %v3908
    %3973 = vst [vmem:[#allocation2 + $0x80] sm:$0xf] %v3909
    %3974 = vst [vmem:[#allocation2 + $0xa4] sm:$0xf] %v3910
    %3975 = vst [vmem:[#allocation2 + $0xc8] sm:$0xf] %v3911
    %3976 = vst [vmem:[#allocation2 + $0xec] sm:$0xf] %v3912
    %3977 = vst [vmem:[#allocation2 + $0x110] sm:$0xf] %v3913
    %3978 = vst [vmem:[#allocation2 + $0x134] sm:$0xf] %v3914
    %3979 = vst [vmem:[#allocation2 + $0x158] sm:$0xf] %v3915
    %3980 = vst [vmem:[#allocation2 + $0x17c] sm:$0xf] %v3916
    %3981 = vst [vmem:[#allocation2 + $0x1a0] sm:$0xf] %v3917
    %3982 = vst [vmem:[#allocation2 + $0x1c4] sm:$0xf] %v3918
    %3983 = vst [vmem:[#allocation2 + $0x1e8] sm:$0xf] %v3919
    %3984 = vst [vmem:[#allocation2 + $0x20c] sm:$0xf] %v3920
    %3985 = vst [vmem:[#allocation2 + $0x230] sm:$0xf] %v3921
    %3986 = vst [vmem:[#allocation2 + $0x254] sm:$0xf] %v3922
    %3987 = vst [vmem:[#allocation2 + $0x278] sm:$0xf] %v3923
    %3988 = vst [vmem:[#allocation2 + $0x29c] sm:$0xf] %v3924
    %3989 = vst [vmem:[#allocation2 + $0x2c0] sm:$0xf] %v3925
    %3990 = vst [vmem:[#allocation2 + $0x2e4] sm:$0xf] %v3926
    %3991 = vst [vmem:[#allocation2 + $0x308] sm:$0xf] %v3927
    %3992 = vst [vmem:[#allocation2 + $0x32c] sm:$0xf] %v3928
    %3993 = vst [vmem:[#allocation2 + $0x350] sm:$0xf] %v3929
    %3994 = vst [vmem:[#allocation2 + $0x374] sm:$0xf] %v3930
    %3995 = vst [vmem:[#allocation2 + $0x398] sm:$0xf] %v3931
    %3996 = vst [vmem:[#allocation2 + $0x3bc] sm:$0xf] %v3932
    %3997 = vst [vmem:[#allocation2 + $0x3e0] sm:$0xf] %v3933
    %3998 = vst [vmem:[#allocation2 + $0x404] sm:$0xf] %v3934
    %3999 = vst [vmem:[#allocation2 + $0x428] sm:$0xf] %v3935
    %4000 = vst [vmem:[#allocation2 + $0x44c] sm:$0xf] %v3936
    %4001 = vst [vmem:[#allocation2 + $0x470] sm:$0xf] %v3937
    %4002 = vst [vmem:[#allocation2 + $0x494] sm:$0xf] %v3938
    %4003 = vst [vmem:[#allocation2 + $0x4b8] sm:$0xf] %v3939
    %4004 = vst [vmem:[#allocation2 + $0x4dc] sm:$0xf] %v3940
    %4005 = vst [vmem:[#allocation2 + $0x500] sm:$0xf] %v3941
    %4006 = vst [vmem:[#allocation2 + $0x524] sm:$0xf] %v3942
    %4007 = vst [vmem:[#allocation2 + $0x548] sm:$0xf] %v3943
    %4008 = vst [vmem:[#allocation2 + $0x56c] sm:$0xf] %v3944
    %4009 = vst [vmem:[#allocation2 + $0x590] sm:$0xf] %v3945
    %4010 = vst [vmem:[#allocation2 + $0x5b4] sm:$0xf] %v3946
    %4011 = vst [vmem:[#allocation2 + $0x5d8] sm:$0xf] %v3947
    %4012 = vst [vmem:[#allocation2 + $0x5fc] sm:$0xf] %v3948
    %4013 = vst [vmem:[#allocation2 + $0x620] sm:$0xf] %v3949
    %4014 = vst [vmem:[#allocation2 + $0x644] sm:$0xf] %v3950
    %4015 = vst [vmem:[#allocation2 + $0x668] sm:$0xf] %v3951
    %4016 = vst [vmem:[#allocation2 + $0x68c] sm:$0xf] %v3952
    %4017 = vst [vmem:[#allocation2 + $0x6b0] sm:$0xf] %v3953
    %4018 = vst [vmem:[#allocation2 + $0x6d4] sm:$0xf] %v3954
    %4019 = vst [vmem:[#allocation2 + $0x6f8] sm:$0xf] %v3955
    %4020 = vst [vmem:[#allocation2 + $0x71c] sm:$0xf] %v3956
    %4021 = vst [vmem:[#allocation2 + $0x740] sm:$0xf] %v3957
    %4022 = vst [vmem:[#allocation2 + $0x764] sm:$0xf] %v3958
    %4023 = vst [vmem:[#allocation2 + $0x788] sm:$0xf] %v3959
    %4024 = vst [vmem:[#allocation2 + $0x7ac] sm:$0xf] %v3960
    %4025 = vst [vmem:[#allocation2 + $0x7d0] sm:$0xf] %v3961
    %4026 = vst [vmem:[#allocation2 + $0x7f4] sm:$0xf] %v3962
    %4027 = vst [vmem:[#allocation2 + $0x818] sm:$0xf] %v3963
    %4028 = vst [vmem:[#allocation2 + $0x83c] sm:$0xf] %v3964
    %4029 = vst [vmem:[#allocation2 + $0x860] sm:$0xf] %v3965
    %4030 = vst [vmem:[#allocation2 + $0x884] sm:$0xf] %v3966
    %4031 = vst [vmem:[#allocation2 + $0x8a8] sm:$0xf] %v3967
    %4032 = vst [vmem:[#allocation2 + $0x8cc] sm:$0xf] %v3968
    %4033 = vst [vmem:[#allocation2 + $0x8f0] sm:$0xf] %v3969
    %v4034 = vsel %vm958, 1, 0
    %v4035 = vsel %vm959, 1, 0
    %v4036 = vsel %vm960, 1, 0
    %v4037 = vsel %vm961, 1, 0
    %v4038 = vsel %vm962, 1, 0
    %v4039 = vsel %vm963, 1, 0
    %v4040 = vsel %vm964, 1, 0
    %v4041 = vsel %vm965, 1, 0
    %v4042 = vsel %vm966, 1, 0
    %v4043 = vsel %vm967, 1, 0
    %v4044 = vsel %vm968, 1, 0
    %v4045 = vsel %vm969, 1, 0
    %v4046 = vsel %vm970, 1, 0
    %v4047 = vsel %vm971, 1, 0
    %v4048 = vsel %vm972, 1, 0
    %v4049 = vsel %vm973, 1, 0
    %v4050 = vsel %vm974, 1, 0
    %v4051 = vsel %vm975, 1, 0
    %v4052 = vsel %vm976, 1, 0
    %v4053 = vsel %vm977, 1, 0
    %v4054 = vsel %vm978, 1, 0
    %v4055 = vsel %vm979, 1, 0
    %v4056 = vsel %vm980, 1, 0
    %v4057 = vsel %vm981, 1, 0
    %v4058 = vsel %vm982, 1, 0
    %v4059 = vsel %vm983, 1, 0
    %v4060 = vsel %vm984, 1, 0
    %v4061 = vsel %vm985, 1, 0
    %v4062 = vsel %vm986, 1, 0
    %v4063 = vsel %vm987, 1, 0
    %v4064 = vsel %vm988, 1, 0
    %v4065 = vsel %vm989, 1, 0
    %v4066 = vsel %vm990, 1, 0
    %v4067 = vsel %vm991, 1, 0
    %v4068 = vsel %vm992, 1, 0
    %v4069 = vsel %vm993, 1, 0
    %v4070 = vsel %vm994, 1, 0
    %v4071 = vsel %vm995, 1, 0
    %v4072 = vsel %vm996, 1, 0
    %v4073 = vsel %vm997, 1, 0
    %v4074 = vsel %vm998, 1, 0
    %v4075 = vsel %vm999, 1, 0
    %v4076 = vsel %vm1000, 1, 0
    %v4077 = vsel %vm1001, 1, 0
    %v4078 = vsel %vm1002, 1, 0
    %v4079 = vsel %vm1003, 1, 0
    %v4080 = vsel %vm1004, 1, 0
    %v4081 = vsel %vm1005, 1, 0
    %v4082 = vsel %vm1006, 1, 0
    %v4083 = vsel %vm1007, 1, 0
    %v4084 = vsel %vm1008, 1, 0
    %v4085 = vsel %vm1009, 1, 0
    %v4086 = vsel %vm1010, 1, 0
    %v4087 = vsel %vm1011, 1, 0
    %v4088 = vsel %vm1012, 1, 0
    %v4089 = vsel %vm1013, 1, 0
    %v4090 = vsel %vm1014, 1, 0
    %v4091 = vsel %vm1015, 1, 0
    %v4092 = vsel %vm1016, 1, 0
    %v4093 = vsel %vm1017, 1, 0
    %v4094 = vsel %vm1018, 1, 0
    %v4095 = vsel %vm1019, 1, 0
    %v4096 = vsel %vm1020, 1, 0
    %v4097 = vsel %vm1021, 1, 0
    %4098 = vset.pattern.permute.xlu0 0
    %4099 = vperm.xlu0 %4098, %v4034
    %v4100 = vpop.permute.xlu0 %4099
    %4101 = vset.pattern.permute.xlu0 0
    %4102 = vperm.xlu0 %4101, %v4035
    %v4103 = vpop.permute.xlu0 %4102
    %4104 = vset.pattern.permute.xlu0 0
    %4105 = vperm.xlu0 %4104, %v4036
    %v4106 = vpop.permute.xlu0 %4105
    %4107 = vset.pattern.permute.xlu0 0
    %4108 = vperm.xlu0 %4107, %v4037
    %v4109 = vpop.permute.xlu0 %4108
    %4110 = vset.pattern.permute.xlu0 0
    %4111 = vperm.xlu0 %4110, %v4038
    %v4112 = vpop.permute.xlu0 %4111
    %4113 = vset.pattern.permute.xlu0 0
    %4114 = vperm.xlu0 %4113, %v4039
    %v4115 = vpop.permute.xlu0 %4114
    %4116 = vset.pattern.permute.xlu0 0
    %4117 = vperm.xlu0 %4116, %v4040
    %v4118 = vpop.permute.xlu0 %4117
    %4119 = vset.pattern.permute.xlu0 0
    %4120 = vperm.xlu0 %4119, %v4041
    %v4121 = vpop.permute.xlu0 %4120
    %4122 = vset.pattern.permute.xlu0 0
    %4123 = vperm.xlu0 %4122, %v4042
    %v4124 = vpop.permute.xlu0 %4123
    %4125 = vset.pattern.permute.xlu0 0
    %4126 = vperm.xlu0 %4125, %v4043
    %v4127 = vpop.permute.xlu0 %4126
    %4128 = vset.pattern.permute.xlu0 0
    %4129 = vperm.xlu0 %4128, %v4044
    %v4130 = vpop.permute.xlu0 %4129
    %4131 = vset.pattern.permute.xlu0 0
    %4132 = vperm.xlu0 %4131, %v4045
    %v4133 = vpop.permute.xlu0 %4132
    %4134 = vset.pattern.permute.xlu0 0
    %4135 = vperm.xlu0 %4134, %v4046
    %v4136 = vpop.permute.xlu0 %4135
    %4137 = vset.pattern.permute.xlu0 0
    %4138 = vperm.xlu0 %4137, %v4047
    %v4139 = vpop.permute.xlu0 %4138
    %4140 = vset.pattern.permute.xlu0 0
    %4141 = vperm.xlu0 %4140, %v4048
    %v4142 = vpop.permute.xlu0 %4141
    %4143 = vset.pattern.permute.xlu0 0
    %4144 = vperm.xlu0 %4143, %v4049
    %v4145 = vpop.permute.xlu0 %4144
    %4146 = vset.pattern.permute.xlu0 0
    %4147 = vperm.xlu0 %4146, %v4050
    %v4148 = vpop.permute.xlu0 %4147
    %4149 = vset.pattern.permute.xlu0 0
    %4150 = vperm.xlu0 %4149, %v4051
    %v4151 = vpop.permute.xlu0 %4150
    %4152 = vset.pattern.permute.xlu0 0
    %4153 = vperm.xlu0 %4152, %v4052
    %v4154 = vpop.permute.xlu0 %4153
    %4155 = vset.pattern.permute.xlu0 0
    %4156 = vperm.xlu0 %4155, %v4053
    %v4157 = vpop.permute.xlu0 %4156
    %4158 = vset.pattern.permute.xlu0 0
    %4159 = vperm.xlu0 %4158, %v4054
    %v4160 = vpop.permute.xlu0 %4159
    %4161 = vset.pattern.permute.xlu0 0
    %4162 = vperm.xlu0 %4161, %v4055
    %v4163 = vpop.permute.xlu0 %4162
    %4164 = vset.pattern.permute.xlu0 0
    %4165 = vperm.xlu0 %4164, %v4056
    %v4166 = vpop.permute.xlu0 %4165
    %4167 = vset.pattern.permute.xlu0 0
    %4168 = vperm.xlu0 %4167, %v4057
    %v4169 = vpop.permute.xlu0 %4168
    %4170 = vset.pattern.permute.xlu0 0
    %4171 = vperm.xlu0 %4170, %v4058
    %v4172 = vpop.permute.xlu0 %4171
    %4173 = vset.pattern.permute.xlu0 0
    %4174 = vperm.xlu0 %4173, %v4059
    %v4175 = vpop.permute.xlu0 %4174
    %4176 = vset.pattern.permute.xlu0 0
    %4177 = vperm.xlu0 %4176, %v4060
    %v4178 = vpop.permute.xlu0 %4177
    %4179 = vset.pattern.permute.xlu0 0
    %4180 = vperm.xlu0 %4179, %v4061
    %v4181 = vpop.permute.xlu0 %4180
    %4182 = vset.pattern.permute.xlu0 0
    %4183 = vperm.xlu0 %4182, %v4062
    %v4184 = vpop.permute.xlu0 %4183
    %4185 = vset.pattern.permute.xlu0 0
    %4186 = vperm.xlu0 %4185, %v4063
    %v4187 = vpop.permute.xlu0 %4186
    %4188 = vset.pattern.permute.xlu0 0
    %4189 = vperm.xlu0 %4188, %v4064
    %v4190 = vpop.permute.xlu0 %4189
    %4191 = vset.pattern.permute.xlu0 0
    %4192 = vperm.xlu0 %4191, %v4065
    %v4193 = vpop.permute.xlu0 %4192
    %4194 = vset.pattern.permute.xlu0 0
    %4195 = vperm.xlu0 %4194, %v4066
    %v4196 = vpop.permute.xlu0 %4195
    %4197 = vset.pattern.permute.xlu0 0
    %4198 = vperm.xlu0 %4197, %v4067
    %v4199 = vpop.permute.xlu0 %4198
    %4200 = vset.pattern.permute.xlu0 0
    %4201 = vperm.xlu0 %4200, %v4068
    %v4202 = vpop.permute.xlu0 %4201
    %4203 = vset.pattern.permute.xlu0 0
    %4204 = vperm.xlu0 %4203, %v4069
    %v4205 = vpop.permute.xlu0 %4204
    %4206 = vset.pattern.permute.xlu0 0
    %4207 = vperm.xlu0 %4206, %v4070
    %v4208 = vpop.permute.xlu0 %4207
    %4209 = vset.pattern.permute.xlu0 0
    %4210 = vperm.xlu0 %4209, %v4071
    %v4211 = vpop.permute.xlu0 %4210
    %4212 = vset.pattern.permute.xlu0 0
    %4213 = vperm.xlu0 %4212, %v4072
    %v4214 = vpop.permute.xlu0 %4213
    %4215 = vset.pattern.permute.xlu0 0
    %4216 = vperm.xlu0 %4215, %v4073
    %v4217 = vpop.permute.xlu0 %4216
    %4218 = vset.pattern.permute.xlu0 0
    %4219 = vperm.xlu0 %4218, %v4074
    %v4220 = vpop.permute.xlu0 %4219
    %4221 = vset.pattern.permute.xlu0 0
    %4222 = vperm.xlu0 %4221, %v4075
    %v4223 = vpop.permute.xlu0 %4222
    %4224 = vset.pattern.permute.xlu0 0
    %4225 = vperm.xlu0 %4224, %v4076
    %v4226 = vpop.permute.xlu0 %4225
    %4227 = vset.pattern.permute.xlu0 0
    %4228 = vperm.xlu0 %4227, %v4077
    %v4229 = vpop.permute.xlu0 %4228
    %4230 = vset.pattern.permute.xlu0 0
    %4231 = vperm.xlu0 %4230, %v4078
    %v4232 = vpop.permute.xlu0 %4231
    %4233 = vset.pattern.permute.xlu0 0
    %4234 = vperm.xlu0 %4233, %v4079
    %v4235 = vpop.permute.xlu0 %4234
    %4236 = vset.pattern.permute.xlu0 0
    %4237 = vperm.xlu0 %4236, %v4080
    %v4238 = vpop.permute.xlu0 %4237
    %4239 = vset.pattern.permute.xlu0 0
    %4240 = vperm.xlu0 %4239, %v4081
    %v4241 = vpop.permute.xlu0 %4240
    %4242 = vset.pattern.permute.xlu0 0
    %4243 = vperm.xlu0 %4242, %v4082
    %v4244 = vpop.permute.xlu0 %4243
    %4245 = vset.pattern.permute.xlu0 0
    %4246 = vperm.xlu0 %4245, %v4083
    %v4247 = vpop.permute.xlu0 %4246
    %4248 = vset.pattern.permute.xlu0 0
    %4249 = vperm.xlu0 %4248, %v4084
    %v4250 = vpop.permute.xlu0 %4249
    %4251 = vset.pattern.permute.xlu0 0
    %4252 = vperm.xlu0 %4251, %v4085
    %v4253 = vpop.permute.xlu0 %4252
    %4254 = vset.pattern.permute.xlu0 0
    %4255 = vperm.xlu0 %4254, %v4086
    %v4256 = vpop.permute.xlu0 %4255
    %4257 = vset.pattern.permute.xlu0 0
    %4258 = vperm.xlu0 %4257, %v4087
    %v4259 = vpop.permute.xlu0 %4258
    %4260 = vset.pattern.permute.xlu0 0
    %4261 = vperm.xlu0 %4260, %v4088
    %v4262 = vpop.permute.xlu0 %4261
    %4263 = vset.pattern.permute.xlu0 0
    %4264 = vperm.xlu0 %4263, %v4089
    %v4265 = vpop.permute.xlu0 %4264
    %4266 = vset.pattern.permute.xlu0 0
    %4267 = vperm.xlu0 %4266, %v4090
    %v4268 = vpop.permute.xlu0 %4267
    %4269 = vset.pattern.permute.xlu0 0
    %4270 = vperm.xlu0 %4269, %v4091
    %v4271 = vpop.permute.xlu0 %4270
    %4272 = vset.pattern.permute.xlu0 0
    %4273 = vperm.xlu0 %4272, %v4092
    %v4274 = vpop.permute.xlu0 %4273
    %4275 = vset.pattern.permute.xlu0 0
    %4276 = vperm.xlu0 %4275, %v4093
    %v4277 = vpop.permute.xlu0 %4276
    %4278 = vset.pattern.permute.xlu0 0
    %4279 = vperm.xlu0 %4278, %v4094
    %v4280 = vpop.permute.xlu0 %4279
    %4281 = vset.pattern.permute.xlu0 0
    %4282 = vperm.xlu0 %4281, %v4095
    %v4283 = vpop.permute.xlu0 %4282
    %4284 = vset.pattern.permute.xlu0 0
    %4285 = vperm.xlu0 %4284, %v4096
    %v4286 = vpop.permute.xlu0 %4285
    %4287 = vset.pattern.permute.xlu0 0
    %4288 = vperm.xlu0 %4287, %v4097
    %v4289 = vpop.permute.xlu0 %4288
    %vm4290 = vcmp.eq.s32.totalorder %v4100, 1
    %vm4291 = vcmp.eq.s32.totalorder %v4103, 1
    %vm4292 = vcmp.eq.s32.totalorder %v4106, 1
    %vm4293 = vcmp.eq.s32.totalorder %v4109, 1
    %vm4294 = vcmp.eq.s32.totalorder %v4112, 1
    %vm4295 = vcmp.eq.s32.totalorder %v4115, 1
    %vm4296 = vcmp.eq.s32.totalorder %v4118, 1
    %vm4297 = vcmp.eq.s32.totalorder %v4121, 1
    %vm4298 = vcmp.eq.s32.totalorder %v4124, 1
    %vm4299 = vcmp.eq.s32.totalorder %v4127, 1
    %vm4300 = vcmp.eq.s32.totalorder %v4130, 1
    %vm4301 = vcmp.eq.s32.totalorder %v4133, 1
    %vm4302 = vcmp.eq.s32.totalorder %v4136, 1
    %vm4303 = vcmp.eq.s32.totalorder %v4139, 1
    %vm4304 = vcmp.eq.s32.totalorder %v4142, 1
    %vm4305 = vcmp.eq.s32.totalorder %v4145, 1
    %vm4306 = vcmp.eq.s32.totalorder %v4148, 1
    %vm4307 = vcmp.eq.s32.totalorder %v4151, 1
    %vm4308 = vcmp.eq.s32.totalorder %v4154, 1
    %vm4309 = vcmp.eq.s32.totalorder %v4157, 1
    %vm4310 = vcmp.eq.s32.totalorder %v4160, 1
    %vm4311 = vcmp.eq.s32.totalorder %v4163, 1
    %vm4312 = vcmp.eq.s32.totalorder %v4166, 1
    %vm4313 = vcmp.eq.s32.totalorder %v4169, 1
    %vm4314 = vcmp.eq.s32.totalorder %v4172, 1
    %vm4315 = vcmp.eq.s32.totalorder %v4175, 1
    %vm4316 = vcmp.eq.s32.totalorder %v4178, 1
    %vm4317 = vcmp.eq.s32.totalorder %v4181, 1
    %vm4318 = vcmp.eq.s32.totalorder %v4184, 1
    %vm4319 = vcmp.eq.s32.totalorder %v4187, 1
    %vm4320 = vcmp.eq.s32.totalorder %v4190, 1
    %vm4321 = vcmp.eq.s32.totalorder %v4193, 1
    %vm4322 = vcmp.eq.s32.totalorder %v4196, 1
    %vm4323 = vcmp.eq.s32.totalorder %v4199, 1
    %vm4324 = vcmp.eq.s32.totalorder %v4202, 1
    %vm4325 = vcmp.eq.s32.totalorder %v4205, 1
    %vm4326 = vcmp.eq.s32.totalorder %v4208, 1
    %vm4327 = vcmp.eq.s32.totalorder %v4211, 1
    %vm4328 = vcmp.eq.s32.totalorder %v4214, 1
    %vm4329 = vcmp.eq.s32.totalorder %v4217, 1
    %vm4330 = vcmp.eq.s32.totalorder %v4220, 1
    %vm4331 = vcmp.eq.s32.totalorder %v4223, 1
    %vm4332 = vcmp.eq.s32.totalorder %v4226, 1
    %vm4333 = vcmp.eq.s32.totalorder %v4229, 1
    %vm4334 = vcmp.eq.s32.totalorder %v4232, 1
    %vm4335 = vcmp.eq.s32.totalorder %v4235, 1
    %vm4336 = vcmp.eq.s32.totalorder %v4238, 1
    %vm4337 = vcmp.eq.s32.totalorder %v4241, 1
    %vm4338 = vcmp.eq.s32.totalorder %v4244, 1
    %vm4339 = vcmp.eq.s32.totalorder %v4247, 1
    %vm4340 = vcmp.eq.s32.totalorder %v4250, 1
    %vm4341 = vcmp.eq.s32.totalorder %v4253, 1
    %vm4342 = vcmp.eq.s32.totalorder %v4256, 1
    %vm4343 = vcmp.eq.s32.totalorder %v4259, 1
    %vm4344 = vcmp.eq.s32.totalorder %v4262, 1
    %vm4345 = vcmp.eq.s32.totalorder %v4265, 1
    %vm4346 = vcmp.eq.s32.totalorder %v4268, 1
    %vm4347 = vcmp.eq.s32.totalorder %v4271, 1
    %vm4348 = vcmp.eq.s32.totalorder %v4274, 1
    %vm4349 = vcmp.eq.s32.totalorder %v4277, 1
    %vm4350 = vcmp.eq.s32.totalorder %v4280, 1
    %vm4351 = vcmp.eq.s32.totalorder %v4283, 1
    %vm4352 = vcmp.eq.s32.totalorder %v4286, 1
    %vm4353 = vcmp.eq.s32.totalorder %v4289, 1
    %v4354 = vsel %vm4290, %v1214, 0.0
    %v4355 = vsel %vm4291, %v1213, 0.0
    %v4356 = vsel %vm4292, %v1212, 0.0
    %v4357 = vsel %vm4293, %v1211, 0.0
    %v4358 = vsel %vm4294, %v1210, 0.0
    %v4359 = vsel %vm4295, %v1209, 0.0
    %v4360 = vsel %vm4296, %v1208, 0.0
    %v4361 = vsel %vm4297, %v1207, 0.0
    %v4362 = vsel %vm4298, %v1206, 0.0
    %v4363 = vsel %vm4299, %v1205, 0.0
    %v4364 = vsel %vm4300, %v1204, 0.0
    %v4365 = vsel %vm4301, %v1203, 0.0
    %v4366 = vsel %vm4302, %v1202, 0.0
    %v4367 = vsel %vm4303, %v1201, 0.0
    %v4368 = vsel %vm4304, %v1200, 0.0
    %v4369 = vsel %vm4305, %v1199, 0.0
    %v4370 = vsel %vm4306, %v1198, 0.0
    %v4371 = vsel %vm4307, %v1197, 0.0
    %v4372 = vsel %vm4308, %v1196, 0.0
    %v4373 = vsel %vm4309, %v1195, 0.0
    %v4374 = vsel %vm4310, %v1194, 0.0
    %v4375 = vsel %vm4311, %v1193, 0.0
    %v4376 = vsel %vm4312, %v1192, 0.0
    %v4377 = vsel %vm4313, %v1191, 0.0
    %v4378 = vsel %vm4314, %v1190, 0.0
    %v4379 = vsel %vm4315, %v1189, 0.0
    %v4380 = vsel %vm4316, %v1188, 0.0
    %v4381 = vsel %vm4317, %v1187, 0.0
    %v4382 = vsel %vm4318, %v1186, 0.0
    %v4383 = vsel %vm4319, %v1185, 0.0
    %v4384 = vsel %vm4320, %v1184, 0.0
    %v4385 = vsel %vm4321, %v1183, 0.0
    %v4386 = vsel %vm4322, %v1182, 0.0
    %v4387 = vsel %vm4323, %v1181, 0.0
    %v4388 = vsel %vm4324, %v1180, 0.0
    %v4389 = vsel %vm4325, %v1179, 0.0
    %v4390 = vsel %vm4326, %v1178, 0.0
    %v4391 = vsel %vm4327, %v1177, 0.0
    %v4392 = vsel %vm4328, %v1176, 0.0
    %v4393 = vsel %vm4329, %v1175, 0.0
    %v4394 = vsel %vm4330, %v1174, 0.0
    %v4395 = vsel %vm4331, %v1173, 0.0
    %v4396 = vsel %vm4332, %v1172, 0.0
    %v4397 = vsel %vm4333, %v1171, 0.0
    %v4398 = vsel %vm4334, %v1170, 0.0
    %v4399 = vsel %vm4335, %v1169, 0.0
    %v4400 = vsel %vm4336, %v1168, 0.0
    %v4401 = vsel %vm4337, %v1167, 0.0
    %v4402 = vsel %vm4338, %v1166, 0.0
    %v4403 = vsel %vm4339, %v1165, 0.0
    %v4404 = vsel %vm4340, %v1164, 0.0
    %v4405 = vsel %vm4341, %v1163, 0.0
    %v4406 = vsel %vm4342, %v1162, 0.0
    %v4407 = vsel %vm4343, %v1161, 0.0
    %v4408 = vsel %vm4344, %v1160, 0.0
    %v4409 = vsel %vm4345, %v1159, 0.0
    %v4410 = vsel %vm4346, %v1158, 0.0
    %v4411 = vsel %vm4347, %v1157, 0.0
    %v4412 = vsel %vm4348, %v1156, 0.0
    %v4413 = vsel %vm4349, %v1155, 0.0
    %v4414 = vsel %vm4350, %v1154, 0.0
    %v4415 = vsel %vm4351, %v1153, 0.0
    %v4416 = vsel %vm4352, %v1216, 0.0
    %v4417 = vsel %vm4353, %v1215, 0.0
    %v4418 = vpack.c.bf16 %v4354, %v4354
    %v4419 = vpack.c.bf16 %v4355, %v4355
    %v4420 = vpack.c.bf16 %v4356, %v4356
    %v4421 = vpack.c.bf16 %v4357, %v4357
    %v4422 = vpack.c.bf16 %v4358, %v4358
    %v4423 = vpack.c.bf16 %v4359, %v4359
    %v4424 = vpack.c.bf16 %v4360, %v4360
    %v4425 = vpack.c.bf16 %v4361, %v4361
    %v4426 = vpack.c.bf16 %v4362, %v4362
    %v4427 = vpack.c.bf16 %v4363, %v4363
    %v4428 = vpack.c.bf16 %v4364, %v4364
    %v4429 = vpack.c.bf16 %v4365, %v4365
    %v4430 = vpack.c.bf16 %v4366, %v4366
    %v4431 = vpack.c.bf16 %v4367, %v4367
    %v4432 = vpack.c.bf16 %v4368, %v4368
    %v4433 = vpack.c.bf16 %v4369, %v4369
    %v4434 = vpack.c.bf16 %v4370, %v4370
    %v4435 = vpack.c.bf16 %v4371, %v4371
    %v4436 = vpack.c.bf16 %v4372, %v4372
    %v4437 = vpack.c.bf16 %v4373, %v4373
    %v4438 = vpack.c.bf16 %v4374, %v4374
    %v4439 = vpack.c.bf16 %v4375, %v4375
    %v4440 = vpack.c.bf16 %v4376, %v4376
    %v4441 = vpack.c.bf16 %v4377, %v4377
    %v4442 = vpack.c.bf16 %v4378, %v4378
    %v4443 = vpack.c.bf16 %v4379, %v4379
    %v4444 = vpack.c.bf16 %v4380, %v4380
    %v4445 = vpack.c.bf16 %v4381, %v4381
    %v4446 = vpack.c.bf16 %v4382, %v4382
    %v4447 = vpack.c.bf16 %v4383, %v4383
    %v4448 = vpack.c.bf16 %v4384, %v4384
    %v4449 = vpack.c.bf16 %v4385, %v4385
    %v4450 = vpack.c.bf16 %v4386, %v4386
    %v4451 = vpack.c.bf16 %v4387, %v4387
    %v4452 = vpack.c.bf16 %v4388, %v4388
    %v4453 = vpack.c.bf16 %v4389, %v4389
    %v4454 = vpack.c.bf16 %v4390, %v4390
    %v4455 = vpack.c.bf16 %v4391, %v4391
    %v4456 = vpack.c.bf16 %v4392, %v4392
    %v4457 = vpack.c.bf16 %v4393, %v4393
    %v4458 = vpack.c.bf16 %v4394, %v4394
    %v4459 = vpack.c.bf16 %v4395, %v4395
    %v4460 = vpack.c.bf16 %v4396, %v4396
    %v4461 = vpack.c.bf16 %v4397, %v4397
    %v4462 = vpack.c.bf16 %v4398, %v4398
    %v4463 = vpack.c.bf16 %v4399, %v4399
    %v4464 = vpack.c.bf16 %v4400, %v4400
    %v4465 = vpack.c.bf16 %v4401, %v4401
    %v4466 = vpack.c.bf16 %v4402, %v4402
    %v4467 = vpack.c.bf16 %v4403, %v4403
    %v4468 = vpack.c.bf16 %v4404, %v4404
    %v4469 = vpack.c.bf16 %v4405, %v4405
    %v4470 = vpack.c.bf16 %v4406, %v4406
    %v4471 = vpack.c.bf16 %v4407, %v4407
    %v4472 = vpack.c.bf16 %v4408, %v4408
    %v4473 = vpack.c.bf16 %v4409, %v4409
    %v4474 = vpack.c.bf16 %v4410, %v4410
    %v4475 = vpack.c.bf16 %v4411, %v4411
    %v4476 = vpack.c.bf16 %v4412, %v4412
    %v4477 = vpack.c.bf16 %v4413, %v4413
    %v4478 = vpack.c.bf16 %v4414, %v4414
    %v4479 = vpack.c.bf16 %v4415, %v4415
    %v4480 = vpack.c.bf16 %v4416, %v4416
    %v4481 = vpack.c.bf16 %v4417, %v4417
    %4482 = vst [vmem:[#allocation2 + $0x18] sm:$0xf] %v4418
    %4483 = vst [vmem:[#allocation2 + $0x3c] sm:$0xf] %v4419
    %4484 = vst [vmem:[#allocation2 + $0x60] sm:$0xf] %v4420
    %4485 = vst [vmem:[#allocation2 + $0x84] sm:$0xf] %v4421
    %4486 = vst [vmem:[#allocation2 + $0xa8] sm:$0xf] %v4422
    %4487 = vst [vmem:[#allocation2 + $0xcc] sm:$0xf] %v4423
    %4488 = vst [vmem:[#allocation2 + $0xf0] sm:$0xf] %v4424
    %4489 = vst [vmem:[#allocation2 + $0x114] sm:$0xf] %v4425
    %4490 = vst [vmem:[#allocation2 + $0x138] sm:$0xf] %v4426
    %4491 = vst [vmem:[#allocation2 + $0x15c] sm:$0xf] %v4427
    %4492 = vst [vmem:[#allocation2 + $0x180] sm:$0xf] %v4428
    %4493 = vst [vmem:[#allocation2 + $0x1a4] sm:$0xf] %v4429
    %4494 = vst [vmem:[#allocation2 + $0x1c8] sm:$0xf] %v4430
    %4495 = vst [vmem:[#allocation2 + $0x1ec] sm:$0xf] %v4431
    %4496 = vst [vmem:[#allocation2 + $0x210] sm:$0xf] %v4432
    %4497 = vst [vmem:[#allocation2 + $0x234] sm:$0xf] %v4433
    %4498 = vst [vmem:[#allocation2 + $0x258] sm:$0xf] %v4434
    %4499 = vst [vmem:[#allocation2 + $0x27c] sm:$0xf] %v4435
    %4500 = vst [vmem:[#allocation2 + $0x2a0] sm:$0xf] %v4436
    %4501 = vst [vmem:[#allocation2 + $0x2c4] sm:$0xf] %v4437
    %4502 = vst [vmem:[#allocation2 + $0x2e8] sm:$0xf] %v4438
    %4503 = vst [vmem:[#allocation2 + $0x30c] sm:$0xf] %v4439
    %4504 = vst [vmem:[#allocation2 + $0x330] sm:$0xf] %v4440
    %4505 = vst [vmem:[#allocation2 + $0x354] sm:$0xf] %v4441
    %4506 = vst [vmem:[#allocation2 + $0x378] sm:$0xf] %v4442
    %4507 = vst [vmem:[#allocation2 + $0x39c] sm:$0xf] %v4443
    %4508 = vst [vmem:[#allocation2 + $0x3c0] sm:$0xf] %v4444
    %4509 = vst [vmem:[#allocation2 + $0x3e4] sm:$0xf] %v4445
    %4510 = vst [vmem:[#allocation2 + $0x408] sm:$0xf] %v4446
    %4511 = vst [vmem:[#allocation2 + $0x42c] sm:$0xf] %v4447
    %4512 = vst [vmem:[#allocation2 + $0x450] sm:$0xf] %v4448
    %4513 = vst [vmem:[#allocation2 + $0x474] sm:$0xf] %v4449
    %4514 = vst [vmem:[#allocation2 + $0x498] sm:$0xf] %v4450
    %4515 = vst [vmem:[#allocation2 + $0x4bc] sm:$0xf] %v4451
    %4516 = vst [vmem:[#allocation2 + $0x4e0] sm:$0xf] %v4452
    %4517 = vst [vmem:[#allocation2 + $0x504] sm:$0xf] %v4453
    %4518 = vst [vmem:[#allocation2 + $0x528] sm:$0xf] %v4454
    %4519 = vst [vmem:[#allocation2 + $0x54c] sm:$0xf] %v4455
    %4520 = vst [vmem:[#allocation2 + $0x570] sm:$0xf] %v4456
    %4521 = vst [vmem:[#allocation2 + $0x594] sm:$0xf] %v4457
    %4522 = vst [vmem:[#allocation2 + $0x5b8] sm:$0xf] %v4458
    %4523 = vst [vmem:[#allocation2 + $0x5dc] sm:$0xf] %v4459
    %4524 = vst [vmem:[#allocation2 + $0x600] sm:$0xf] %v4460
    %4525 = vst [vmem:[#allocation2 + $0x624] sm:$0xf] %v4461
    %4526 = vst [vmem:[#allocation2 + $0x648] sm:$0xf] %v4462
    %4527 = vst [vmem:[#allocation2 + $0x66c] sm:$0xf] %v4463
    %4528 = vst [vmem:[#allocation2 + $0x690] sm:$0xf] %v4464
    %4529 = vst [vmem:[#allocation2 + $0x6b4] sm:$0xf] %v4465
    %4530 = vst [vmem:[#allocation2 + $0x6d8] sm:$0xf] %v4466
    %4531 = vst [vmem:[#allocation2 + $0x6fc] sm:$0xf] %v4467
    %4532 = vst [vmem:[#allocation2 + $0x720] sm:$0xf] %v4468
    %4533 = vst [vmem:[#allocation2 + $0x744] sm:$0xf] %v4469
    %4534 = vst [vmem:[#allocation2 + $0x768] sm:$0xf] %v4470
    %4535 = vst [vmem:[#allocation2 + $0x78c] sm:$0xf] %v4471
    %4536 = vst [vmem:[#allocation2 + $0x7b0] sm:$0xf] %v4472
    %4537 = vst [vmem:[#allocation2 + $0x7d4] sm:$0xf] %v4473
    %4538 = vst [vmem:[#allocation2 + $0x7f8] sm:$0xf] %v4474
    %4539 = vst [vmem:[#allocation2 + $0x81c] sm:$0xf] %v4475
    %4540 = vst [vmem:[#allocation2 + $0x840] sm:$0xf] %v4476
    %4541 = vst [vmem:[#allocation2 + $0x864] sm:$0xf] %v4477
    %4542 = vst [vmem:[#allocation2 + $0x888] sm:$0xf] %v4478
    %4543 = vst [vmem:[#allocation2 + $0x8ac] sm:$0xf] %v4479
    %4544 = vst [vmem:[#allocation2 + $0x8d0] sm:$0xf] %v4480
    %4545 = vst [vmem:[#allocation2 + $0x8f4] sm:$0xf] %v4481
    %v4546 = vsel %vm638, 1, 0
    %v4547 = vsel %vm639, 1, 0
    %v4548 = vsel %vm640, 1, 0
    %v4549 = vsel %vm641, 1, 0
    %v4550 = vsel %vm642, 1, 0
    %v4551 = vsel %vm643, 1, 0
    %v4552 = vsel %vm644, 1, 0
    %v4553 = vsel %vm645, 1, 0
    %v4554 = vsel %vm646, 1, 0
    %v4555 = vsel %vm647, 1, 0
    %v4556 = vsel %vm648, 1, 0
    %v4557 = vsel %vm649, 1, 0
    %v4558 = vsel %vm650, 1, 0
    %v4559 = vsel %vm651, 1, 0
    %v4560 = vsel %vm652, 1, 0
    %v4561 = vsel %vm653, 1, 0
    %v4562 = vsel %vm654, 1, 0
    %v4563 = vsel %vm655, 1, 0
    %v4564 = vsel %vm656, 1, 0
    %v4565 = vsel %vm657, 1, 0
    %v4566 = vsel %vm658, 1, 0
    %v4567 = vsel %vm659, 1, 0
    %v4568 = vsel %vm660, 1, 0
    %v4569 = vsel %vm661, 1, 0
    %v4570 = vsel %vm662, 1, 0
    %v4571 = vsel %vm663, 1, 0
    %v4572 = vsel %vm664, 1, 0
    %v4573 = vsel %vm665, 1, 0
    %v4574 = vsel %vm666, 1, 0
    %v4575 = vsel %vm667, 1, 0
    %v4576 = vsel %vm668, 1, 0
    %v4577 = vsel %vm669, 1, 0
    %v4578 = vsel %vm670, 1, 0
    %v4579 = vsel %vm671, 1, 0
    %v4580 = vsel %vm672, 1, 0
    %v4581 = vsel %vm673, 1, 0
    %v4582 = vsel %vm674, 1, 0
    %v4583 = vsel %vm675, 1, 0
    %v4584 = vsel %vm676, 1, 0
    %v4585 = vsel %vm677, 1, 0
    %v4586 = vsel %vm678, 1, 0
    %v4587 = vsel %vm679, 1, 0
    %v4588 = vsel %vm680, 1, 0
    %v4589 = vsel %vm681, 1, 0
    %v4590 = vsel %vm682, 1, 0
    %v4591 = vsel %vm683, 1, 0
    %v4592 = vsel %vm684, 1, 0
    %v4593 = vsel %vm685, 1, 0
    %v4594 = vsel %vm686, 1, 0
    %v4595 = vsel %vm687, 1, 0
    %v4596 = vsel %vm688, 1, 0
    %v4597 = vsel %vm689, 1, 0
    %v4598 = vsel %vm690, 1, 0
    %v4599 = vsel %vm691, 1, 0
    %v4600 = vsel %vm692, 1, 0
    %v4601 = vsel %vm693, 1, 0
    %v4602 = vsel %vm694, 1, 0
    %v4603 = vsel %vm695, 1, 0
    %v4604 = vsel %vm696, 1, 0
    %v4605 = vsel %vm697, 1, 0
    %v4606 = vsel %vm698, 1, 0
    %v4607 = vsel %vm699, 1, 0
    %v4608 = vsel %vm700, 1, 0
    %v4609 = vsel %vm701, 1, 0
    %4610 = vset.pattern.permute.xlu0 0
    %4611 = vperm.xlu0 %4610, %v4546
    %v4612 = vpop.permute.xlu0 %4611
    %4613 = vset.pattern.permute.xlu0 0
    %4614 = vperm.xlu0 %4613, %v4547
    %v4615 = vpop.permute.xlu0 %4614
    %4616 = vset.pattern.permute.xlu0 0
    %4617 = vperm.xlu0 %4616, %v4548
    %v4618 = vpop.permute.xlu0 %4617
    %4619 = vset.pattern.permute.xlu0 0
    %4620 = vperm.xlu0 %4619, %v4549
    %v4621 = vpop.permute.xlu0 %4620
    %4622 = vset.pattern.permute.xlu0 0
    %4623 = vperm.xlu0 %4622, %v4550
    %v4624 = vpop.permute.xlu0 %4623
    %4625 = vset.pattern.permute.xlu0 0
    %4626 = vperm.xlu0 %4625, %v4551
    %v4627 = vpop.permute.xlu0 %4626
    %4628 = vset.pattern.permute.xlu0 0
    %4629 = vperm.xlu0 %4628, %v4552
    %v4630 = vpop.permute.xlu0 %4629
    %4631 = vset.pattern.permute.xlu0 0
    %4632 = vperm.xlu0 %4631, %v4553
    %v4633 = vpop.permute.xlu0 %4632
    %4634 = vset.pattern.permute.xlu0 0
    %4635 = vperm.xlu0 %4634, %v4554
    %v4636 = vpop.permute.xlu0 %4635
    %4637 = vset.pattern.permute.xlu0 0
    %4638 = vperm.xlu0 %4637, %v4555
    %v4639 = vpop.permute.xlu0 %4638
    %4640 = vset.pattern.permute.xlu0 0
    %4641 = vperm.xlu0 %4640, %v4556
    %v4642 = vpop.permute.xlu0 %4641
    %4643 = vset.pattern.permute.xlu0 0
    %4644 = vperm.xlu0 %4643, %v4557
    %v4645 = vpop.permute.xlu0 %4644
    %4646 = vset.pattern.permute.xlu0 0
    %4647 = vperm.xlu0 %4646, %v4558
    %v4648 = vpop.permute.xlu0 %4647
    %4649 = vset.pattern.permute.xlu0 0
    %4650 = vperm.xlu0 %4649, %v4559
    %v4651 = vpop.permute.xlu0 %4650
    %4652 = vset.pattern.permute.xlu0 0
    %4653 = vperm.xlu0 %4652, %v4560
    %v4654 = vpop.permute.xlu0 %4653
    %4655 = vset.pattern.permute.xlu0 0
    %4656 = vperm.xlu0 %4655, %v4561
    %v4657 = vpop.permute.xlu0 %4656
    %4658 = vset.pattern.permute.xlu0 0
    %4659 = vperm.xlu0 %4658, %v4562
    %v4660 = vpop.permute.xlu0 %4659
    %4661 = vset.pattern.permute.xlu0 0
    %4662 = vperm.xlu0 %4661, %v4563
    %v4663 = vpop.permute.xlu0 %4662
    %4664 = vset.pattern.permute.xlu0 0
    %4665 = vperm.xlu0 %4664, %v4564
    %v4666 = vpop.permute.xlu0 %4665
    %4667 = vset.pattern.permute.xlu0 0
    %4668 = vperm.xlu0 %4667, %v4565
    %v4669 = vpop.permute.xlu0 %4668
    %4670 = vset.pattern.permute.xlu0 0
    %4671 = vperm.xlu0 %4670, %v4566
    %v4672 = vpop.permute.xlu0 %4671
    %4673 = vset.pattern.permute.xlu0 0
    %4674 = vperm.xlu0 %4673, %v4567
    %v4675 = vpop.permute.xlu0 %4674
    %4676 = vset.pattern.permute.xlu0 0
    %4677 = vperm.xlu0 %4676, %v4568
    %v4678 = vpop.permute.xlu0 %4677
    %4679 = vset.pattern.permute.xlu0 0
    %4680 = vperm.xlu0 %4679, %v4569
    %v4681 = vpop.permute.xlu0 %4680
    %4682 = vset.pattern.permute.xlu0 0
    %4683 = vperm.xlu0 %4682, %v4570
    %v4684 = vpop.permute.xlu0 %4683
    %4685 = vset.pattern.permute.xlu0 0
    %4686 = vperm.xlu0 %4685, %v4571
    %v4687 = vpop.permute.xlu0 %4686
    %4688 = vset.pattern.permute.xlu0 0
    %4689 = vperm.xlu0 %4688, %v4572
    %v4690 = vpop.permute.xlu0 %4689
    %4691 = vset.pattern.permute.xlu0 0
    %4692 = vperm.xlu0 %4691, %v4573
    %v4693 = vpop.permute.xlu0 %4692
    %4694 = vset.pattern.permute.xlu0 0
    %4695 = vperm.xlu0 %4694, %v4574
    %v4696 = vpop.permute.xlu0 %4695
    %4697 = vset.pattern.permute.xlu0 0
    %4698 = vperm.xlu0 %4697, %v4575
    %v4699 = vpop.permute.xlu0 %4698
    %4700 = vset.pattern.permute.xlu0 0
    %4701 = vperm.xlu0 %4700, %v4576
    %v4702 = vpop.permute.xlu0 %4701
    %4703 = vset.pattern.permute.xlu0 0
    %4704 = vperm.xlu0 %4703, %v4577
    %v4705 = vpop.permute.xlu0 %4704
    %4706 = vset.pattern.permute.xlu0 0
    %4707 = vperm.xlu0 %4706, %v4578
    %v4708 = vpop.permute.xlu0 %4707
    %4709 = vset.pattern.permute.xlu0 0
    %4710 = vperm.xlu0 %4709, %v4579
    %v4711 = vpop.permute.xlu0 %4710
    %4712 = vset.pattern.permute.xlu0 0
    %4713 = vperm.xlu0 %4712, %v4580
    %v4714 = vpop.permute.xlu0 %4713
    %4715 = vset.pattern.permute.xlu0 0
    %4716 = vperm.xlu0 %4715, %v4581
    %v4717 = vpop.permute.xlu0 %4716
    %4718 = vset.pattern.permute.xlu0 0
    %4719 = vperm.xlu0 %4718, %v4582
    %v4720 = vpop.permute.xlu0 %4719
    %4721 = vset.pattern.permute.xlu0 0
    %4722 = vperm.xlu0 %4721, %v4583
    %v4723 = vpop.permute.xlu0 %4722
    %4724 = vset.pattern.permute.xlu0 0
    %4725 = vperm.xlu0 %4724, %v4584
    %v4726 = vpop.permute.xlu0 %4725
    %4727 = vset.pattern.permute.xlu0 0
    %4728 = vperm.xlu0 %4727, %v4585
    %v4729 = vpop.permute.xlu0 %4728
    %4730 = vset.pattern.permute.xlu0 0
    %4731 = vperm.xlu0 %4730, %v4586
    %v4732 = vpop.permute.xlu0 %4731
    %4733 = vset.pattern.permute.xlu0 0
    %4734 = vperm.xlu0 %4733, %v4587
    %v4735 = vpop.permute.xlu0 %4734
    %4736 = vset.pattern.permute.xlu0 0
    %4737 = vperm.xlu0 %4736, %v4588
    %v4738 = vpop.permute.xlu0 %4737
    %4739 = vset.pattern.permute.xlu0 0
    %4740 = vperm.xlu0 %4739, %v4589
    %v4741 = vpop.permute.xlu0 %4740
    %4742 = vset.pattern.permute.xlu0 0
    %4743 = vperm.xlu0 %4742, %v4590
    %v4744 = vpop.permute.xlu0 %4743
    %4745 = vset.pattern.permute.xlu0 0
    %4746 = vperm.xlu0 %4745, %v4591
    %v4747 = vpop.permute.xlu0 %4746
    %4748 = vset.pattern.permute.xlu0 0
    %4749 = vperm.xlu0 %4748, %v4592
    %v4750 = vpop.permute.xlu0 %4749
    %4751 = vset.pattern.permute.xlu0 0
    %4752 = vperm.xlu0 %4751, %v4593
    %v4753 = vpop.permute.xlu0 %4752
    %4754 = vset.pattern.permute.xlu0 0
    %4755 = vperm.xlu0 %4754, %v4594
    %v4756 = vpop.permute.xlu0 %4755
    %4757 = vset.pattern.permute.xlu0 0
    %4758 = vperm.xlu0 %4757, %v4595
    %v4759 = vpop.permute.xlu0 %4758
    %4760 = vset.pattern.permute.xlu0 0
    %4761 = vperm.xlu0 %4760, %v4596
    %v4762 = vpop.permute.xlu0 %4761
    %4763 = vset.pattern.permute.xlu0 0
    %4764 = vperm.xlu0 %4763, %v4597
    %v4765 = vpop.permute.xlu0 %4764
    %4766 = vset.pattern.permute.xlu0 0
    %4767 = vperm.xlu0 %4766, %v4598
    %v4768 = vpop.permute.xlu0 %4767
    %4769 = vset.pattern.permute.xlu0 0
    %4770 = vperm.xlu0 %4769, %v4599
    %v4771 = vpop.permute.xlu0 %4770
    %4772 = vset.pattern.permute.xlu0 0
    %4773 = vperm.xlu0 %4772, %v4600
    %v4774 = vpop.permute.xlu0 %4773
    %4775 = vset.pattern.permute.xlu0 0
    %4776 = vperm.xlu0 %4775, %v4601
    %v4777 = vpop.permute.xlu0 %4776
    %4778 = vset.pattern.permute.xlu0 0
    %4779 = vperm.xlu0 %4778, %v4602
    %v4780 = vpop.permute.xlu0 %4779
    %4781 = vset.pattern.permute.xlu0 0
    %4782 = vperm.xlu0 %4781, %v4603
    %v4783 = vpop.permute.xlu0 %4782
    %4784 = vset.pattern.permute.xlu0 0
    %4785 = vperm.xlu0 %4784, %v4604
    %v4786 = vpop.permute.xlu0 %4785
    %4787 = vset.pattern.permute.xlu0 0
    %4788 = vperm.xlu0 %4787, %v4605
    %v4789 = vpop.permute.xlu0 %4788
    %4790 = vset.pattern.permute.xlu0 0
    %4791 = vperm.xlu0 %4790, %v4606
    %v4792 = vpop.permute.xlu0 %4791
    %4793 = vset.pattern.permute.xlu0 0
    %4794 = vperm.xlu0 %4793, %v4607
    %v4795 = vpop.permute.xlu0 %4794
    %4796 = vset.pattern.permute.xlu0 0
    %4797 = vperm.xlu0 %4796, %v4608
    %v4798 = vpop.permute.xlu0 %4797
    %4799 = vset.pattern.permute.xlu0 0
    %4800 = vperm.xlu0 %4799, %v4609
    %v4801 = vpop.permute.xlu0 %4800
    %vm4802 = vcmp.eq.s32.totalorder %v4612, 1
    %vm4803 = vcmp.eq.s32.totalorder %v4615, 1
    %vm4804 = vcmp.eq.s32.totalorder %v4618, 1
    %vm4805 = vcmp.eq.s32.totalorder %v4621, 1
    %vm4806 = vcmp.eq.s32.totalorder %v4624, 1
    %vm4807 = vcmp.eq.s32.totalorder %v4627, 1
    %vm4808 = vcmp.eq.s32.totalorder %v4630, 1
    %vm4809 = vcmp.eq.s32.totalorder %v4633, 1
    %vm4810 = vcmp.eq.s32.totalorder %v4636, 1
    %vm4811 = vcmp.eq.s32.totalorder %v4639, 1
    %vm4812 = vcmp.eq.s32.totalorder %v4642, 1
    %vm4813 = vcmp.eq.s32.totalorder %v4645, 1
    %vm4814 = vcmp.eq.s32.totalorder %v4648, 1
    %vm4815 = vcmp.eq.s32.totalorder %v4651, 1
    %vm4816 = vcmp.eq.s32.totalorder %v4654, 1
    %vm4817 = vcmp.eq.s32.totalorder %v4657, 1
    %vm4818 = vcmp.eq.s32.totalorder %v4660, 1
    %vm4819 = vcmp.eq.s32.totalorder %v4663, 1
    %vm4820 = vcmp.eq.s32.totalorder %v4666, 1
    %vm4821 = vcmp.eq.s32.totalorder %v4669, 1
    %vm4822 = vcmp.eq.s32.totalorder %v4672, 1
    %vm4823 = vcmp.eq.s32.totalorder %v4675, 1
    %vm4824 = vcmp.eq.s32.totalorder %v4678, 1
    %vm4825 = vcmp.eq.s32.totalorder %v4681, 1
    %vm4826 = vcmp.eq.s32.totalorder %v4684, 1
    %vm4827 = vcmp.eq.s32.totalorder %v4687, 1
    %vm4828 = vcmp.eq.s32.totalorder %v4690, 1
    %vm4829 = vcmp.eq.s32.totalorder %v4693, 1
    %vm4830 = vcmp.eq.s32.totalorder %v4696, 1
    %vm4831 = vcmp.eq.s32.totalorder %v4699, 1
    %vm4832 = vcmp.eq.s32.totalorder %v4702, 1
    %vm4833 = vcmp.eq.s32.totalorder %v4705, 1
    %vm4834 = vcmp.eq.s32.totalorder %v4708, 1
    %vm4835 = vcmp.eq.s32.totalorder %v4711, 1
    %vm4836 = vcmp.eq.s32.totalorder %v4714, 1
    %vm4837 = vcmp.eq.s32.totalorder %v4717, 1
    %vm4838 = vcmp.eq.s32.totalorder %v4720, 1
    %vm4839 = vcmp.eq.s32.totalorder %v4723, 1
    %vm4840 = vcmp.eq.s32.totalorder %v4726, 1
    %vm4841 = vcmp.eq.s32.totalorder %v4729, 1
    %vm4842 = vcmp.eq.s32.totalorder %v4732, 1
    %vm4843 = vcmp.eq.s32.totalorder %v4735, 1
    %vm4844 = vcmp.eq.s32.totalorder %v4738, 1
    %vm4845 = vcmp.eq.s32.totalorder %v4741, 1
    %vm4846 = vcmp.eq.s32.totalorder %v4744, 1
    %vm4847 = vcmp.eq.s32.totalorder %v4747, 1
    %vm4848 = vcmp.eq.s32.totalorder %v4750, 1
    %vm4849 = vcmp.eq.s32.totalorder %v4753, 1
    %vm4850 = vcmp.eq.s32.totalorder %v4756, 1
    %vm4851 = vcmp.eq.s32.totalorder %v4759, 1
    %vm4852 = vcmp.eq.s32.totalorder %v4762, 1
    %vm4853 = vcmp.eq.s32.totalorder %v4765, 1
    %vm4854 = vcmp.eq.s32.totalorder %v4768, 1
    %vm4855 = vcmp.eq.s32.totalorder %v4771, 1
    %vm4856 = vcmp.eq.s32.totalorder %v4774, 1
    %vm4857 = vcmp.eq.s32.totalorder %v4777, 1
    %vm4858 = vcmp.eq.s32.totalorder %v4780, 1
    %vm4859 = vcmp.eq.s32.totalorder %v4783, 1
    %vm4860 = vcmp.eq.s32.totalorder %v4786, 1
    %vm4861 = vcmp.eq.s32.totalorder %v4789, 1
    %vm4862 = vcmp.eq.s32.totalorder %v4792, 1
    %vm4863 = vcmp.eq.s32.totalorder %v4795, 1
    %vm4864 = vcmp.eq.s32.totalorder %v4798, 1
    %vm4865 = vcmp.eq.s32.totalorder %v4801, 1
    %v4866 = vsel %vm4802, %v384, 0.0
    %v4867 = vsel %vm4803, %v385, 0.0
    %v4868 = vsel %vm4804, %v386, 0.0
    %v4869 = vsel %vm4805, %v387, 0.0
    %v4870 = vsel %vm4806, %v388, 0.0
    %v4871 = vsel %vm4807, %v389, 0.0
    %v4872 = vsel %vm4808, %v390, 0.0
    %v4873 = vsel %vm4809, %v391, 0.0
    %v4874 = vsel %vm4810, %v392, 0.0
    %v4875 = vsel %vm4811, %v393, 0.0
    %v4876 = vsel %vm4812, %v394, 0.0
    %v4877 = vsel %vm4813, %v395, 0.0
    %v4878 = vsel %vm4814, %v396, 0.0
    %v4879 = vsel %vm4815, %v397, 0.0
    %v4880 = vsel %vm4816, %v398, 0.0
    %v4881 = vsel %vm4817, %v399, 0.0
    %v4882 = vsel %vm4818, %v400, 0.0
    %v4883 = vsel %vm4819, %v401, 0.0
    %v4884 = vsel %vm4820, %v402, 0.0
    %v4885 = vsel %vm4821, %v403, 0.0
    %v4886 = vsel %vm4822, %v404, 0.0
    %v4887 = vsel %vm4823, %v405, 0.0
    %v4888 = vsel %vm4824, %v406, 0.0
    %v4889 = vsel %vm4825, %v407, 0.0
    %v4890 = vsel %vm4826, %v408, 0.0
    %v4891 = vsel %vm4827, %v409, 0.0
    %v4892 = vsel %vm4828, %v410, 0.0
    %v4893 = vsel %vm4829, %v411, 0.0
    %v4894 = vsel %vm4830, %v412, 0.0
    %v4895 = vsel %vm4831, %v413, 0.0
    %v4896 = vsel %vm4832, %v414, 0.0
    %v4897 = vsel %vm4833, %v415, 0.0
    %v4898 = vsel %vm4834, %v416, 0.0
    %v4899 = vsel %vm4835, %v417, 0.0
    %v4900 = vsel %vm4836, %v418, 0.0
    %v4901 = vsel %vm4837, %v419, 0.0
    %v4902 = vsel %vm4838, %v420, 0.0
    %v4903 = vsel %vm4839, %v421, 0.0
    %v4904 = vsel %vm4840, %v422, 0.0
    %v4905 = vsel %vm4841, %v423, 0.0
    %v4906 = vsel %vm4842, %v424, 0.0
    %v4907 = vsel %vm4843, %v425, 0.0
    %v4908 = vsel %vm4844, %v426, 0.0
    %v4909 = vsel %vm4845, %v427, 0.0
    %v4910 = vsel %vm4846, %v428, 0.0
    %v4911 = vsel %vm4847, %v429, 0.0
    %v4912 = vsel %vm4848, %v430, 0.0
    %v4913 = vsel %vm4849, %v431, 0.0
    %v4914 = vsel %vm4850, %v432, 0.0
    %v4915 = vsel %vm4851, %v433, 0.0
    %v4916 = vsel %vm4852, %v434, 0.0
    %v4917 = vsel %vm4853, %v435, 0.0
    %v4918 = vsel %vm4854, %v436, 0.0
    %v4919 = vsel %vm4855, %v437, 0.0
    %v4920 = vsel %vm4856, %v438, 0.0
    %v4921 = vsel %vm4857, %v439, 0.0
    %v4922 = vsel %vm4858, %v440, 0.0
    %v4923 = vsel %vm4859, %v441, 0.0
    %v4924 = vsel %vm4860, %v442, 0.0
    %v4925 = vsel %vm4861, %v443, 0.0
    %v4926 = vsel %vm4862, %v444, 0.0
    %v4927 = vsel %vm4863, %v445, 0.0
    %v4928 = vsel %vm4864, %v382, 0.0
    %v4929 = vsel %vm4865, %v383, 0.0
    %v4930 = vpack.c.bf16 %v4866, %v4866
    %v4931 = vpack.c.bf16 %v4867, %v4867
    %v4932 = vpack.c.bf16 %v4868, %v4868
    %v4933 = vpack.c.bf16 %v4869, %v4869
    %v4934 = vpack.c.bf16 %v4870, %v4870
    %v4935 = vpack.c.bf16 %v4871, %v4871
    %v4936 = vpack.c.bf16 %v4872, %v4872
    %v4937 = vpack.c.bf16 %v4873, %v4873
    %v4938 = vpack.c.bf16 %v4874, %v4874
    %v4939 = vpack.c.bf16 %v4875, %v4875
    %v4940 = vpack.c.bf16 %v4876, %v4876
    %v4941 = vpack.c.bf16 %v4877, %v4877
    %v4942 = vpack.c.bf16 %v4878, %v4878
    %v4943 = vpack.c.bf16 %v4879, %v4879
    %v4944 = vpack.c.bf16 %v4880, %v4880
    %v4945 = vpack.c.bf16 %v4881, %v4881
    %v4946 = vpack.c.bf16 %v4882, %v4882
    %v4947 = vpack.c.bf16 %v4883, %v4883
    %v4948 = vpack.c.bf16 %v4884, %v4884
    %v4949 = vpack.c.bf16 %v4885, %v4885
    %v4950 = vpack.c.bf16 %v4886, %v4886
    %v4951 = vpack.c.bf16 %v4887, %v4887
    %v4952 = vpack.c.bf16 %v4888, %v4888
    %v4953 = vpack.c.bf16 %v4889, %v4889
    %v4954 = vpack.c.bf16 %v4890, %v4890
    %v4955 = vpack.c.bf16 %v4891, %v4891
    %v4956 = vpack.c.bf16 %v4892, %v4892
    %v4957 = vpack.c.bf16 %v4893, %v4893
    %v4958 = vpack.c.bf16 %v4894, %v4894
    %v4959 = vpack.c.bf16 %v4895, %v4895
    %v4960 = vpack.c.bf16 %v4896, %v4896
    %v4961 = vpack.c.bf16 %v4897, %v4897
    %v4962 = vpack.c.bf16 %v4898, %v4898
    %v4963 = vpack.c.bf16 %v4899, %v4899
    %v4964 = vpack.c.bf16 %v4900, %v4900
    %v4965 = vpack.c.bf16 %v4901, %v4901
    %v4966 = vpack.c.bf16 %v4902, %v4902
    %v4967 = vpack.c.bf16 %v4903, %v4903
    %v4968 = vpack.c.bf16 %v4904, %v4904
    %v4969 = vpack.c.bf16 %v4905, %v4905
    %v4970 = vpack.c.bf16 %v4906, %v4906
    %v4971 = vpack.c.bf16 %v4907, %v4907
    %v4972 = vpack.c.bf16 %v4908, %v4908
    %v4973 = vpack.c.bf16 %v4909, %v4909
    %v4974 = vpack.c.bf16 %v4910, %v4910
    %v4975 = vpack.c.bf16 %v4911, %v4911
    %v4976 = vpack.c.bf16 %v4912, %v4912
    %v4977 = vpack.c.bf16 %v4913, %v4913
    %v4978 = vpack.c.bf16 %v4914, %v4914
    %v4979 = vpack.c.bf16 %v4915, %v4915
    %v4980 = vpack.c.bf16 %v4916, %v4916
    %v4981 = vpack.c.bf16 %v4917, %v4917
    %v4982 = vpack.c.bf16 %v4918, %v4918
    %v4983 = vpack.c.bf16 %v4919, %v4919
    %v4984 = vpack.c.bf16 %v4920, %v4920
    %v4985 = vpack.c.bf16 %v4921, %v4921
    %v4986 = vpack.c.bf16 %v4922, %v4922
    %v4987 = vpack.c.bf16 %v4923, %v4923
    %v4988 = vpack.c.bf16 %v4924, %v4924
    %v4989 = vpack.c.bf16 %v4925, %v4925
    %v4990 = vpack.c.bf16 %v4926, %v4926
    %v4991 = vpack.c.bf16 %v4927, %v4927
    %v4992 = vpack.c.bf16 %v4928, %v4928
    %v4993 = vpack.c.bf16 %v4929, %v4929
    %4994 = vst [vmem:[#allocation2 + $0x1c] sm:$0xf] %v4930
    %4995 = vst [vmem:[#allocation2 + $0x40] sm:$0xf] %v4931
    %4996 = vst [vmem:[#allocation2 + $0x64] sm:$0xf] %v4932
    %4997 = vst [vmem:[#allocation2 + $0x88] sm:$0xf] %v4933
    %4998 = vst [vmem:[#allocation2 + $0xac] sm:$0xf] %v4934
    %4999 = vst [vmem:[#allocation2 + $0xd0] sm:$0xf] %v4935
    %5000 = vst [vmem:[#allocation2 + $0xf4] sm:$0xf] %v4936
    %5001 = vst [vmem:[#allocation2 + $0x118] sm:$0xf] %v4937
    %5002 = vst [vmem:[#allocation2 + $0x13c] sm:$0xf] %v4938
    %5003 = vst [vmem:[#allocation2 + $0x160] sm:$0xf] %v4939
    %5004 = vst [vmem:[#allocation2 + $0x184] sm:$0xf] %v4940
    %5005 = vst [vmem:[#allocation2 + $0x1a8] sm:$0xf] %v4941
    %5006 = vst [vmem:[#allocation2 + $0x1cc] sm:$0xf] %v4942
    %5007 = vst [vmem:[#allocation2 + $0x1f0] sm:$0xf] %v4943
    %5008 = vst [vmem:[#allocation2 + $0x214] sm:$0xf] %v4944
    %5009 = vst [vmem:[#allocation2 + $0x238] sm:$0xf] %v4945
    %5010 = vst [vmem:[#allocation2 + $0x25c] sm:$0xf] %v4946
    %5011 = vst [vmem:[#allocation2 + $0x280] sm:$0xf] %v4947
    %5012 = vst [vmem:[#allocation2 + $0x2a4] sm:$0xf] %v4948
    %5013 = vst [vmem:[#allocation2 + $0x2c8] sm:$0xf] %v4949
    %5014 = vst [vmem:[#allocation2 + $0x2ec] sm:$0xf] %v4950
    %5015 = vst [vmem:[#allocation2 + $0x310] sm:$0xf] %v4951
    %5016 = vst [vmem:[#allocation2 + $0x334] sm:$0xf] %v4952
    %5017 = vst [vmem:[#allocation2 + $0x358] sm:$0xf] %v4953
    %5018 = vst [vmem:[#allocation2 + $0x37c] sm:$0xf] %v4954
    %5019 = vst [vmem:[#allocation2 + $0x3a0] sm:$0xf] %v4955
    %5020 = vst [vmem:[#allocation2 + $0x3c4] sm:$0xf] %v4956
    %5021 = vst [vmem:[#allocation2 + $0x3e8] sm:$0xf] %v4957
    %5022 = vst [vmem:[#allocation2 + $0x40c] sm:$0xf] %v4958
    %5023 = vst [vmem:[#allocation2 + $0x430] sm:$0xf] %v4959
    %5024 = vst [vmem:[#allocation2 + $0x454] sm:$0xf] %v4960
    %5025 = vst [vmem:[#allocation2 + $0x478] sm:$0xf] %v4961
    %5026 = vst [vmem:[#allocation2 + $0x49c] sm:$0xf] %v4962
    %5027 = vst [vmem:[#allocation2 + $0x4c0] sm:$0xf] %v4963
    %5028 = vst [vmem:[#allocation2 + $0x4e4] sm:$0xf] %v4964
    %5029 = vst [vmem:[#allocation2 + $0x508] sm:$0xf] %v4965
    %5030 = vst [vmem:[#allocation2 + $0x52c] sm:$0xf] %v4966
    %5031 = vst [vmem:[#allocation2 + $0x550] sm:$0xf] %v4967
    %5032 = vst [vmem:[#allocation2 + $0x574] sm:$0xf] %v4968
    %5033 = vst [vmem:[#allocation2 + $0x598] sm:$0xf] %v4969
    %5034 = vst [vmem:[#allocation2 + $0x5bc] sm:$0xf] %v4970
    %5035 = vst [vmem:[#allocation2 + $0x5e0] sm:$0xf] %v4971
    %5036 = vst [vmem:[#allocation2 + $0x604] sm:$0xf] %v4972
    %5037 = vst [vmem:[#allocation2 + $0x628] sm:$0xf] %v4973
    %5038 = vst [vmem:[#allocation2 + $0x64c] sm:$0xf] %v4974
    %5039 = vst [vmem:[#allocation2 + $0x670] sm:$0xf] %v4975
    %5040 = vst [vmem:[#allocation2 + $0x694] sm:$0xf] %v4976
    %5041 = vst [vmem:[#allocation2 + $0x6b8] sm:$0xf] %v4977
    %5042 = vst [vmem:[#allocation2 + $0x6dc] sm:$0xf] %v4978
    %5043 = vst [vmem:[#allocation2 + $0x700] sm:$0xf] %v4979
    %5044 = vst [vmem:[#allocation2 + $0x724] sm:$0xf] %v4980
    %5045 = vst [vmem:[#allocation2 + $0x748] sm:$0xf] %v4981
    %5046 = vst [vmem:[#allocation2 + $0x76c] sm:$0xf] %v4982
    %5047 = vst [vmem:[#allocation2 + $0x790] sm:$0xf] %v4983
    %5048 = vst [vmem:[#allocation2 + $0x7b4] sm:$0xf] %v4984
    %5049 = vst [vmem:[#allocation2 + $0x7d8] sm:$0xf] %v4985
    %5050 = vst [vmem:[#allocation2 + $0x7fc] sm:$0xf] %v4986
    %5051 = vst [vmem:[#allocation2 + $0x820] sm:$0xf] %v4987
    %5052 = vst [vmem:[#allocation2 + $0x844] sm:$0xf] %v4988
    %5053 = vst [vmem:[#allocation2 + $0x868] sm:$0xf] %v4989
    %5054 = vst [vmem:[#allocation2 + $0x88c] sm:$0xf] %v4990
    %5055 = vst [vmem:[#allocation2 + $0x8b0] sm:$0xf] %v4991
    %5056 = vst [vmem:[#allocation2 + $0x8d4] sm:$0xf] %v4992
    %5057 = vst [vmem:[#allocation2 + $0x8f8] sm:$0xf] %v4993
    %v5058 = vsel %vm1022, 1, 0
    %v5059 = vsel %vm1023, 1, 0
    %v5060 = vsel %vm1024, 1, 0
    %v5061 = vsel %vm1025, 1, 0
    %v5062 = vsel %vm1026, 1, 0
    %v5063 = vsel %vm1027, 1, 0
    %v5064 = vsel %vm1028, 1, 0
    %v5065 = vsel %vm1029, 1, 0
    %v5066 = vsel %vm1030, 1, 0
    %v5067 = vsel %vm1031, 1, 0
    %v5068 = vsel %vm1032, 1, 0
    %v5069 = vsel %vm1033, 1, 0
    %v5070 = vsel %vm1034, 1, 0
    %v5071 = vsel %vm1035, 1, 0
    %v5072 = vsel %vm1036, 1, 0
    %v5073 = vsel %vm1037, 1, 0
    %v5074 = vsel %vm1038, 1, 0
    %v5075 = vsel %vm1039, 1, 0
    %v5076 = vsel %vm1040, 1, 0
    %v5077 = vsel %vm1041, 1, 0
    %v5078 = vsel %vm1042, 1, 0
    %v5079 = vsel %vm1043, 1, 0
    %v5080 = vsel %vm1044, 1, 0
    %v5081 = vsel %vm1045, 1, 0
    %v5082 = vsel %vm1046, 1, 0
    %v5083 = vsel %vm1047, 1, 0
    %v5084 = vsel %vm1048, 1, 0
    %v5085 = vsel %vm1049, 1, 0
    %v5086 = vsel %vm1050, 1, 0
    %v5087 = vsel %vm1051, 1, 0
    %v5088 = vsel %vm1052, 1, 0
    %v5089 = vsel %vm1053, 1, 0
    %v5090 = vsel %vm1054, 1, 0
    %v5091 = vsel %vm1055, 1, 0
    %v5092 = vsel %vm1056, 1, 0
    %v5093 = vsel %vm1057, 1, 0
    %v5094 = vsel %vm1058, 1, 0
    %v5095 = vsel %vm1059, 1, 0
    %v5096 = vsel %vm1060, 1, 0
    %v5097 = vsel %vm1061, 1, 0
    %v5098 = vsel %vm1062, 1, 0
    %v5099 = vsel %vm1063, 1, 0
    %v5100 = vsel %vm1064, 1, 0
    %v5101 = vsel %vm1065, 1, 0
    %v5102 = vsel %vm1066, 1, 0
    %v5103 = vsel %vm1067, 1, 0
    %v5104 = vsel %vm1068, 1, 0
    %v5105 = vsel %vm1069, 1, 0
    %v5106 = vsel %vm1070, 1, 0
    %v5107 = vsel %vm1071, 1, 0
    %v5108 = vsel %vm1072, 1, 0
    %v5109 = vsel %vm1073, 1, 0
    %v5110 = vsel %vm1074, 1, 0
    %v5111 = vsel %vm1075, 1, 0
    %v5112 = vsel %vm1076, 1, 0
    %v5113 = vsel %vm1077, 1, 0
    %v5114 = vsel %vm1078, 1, 0
    %v5115 = vsel %vm1079, 1, 0
    %v5116 = vsel %vm1080, 1, 0
    %v5117 = vsel %vm1081, 1, 0
    %v5118 = vsel %vm1082, 1, 0
    %v5119 = vsel %vm1083, 1, 0
    %v5120 = vsel %vm1084, 1, 0
    %v5121 = vsel %vm1085, 1, 0
    %5122 = vset.pattern.permute.xlu0 0
    %5123 = vperm.xlu0 %5122, %v5058
    %v5124 = vpop.permute.xlu0 %5123
    %5125 = vset.pattern.permute.xlu0 0
    %5126 = vperm.xlu0 %5125, %v5059
    %v5127 = vpop.permute.xlu0 %5126
    %5128 = vset.pattern.permute.xlu0 0
    %5129 = vperm.xlu0 %5128, %v5060
    %v5130 = vpop.permute.xlu0 %5129
    %5131 = vset.pattern.permute.xlu0 0
    %5132 = vperm.xlu0 %5131, %v5061
    %v5133 = vpop.permute.xlu0 %5132
    %5134 = vset.pattern.permute.xlu0 0
    %5135 = vperm.xlu0 %5134, %v5062
    %v5136 = vpop.permute.xlu0 %5135
    %5137 = vset.pattern.permute.xlu0 0
    %5138 = vperm.xlu0 %5137, %v5063
    %v5139 = vpop.permute.xlu0 %5138
    %5140 = vset.pattern.permute.xlu0 0
    %5141 = vperm.xlu0 %5140, %v5064
    %v5142 = vpop.permute.xlu0 %5141
    %5143 = vset.pattern.permute.xlu0 0
    %5144 = vperm.xlu0 %5143, %v5065
    %v5145 = vpop.permute.xlu0 %5144
    %5146 = vset.pattern.permute.xlu0 0
    %5147 = vperm.xlu0 %5146, %v5066
    %v5148 = vpop.permute.xlu0 %5147
    %5149 = vset.pattern.permute.xlu0 0
    %5150 = vperm.xlu0 %5149, %v5067
    %v5151 = vpop.permute.xlu0 %5150
    %5152 = vset.pattern.permute.xlu0 0
    %5153 = vperm.xlu0 %5152, %v5068
    %v5154 = vpop.permute.xlu0 %5153
    %5155 = vset.pattern.permute.xlu0 0
    %5156 = vperm.xlu0 %5155, %v5069
    %v5157 = vpop.permute.xlu0 %5156
    %5158 = vset.pattern.permute.xlu0 0
    %5159 = vperm.xlu0 %5158, %v5070
    %v5160 = vpop.permute.xlu0 %5159
    %5161 = vset.pattern.permute.xlu0 0
    %5162 = vperm.xlu0 %5161, %v5071
    %v5163 = vpop.permute.xlu0 %5162
    %5164 = vset.pattern.permute.xlu0 0
    %5165 = vperm.xlu0 %5164, %v5072
    %v5166 = vpop.permute.xlu0 %5165
    %5167 = vset.pattern.permute.xlu0 0
    %5168 = vperm.xlu0 %5167, %v5073
    %v5169 = vpop.permute.xlu0 %5168
    %5170 = vset.pattern.permute.xlu0 0
    %5171 = vperm.xlu0 %5170, %v5074
    %v5172 = vpop.permute.xlu0 %5171
    %5173 = vset.pattern.permute.xlu0 0
    %5174 = vperm.xlu0 %5173, %v5075
    %v5175 = vpop.permute.xlu0 %5174
    %5176 = vset.pattern.permute.xlu0 0
    %5177 = vperm.xlu0 %5176, %v5076
    %v5178 = vpop.permute.xlu0 %5177
    %5179 = vset.pattern.permute.xlu0 0
    %5180 = vperm.xlu0 %5179, %v5077
    %v5181 = vpop.permute.xlu0 %5180
    %5182 = vset.pattern.permute.xlu0 0
    %5183 = vperm.xlu0 %5182, %v5078
    %v5184 = vpop.permute.xlu0 %5183
    %5185 = vset.pattern.permute.xlu0 0
    %5186 = vperm.xlu0 %5185, %v5079
    %v5187 = vpop.permute.xlu0 %5186
    %5188 = vset.pattern.permute.xlu0 0
    %5189 = vperm.xlu0 %5188, %v5080
    %v5190 = vpop.permute.xlu0 %5189
    %5191 = vset.pattern.permute.xlu0 0
    %5192 = vperm.xlu0 %5191, %v5081
    %v5193 = vpop.permute.xlu0 %5192
    %5194 = vset.pattern.permute.xlu0 0
    %5195 = vperm.xlu0 %5194, %v5082
    %v5196 = vpop.permute.xlu0 %5195
    %5197 = vset.pattern.permute.xlu0 0
    %5198 = vperm.xlu0 %5197, %v5083
    %v5199 = vpop.permute.xlu0 %5198
    %5200 = vset.pattern.permute.xlu0 0
    %5201 = vperm.xlu0 %5200, %v5084
    %v5202 = vpop.permute.xlu0 %5201
    %5203 = vset.pattern.permute.xlu0 0
    %5204 = vperm.xlu0 %5203, %v5085
    %v5205 = vpop.permute.xlu0 %5204
    %5206 = vset.pattern.permute.xlu0 0
    %5207 = vperm.xlu0 %5206, %v5086
    %v5208 = vpop.permute.xlu0 %5207
    %5209 = vset.pattern.permute.xlu0 0
    %5210 = vperm.xlu0 %5209, %v5087
    %v5211 = vpop.permute.xlu0 %5210
    %5212 = vset.pattern.permute.xlu0 0
    %5213 = vperm.xlu0 %5212, %v5088
    %v5214 = vpop.permute.xlu0 %5213
    %5215 = vset.pattern.permute.xlu0 0
    %5216 = vperm.xlu0 %5215, %v5089
    %v5217 = vpop.permute.xlu0 %5216
    %5218 = vset.pattern.permute.xlu0 0
    %5219 = vperm.xlu0 %5218, %v5090
    %v5220 = vpop.permute.xlu0 %5219
    %5221 = vset.pattern.permute.xlu0 0
    %5222 = vperm.xlu0 %5221, %v5091
    %v5223 = vpop.permute.xlu0 %5222
    %5224 = vset.pattern.permute.xlu0 0
    %5225 = vperm.xlu0 %5224, %v5092
    %v5226 = vpop.permute.xlu0 %5225
    %5227 = vset.pattern.permute.xlu0 0
    %5228 = vperm.xlu0 %5227, %v5093
    %v5229 = vpop.permute.xlu0 %5228
    %5230 = vset.pattern.permute.xlu0 0
    %5231 = vperm.xlu0 %5230, %v5094
    %v5232 = vpop.permute.xlu0 %5231
    %5233 = vset.pattern.permute.xlu0 0
    %5234 = vperm.xlu0 %5233, %v5095
    %v5235 = vpop.permute.xlu0 %5234
    %5236 = vset.pattern.permute.xlu0 0
    %5237 = vperm.xlu0 %5236, %v5096
    %v5238 = vpop.permute.xlu0 %5237
    %5239 = vset.pattern.permute.xlu0 0
    %5240 = vperm.xlu0 %5239, %v5097
    %v5241 = vpop.permute.xlu0 %5240
    %5242 = vset.pattern.permute.xlu0 0
    %5243 = vperm.xlu0 %5242, %v5098
    %v5244 = vpop.permute.xlu0 %5243
    %5245 = vset.pattern.permute.xlu0 0
    %5246 = vperm.xlu0 %5245, %v5099
    %v5247 = vpop.permute.xlu0 %5246
    %5248 = vset.pattern.permute.xlu0 0
    %5249 = vperm.xlu0 %5248, %v5100
    %v5250 = vpop.permute.xlu0 %5249
    %5251 = vset.pattern.permute.xlu0 0
    %5252 = vperm.xlu0 %5251, %v5101
    %v5253 = vpop.permute.xlu0 %5252
    %5254 = vset.pattern.permute.xlu0 0
    %5255 = vperm.xlu0 %5254, %v5102
    %v5256 = vpop.permute.xlu0 %5255
    %5257 = vset.pattern.permute.xlu0 0
    %5258 = vperm.xlu0 %5257, %v5103
    %v5259 = vpop.permute.xlu0 %5258
    %5260 = vset.pattern.permute.xlu0 0
    %5261 = vperm.xlu0 %5260, %v5104
    %v5262 = vpop.permute.xlu0 %5261
    %5263 = vset.pattern.permute.xlu0 0
    %5264 = vperm.xlu0 %5263, %v5105
    %v5265 = vpop.permute.xlu0 %5264
    %5266 = vset.pattern.permute.xlu0 0
    %5267 = vperm.xlu0 %5266, %v5106
    %v5268 = vpop.permute.xlu0 %5267
    %5269 = vset.pattern.permute.xlu0 0
    %5270 = vperm.xlu0 %5269, %v5107
    %v5271 = vpop.permute.xlu0 %5270
    %5272 = vset.pattern.permute.xlu0 0
    %5273 = vperm.xlu0 %5272, %v5108
    %v5274 = vpop.permute.xlu0 %5273
    %5275 = vset.pattern.permute.xlu0 0
    %5276 = vperm.xlu0 %5275, %v5109
    %v5277 = vpop.permute.xlu0 %5276
    %5278 = vset.pattern.permute.xlu0 0
    %5279 = vperm.xlu0 %5278, %v5110
    %v5280 = vpop.permute.xlu0 %5279
    %5281 = vset.pattern.permute.xlu0 0
    %5282 = vperm.xlu0 %5281, %v5111
    %v5283 = vpop.permute.xlu0 %5282
    %5284 = vset.pattern.permute.xlu0 0
    %5285 = vperm.xlu0 %5284, %v5112
    %v5286 = vpop.permute.xlu0 %5285
    %5287 = vset.pattern.permute.xlu0 0
    %5288 = vperm.xlu0 %5287, %v5113
    %v5289 = vpop.permute.xlu0 %5288
    %5290 = vset.pattern.permute.xlu0 0
    %5291 = vperm.xlu0 %5290, %v5114
    %v5292 = vpop.permute.xlu0 %5291
    %5293 = vset.pattern.permute.xlu0 0
    %5294 = vperm.xlu0 %5293, %v5115
    %v5295 = vpop.permute.xlu0 %5294
    %5296 = vset.pattern.permute.xlu0 0
    %5297 = vperm.xlu0 %5296, %v5116
    %v5298 = vpop.permute.xlu0 %5297
    %5299 = vset.pattern.permute.xlu0 0
    %5300 = vperm.xlu0 %5299, %v5117
    %v5301 = vpop.permute.xlu0 %5300
    %5302 = vset.pattern.permute.xlu0 0
    %5303 = vperm.xlu0 %5302, %v5118
    %v5304 = vpop.permute.xlu0 %5303
    %5305 = vset.pattern.permute.xlu0 0
    %5306 = vperm.xlu0 %5305, %v5119
    %v5307 = vpop.permute.xlu0 %5306
    %5308 = vset.pattern.permute.xlu0 0
    %5309 = vperm.xlu0 %5308, %v5120
    %v5310 = vpop.permute.xlu0 %5309
    %5311 = vset.pattern.permute.xlu0 0
    %5312 = vperm.xlu0 %5311, %v5121
    %v5313 = vpop.permute.xlu0 %5312
    %vm5314 = vcmp.eq.s32.totalorder %v5124, 1
    %vm5315 = vcmp.eq.s32.totalorder %v5127, 1
    %vm5316 = vcmp.eq.s32.totalorder %v5130, 1
    %vm5317 = vcmp.eq.s32.totalorder %v5133, 1
    %vm5318 = vcmp.eq.s32.totalorder %v5136, 1
    %vm5319 = vcmp.eq.s32.totalorder %v5139, 1
    %vm5320 = vcmp.eq.s32.totalorder %v5142, 1
    %vm5321 = vcmp.eq.s32.totalorder %v5145, 1
    %vm5322 = vcmp.eq.s32.totalorder %v5148, 1
    %vm5323 = vcmp.eq.s32.totalorder %v5151, 1
    %vm5324 = vcmp.eq.s32.totalorder %v5154, 1
    %vm5325 = vcmp.eq.s32.totalorder %v5157, 1
    %vm5326 = vcmp.eq.s32.totalorder %v5160, 1
    %vm5327 = vcmp.eq.s32.totalorder %v5163, 1
    %vm5328 = vcmp.eq.s32.totalorder %v5166, 1
    %vm5329 = vcmp.eq.s32.totalorder %v5169, 1
    %vm5330 = vcmp.eq.s32.totalorder %v5172, 1
    %vm5331 = vcmp.eq.s32.totalorder %v5175, 1
    %vm5332 = vcmp.eq.s32.totalorder %v5178, 1
    %vm5333 = vcmp.eq.s32.totalorder %v5181, 1
    %vm5334 = vcmp.eq.s32.totalorder %v5184, 1
    %vm5335 = vcmp.eq.s32.totalorder %v5187, 1
    %vm5336 = vcmp.eq.s32.totalorder %v5190, 1
    %vm5337 = vcmp.eq.s32.totalorder %v5193, 1
    %vm5338 = vcmp.eq.s32.totalorder %v5196, 1
    %vm5339 = vcmp.eq.s32.totalorder %v5199, 1
    %vm5340 = vcmp.eq.s32.totalorder %v5202, 1
    %vm5341 = vcmp.eq.s32.totalorder %v5205, 1
    %vm5342 = vcmp.eq.s32.totalorder %v5208, 1
    %vm5343 = vcmp.eq.s32.totalorder %v5211, 1
    %vm5344 = vcmp.eq.s32.totalorder %v5214, 1
    %vm5345 = vcmp.eq.s32.totalorder %v5217, 1
    %vm5346 = vcmp.eq.s32.totalorder %v5220, 1
    %vm5347 = vcmp.eq.s32.totalorder %v5223, 1
    %vm5348 = vcmp.eq.s32.totalorder %v5226, 1
    %vm5349 = vcmp.eq.s32.totalorder %v5229, 1
    %vm5350 = vcmp.eq.s32.totalorder %v5232, 1
    %vm5351 = vcmp.eq.s32.totalorder %v5235, 1
    %vm5352 = vcmp.eq.s32.totalorder %v5238, 1
    %vm5353 = vcmp.eq.s32.totalorder %v5241, 1
    %vm5354 = vcmp.eq.s32.totalorder %v5244, 1
    %vm5355 = vcmp.eq.s32.totalorder %v5247, 1
    %vm5356 = vcmp.eq.s32.totalorder %v5250, 1
    %vm5357 = vcmp.eq.s32.totalorder %v5253, 1
    %vm5358 = vcmp.eq.s32.totalorder %v5256, 1
    %vm5359 = vcmp.eq.s32.totalorder %v5259, 1
    %vm5360 = vcmp.eq.s32.totalorder %v5262, 1
    %vm5361 = vcmp.eq.s32.totalorder %v5265, 1
    %vm5362 = vcmp.eq.s32.totalorder %v5268, 1
    %vm5363 = vcmp.eq.s32.totalorder %v5271, 1
    %vm5364 = vcmp.eq.s32.totalorder %v5274, 1
    %vm5365 = vcmp.eq.s32.totalorder %v5277, 1
    %vm5366 = vcmp.eq.s32.totalorder %v5280, 1
    %vm5367 = vcmp.eq.s32.totalorder %v5283, 1
    %vm5368 = vcmp.eq.s32.totalorder %v5286, 1
    %vm5369 = vcmp.eq.s32.totalorder %v5289, 1
    %vm5370 = vcmp.eq.s32.totalorder %v5292, 1
    %vm5371 = vcmp.eq.s32.totalorder %v5295, 1
    %vm5372 = vcmp.eq.s32.totalorder %v5298, 1
    %vm5373 = vcmp.eq.s32.totalorder %v5301, 1
    %vm5374 = vcmp.eq.s32.totalorder %v5304, 1
    %vm5375 = vcmp.eq.s32.totalorder %v5307, 1
    %vm5376 = vcmp.eq.s32.totalorder %v5310, 1
    %vm5377 = vcmp.eq.s32.totalorder %v5313, 1
    %v5378 = vsel %vm5314, %v2366, 0.0
    %v5379 = vsel %vm5315, %v2365, 0.0
    %v5380 = vsel %vm5316, %v2364, 0.0
    %v5381 = vsel %vm5317, %v2363, 0.0
    %v5382 = vsel %vm5318, %v2362, 0.0
    %v5383 = vsel %vm5319, %v2361, 0.0
    %v5384 = vsel %vm5320, %v2360, 0.0
    %v5385 = vsel %vm5321, %v2359, 0.0
    %v5386 = vsel %vm5322, %v2358, 0.0
    %v5387 = vsel %vm5323, %v2357, 0.0
    %v5388 = vsel %vm5324, %v2356, 0.0
    %v5389 = vsel %vm5325, %v2355, 0.0
    %v5390 = vsel %vm5326, %v2354, 0.0
    %v5391 = vsel %vm5327, %v2353, 0.0
    %v5392 = vsel %vm5328, %v2352, 0.0
    %v5393 = vsel %vm5329, %v2351, 0.0
    %v5394 = vsel %vm5330, %v2350, 0.0
    %v5395 = vsel %vm5331, %v2349, 0.0
    %v5396 = vsel %vm5332, %v2348, 0.0
    %v5397 = vsel %vm5333, %v2347, 0.0
    %v5398 = vsel %vm5334, %v2346, 0.0
    %v5399 = vsel %vm5335, %v2345, 0.0
    %v5400 = vsel %vm5336, %v2344, 0.0
    %v5401 = vsel %vm5337, %v2343, 0.0
    %v5402 = vsel %vm5338, %v2342, 0.0
    %v5403 = vsel %vm5339, %v2341, 0.0
    %v5404 = vsel %vm5340, %v2340, 0.0
    %v5405 = vsel %vm5341, %v2339, 0.0
    %v5406 = vsel %vm5342, %v2338, 0.0
    %v5407 = vsel %vm5343, %v2337, 0.0
    %v5408 = vsel %vm5344, %v2336, 0.0
    %v5409 = vsel %vm5345, %v2335, 0.0
    %v5410 = vsel %vm5346, %v2334, 0.0
    %v5411 = vsel %vm5347, %v2333, 0.0
    %v5412 = vsel %vm5348, %v2332, 0.0
    %v5413 = vsel %vm5349, %v2331, 0.0
    %v5414 = vsel %vm5350, %v2330, 0.0
    %v5415 = vsel %vm5351, %v2329, 0.0
    %v5416 = vsel %vm5352, %v2328, 0.0
    %v5417 = vsel %vm5353, %v2327, 0.0
    %v5418 = vsel %vm5354, %v2326, 0.0
    %v5419 = vsel %vm5355, %v2325, 0.0
    %v5420 = vsel %vm5356, %v2324, 0.0
    %v5421 = vsel %vm5357, %v2323, 0.0
    %v5422 = vsel %vm5358, %v2322, 0.0
    %v5423 = vsel %vm5359, %v2321, 0.0
    %v5424 = vsel %vm5360, %v2320, 0.0
    %v5425 = vsel %vm5361, %v2319, 0.0
    %v5426 = vsel %vm5362, %v2318, 0.0
    %v5427 = vsel %vm5363, %v2317, 0.0
    %v5428 = vsel %vm5364, %v2316, 0.0
    %v5429 = vsel %vm5365, %v2315, 0.0
    %v5430 = vsel %vm5366, %v2314, 0.0
    %v5431 = vsel %vm5367, %v2313, 0.0
    %v5432 = vsel %vm5368, %v2312, 0.0
    %v5433 = vsel %vm5369, %v2311, 0.0
    %v5434 = vsel %vm5370, %v2310, 0.0
    %v5435 = vsel %vm5371, %v2309, 0.0
    %v5436 = vsel %vm5372, %v2308, 0.0
    %v5437 = vsel %vm5373, %v2307, 0.0
    %v5438 = vsel %vm5374, %v2306, 0.0
    %v5439 = vsel %vm5375, %v2369, 0.0
    %v5440 = vsel %vm5376, %v2368, 0.0
    %v5441 = vsel %vm5377, %v2367, 0.0
    %v5442 = vpack.c.bf16 %v5378, %v5378
    %v5443 = vpack.c.bf16 %v5379, %v5379
    %v5444 = vpack.c.bf16 %v5380, %v5380
    %v5445 = vpack.c.bf16 %v5381, %v5381
    %v5446 = vpack.c.bf16 %v5382, %v5382
    %v5447 = vpack.c.bf16 %v5383, %v5383
    %v5448 = vpack.c.bf16 %v5384, %v5384
    %v5449 = vpack.c.bf16 %v5385, %v5385
    %v5450 = vpack.c.bf16 %v5386, %v5386
    %v5451 = vpack.c.bf16 %v5387, %v5387
    %v5452 = vpack.c.bf16 %v5388, %v5388
    %v5453 = vpack.c.bf16 %v5389, %v5389
    %v5454 = vpack.c.bf16 %v5390, %v5390
    %v5455 = vpack.c.bf16 %v5391, %v5391
    %v5456 = vpack.c.bf16 %v5392, %v5392
    %v5457 = vpack.c.bf16 %v5393, %v5393
    %v5458 = vpack.c.bf16 %v5394, %v5394
    %v5459 = vpack.c.bf16 %v5395, %v5395
    %v5460 = vpack.c.bf16 %v5396, %v5396
    %v5461 = vpack.c.bf16 %v5397, %v5397
    %v5462 = vpack.c.bf16 %v5398, %v5398
    %v5463 = vpack.c.bf16 %v5399, %v5399
    %v5464 = vpack.c.bf16 %v5400, %v5400
    %v5465 = vpack.c.bf16 %v5401, %v5401
    %v5466 = vpack.c.bf16 %v5402, %v5402
    %v5467 = vpack.c.bf16 %v5403, %v5403
    %v5468 = vpack.c.bf16 %v5404, %v5404
    %v5469 = vpack.c.bf16 %v5405, %v5405
    %v5470 = vpack.c.bf16 %v5406, %v5406
    %v5471 = vpack.c.bf16 %v5407, %v5407
    %v5472 = vpack.c.bf16 %v5408, %v5408
    %v5473 = vpack.c.bf16 %v5409, %v5409
    %v5474 = vpack.c.bf16 %v5410, %v5410
    %v5475 = vpack.c.bf16 %v5411, %v5411
    %v5476 = vpack.c.bf16 %v5412, %v5412
    %v5477 = vpack.c.bf16 %v5413, %v5413
    %v5478 = vpack.c.bf16 %v5414, %v5414
    %v5479 = vpack.c.bf16 %v5415, %v5415
    %v5480 = vpack.c.bf16 %v5416, %v5416
    %v5481 = vpack.c.bf16 %v5417, %v5417
    %v5482 = vpack.c.bf16 %v5418, %v5418
    %v5483 = vpack.c.bf16 %v5419, %v5419
    %v5484 = vpack.c.bf16 %v5420, %v5420
    %v5485 = vpack.c.bf16 %v5421, %v5421
    %v5486 = vpack.c.bf16 %v5422, %v5422
    %v5487 = vpack.c.bf16 %v5423, %v5423
    %v5488 = vpack.c.bf16 %v5424, %v5424
    %v5489 = vpack.c.bf16 %v5425, %v5425
    %v5490 = vpack.c.bf16 %v5426, %v5426
    %v5491 = vpack.c.bf16 %v5427, %v5427
    %v5492 = vpack.c.bf16 %v5428, %v5428
    %v5493 = vpack.c.bf16 %v5429, %v5429
    %v5494 = vpack.c.bf16 %v5430, %v5430
    %v5495 = vpack.c.bf16 %v5431, %v5431
    %v5496 = vpack.c.bf16 %v5432, %v5432
    %v5497 = vpack.c.bf16 %v5433, %v5433
    %v5498 = vpack.c.bf16 %v5434, %v5434
    %v5499 = vpack.c.bf16 %v5435, %v5435
    %v5500 = vpack.c.bf16 %v5436, %v5436
    %v5501 = vpack.c.bf16 %v5437, %v5437
    %v5502 = vpack.c.bf16 %v5438, %v5438
    %v5503 = vpack.c.bf16 %v5439, %v5439
    %v5504 = vpack.c.bf16 %v5440, %v5440
    %v5505 = vpack.c.bf16 %v5441, %v5441
    %5506 = vst [vmem:[#allocation2 + $0x20] sm:$0xf] %v5442
    %5507 = vst [vmem:[#allocation2 + $0x44] sm:$0xf] %v5443
    %5508 = vst [vmem:[#allocation2 + $0x68] sm:$0xf] %v5444
    %5509 = vst [vmem:[#allocation2 + $0x8c] sm:$0xf] %v5445
    %5510 = vst [vmem:[#allocation2 + $0xb0] sm:$0xf] %v5446
    %5511 = vst [vmem:[#allocation2 + $0xd4] sm:$0xf] %v5447
    %5512 = vst [vmem:[#allocation2 + $0xf8] sm:$0xf] %v5448
    %5513 = vst [vmem:[#allocation2 + $0x11c] sm:$0xf] %v5449
    %5514 = vst [vmem:[#allocation2 + $0x140] sm:$0xf] %v5450
    %5515 = vst [vmem:[#allocation2 + $0x164] sm:$0xf] %v5451
    %5516 = vst [vmem:[#allocation2 + $0x188] sm:$0xf] %v5452
    %5517 = vst [vmem:[#allocation2 + $0x1ac] sm:$0xf] %v5453
    %5518 = vst [vmem:[#allocation2 + $0x1d0] sm:$0xf] %v5454
    %5519 = vst [vmem:[#allocation2 + $0x1f4] sm:$0xf] %v5455
    %5520 = vst [vmem:[#allocation2 + $0x218] sm:$0xf] %v5456
    %5521 = vst [vmem:[#allocation2 + $0x23c] sm:$0xf] %v5457
    %5522 = vst [vmem:[#allocation2 + $0x260] sm:$0xf] %v5458
    %5523 = vst [vmem:[#allocation2 + $0x284] sm:$0xf] %v5459
    %5524 = vst [vmem:[#allocation2 + $0x2a8] sm:$0xf] %v5460
    %5525 = vst [vmem:[#allocation2 + $0x2cc] sm:$0xf] %v5461
    %5526 = vst [vmem:[#allocation2 + $0x2f0] sm:$0xf] %v5462
    %5527 = vst [vmem:[#allocation2 + $0x314] sm:$0xf] %v5463
    %5528 = vst [vmem:[#allocation2 + $0x338] sm:$0xf] %v5464
    %5529 = vst [vmem:[#allocation2 + $0x35c] sm:$0xf] %v5465
    %5530 = vst [vmem:[#allocation2 + $0x380] sm:$0xf] %v5466
    %5531 = vst [vmem:[#allocation2 + $0x3a4] sm:$0xf] %v5467
    %5532 = vst [vmem:[#allocation2 + $0x3c8] sm:$0xf] %v5468
    %5533 = vst [vmem:[#allocation2 + $0x3ec] sm:$0xf] %v5469
    %5534 = vst [vmem:[#allocation2 + $0x410] sm:$0xf] %v5470
    %5535 = vst [vmem:[#allocation2 + $0x434] sm:$0xf] %v5471
    %5536 = vst [vmem:[#allocation2 + $0x458] sm:$0xf] %v5472
    %5537 = vst [vmem:[#allocation2 + $0x47c] sm:$0xf] %v5473
    %5538 = vst [vmem:[#allocation2 + $0x4a0] sm:$0xf] %v5474
    %5539 = vst [vmem:[#allocation2 + $0x4c4] sm:$0xf] %v5475
    %5540 = vst [vmem:[#allocation2 + $0x4e8] sm:$0xf] %v5476
    %5541 = vst [vmem:[#allocation2 + $0x50c] sm:$0xf] %v5477
    %5542 = vst [vmem:[#allocation2 + $0x530] sm:$0xf] %v5478
    %5543 = vst [vmem:[#allocation2 + $0x554] sm:$0xf] %v5479
    %5544 = vst [vmem:[#allocation2 + $0x578] sm:$0xf] %v5480
    %5545 = vst [vmem:[#allocation2 + $0x59c] sm:$0xf] %v5481
    %5546 = vst [vmem:[#allocation2 + $0x5c0] sm:$0xf] %v5482
    %5547 = vst [vmem:[#allocation2 + $0x5e4] sm:$0xf] %v5483
    %5548 = vst [vmem:[#allocation2 + $0x608] sm:$0xf] %v5484
    %5549 = vst [vmem:[#allocation2 + $0x62c] sm:$0xf] %v5485
    %5550 = vst [vmem:[#allocation2 + $0x650] sm:$0xf] %v5486
    %5551 = vst [vmem:[#allocation2 + $0x674] sm:$0xf] %v5487
    %5552 = vst [vmem:[#allocation2 + $0x698] sm:$0xf] %v5488
    %5553 = vst [vmem:[#allocation2 + $0x6bc] sm:$0xf] %v5489
    %5554 = vst [vmem:[#allocation2 + $0x6e0] sm:$0xf] %v5490
    %5555 = vst [vmem:[#allocation2 + $0x704] sm:$0xf] %v5491
    %5556 = vst [vmem:[#allocation2 + $0x728] sm:$0xf] %v5492
    %5557 = vst [vmem:[#allocation2 + $0x74c] sm:$0xf] %v5493
    %5558 = vst [vmem:[#allocation2 + $0x770] sm:$0xf] %v5494
    %5559 = vst [vmem:[#allocation2 + $0x794] sm:$0xf] %v5495
    %5560 = vst [vmem:[#allocation2 + $0x7b8] sm:$0xf] %v5496
    %5561 = vst [vmem:[#allocation2 + $0x7dc] sm:$0xf] %v5497
    %5562 = vst [vmem:[#allocation2 + $0x800] sm:$0xf] %v5498
    %5563 = vst [vmem:[#allocation2 + $0x824] sm:$0xf] %v5499
    %5564 = vst [vmem:[#allocation2 + $0x848] sm:$0xf] %v5500
    %5565 = vst [vmem:[#allocation2 + $0x86c] sm:$0xf] %v5501
    %5566 = vst [vmem:[#allocation2 + $0x890] sm:$0xf] %v5502
    %5567 = vst [vmem:[#allocation2 + $0x8b4] sm:$0xf] %v5503
    %5568 = vst [vmem:[#allocation2 + $0x8d8] sm:$0xf] %v5504
    %5569 = vst [vmem:[#allocation2 + $0x8fc] sm:$0xf] %v5505
    %v5570 = vld [vmem:[#allocation2] sm:$0xff]
    %v5571 = vld [vmem:[#allocation2 + $0x8] sm:$0xff]
    %v5572 = vld [vmem:[#allocation2 + $0x10] sm:$0xff]
    %v5573 = vld [vmem:[#allocation2 + $0x18] sm:$0xff]
    %v5574 = vld [vmem:[#allocation2 + $0x20] sm:$0xf]
    %v5575 = vld [vmem:[#allocation2 + $0x24] sm:$0xff]
    %v5576 = vld [vmem:[#allocation2 + $0x2c] sm:$0xff]
    %v5577 = vld [vmem:[#allocation2 + $0x34] sm:$0xff]
    %v5578 = vld [vmem:[#allocation2 + $0x3c] sm:$0xff]
    %v5579 = vld [vmem:[#allocation2 + $0x44] sm:$0xf]
    %v5580 = vld [vmem:[#allocation2 + $0x48] sm:$0xff]
    %v5581 = vld [vmem:[#allocation2 + $0x50] sm:$0xff]
    %v5582 = vld [vmem:[#allocation2 + $0x58] sm:$0xff]
    %v5583 = vld [vmem:[#allocation2 + $0x60] sm:$0xff]
    %v5584 = vld [vmem:[#allocation2 + $0x68] sm:$0xf]
    %v5585 = vld [vmem:[#allocation2 + $0x6c] sm:$0xff]
    %v5586 = vld [vmem:[#allocation2 + $0x74] sm:$0xff]
    %v5587 = vld [vmem:[#allocation2 + $0x7c] sm:$0xff]
    %v5588 = vld [vmem:[#allocation2 + $0x84] sm:$0xff]
    %v5589 = vld [vmem:[#allocation2 + $0x8c] sm:$0xf]
    %v5590 = vld [vmem:[#allocation2 + $0x90] sm:$0xff]
    %v5591 = vld [vmem:[#allocation2 + $0x98] sm:$0xff]
    %v5592 = vld [vmem:[#allocation2 + $0xa0] sm:$0xff]
    %v5593 = vld [vmem:[#allocation2 + $0xa8] sm:$0xff]
    %v5594 = vld [vmem:[#allocation2 + $0xb0] sm:$0xf]
    %v5595 = vld [vmem:[#allocation2 + $0xb4] sm:$0xff]
    %v5596 = vld [vmem:[#allocation2 + $0xbc] sm:$0xff]
    %v5597 = vld [vmem:[#allocation2 + $0xc4] sm:$0xff]
    %v5598 = vld [vmem:[#allocation2 + $0xcc] sm:$0xff]
    %v5599 = vld [vmem:[#allocation2 + $0xd4] sm:$0xf]
    %v5600 = vld [vmem:[#allocation2 + $0xd8] sm:$0xff]
    %v5601 = vld [vmem:[#allocation2 + $0xe0] sm:$0xff]
    %v5602 = vld [vmem:[#allocation2 + $0xe8] sm:$0xff]
    %v5603 = vld [vmem:[#allocation2 + $0xf0] sm:$0xff]
    %v5604 = vld [vmem:[#allocation2 + $0xf8] sm:$0xf]
    %v5605 = vld [vmem:[#allocation2 + $0xfc] sm:$0xff]
    %v5606 = vld [vmem:[#allocation2 + $0x104] sm:$0xff]
    %v5607 = vld [vmem:[#allocation2 + $0x10c] sm:$0xff]
    %v5608 = vld [vmem:[#allocation2 + $0x114] sm:$0xff]
    %v5609 = vld [vmem:[#allocation2 + $0x11c] sm:$0xf]
    %v5610 = vld [vmem:[#allocation2 + $0x120] sm:$0xff]
    %v5611 = vld [vmem:[#allocation2 + $0x128] sm:$0xff]
    %v5612 = vld [vmem:[#allocation2 + $0x130] sm:$0xff]
    %v5613 = vld [vmem:[#allocation2 + $0x138] sm:$0xff]
    %v5614 = vld [vmem:[#allocation2 + $0x140] sm:$0xf]
    %v5615 = vld [vmem:[#allocation2 + $0x144] sm:$0xff]
    %v5616 = vld [vmem:[#allocation2 + $0x14c] sm:$0xff]
    %v5617 = vld [vmem:[#allocation2 + $0x154] sm:$0xff]
    %v5618 = vld [vmem:[#allocation2 + $0x15c] sm:$0xff]
    %v5619 = vld [vmem:[#allocation2 + $0x164] sm:$0xf]
    %v5620 = vld [vmem:[#allocation2 + $0x168] sm:$0xff]
    %v5621 = vld [vmem:[#allocation2 + $0x170] sm:$0xff]
    %v5622 = vld [vmem:[#allocation2 + $0x178] sm:$0xff]
    %v5623 = vld [vmem:[#allocation2 + $0x180] sm:$0xff]
    %v5624 = vld [vmem:[#allocation2 + $0x188] sm:$0xf]
    %v5625 = vld [vmem:[#allocation2 + $0x18c] sm:$0xff]
    %v5626 = vld [vmem:[#allocation2 + $0x194] sm:$0xff]
    %v5627 = vld [vmem:[#allocation2 + $0x19c] sm:$0xff]
    %v5628 = vld [vmem:[#allocation2 + $0x1a4] sm:$0xff]
    %v5629 = vld [vmem:[#allocation2 + $0x1ac] sm:$0xf]
    %v5630 = vld [vmem:[#allocation2 + $0x1b0] sm:$0xff]
    %v5631 = vld [vmem:[#allocation2 + $0x1b8] sm:$0xff]
    %v5632 = vld [vmem:[#allocation2 + $0x1c0] sm:$0xff]
    %v5633 = vld [vmem:[#allocation2 + $0x1c8] sm:$0xff]
    %v5634 = vld [vmem:[#allocation2 + $0x1d0] sm:$0xf]
    %v5635 = vld [vmem:[#allocation2 + $0x1d4] sm:$0xff]
    %v5636 = vld [vmem:[#allocation2 + $0x1dc] sm:$0xff]
    %v5637 = vld [vmem:[#allocation2 + $0x1e4] sm:$0xff]
    %v5638 = vld [vmem:[#allocation2 + $0x1ec] sm:$0xff]
    %v5639 = vld [vmem:[#allocation2 + $0x1f4] sm:$0xf]
    %v5640 = vld [vmem:[#allocation2 + $0x1f8] sm:$0xff]
    %v5641 = vld [vmem:[#allocation2 + $0x200] sm:$0xff]
    %v5642 = vld [vmem:[#allocation2 + $0x208] sm:$0xff]
    %v5643 = vld [vmem:[#allocation2 + $0x210] sm:$0xff]
    %v5644 = vld [vmem:[#allocation2 + $0x218] sm:$0xf]
    %v5645 = vld [vmem:[#allocation2 + $0x21c] sm:$0xff]
    %v5646 = vld [vmem:[#allocation2 + $0x224] sm:$0xff]
    %v5647 = vld [vmem:[#allocation2 + $0x22c] sm:$0xff]
    %v5648 = vld [vmem:[#allocation2 + $0x234] sm:$0xff]
    %v5649 = vld [vmem:[#allocation2 + $0x23c] sm:$0xf]
    %v5650 = vld [vmem:[#allocation2 + $0x240] sm:$0xff]
    %v5651 = vld [vmem:[#allocation2 + $0x248] sm:$0xff]
    %v5652 = vld [vmem:[#allocation2 + $0x250] sm:$0xff]
    %v5653 = vld [vmem:[#allocation2 + $0x258] sm:$0xff]
    %v5654 = vld [vmem:[#allocation2 + $0x260] sm:$0xf]
    %v5655 = vld [vmem:[#allocation2 + $0x264] sm:$0xff]
    %v5656 = vld [vmem:[#allocation2 + $0x26c] sm:$0xff]
    %v5657 = vld [vmem:[#allocation2 + $0x274] sm:$0xff]
    %v5658 = vld [vmem:[#allocation2 + $0x27c] sm:$0xff]
    %v5659 = vld [vmem:[#allocation2 + $0x284] sm:$0xf]
    %v5660 = vld [vmem:[#allocation2 + $0x288] sm:$0xff]
    %v5661 = vld [vmem:[#allocation2 + $0x290] sm:$0xff]
    %v5662 = vld [vmem:[#allocation2 + $0x298] sm:$0xff]
    %v5663 = vld [vmem:[#allocation2 + $0x2a0] sm:$0xff]
    %v5664 = vld [vmem:[#allocation2 + $0x2a8] sm:$0xf]
    %v5665 = vld [vmem:[#allocation2 + $0x2ac] sm:$0xff]
    %v5666 = vld [vmem:[#allocation2 + $0x2b4] sm:$0xff]
    %v5667 = vld [vmem:[#allocation2 + $0x2bc] sm:$0xff]
    %v5668 = vld [vmem:[#allocation2 + $0x2c4] sm:$0xff]
    %v5669 = vld [vmem:[#allocation2 + $0x2cc] sm:$0xf]
    %v5670 = vld [vmem:[#allocation2 + $0x2d0] sm:$0xff]
    %v5671 = vld [vmem:[#allocation2 + $0x2d8] sm:$0xff]
    %v5672 = vld [vmem:[#allocation2 + $0x2e0] sm:$0xff]
    %v5673 = vld [vmem:[#allocation2 + $0x2e8] sm:$0xff]
    %v5674 = vld [vmem:[#allocation2 + $0x2f0] sm:$0xf]
    %v5675 = vld [vmem:[#allocation2 + $0x2f4] sm:$0xff]
    %v5676 = vld [vmem:[#allocation2 + $0x2fc] sm:$0xff]
    %v5677 = vld [vmem:[#allocation2 + $0x304] sm:$0xff]
    %v5678 = vld [vmem:[#allocation2 + $0x30c] sm:$0xff]
    %v5679 = vld [vmem:[#allocation2 + $0x314] sm:$0xf]
    %v5680 = vld [vmem:[#allocation2 + $0x318] sm:$0xff]
    %v5681 = vld [vmem:[#allocation2 + $0x320] sm:$0xff]
    %v5682 = vld [vmem:[#allocation2 + $0x328] sm:$0xff]
    %v5683 = vld [vmem:[#allocation2 + $0x330] sm:$0xff]
    %v5684 = vld [vmem:[#allocation2 + $0x338] sm:$0xf]
    %v5685 = vld [vmem:[#allocation2 + $0x33c] sm:$0xff]
    %v5686 = vld [vmem:[#allocation2 + $0x344] sm:$0xff]
    %v5687 = vld [vmem:[#allocation2 + $0x34c] sm:$0xff]
    %v5688 = vld [vmem:[#allocation2 + $0x354] sm:$0xff]
    %v5689 = vld [vmem:[#allocation2 + $0x35c] sm:$0xf]
    %v5690 = vld [vmem:[#allocation2 + $0x360] sm:$0xff]
    %v5691 = vld [vmem:[#allocation2 + $0x368] sm:$0xff]
    %v5692 = vld [vmem:[#allocation2 + $0x370] sm:$0xff]
    %v5693 = vld [vmem:[#allocation2 + $0x378] sm:$0xff]
    %v5694 = vld [vmem:[#allocation2 + $0x380] sm:$0xf]
    %v5695 = vld [vmem:[#allocation2 + $0x384] sm:$0xff]
    %v5696 = vld [vmem:[#allocation2 + $0x38c] sm:$0xff]
    %v5697 = vld [vmem:[#allocation2 + $0x394] sm:$0xff]
    %v5698 = vld [vmem:[#allocation2 + $0x39c] sm:$0xff]
    %v5699 = vld [vmem:[#allocation2 + $0x3a4] sm:$0xf]
    %v5700 = vld [vmem:[#allocation2 + $0x3a8] sm:$0xff]
    %v5701 = vld [vmem:[#allocation2 + $0x3b0] sm:$0xff]
    %v5702 = vld [vmem:[#allocation2 + $0x3b8] sm:$0xff]
    %v5703 = vld [vmem:[#allocation2 + $0x3c0] sm:$0xff]
    %v5704 = vld [vmem:[#allocation2 + $0x3c8] sm:$0xf]
    %v5705 = vld [vmem:[#allocation2 + $0x3cc] sm:$0xff]
    %v5706 = vld [vmem:[#allocation2 + $0x3d4] sm:$0xff]
    %v5707 = vld [vmem:[#allocation2 + $0x3dc] sm:$0xff]
    %v5708 = vld [vmem:[#allocation2 + $0x3e4] sm:$0xff]
    %v5709 = vld [vmem:[#allocation2 + $0x3ec] sm:$0xf]
    %v5710 = vld [vmem:[#allocation2 + $0x3f0] sm:$0xff]
    %v5711 = vld [vmem:[#allocation2 + $0x3f8] sm:$0xff]
    %v5712 = vld [vmem:[#allocation2 + $0x400] sm:$0xff]
    %v5713 = vld [vmem:[#allocation2 + $0x408] sm:$0xff]
    %v5714 = vld [vmem:[#allocation2 + $0x410] sm:$0xf]
    %v5715 = vld [vmem:[#allocation2 + $0x414] sm:$0xff]
    %v5716 = vld [vmem:[#allocation2 + $0x41c] sm:$0xff]
    %v5717 = vld [vmem:[#allocation2 + $0x424] sm:$0xff]
    %v5718 = vld [vmem:[#allocation2 + $0x42c] sm:$0xff]
    %v5719 = vld [vmem:[#allocation2 + $0x434] sm:$0xf]
    %v5720 = vld [vmem:[#allocation2 + $0x438] sm:$0xff]
    %v5721 = vld [vmem:[#allocation2 + $0x440] sm:$0xff]
    %v5722 = vld [vmem:[#allocation2 + $0x448] sm:$0xff]
    %v5723 = vld [vmem:[#allocation2 + $0x450] sm:$0xff]
    %v5724 = vld [vmem:[#allocation2 + $0x458] sm:$0xf]
    %v5725 = vld [vmem:[#allocation2 + $0x45c] sm:$0xff]
    %v5726 = vld [vmem:[#allocation2 + $0x464] sm:$0xff]
    %v5727 = vld [vmem:[#allocation2 + $0x46c] sm:$0xff]
    %v5728 = vld [vmem:[#allocation2 + $0x474] sm:$0xff]
    %v5729 = vld [vmem:[#allocation2 + $0x47c] sm:$0xf]
    %v5730 = vld [vmem:[#allocation2 + $0x480] sm:$0xff]
    %v5731 = vld [vmem:[#allocation2 + $0x488] sm:$0xff]
    %v5732 = vld [vmem:[#allocation2 + $0x490] sm:$0xff]
    %v5733 = vld [vmem:[#allocation2 + $0x498] sm:$0xff]
    %v5734 = vld [vmem:[#allocation2 + $0x4a0] sm:$0xf]
    %v5735 = vld [vmem:[#allocation2 + $0x4a4] sm:$0xff]
    %v5736 = vld [vmem:[#allocation2 + $0x4ac] sm:$0xff]
    %v5737 = vld [vmem:[#allocation2 + $0x4b4] sm:$0xff]
    %v5738 = vld [vmem:[#allocation2 + $0x4bc] sm:$0xff]
    %v5739 = vld [vmem:[#allocation2 + $0x4c4] sm:$0xf]
    %v5740 = vld [vmem:[#allocation2 + $0x4c8] sm:$0xff]
    %v5741 = vld [vmem:[#allocation2 + $0x4d0] sm:$0xff]
    %v5742 = vld [vmem:[#allocation2 + $0x4d8] sm:$0xff]
    %v5743 = vld [vmem:[#allocation2 + $0x4e0] sm:$0xff]
    %v5744 = vld [vmem:[#allocation2 + $0x4e8] sm:$0xf]
    %v5745 = vld [vmem:[#allocation2 + $0x4ec] sm:$0xff]
    %v5746 = vld [vmem:[#allocation2 + $0x4f4] sm:$0xff]
    %v5747 = vld [vmem:[#allocation2 + $0x4fc] sm:$0xff]
    %v5748 = vld [vmem:[#allocation2 + $0x504] sm:$0xff]
    %v5749 = vld [vmem:[#allocation2 + $0x50c] sm:$0xf]
    %v5750 = vld [vmem:[#allocation2 + $0x510] sm:$0xff]
    %v5751 = vld [vmem:[#allocation2 + $0x518] sm:$0xff]
    %v5752 = vld [vmem:[#allocation2 + $0x520] sm:$0xff]
    %v5753 = vld [vmem:[#allocation2 + $0x528] sm:$0xff]
    %v5754 = vld [vmem:[#allocation2 + $0x530] sm:$0xf]
    %v5755 = vld [vmem:[#allocation2 + $0x534] sm:$0xff]
    %v5756 = vld [vmem:[#allocation2 + $0x53c] sm:$0xff]
    %v5757 = vld [vmem:[#allocation2 + $0x544] sm:$0xff]
    %v5758 = vld [vmem:[#allocation2 + $0x54c] sm:$0xff]
    %v5759 = vld [vmem:[#allocation2 + $0x554] sm:$0xf]
    %v5760 = vld [vmem:[#allocation2 + $0x558] sm:$0xff]
    %v5761 = vld [vmem:[#allocation2 + $0x560] sm:$0xff]
    %v5762 = vld [vmem:[#allocation2 + $0x568] sm:$0xff]
    %v5763 = vld [vmem:[#allocation2 + $0x570] sm:$0xff]
    %v5764 = vld [vmem:[#allocation2 + $0x578] sm:$0xf]
    %v5765 = vld [vmem:[#allocation2 + $0x57c] sm:$0xff]
    %v5766 = vld [vmem:[#allocation2 + $0x584] sm:$0xff]
    %v5767 = vld [vmem:[#allocation2 + $0x58c] sm:$0xff]
    %v5768 = vld [vmem:[#allocation2 + $0x594] sm:$0xff]
    %v5769 = vld [vmem:[#allocation2 + $0x59c] sm:$0xf]
    %v5770 = vld [vmem:[#allocation2 + $0x5a0] sm:$0xff]
    %v5771 = vld [vmem:[#allocation2 + $0x5a8] sm:$0xff]
    %v5772 = vld [vmem:[#allocation2 + $0x5b0] sm:$0xff]
    %v5773 = vld [vmem:[#allocation2 + $0x5b8] sm:$0xff]
    %v5774 = vld [vmem:[#allocation2 + $0x5c0] sm:$0xf]
    %v5775 = vld [vmem:[#allocation2 + $0x5c4] sm:$0xff]
    %v5776 = vld [vmem:[#allocation2 + $0x5cc] sm:$0xff]
    %v5777 = vld [vmem:[#allocation2 + $0x5d4] sm:$0xff]
    %v5778 = vld [vmem:[#allocation2 + $0x5dc] sm:$0xff]
    %v5779 = vld [vmem:[#allocation2 + $0x5e4] sm:$0xf]
    %v5780 = vld [vmem:[#allocation2 + $0x5e8] sm:$0xff]
    %v5781 = vld [vmem:[#allocation2 + $0x5f0] sm:$0xff]
    %v5782 = vld [vmem:[#allocation2 + $0x5f8] sm:$0xff]
    %v5783 = vld [vmem:[#allocation2 + $0x600] sm:$0xff]
    %v5784 = vld [vmem:[#allocation2 + $0x608] sm:$0xf]
    %v5785 = vld [vmem:[#allocation2 + $0x60c] sm:$0xff]
    %v5786 = vld [vmem:[#allocation2 + $0x614] sm:$0xff]
    %v5787 = vld [vmem:[#allocation2 + $0x61c] sm:$0xff]
    %v5788 = vld [vmem:[#allocation2 + $0x624] sm:$0xff]
    %v5789 = vld [vmem:[#allocation2 + $0x62c] sm:$0xf]
    %v5790 = vld [vmem:[#allocation2 + $0x630] sm:$0xff]
    %v5791 = vld [vmem:[#allocation2 + $0x638] sm:$0xff]
    %v5792 = vld [vmem:[#allocation2 + $0x640] sm:$0xff]
    %v5793 = vld [vmem:[#allocation2 + $0x648] sm:$0xff]
    %v5794 = vld [vmem:[#allocation2 + $0x650] sm:$0xf]
    %v5795 = vld [vmem:[#allocation2 + $0x654] sm:$0xff]
    %v5796 = vld [vmem:[#allocation2 + $0x65c] sm:$0xff]
    %v5797 = vld [vmem:[#allocation2 + $0x664] sm:$0xff]
    %v5798 = vld [vmem:[#allocation2 + $0x66c] sm:$0xff]
    %v5799 = vld [vmem:[#allocation2 + $0x674] sm:$0xf]
    %v5800 = vld [vmem:[#allocation2 + $0x678] sm:$0xff]
    %v5801 = vld [vmem:[#allocation2 + $0x680] sm:$0xff]
    %v5802 = vld [vmem:[#allocation2 + $0x688] sm:$0xff]
    %v5803 = vld [vmem:[#allocation2 + $0x690] sm:$0xff]
    %v5804 = vld [vmem:[#allocation2 + $0x698] sm:$0xf]
    %v5805 = vld [vmem:[#allocation2 + $0x69c] sm:$0xff]
    %v5806 = vld [vmem:[#allocation2 + $0x6a4] sm:$0xff]
    %v5807 = vld [vmem:[#allocation2 + $0x6ac] sm:$0xff]
    %v5808 = vld [vmem:[#allocation2 + $0x6b4] sm:$0xff]
    %v5809 = vld [vmem:[#allocation2 + $0x6bc] sm:$0xf]
    %v5810 = vld [vmem:[#allocation2 + $0x6c0] sm:$0xff]
    %v5811 = vld [vmem:[#allocation2 + $0x6c8] sm:$0xff]
    %v5812 = vld [vmem:[#allocation2 + $0x6d0] sm:$0xff]
    %v5813 = vld [vmem:[#allocation2 + $0x6d8] sm:$0xff]
    %v5814 = vld [vmem:[#allocation2 + $0x6e0] sm:$0xf]
    %v5815 = vld [vmem:[#allocation2 + $0x6e4] sm:$0xff]
    %v5816 = vld [vmem:[#allocation2 + $0x6ec] sm:$0xff]
    %v5817 = vld [vmem:[#allocation2 + $0x6f4] sm:$0xff]
    %v5818 = vld [vmem:[#allocation2 + $0x6fc] sm:$0xff]
    %v5819 = vld [vmem:[#allocation2 + $0x704] sm:$0xf]
    %v5820 = vld [vmem:[#allocation2 + $0x708] sm:$0xff]
    %v5821 = vld [vmem:[#allocation2 + $0x710] sm:$0xff]
    %v5822 = vld [vmem:[#allocation2 + $0x718] sm:$0xff]
    %v5823 = vld [vmem:[#allocation2 + $0x720] sm:$0xff]
    %v5824 = vld [vmem:[#allocation2 + $0x728] sm:$0xf]
    %v5825 = vld [vmem:[#allocation2 + $0x72c] sm:$0xff]
    %v5826 = vld [vmem:[#allocation2 + $0x734] sm:$0xff]
    %v5827 = vld [vmem:[#allocation2 + $0x73c] sm:$0xff]
    %v5828 = vld [vmem:[#allocation2 + $0x744] sm:$0xff]
    %v5829 = vld [vmem:[#allocation2 + $0x74c] sm:$0xf]
    %v5830 = vld [vmem:[#allocation2 + $0x750] sm:$0xff]
    %v5831 = vld [vmem:[#allocation2 + $0x758] sm:$0xff]
    %v5832 = vld [vmem:[#allocation2 + $0x760] sm:$0xff]
    %v5833 = vld [vmem:[#allocation2 + $0x768] sm:$0xff]
    %v5834 = vld [vmem:[#allocation2 + $0x770] sm:$0xf]
    %v5835 = vld [vmem:[#allocation2 + $0x774] sm:$0xff]
    %v5836 = vld [vmem:[#allocation2 + $0x77c] sm:$0xff]
    %v5837 = vld [vmem:[#allocation2 + $0x784] sm:$0xff]
    %v5838 = vld [vmem:[#allocation2 + $0x78c] sm:$0xff]
    %v5839 = vld [vmem:[#allocation2 + $0x794] sm:$0xf]
    %v5840 = vld [vmem:[#allocation2 + $0x798] sm:$0xff]
    %v5841 = vld [vmem:[#allocation2 + $0x7a0] sm:$0xff]
    %v5842 = vld [vmem:[#allocation2 + $0x7a8] sm:$0xff]
    %v5843 = vld [vmem:[#allocation2 + $0x7b0] sm:$0xff]
    %v5844 = vld [vmem:[#allocation2 + $0x7b8] sm:$0xf]
    %v5845 = vld [vmem:[#allocation2 + $0x7bc] sm:$0xff]
    %v5846 = vld [vmem:[#allocation2 + $0x7c4] sm:$0xff]
    %v5847 = vld [vmem:[#allocation2 + $0x7cc] sm:$0xff]
    %v5848 = vld [vmem:[#allocation2 + $0x7d4] sm:$0xff]
    %v5849 = vld [vmem:[#allocation2 + $0x7dc] sm:$0xf]
    %v5850 = vld [vmem:[#allocation2 + $0x7e0] sm:$0xff]
    %v5851 = vld [vmem:[#allocation2 + $0x7e8] sm:$0xff]
    %v5852 = vld [vmem:[#allocation2 + $0x7f0] sm:$0xff]
    %v5853 = vld [vmem:[#allocation2 + $0x7f8] sm:$0xff]
    %v5854 = vld [vmem:[#allocation2 + $0x800] sm:$0xf]
    %v5855 = vld [vmem:[#allocation2 + $0x804] sm:$0xff]
    %v5856 = vld [vmem:[#allocation2 + $0x80c] sm:$0xff]
    %v5857 = vld [vmem:[#allocation2 + $0x814] sm:$0xff]
    %v5858 = vld [vmem:[#allocation2 + $0x81c] sm:$0xff]
    %v5859 = vld [vmem:[#allocation2 + $0x824] sm:$0xf]
    %v5860 = vld [vmem:[#allocation2 + $0x828] sm:$0xff]
    %v5861 = vld [vmem:[#allocation2 + $0x830] sm:$0xff]
    %v5862 = vld [vmem:[#allocation2 + $0x838] sm:$0xff]
    %v5863 = vld [vmem:[#allocation2 + $0x840] sm:$0xff]
    %v5864 = vld [vmem:[#allocation2 + $0x848] sm:$0xf]
    %v5865 = vld [vmem:[#allocation2 + $0x84c] sm:$0xff]
    %v5866 = vld [vmem:[#allocation2 + $0x854] sm:$0xff]
    %v5867 = vld [vmem:[#allocation2 + $0x85c] sm:$0xff]
    %v5868 = vld [vmem:[#allocation2 + $0x864] sm:$0xff]
    %v5869 = vld [vmem:[#allocation2 + $0x86c] sm:$0xf]
    %v5870 = vld [vmem:[#allocation2 + $0x870] sm:$0xff]
    %v5871 = vld [vmem:[#allocation2 + $0x878] sm:$0xff]
    %v5872 = vld [vmem:[#allocation2 + $0x880] sm:$0xff]
    %v5873 = vld [vmem:[#allocation2 + $0x888] sm:$0xff]
    %v5874 = vld [vmem:[#allocation2 + $0x890] sm:$0xf]
    %v5875 = vld [vmem:[#allocation2 + $0x894] sm:$0xff]
    %v5876 = vld [vmem:[#allocation2 + $0x89c] sm:$0xff]
    %v5877 = vld [vmem:[#allocation2 + $0x8a4] sm:$0xff]
    %v5878 = vld [vmem:[#allocation2 + $0x8ac] sm:$0xff]
    %v5879 = vld [vmem:[#allocation2 + $0x8b4] sm:$0xf]
    %v5880 = vld [vmem:[#allocation2 + $0x8b8] sm:$0xff]
    %v5881 = vld [vmem:[#allocation2 + $0x8c0] sm:$0xff]
    %v5882 = vld [vmem:[#allocation2 + $0x8c8] sm:$0xff]
    %v5883 = vld [vmem:[#allocation2 + $0x8d0] sm:$0xff]
    %v5884 = vld [vmem:[#allocation2 + $0x8d8] sm:$0xf]
    %v5885 = vld [vmem:[#allocation2 + $0x8dc] sm:$0xff]
    %v5886 = vld [vmem:[#allocation2 + $0x8e4] sm:$0xff]
    %v5887 = vld [vmem:[#allocation2 + $0x8ec] sm:$0xff]
    %v5888 = vld [vmem:[#allocation2 + $0x8f4] sm:$0xff]
    %v5889 = vld [vmem:[#allocation2 + $0x8fc] sm:$0xf]
    %v5890 = vld [vmem:[%s5] sm:$0xf]
    %v5891 = vld [vmem:[%s5 + $0x4] sm:$0xf]
    %v5892 = vld [vmem:[%s5 + $0x8] sm:$0xf]
    %v5893 = vld [vmem:[%s5 + $0xc] sm:$0xf]
    %v5894 = vld [vmem:[%s5 + $0x10] sm:$0xf]
    %v5895 = vld [vmem:[%s5 + $0x14] sm:$0xf]
    %v5896 = vld [vmem:[%s5 + $0x18] sm:$0xf]
    %v5897 = vld [vmem:[%s5 + $0x1c] sm:$0xf]
    %v5898 = vld [vmem:[%s5 + $0x20] sm:$0xf]
    %v5899 = vld [vmem:[%s5 + $0x24] sm:$0xf]
    %v5900 = vld [vmem:[%s5 + $0x28] sm:$0xf]
    %v5901 = vld [vmem:[%s5 + $0x2c] sm:$0xf]
    %v5902 = vld [vmem:[%s5 + $0x30] sm:$0xf]
    %v5903 = vld [vmem:[%s5 + $0x34] sm:$0xf]
    %v5904 = vld [vmem:[%s5 + $0x38] sm:$0xf]
    %v5905 = vld [vmem:[%s5 + $0x3c] sm:$0xf]
    %v5906 = vld [vmem:[%s5 + $0x40] sm:$0xf]
    %v5907 = vld [vmem:[%s5 + $0x44] sm:$0xf]
    %v5908 = vld [vmem:[%s5 + $0x48] sm:$0xf]
    %v5909 = vld [vmem:[%s5 + $0x4c] sm:$0xf]
    %v5910 = vld [vmem:[%s5 + $0x50] sm:$0xf]
    %v5911 = vld [vmem:[%s5 + $0x54] sm:$0xf]
    %v5912 = vld [vmem:[%s5 + $0x58] sm:$0xf]
    %v5913 = vld [vmem:[%s5 + $0x5c] sm:$0xf]
    %v5914 = vld [vmem:[%s5 + $0x60] sm:$0xf]
    %v5915 = vld [vmem:[%s5 + $0x64] sm:$0xf]
    %v5916 = vld [vmem:[%s5 + $0x68] sm:$0xf]
    %v5917 = vld [vmem:[%s5 + $0x6c] sm:$0xf]
    %v5918 = vld [vmem:[%s5 + $0x70] sm:$0xf]
    %v5919 = vld [vmem:[%s5 + $0x74] sm:$0xf]
    %v5920 = vld [vmem:[%s5 + $0x78] sm:$0xf]
    %v5921 = vld [vmem:[%s5 + $0x7c] sm:$0xf]
    %v5922 = vld [vmem:[%s5 + $0x80] sm:$0xf]
    %v5923 = vld [vmem:[%s5 + $0x84] sm:$0xf]
    %v5924 = vld [vmem:[%s5 + $0x88] sm:$0xf]
    %v5925 = vld [vmem:[%s5 + $0x8c] sm:$0xf]
    %v5926 = vld [vmem:[%s5 + $0x90] sm:$0xf]
    %v5927 = vld [vmem:[%s5 + $0x94] sm:$0xf]
    %v5928 = vld [vmem:[%s5 + $0x98] sm:$0xf]
    %v5929 = vld [vmem:[%s5 + $0x9c] sm:$0xf]
    %v5930 = vld [vmem:[%s5 + $0xa0] sm:$0xf]
    %v5931 = vld [vmem:[%s5 + $0xa4] sm:$0xf]
    %v5932 = vld [vmem:[%s5 + $0xa8] sm:$0xf]
    %v5933 = vld [vmem:[%s5 + $0xac] sm:$0xf]
    %v5934 = vld [vmem:[%s5 + $0xb0] sm:$0xf]
    %v5935 = vld [vmem:[%s5 + $0xb4] sm:$0xf]
    %v5936 = vld [vmem:[%s5 + $0xb8] sm:$0xf]
    %v5937 = vld [vmem:[%s5 + $0xbc] sm:$0xf]
    %v5938 = vld [vmem:[%s5 + $0xc0] sm:$0xf]
    %v5939 = vld [vmem:[%s5 + $0xc4] sm:$0xf]
    %v5940 = vld [vmem:[%s5 + $0xc8] sm:$0xf]
    %v5941 = vld [vmem:[%s5 + $0xcc] sm:$0xf]
    %v5942 = vld [vmem:[%s5 + $0xd0] sm:$0xf]
    %v5943 = vld [vmem:[%s5 + $0xd4] sm:$0xf]
    %v5944 = vld [vmem:[%s5 + $0xd8] sm:$0xf]
    %v5945 = vld [vmem:[%s5 + $0xdc] sm:$0xf]
    %v5946 = vld [vmem:[%s5 + $0xe0] sm:$0xf]
    %v5947 = vld [vmem:[%s5 + $0xe4] sm:$0xf]
    %v5948 = vld [vmem:[%s5 + $0xe8] sm:$0xf]
    %v5949 = vld [vmem:[%s5 + $0xec] sm:$0xf]
    %v5950 = vld [vmem:[%s5 + $0xf0] sm:$0xf]
    %v5951 = vld [vmem:[%s5 + $0xf4] sm:$0xf]
    %v5952 = vld [vmem:[%s5 + $0xf8] sm:$0xf]
    %v5953 = vld [vmem:[%s5 + $0xfc] sm:$0xf]
    %v5954 = vld [vmem:[%s5 + $0x100] sm:$0xf]
    %v5955 = vld [vmem:[%s5 + $0x104] sm:$0xf]
    %v5956 = vld [vmem:[%s5 + $0x108] sm:$0xf]
    %v5957 = vld [vmem:[%s5 + $0x10c] sm:$0xf]
    %v5958 = vld [vmem:[%s5 + $0x110] sm:$0xf]
    %v5959 = vld [vmem:[%s5 + $0x114] sm:$0xf]
    %v5960 = vld [vmem:[%s5 + $0x118] sm:$0xf]
    %v5961 = vld [vmem:[%s5 + $0x11c] sm:$0xf]
    %v5962 = vld [vmem:[%s5 + $0x120] sm:$0xf]
    %v5963 = vld [vmem:[%s5 + $0x124] sm:$0xf]
    %v5964 = vld [vmem:[%s5 + $0x128] sm:$0xf]
    %v5965 = vld [vmem:[%s5 + $0x12c] sm:$0xf]
    %v5966 = vld [vmem:[%s5 + $0x130] sm:$0xf]
    %v5967 = vld [vmem:[%s5 + $0x134] sm:$0xf]
    %v5968 = vld [vmem:[%s5 + $0x138] sm:$0xf]
    %v5969 = vld [vmem:[%s5 + $0x13c] sm:$0xf]
    %v5970 = vld [vmem:[%s5 + $0x140] sm:$0xf]
    %v5971 = vld [vmem:[%s5 + $0x144] sm:$0xf]
    %v5972 = vld [vmem:[%s5 + $0x148] sm:$0xf]
    %v5973 = vld [vmem:[%s5 + $0x14c] sm:$0xf]
    %v5974 = vld [vmem:[%s5 + $0x150] sm:$0xf]
    %v5975 = vld [vmem:[%s5 + $0x154] sm:$0xf]
    %v5976 = vld [vmem:[%s5 + $0x158] sm:$0xf]
    %v5977 = vld [vmem:[%s5 + $0x15c] sm:$0xf]
    %v5978 = vld [vmem:[%s5 + $0x160] sm:$0xf]
    %v5979 = vld [vmem:[%s5 + $0x164] sm:$0xf]
    %v5980 = vld [vmem:[%s5 + $0x168] sm:$0xf]
    %v5981 = vld [vmem:[%s5 + $0x16c] sm:$0xf]
    %v5982 = vld [vmem:[%s5 + $0x170] sm:$0xf]
    %v5983 = vld [vmem:[%s5 + $0x174] sm:$0xf]
    %v5984 = vld [vmem:[%s5 + $0x178] sm:$0xf]
    %v5985 = vld [vmem:[%s5 + $0x17c] sm:$0xf]
    %v5986 = vld [vmem:[%s5 + $0x180] sm:$0xf]
    %v5987 = vld [vmem:[%s5 + $0x184] sm:$0xf]
    %v5988 = vld [vmem:[%s5 + $0x188] sm:$0xf]
    %v5989 = vld [vmem:[%s5 + $0x18c] sm:$0xf]
    %v5990 = vld [vmem:[%s5 + $0x190] sm:$0xf]
    %v5991 = vld [vmem:[%s5 + $0x194] sm:$0xf]
    %v5992 = vld [vmem:[%s5 + $0x198] sm:$0xf]
    %v5993 = vld [vmem:[%s5 + $0x19c] sm:$0xf]
    %v5994 = vld [vmem:[%s5 + $0x1a0] sm:$0xf]
    %v5995 = vld [vmem:[%s5 + $0x1a4] sm:$0xf]
    %v5996 = vld [vmem:[%s5 + $0x1a8] sm:$0xf]
    %v5997 = vld [vmem:[%s5 + $0x1ac] sm:$0xf]
    %v5998 = vld [vmem:[%s5 + $0x1b0] sm:$0xf]
    %v5999 = vld [vmem:[%s5 + $0x1b4] sm:$0xf]
    %v6000 = vld [vmem:[%s5 + $0x1b8] sm:$0xf]
    %v6001 = vld [vmem:[%s5 + $0x1bc] sm:$0xf]
    %v6002 = vld [vmem:[%s5 + $0x1c0] sm:$0xf]
    %v6003 = vld [vmem:[%s5 + $0x1c4] sm:$0xf]
    %v6004 = vld [vmem:[%s5 + $0x1c8] sm:$0xf]
    %v6005 = vld [vmem:[%s5 + $0x1cc] sm:$0xf]
    %v6006 = vld [vmem:[%s5 + $0x1d0] sm:$0xf]
    %v6007 = vld [vmem:[%s5 + $0x1d4] sm:$0xf]
    %v6008 = vld [vmem:[%s5 + $0x1d8] sm:$0xf]
    %v6009 = vld [vmem:[%s5 + $0x1dc] sm:$0xf]
    %v6010 = vld [vmem:[%s5 + $0x1e0] sm:$0xf]
    %v6011 = vld [vmem:[%s5 + $0x1e4] sm:$0xf]
    %v6012 = vld [vmem:[%s5 + $0x1e8] sm:$0xf]
    %v6013 = vld [vmem:[%s5 + $0x1ec] sm:$0xf]
    %v6014 = vld [vmem:[%s5 + $0x1f0] sm:$0xf]
    %v6015 = vld [vmem:[%s5 + $0x1f4] sm:$0xf]
    %v6016 = vld [vmem:[%s5 + $0x1f8] sm:$0xf]
    %v6017 = vld [vmem:[%s5 + $0x1fc] sm:$0xf]
    %v6018 = vld [vmem:[%s5 + $0x200] sm:$0xf]
    %v6019 = vld [vmem:[%s5 + $0x204] sm:$0xf]
    %v6020 = vld [vmem:[%s5 + $0x208] sm:$0xf]
    %v6021 = vld [vmem:[%s5 + $0x20c] sm:$0xf]
    %v6022 = vld [vmem:[%s5 + $0x210] sm:$0xf]
    %v6023 = vld [vmem:[%s5 + $0x214] sm:$0xf]
    %v6024 = vld [vmem:[%s5 + $0x218] sm:$0xf]
    %v6025 = vld [vmem:[%s5 + $0x21c] sm:$0xf]
    %v6026 = vld [vmem:[%s5 + $0x220] sm:$0xf]
    %v6027 = vld [vmem:[%s5 + $0x224] sm:$0xf]
    %v6028 = vld [vmem:[%s5 + $0x228] sm:$0xf]
    %v6029 = vld [vmem:[%s5 + $0x22c] sm:$0xf]
    %v6030 = vld [vmem:[%s5 + $0x230] sm:$0xf]
    %v6031 = vld [vmem:[%s5 + $0x234] sm:$0xf]
    %v6032 = vld [vmem:[%s5 + $0x238] sm:$0xf]
    %v6033 = vld [vmem:[%s5 + $0x23c] sm:$0xf]
    %v6034 = vld [vmem:[%s6] sm:$0x1]
    %v6036 = vperm.slane %v6034, 0
    %v6358 = vunpack.c.l.b16 %v5570
    %v6359 = vunpack.c.h.b16 %v5570
    %v6360 = vunpack.c.l.b16 %v5571
    %v6361 = vunpack.c.h.b16 %v5571
    %v6362 = vunpack.c.l.b16 %v5572
    %v6363 = vunpack.c.h.b16 %v5572
    %v6364 = vunpack.c.l.b16 %v5573
    %v6365 = vunpack.c.h.b16 %v5573
    %v6366 = vunpack.c.l.b16 %v5574
    %v6367 = vunpack.c.l.b16 %v5575
    %v6368 = vunpack.c.h.b16 %v5575
    %v6369 = vunpack.c.l.b16 %v5576
    %v6370 = vunpack.c.h.b16 %v5576
    %v6371 = vunpack.c.l.b16 %v5577
    %v6372 = vunpack.c.h.b16 %v5577
    %v6373 = vunpack.c.l.b16 %v5578
    %v6374 = vunpack.c.h.b16 %v5578
    %v6375 = vunpack.c.l.b16 %v5579
    %v6376 = vunpack.c.l.b16 %v5580
    %v6377 = vunpack.c.h.b16 %v5580
    %v6378 = vunpack.c.l.b16 %v5581
    %v6379 = vunpack.c.h.b16 %v5581
    %v6380 = vunpack.c.l.b16 %v5582
    %v6381 = vunpack.c.h.b16 %v5582
    %v6382 = vunpack.c.l.b16 %v5583
    %v6383 = vunpack.c.h.b16 %v5583
    %v6384 = vunpack.c.l.b16 %v5584
    %v6385 = vunpack.c.l.b16 %v5585
    %v6386 = vunpack.c.h.b16 %v5585
    %v6387 = vunpack.c.l.b16 %v5586
    %v6388 = vunpack.c.h.b16 %v5586
    %v6389 = vunpack.c.l.b16 %v5587
    %v6390 = vunpack.c.h.b16 %v5587
    %v6391 = vunpack.c.l.b16 %v5588
    %v6392 = vunpack.c.h.b16 %v5588
    %v6393 = vunpack.c.l.b16 %v5589
    %v6394 = vunpack.c.l.b16 %v5590
    %v6395 = vunpack.c.h.b16 %v5590
    %v6396 = vunpack.c.l.b16 %v5591
    %v6397 = vunpack.c.h.b16 %v5591
    %v6398 = vunpack.c.l.b16 %v5592
    %v6399 = vunpack.c.h.b16 %v5592
    %v6400 = vunpack.c.l.b16 %v5593
    %v6401 = vunpack.c.h.b16 %v5593
    %v6402 = vunpack.c.l.b16 %v5594
    %v6403 = vunpack.c.l.b16 %v5595
    %v6404 = vunpack.c.h.b16 %v5595
    %v6405 = vunpack.c.l.b16 %v5596
    %v6406 = vunpack.c.h.b16 %v5596
    %v6407 = vunpack.c.l.b16 %v5597
    %v6408 = vunpack.c.h.b16 %v5597
    %v6409 = vunpack.c.l.b16 %v5598
    %v6410 = vunpack.c.h.b16 %v5598
    %v6411 = vunpack.c.l.b16 %v5599
    %v6412 = vunpack.c.l.b16 %v5600
    %v6413 = vunpack.c.h.b16 %v5600
    %v6414 = vunpack.c.l.b16 %v5601
    %v6415 = vunpack.c.h.b16 %v5601
    %v6416 = vunpack.c.l.b16 %v5602
    %v6417 = vunpack.c.h.b16 %v5602
    %v6418 = vunpack.c.l.b16 %v5603
    %v6419 = vunpack.c.h.b16 %v5603
    %v6420 = vunpack.c.l.b16 %v5604
    %v6421 = vunpack.c.l.b16 %v5605
    %v6422 = vunpack.c.h.b16 %v5605
    %v6423 = vunpack.c.l.b16 %v5606
    %v6424 = vunpack.c.h.b16 %v5606
    %v6425 = vunpack.c.l.b16 %v5607
    %v6426 = vunpack.c.h.b16 %v5607
    %v6427 = vunpack.c.l.b16 %v5608
    %v6428 = vunpack.c.h.b16 %v5608
    %v6429 = vunpack.c.l.b16 %v5609
    %v6430 = vunpack.c.l.b16 %v5610
    %v6431 = vunpack.c.h.b16 %v5610
    %v6432 = vunpack.c.l.b16 %v5611
    %v6433 = vunpack.c.h.b16 %v5611
    %v6434 = vunpack.c.l.b16 %v5612
    %v6435 = vunpack.c.h.b16 %v5612
    %v6436 = vunpack.c.l.b16 %v5613
    %v6437 = vunpack.c.h.b16 %v5613
    %v6438 = vunpack.c.l.b16 %v5614
    %v6439 = vunpack.c.l.b16 %v5615
    %v6440 = vunpack.c.h.b16 %v5615
    %v6441 = vunpack.c.l.b16 %v5616
    %v6442 = vunpack.c.h.b16 %v5616
    %v6443 = vunpack.c.l.b16 %v5617
    %v6444 = vunpack.c.h.b16 %v5617
    %v6445 = vunpack.c.l.b16 %v5618
    %v6446 = vunpack.c.h.b16 %v5618
    %v6447 = vunpack.c.l.b16 %v5619
    %v6448 = vunpack.c.l.b16 %v5620
    %v6449 = vunpack.c.h.b16 %v5620
    %v6450 = vunpack.c.l.b16 %v5621
    %v6451 = vunpack.c.h.b16 %v5621
    %v6452 = vunpack.c.l.b16 %v5622
    %v6453 = vunpack.c.h.b16 %v5622
    %v6454 = vunpack.c.l.b16 %v5623
    %v6455 = vunpack.c.h.b16 %v5623
    %v6456 = vunpack.c.l.b16 %v5624
    %v6457 = vunpack.c.l.b16 %v5625
    %v6458 = vunpack.c.h.b16 %v5625
    %v6459 = vunpack.c.l.b16 %v5626
    %v6460 = vunpack.c.h.b16 %v5626
    %v6461 = vunpack.c.l.b16 %v5627
    %v6462 = vunpack.c.h.b16 %v5627
    %v6463 = vunpack.c.l.b16 %v5628
    %v6464 = vunpack.c.h.b16 %v5628
    %v6465 = vunpack.c.l.b16 %v5629
    %v6466 = vunpack.c.l.b16 %v5630
    %v6467 = vunpack.c.h.b16 %v5630
    %v6468 = vunpack.c.l.b16 %v5631
    %v6469 = vunpack.c.h.b16 %v5631
    %v6470 = vunpack.c.l.b16 %v5632
    %v6471 = vunpack.c.h.b16 %v5632
    %v6472 = vunpack.c.l.b16 %v5633
    %v6473 = vunpack.c.h.b16 %v5633
    %v6474 = vunpack.c.l.b16 %v5634
    %v6475 = vunpack.c.l.b16 %v5635
    %v6476 = vunpack.c.h.b16 %v5635
    %v6477 = vunpack.c.l.b16 %v5636
    %v6478 = vunpack.c.h.b16 %v5636
    %v6479 = vunpack.c.l.b16 %v5637
    %v6480 = vunpack.c.h.b16 %v5637
    %v6481 = vunpack.c.l.b16 %v5638
    %v6482 = vunpack.c.h.b16 %v5638
    %v6483 = vunpack.c.l.b16 %v5639
    %v6484 = vunpack.c.l.b16 %v5640
    %v6485 = vunpack.c.h.b16 %v5640
    %v6486 = vunpack.c.l.b16 %v5641
    %v6487 = vunpack.c.h.b16 %v5641
    %v6488 = vunpack.c.l.b16 %v5642
    %v6489 = vunpack.c.h.b16 %v5642
    %v6490 = vunpack.c.l.b16 %v5643
    %v6491 = vunpack.c.h.b16 %v5643
    %v6492 = vunpack.c.l.b16 %v5644
    %v6493 = vunpack.c.l.b16 %v5645
    %v6494 = vunpack.c.h.b16 %v5645
    %v6495 = vunpack.c.l.b16 %v5646
    %v6496 = vunpack.c.h.b16 %v5646
    %v6497 = vunpack.c.l.b16 %v5647
    %v6498 = vunpack.c.h.b16 %v5647
    %v6499 = vunpack.c.l.b16 %v5648
    %v6500 = vunpack.c.h.b16 %v5648
    %v6501 = vunpack.c.l.b16 %v5649
    %v6502 = vunpack.c.l.b16 %v5650
    %v6503 = vunpack.c.h.b16 %v5650
    %v6504 = vunpack.c.l.b16 %v5651
    %v6505 = vunpack.c.h.b16 %v5651
    %v6506 = vunpack.c.l.b16 %v5652
    %v6507 = vunpack.c.h.b16 %v5652
    %v6508 = vunpack.c.l.b16 %v5653
    %v6509 = vunpack.c.h.b16 %v5653
    %v6510 = vunpack.c.l.b16 %v5654
    %v6511 = vunpack.c.l.b16 %v5655
    %v6512 = vunpack.c.h.b16 %v5655
    %v6513 = vunpack.c.l.b16 %v5656
    %v6514 = vunpack.c.h.b16 %v5656
    %v6515 = vunpack.c.l.b16 %v5657
    %v6516 = vunpack.c.h.b16 %v5657
    %v6517 = vunpack.c.l.b16 %v5658
    %v6518 = vunpack.c.h.b16 %v5658
    %v6519 = vunpack.c.l.b16 %v5659
    %v6520 = vunpack.c.l.b16 %v5660
    %v6521 = vunpack.c.h.b16 %v5660
    %v6522 = vunpack.c.l.b16 %v5661
    %v6523 = vunpack.c.h.b16 %v5661
    %v6524 = vunpack.c.l.b16 %v5662
    %v6525 = vunpack.c.h.b16 %v5662
    %v6526 = vunpack.c.l.b16 %v5663
    %v6527 = vunpack.c.h.b16 %v5663
    %v6528 = vunpack.c.l.b16 %v5664
    %v6529 = vunpack.c.l.b16 %v5665
    %v6530 = vunpack.c.h.b16 %v5665
    %v6531 = vunpack.c.l.b16 %v5666
    %v6532 = vunpack.c.h.b16 %v5666
    %v6533 = vunpack.c.l.b16 %v5667
    %v6534 = vunpack.c.h.b16 %v5667
    %v6535 = vunpack.c.l.b16 %v5668
    %v6536 = vunpack.c.h.b16 %v5668
    %v6537 = vunpack.c.l.b16 %v5669
    %v6538 = vunpack.c.l.b16 %v5670
    %v6539 = vunpack.c.h.b16 %v5670
    %v6540 = vunpack.c.l.b16 %v5671
    %v6541 = vunpack.c.h.b16 %v5671
    %v6542 = vunpack.c.l.b16 %v5672
    %v6543 = vunpack.c.h.b16 %v5672
    %v6544 = vunpack.c.l.b16 %v5673
    %v6545 = vunpack.c.h.b16 %v5673
    %v6546 = vunpack.c.l.b16 %v5674
    %v6547 = vunpack.c.l.b16 %v5675
    %v6548 = vunpack.c.h.b16 %v5675
    %v6549 = vunpack.c.l.b16 %v5676
    %v6550 = vunpack.c.h.b16 %v5676
    %v6551 = vunpack.c.l.b16 %v5677
    %v6552 = vunpack.c.h.b16 %v5677
    %v6553 = vunpack.c.l.b16 %v5678
    %v6554 = vunpack.c.h.b16 %v5678
    %v6555 = vunpack.c.l.b16 %v5679
    %v6556 = vunpack.c.l.b16 %v5680
    %v6557 = vunpack.c.h.b16 %v5680
    %v6558 = vunpack.c.l.b16 %v5681
    %v6559 = vunpack.c.h.b16 %v5681
    %v6560 = vunpack.c.l.b16 %v5682
    %v6561 = vunpack.c.h.b16 %v5682
    %v6562 = vunpack.c.l.b16 %v5683
    %v6563 = vunpack.c.h.b16 %v5683
    %v6564 = vunpack.c.l.b16 %v5684
    %v6565 = vunpack.c.l.b16 %v5685
    %v6566 = vunpack.c.h.b16 %v5685
    %v6567 = vunpack.c.l.b16 %v5686
    %v6568 = vunpack.c.h.b16 %v5686
    %v6569 = vunpack.c.l.b16 %v5687
    %v6570 = vunpack.c.h.b16 %v5687
    %v6571 = vunpack.c.l.b16 %v5688
    %v6572 = vunpack.c.h.b16 %v5688
    %v6573 = vunpack.c.l.b16 %v5689
    %v6574 = vunpack.c.l.b16 %v5690
    %v6575 = vunpack.c.h.b16 %v5690
    %v6576 = vunpack.c.l.b16 %v5691
    %v6577 = vunpack.c.h.b16 %v5691
    %v6578 = vunpack.c.l.b16 %v5692
    %v6579 = vunpack.c.h.b16 %v5692
    %v6580 = vunpack.c.l.b16 %v5693
    %v6581 = vunpack.c.h.b16 %v5693
    %v6582 = vunpack.c.l.b16 %v5694
    %v6583 = vunpack.c.l.b16 %v5695
    %v6584 = vunpack.c.h.b16 %v5695
    %v6585 = vunpack.c.l.b16 %v5696
    %v6586 = vunpack.c.h.b16 %v5696
    %v6587 = vunpack.c.l.b16 %v5697
    %v6588 = vunpack.c.h.b16 %v5697
    %v6589 = vunpack.c.l.b16 %v5698
    %v6590 = vunpack.c.h.b16 %v5698
    %v6591 = vunpack.c.l.b16 %v5699
    %v6592 = vunpack.c.l.b16 %v5700
    %v6593 = vunpack.c.h.b16 %v5700
    %v6594 = vunpack.c.l.b16 %v5701
    %v6595 = vunpack.c.h.b16 %v5701
    %v6596 = vunpack.c.l.b16 %v5702
    %v6597 = vunpack.c.h.b16 %v5702
    %v6598 = vunpack.c.l.b16 %v5703
    %v6599 = vunpack.c.h.b16 %v5703
    %v6600 = vunpack.c.l.b16 %v5704
    %v6601 = vunpack.c.l.b16 %v5705
    %v6602 = vunpack.c.h.b16 %v5705
    %v6603 = vunpack.c.l.b16 %v5706
    %v6604 = vunpack.c.h.b16 %v5706
    %v6605 = vunpack.c.l.b16 %v5707
    %v6606 = vunpack.c.h.b16 %v5707
    %v6607 = vunpack.c.l.b16 %v5708
    %v6608 = vunpack.c.h.b16 %v5708
    %v6609 = vunpack.c.l.b16 %v5709
    %v6610 = vunpack.c.l.b16 %v5710
    %v6611 = vunpack.c.h.b16 %v5710
    %v6612 = vunpack.c.l.b16 %v5711
    %v6613 = vunpack.c.h.b16 %v5711
    %v6614 = vunpack.c.l.b16 %v5712
    %v6615 = vunpack.c.h.b16 %v5712
    %v6616 = vunpack.c.l.b16 %v5713
    %v6617 = vunpack.c.h.b16 %v5713
    %v6618 = vunpack.c.l.b16 %v5714
    %v6619 = vunpack.c.l.b16 %v5715
    %v6620 = vunpack.c.h.b16 %v5715
    %v6621 = vunpack.c.l.b16 %v5716
    %v6622 = vunpack.c.h.b16 %v5716
    %v6623 = vunpack.c.l.b16 %v5717
    %v6624 = vunpack.c.h.b16 %v5717
    %v6625 = vunpack.c.l.b16 %v5718
    %v6626 = vunpack.c.h.b16 %v5718
    %v6627 = vunpack.c.l.b16 %v5719
    %v6628 = vunpack.c.l.b16 %v5720
    %v6629 = vunpack.c.h.b16 %v5720
    %v6630 = vunpack.c.l.b16 %v5721
    %v6631 = vunpack.c.h.b16 %v5721
    %v6632 = vunpack.c.l.b16 %v5722
    %v6633 = vunpack.c.h.b16 %v5722
    %v6634 = vunpack.c.l.b16 %v5723
    %v6635 = vunpack.c.h.b16 %v5723
    %v6636 = vunpack.c.l.b16 %v5724
    %v6637 = vunpack.c.l.b16 %v5725
    %v6638 = vunpack.c.h.b16 %v5725
    %v6639 = vunpack.c.l.b16 %v5726
    %v6640 = vunpack.c.h.b16 %v5726
    %v6641 = vunpack.c.l.b16 %v5727
    %v6642 = vunpack.c.h.b16 %v5727
    %v6643 = vunpack.c.l.b16 %v5728
    %v6644 = vunpack.c.h.b16 %v5728
    %v6645 = vunpack.c.l.b16 %v5729
    %v6646 = vunpack.c.l.b16 %v5730
    %v6647 = vunpack.c.h.b16 %v5730
    %v6648 = vunpack.c.l.b16 %v5731
    %v6649 = vunpack.c.h.b16 %v5731
    %v6650 = vunpack.c.l.b16 %v5732
    %v6651 = vunpack.c.h.b16 %v5732
    %v6652 = vunpack.c.l.b16 %v5733
    %v6653 = vunpack.c.h.b16 %v5733
    %v6654 = vunpack.c.l.b16 %v5734
    %v6655 = vunpack.c.l.b16 %v5735
    %v6656 = vunpack.c.h.b16 %v5735
    %v6657 = vunpack.c.l.b16 %v5736
    %v6658 = vunpack.c.h.b16 %v5736
    %v6659 = vunpack.c.l.b16 %v5737
    %v6660 = vunpack.c.h.b16 %v5737
    %v6661 = vunpack.c.l.b16 %v5738
    %v6662 = vunpack.c.h.b16 %v5738
    %v6663 = vunpack.c.l.b16 %v5739
    %v6664 = vunpack.c.l.b16 %v5740
    %v6665 = vunpack.c.h.b16 %v5740
    %v6666 = vunpack.c.l.b16 %v5741
    %v6667 = vunpack.c.h.b16 %v5741
    %v6668 = vunpack.c.l.b16 %v5742
    %v6669 = vunpack.c.h.b16 %v5742
    %v6670 = vunpack.c.l.b16 %v5743
    %v6671 = vunpack.c.h.b16 %v5743
    %v6672 = vunpack.c.l.b16 %v5744
    %v6673 = vunpack.c.l.b16 %v5745
    %v6674 = vunpack.c.h.b16 %v5745
    %v6675 = vunpack.c.l.b16 %v5746
    %v6676 = vunpack.c.h.b16 %v5746
    %v6677 = vunpack.c.l.b16 %v5747
    %v6678 = vunpack.c.h.b16 %v5747
    %v6679 = vunpack.c.l.b16 %v5748
    %v6680 = vunpack.c.h.b16 %v5748
    %v6681 = vunpack.c.l.b16 %v5749
    %v6682 = vunpack.c.l.b16 %v5750
    %v6683 = vunpack.c.h.b16 %v5750
    %v6684 = vunpack.c.l.b16 %v5751
    %v6685 = vunpack.c.h.b16 %v5751
    %v6686 = vunpack.c.l.b16 %v5752
    %v6687 = vunpack.c.h.b16 %v5752
    %v6688 = vunpack.c.l.b16 %v5753
    %v6689 = vunpack.c.h.b16 %v5753
    %v6690 = vunpack.c.l.b16 %v5754
    %v6691 = vunpack.c.l.b16 %v5755
    %v6692 = vunpack.c.h.b16 %v5755
    %v6693 = vunpack.c.l.b16 %v5756
    %v6694 = vunpack.c.h.b16 %v5756
    %v6695 = vunpack.c.l.b16 %v5757
    %v6696 = vunpack.c.h.b16 %v5757
    %v6697 = vunpack.c.l.b16 %v5758
    %v6698 = vunpack.c.h.b16 %v5758
    %v6699 = vunpack.c.l.b16 %v5759
    %v6700 = vunpack.c.l.b16 %v5760
    %v6701 = vunpack.c.h.b16 %v5760
    %v6702 = vunpack.c.l.b16 %v5761
    %v6703 = vunpack.c.h.b16 %v5761
    %v6704 = vunpack.c.l.b16 %v5762
    %v6705 = vunpack.c.h.b16 %v5762
    %v6706 = vunpack.c.l.b16 %v5763
    %v6707 = vunpack.c.h.b16 %v5763
    %v6708 = vunpack.c.l.b16 %v5764
    %v6709 = vunpack.c.l.b16 %v5765
    %v6710 = vunpack.c.h.b16 %v5765
    %v6711 = vunpack.c.l.b16 %v5766
    %v6712 = vunpack.c.h.b16 %v5766
    %v6713 = vunpack.c.l.b16 %v5767
    %v6714 = vunpack.c.h.b16 %v5767
    %v6715 = vunpack.c.l.b16 %v5768
    %v6716 = vunpack.c.h.b16 %v5768
    %v6717 = vunpack.c.l.b16 %v5769
    %v6718 = vunpack.c.l.b16 %v5770
    %v6719 = vunpack.c.h.b16 %v5770
    %v6720 = vunpack.c.l.b16 %v5771
    %v6721 = vunpack.c.h.b16 %v5771
    %v6722 = vunpack.c.l.b16 %v5772
    %v6723 = vunpack.c.h.b16 %v5772
    %v6724 = vunpack.c.l.b16 %v5773
    %v6725 = vunpack.c.h.b16 %v5773
    %v6726 = vunpack.c.l.b16 %v5774
    %v6727 = vunpack.c.l.b16 %v5775
    %v6728 = vunpack.c.h.b16 %v5775
    %v6729 = vunpack.c.l.b16 %v5776
    %v6730 = vunpack.c.h.b16 %v5776
    %v6731 = vunpack.c.l.b16 %v5777
    %v6732 = vunpack.c.h.b16 %v5777
    %v6733 = vunpack.c.l.b16 %v5778
    %v6734 = vunpack.c.h.b16 %v5778
    %v6735 = vunpack.c.l.b16 %v5779
    %v6736 = vunpack.c.l.b16 %v5780
    %v6737 = vunpack.c.h.b16 %v5780
    %v6738 = vunpack.c.l.b16 %v5781
    %v6739 = vunpack.c.h.b16 %v5781
    %v6740 = vunpack.c.l.b16 %v5782
    %v6741 = vunpack.c.h.b16 %v5782
    %v6742 = vunpack.c.l.b16 %v5783
    %v6743 = vunpack.c.h.b16 %v5783
    %v6744 = vunpack.c.l.b16 %v5784
    %v6745 = vunpack.c.l.b16 %v5785
    %v6746 = vunpack.c.h.b16 %v5785
    %v6747 = vunpack.c.l.b16 %v5786
    %v6748 = vunpack.c.h.b16 %v5786
    %v6749 = vunpack.c.l.b16 %v5787
    %v6750 = vunpack.c.h.b16 %v5787
    %v6751 = vunpack.c.l.b16 %v5788
    %v6752 = vunpack.c.h.b16 %v5788
    %v6753 = vunpack.c.l.b16 %v5789
    %v6754 = vunpack.c.l.b16 %v5790
    %v6755 = vunpack.c.h.b16 %v5790
    %v6756 = vunpack.c.l.b16 %v5791
    %v6757 = vunpack.c.h.b16 %v5791
    %v6758 = vunpack.c.l.b16 %v5792
    %v6759 = vunpack.c.h.b16 %v5792
    %v6760 = vunpack.c.l.b16 %v5793
    %v6761 = vunpack.c.h.b16 %v5793
    %v6762 = vunpack.c.l.b16 %v5794
    %v6763 = vunpack.c.l.b16 %v5795
    %v6764 = vunpack.c.h.b16 %v5795
    %v6765 = vunpack.c.l.b16 %v5796
    %v6766 = vunpack.c.h.b16 %v5796
    %v6767 = vunpack.c.l.b16 %v5797
    %v6768 = vunpack.c.h.b16 %v5797
    %v6769 = vunpack.c.l.b16 %v5798
    %v6770 = vunpack.c.h.b16 %v5798
    %v6771 = vunpack.c.l.b16 %v5799
    %v6772 = vunpack.c.l.b16 %v5800
    %v6773 = vunpack.c.h.b16 %v5800
    %v6774 = vunpack.c.l.b16 %v5801
    %v6775 = vunpack.c.h.b16 %v5801
    %v6776 = vunpack.c.l.b16 %v5802
    %v6777 = vunpack.c.h.b16 %v5802
    %v6778 = vunpack.c.l.b16 %v5803
    %v6779 = vunpack.c.h.b16 %v5803
    %v6780 = vunpack.c.l.b16 %v5804
    %v6781 = vunpack.c.l.b16 %v5805
    %v6782 = vunpack.c.h.b16 %v5805
    %v6783 = vunpack.c.l.b16 %v5806
    %v6784 = vunpack.c.h.b16 %v5806
    %v6785 = vunpack.c.l.b16 %v5807
    %v6786 = vunpack.c.h.b16 %v5807
    %v6787 = vunpack.c.l.b16 %v5808
    %v6788 = vunpack.c.h.b16 %v5808
    %v6789 = vunpack.c.l.b16 %v5809
    %v6790 = vunpack.c.l.b16 %v5810
    %v6791 = vunpack.c.h.b16 %v5810
    %v6792 = vunpack.c.l.b16 %v5811
    %v6793 = vunpack.c.h.b16 %v5811
    %v6794 = vunpack.c.l.b16 %v5812
    %v6795 = vunpack.c.h.b16 %v5812
    %v6796 = vunpack.c.l.b16 %v5813
    %v6797 = vunpack.c.h.b16 %v5813
    %v6798 = vunpack.c.l.b16 %v5814
    %v6799 = vunpack.c.l.b16 %v5815
    %v6800 = vunpack.c.h.b16 %v5815
    %v6801 = vunpack.c.l.b16 %v5816
    %v6802 = vunpack.c.h.b16 %v5816
    %v6803 = vunpack.c.l.b16 %v5817
    %v6804 = vunpack.c.h.b16 %v5817
    %v6805 = vunpack.c.l.b16 %v5818
    %v6806 = vunpack.c.h.b16 %v5818
    %v6807 = vunpack.c.l.b16 %v5819
    %v6808 = vunpack.c.l.b16 %v5820
    %v6809 = vunpack.c.h.b16 %v5820
    %v6810 = vunpack.c.l.b16 %v5821
    %v6811 = vunpack.c.h.b16 %v5821
    %v6812 = vunpack.c.l.b16 %v5822
    %v6813 = vunpack.c.h.b16 %v5822
    %v6814 = vunpack.c.l.b16 %v5823
    %v6815 = vunpack.c.h.b16 %v5823
    %v6816 = vunpack.c.l.b16 %v5824
    %v6817 = vunpack.c.l.b16 %v5825
    %v6818 = vunpack.c.h.b16 %v5825
    %v6819 = vunpack.c.l.b16 %v5826
    %v6820 = vunpack.c.h.b16 %v5826
    %v6821 = vunpack.c.l.b16 %v5827
    %v6822 = vunpack.c.h.b16 %v5827
    %v6823 = vunpack.c.l.b16 %v5828
    %v6824 = vunpack.c.h.b16 %v5828
    %v6825 = vunpack.c.l.b16 %v5829
    %v6826 = vunpack.c.l.b16 %v5830
    %v6827 = vunpack.c.h.b16 %v5830
    %v6828 = vunpack.c.l.b16 %v5831
    %v6829 = vunpack.c.h.b16 %v5831
    %v6830 = vunpack.c.l.b16 %v5832
    %v6831 = vunpack.c.h.b16 %v5832
    %v6832 = vunpack.c.l.b16 %v5833
    %v6833 = vunpack.c.h.b16 %v5833
    %v6834 = vunpack.c.l.b16 %v5834
    %v6835 = vunpack.c.l.b16 %v5835
    %v6836 = vunpack.c.h.b16 %v5835
    %v6837 = vunpack.c.l.b16 %v5836
    %v6838 = vunpack.c.h.b16 %v5836
    %v6839 = vunpack.c.l.b16 %v5837
    %v6840 = vunpack.c.h.b16 %v5837
    %v6841 = vunpack.c.l.b16 %v5838
    %v6842 = vunpack.c.h.b16 %v5838
    %v6843 = vunpack.c.l.b16 %v5839
    %v6844 = vunpack.c.l.b16 %v5840
    %v6845 = vunpack.c.h.b16 %v5840
    %v6846 = vunpack.c.l.b16 %v5841
    %v6847 = vunpack.c.h.b16 %v5841
    %v6848 = vunpack.c.l.b16 %v5842
    %v6849 = vunpack.c.h.b16 %v5842
    %v6850 = vunpack.c.l.b16 %v5843
    %v6851 = vunpack.c.h.b16 %v5843
    %v6852 = vunpack.c.l.b16 %v5844
    %v6853 = vunpack.c.l.b16 %v5845
    %v6854 = vunpack.c.h.b16 %v5845
    %v6855 = vunpack.c.l.b16 %v5846
    %v6856 = vunpack.c.h.b16 %v5846
    %v6857 = vunpack.c.l.b16 %v5847
    %v6858 = vunpack.c.h.b16 %v5847
    %v6859 = vunpack.c.l.b16 %v5848
    %v6860 = vunpack.c.h.b16 %v5848
    %v6861 = vunpack.c.l.b16 %v5849
    %v6862 = vunpack.c.l.b16 %v5850
    %v6863 = vunpack.c.h.b16 %v5850
    %v6864 = vunpack.c.l.b16 %v5851
    %v6865 = vunpack.c.h.b16 %v5851
    %v6866 = vunpack.c.l.b16 %v5852
    %v6867 = vunpack.c.h.b16 %v5852
    %v6868 = vunpack.c.l.b16 %v5853
    %v6869 = vunpack.c.h.b16 %v5853
    %v6870 = vunpack.c.l.b16 %v5854
    %v6871 = vunpack.c.l.b16 %v5855
    %v6872 = vunpack.c.h.b16 %v5855
    %v6873 = vunpack.c.l.b16 %v5856
    %v6874 = vunpack.c.h.b16 %v5856
    %v6875 = vunpack.c.l.b16 %v5857
    %v6876 = vunpack.c.h.b16 %v5857
    %v6877 = vunpack.c.l.b16 %v5858
    %v6878 = vunpack.c.h.b16 %v5858
    %v6879 = vunpack.c.l.b16 %v5859
    %v6880 = vunpack.c.l.b16 %v5860
    %v6881 = vunpack.c.h.b16 %v5860
    %v6882 = vunpack.c.l.b16 %v5861
    %v6883 = vunpack.c.h.b16 %v5861
    %v6884 = vunpack.c.l.b16 %v5862
    %v6885 = vunpack.c.h.b16 %v5862
    %v6886 = vunpack.c.l.b16 %v5863
    %v6887 = vunpack.c.h.b16 %v5863
    %v6888 = vunpack.c.l.b16 %v5864
    %v6889 = vunpack.c.l.b16 %v5865
    %v6890 = vunpack.c.h.b16 %v5865
    %v6891 = vunpack.c.l.b16 %v5866
    %v6892 = vunpack.c.h.b16 %v5866
    %v6893 = vunpack.c.l.b16 %v5867
    %v6894 = vunpack.c.h.b16 %v5867
    %v6895 = vunpack.c.l.b16 %v5868
    %v6896 = vunpack.c.h.b16 %v5868
    %v6897 = vunpack.c.l.b16 %v5869
    %v6898 = vunpack.c.l.b16 %v5870
    %v6899 = vunpack.c.h.b16 %v5870
    %v6900 = vunpack.c.l.b16 %v5871
    %v6901 = vunpack.c.h.b16 %v5871
    %v6902 = vunpack.c.l.b16 %v5872
    %v6903 = vunpack.c.h.b16 %v5872
    %v6904 = vunpack.c.l.b16 %v5873
    %v6905 = vunpack.c.h.b16 %v5873
    %v6906 = vunpack.c.l.b16 %v5874
    %v6907 = vunpack.c.l.b16 %v5875
    %v6908 = vunpack.c.h.b16 %v5875
    %v6909 = vunpack.c.l.b16 %v5876
    %v6910 = vunpack.c.h.b16 %v5876
    %v6911 = vunpack.c.l.b16 %v5877
    %v6912 = vunpack.c.h.b16 %v5877
    %v6913 = vunpack.c.l.b16 %v5878
    %v6914 = vunpack.c.h.b16 %v5878
    %v6915 = vunpack.c.l.b16 %v5879
    %v6916 = vunpack.c.l.b16 %v5880
    %v6917 = vunpack.c.h.b16 %v5880
    %v6918 = vunpack.c.l.b16 %v5881
    %v6919 = vunpack.c.h.b16 %v5881
    %v6920 = vunpack.c.l.b16 %v5882
    %v6921 = vunpack.c.h.b16 %v5882
    %v6922 = vunpack.c.l.b16 %v5883
    %v6923 = vunpack.c.h.b16 %v5883
    %v6924 = vunpack.c.l.b16 %v5884
    %v6925 = vunpack.c.l.b16 %v5885
    %v6926 = vunpack.c.h.b16 %v5885
    %v6927 = vunpack.c.l.b16 %v5886
    %v6928 = vunpack.c.h.b16 %v5886
    %v6929 = vunpack.c.l.b16 %v5887
    %v6930 = vunpack.c.h.b16 %v5887
    %v6931 = vunpack.c.l.b16 %v5888
    %v6932 = vunpack.c.h.b16 %v5888
    %v6933 = vunpack.c.l.b16 %v5889
    %v6934 = vpack.c.b16 %v6367, %v6358
    %v6935 = vpack.c.b16 %v6368, %v6359
    %v6936 = vpack.c.b16 %v6369, %v6360
    %v6937 = vpack.c.b16 %v6370, %v6361
    %v6938 = vpack.c.b16 %v6371, %v6362
    %v6939 = vpack.c.b16 %v6372, %v6363
    %v6940 = vpack.c.b16 %v6373, %v6364
    %v6941 = vpack.c.b16 %v6374, %v6365
    %v6942 = vpack.c.b16 %v6375, %v6366
    %v6943 = vpack.c.b16 %v6385, %v6376
    %v6944 = vpack.c.b16 %v6386, %v6377
    %v6945 = vpack.c.b16 %v6387, %v6378
    %v6946 = vpack.c.b16 %v6388, %v6379
    %v6947 = vpack.c.b16 %v6389, %v6380
    %v6948 = vpack.c.b16 %v6390, %v6381
    %v6949 = vpack.c.b16 %v6391, %v6382
    %v6950 = vpack.c.b16 %v6392, %v6383
    %v6951 = vpack.c.b16 %v6393, %v6384
    %v6952 = vpack.c.b16 %v6403, %v6394
    %v6953 = vpack.c.b16 %v6404, %v6395
    %v6954 = vpack.c.b16 %v6405, %v6396
    %v6955 = vpack.c.b16 %v6406, %v6397
    %v6956 = vpack.c.b16 %v6407, %v6398
    %v6957 = vpack.c.b16 %v6408, %v6399
    %v6958 = vpack.c.b16 %v6409, %v6400
    %v6959 = vpack.c.b16 %v6410, %v6401
    %v6960 = vpack.c.b16 %v6411, %v6402
    %v6961 = vpack.c.b16 %v6421, %v6412
    %v6962 = vpack.c.b16 %v6422, %v6413
    %v6963 = vpack.c.b16 %v6423, %v6414
    %v6964 = vpack.c.b16 %v6424, %v6415
    %v6965 = vpack.c.b16 %v6425, %v6416
    %v6966 = vpack.c.b16 %v6426, %v6417
    %v6967 = vpack.c.b16 %v6427, %v6418
    %v6968 = vpack.c.b16 %v6428, %v6419
    %v6969 = vpack.c.b16 %v6429, %v6420
    %v6970 = vpack.c.b16 %v6439, %v6430
    %v6971 = vpack.c.b16 %v6440, %v6431
    %v6972 = vpack.c.b16 %v6441, %v6432
    %v6973 = vpack.c.b16 %v6442, %v6433
    %v6974 = vpack.c.b16 %v6443, %v6434
    %v6975 = vpack.c.b16 %v6444, %v6435
    %v6976 = vpack.c.b16 %v6445, %v6436
    %v6977 = vpack.c.b16 %v6446, %v6437
    %v6978 = vpack.c.b16 %v6447, %v6438
    %v6979 = vpack.c.b16 %v6457, %v6448
    %v6980 = vpack.c.b16 %v6458, %v6449
    %v6981 = vpack.c.b16 %v6459, %v6450
    %v6982 = vpack.c.b16 %v6460, %v6451
    %v6983 = vpack.c.b16 %v6461, %v6452
    %v6984 = vpack.c.b16 %v6462, %v6453
    %v6985 = vpack.c.b16 %v6463, %v6454
    %v6986 = vpack.c.b16 %v6464, %v6455
    %v6987 = vpack.c.b16 %v6465, %v6456
    %v6988 = vpack.c.b16 %v6475, %v6466
    %v6989 = vpack.c.b16 %v6476, %v6467
    %v6990 = vpack.c.b16 %v6477, %v6468
    %v6991 = vpack.c.b16 %v6478, %v6469
    %v6992 = vpack.c.b16 %v6479, %v6470
    %v6993 = vpack.c.b16 %v6480, %v6471
    %v6994 = vpack.c.b16 %v6481, %v6472
    %v6995 = vpack.c.b16 %v6482, %v6473
    %v6996 = vpack.c.b16 %v6483, %v6474
    %v6997 = vpack.c.b16 %v6493, %v6484
    %v6998 = vpack.c.b16 %v6494, %v6485
    %v6999 = vpack.c.b16 %v6495, %v6486
    %v7000 = vpack.c.b16 %v6496, %v6487
    %v7001 = vpack.c.b16 %v6497, %v6488
    %v7002 = vpack.c.b16 %v6498, %v6489
    %v7003 = vpack.c.b16 %v6499, %v6490
    %v7004 = vpack.c.b16 %v6500, %v6491
    %v7005 = vpack.c.b16 %v6501, %v6492
    %v7006 = vpack.c.b16 %v6511, %v6502
    %v7007 = vpack.c.b16 %v6512, %v6503
    %v7008 = vpack.c.b16 %v6513, %v6504
    %v7009 = vpack.c.b16 %v6514, %v6505
    %v7010 = vpack.c.b16 %v6515, %v6506
    %v7011 = vpack.c.b16 %v6516, %v6507
    %v7012 = vpack.c.b16 %v6517, %v6508
    %v7013 = vpack.c.b16 %v6518, %v6509
    %v7014 = vpack.c.b16 %v6519, %v6510
    %v7015 = vpack.c.b16 %v6529, %v6520
    %v7016 = vpack.c.b16 %v6530, %v6521
    %v7017 = vpack.c.b16 %v6531, %v6522
    %v7018 = vpack.c.b16 %v6532, %v6523
    %v7019 = vpack.c.b16 %v6533, %v6524
    %v7020 = vpack.c.b16 %v6534, %v6525
    %v7021 = vpack.c.b16 %v6535, %v6526
    %v7022 = vpack.c.b16 %v6536, %v6527
    %v7023 = vpack.c.b16 %v6537, %v6528
    %v7024 = vpack.c.b16 %v6547, %v6538
    %v7025 = vpack.c.b16 %v6548, %v6539
    %v7026 = vpack.c.b16 %v6549, %v6540
    %v7027 = vpack.c.b16 %v6550, %v6541
    %v7028 = vpack.c.b16 %v6551, %v6542
    %v7029 = vpack.c.b16 %v6552, %v6543
    %v7030 = vpack.c.b16 %v6553, %v6544
    %v7031 = vpack.c.b16 %v6554, %v6545
    %v7032 = vpack.c.b16 %v6555, %v6546
    %v7033 = vpack.c.b16 %v6565, %v6556
    %v7034 = vpack.c.b16 %v6566, %v6557
    %v7035 = vpack.c.b16 %v6567, %v6558
    %v7036 = vpack.c.b16 %v6568, %v6559
    %v7037 = vpack.c.b16 %v6569, %v6560
    %v7038 = vpack.c.b16 %v6570, %v6561
    %v7039 = vpack.c.b16 %v6571, %v6562
    %v7040 = vpack.c.b16 %v6572, %v6563
    %v7041 = vpack.c.b16 %v6573, %v6564
    %v7042 = vpack.c.b16 %v6583, %v6574
    %v7043 = vpack.c.b16 %v6584, %v6575
    %v7044 = vpack.c.b16 %v6585, %v6576
    %v7045 = vpack.c.b16 %v6586, %v6577
    %v7046 = vpack.c.b16 %v6587, %v6578
    %v7047 = vpack.c.b16 %v6588, %v6579
    %v7048 = vpack.c.b16 %v6589, %v6580
    %v7049 = vpack.c.b16 %v6590, %v6581
    %v7050 = vpack.c.b16 %v6591, %v6582
    %v7051 = vpack.c.b16 %v6601, %v6592
    %v7052 = vpack.c.b16 %v6602, %v6593
    %v7053 = vpack.c.b16 %v6603, %v6594
    %v7054 = vpack.c.b16 %v6604, %v6595
    %v7055 = vpack.c.b16 %v6605, %v6596
    %v7056 = vpack.c.b16 %v6606, %v6597
    %v7057 = vpack.c.b16 %v6607, %v6598
    %v7058 = vpack.c.b16 %v6608, %v6599
    %v7059 = vpack.c.b16 %v6609, %v6600
    %v7060 = vpack.c.b16 %v6619, %v6610
    %v7061 = vpack.c.b16 %v6620, %v6611
    %v7062 = vpack.c.b16 %v6621, %v6612
    %v7063 = vpack.c.b16 %v6622, %v6613
    %v7064 = vpack.c.b16 %v6623, %v6614
    %v7065 = vpack.c.b16 %v6624, %v6615
    %v7066 = vpack.c.b16 %v6625, %v6616
    %v7067 = vpack.c.b16 %v6626, %v6617
    %v7068 = vpack.c.b16 %v6627, %v6618
    %v7069 = vpack.c.b16 %v6637, %v6628
    %v7070 = vpack.c.b16 %v6638, %v6629
    %v7071 = vpack.c.b16 %v6639, %v6630
    %v7072 = vpack.c.b16 %v6640, %v6631
    %v7073 = vpack.c.b16 %v6641, %v6632
    %v7074 = vpack.c.b16 %v6642, %v6633
    %v7075 = vpack.c.b16 %v6643, %v6634
    %v7076 = vpack.c.b16 %v6644, %v6635
    %v7077 = vpack.c.b16 %v6645, %v6636
    %v7078 = vpack.c.b16 %v6655, %v6646
    %v7079 = vpack.c.b16 %v6656, %v6647
    %v7080 = vpack.c.b16 %v6657, %v6648
    %v7081 = vpack.c.b16 %v6658, %v6649
    %v7082 = vpack.c.b16 %v6659, %v6650
    %v7083 = vpack.c.b16 %v6660, %v6651
    %v7084 = vpack.c.b16 %v6661, %v6652
    %v7085 = vpack.c.b16 %v6662, %v6653
    %v7086 = vpack.c.b16 %v6663, %v6654
    %v7087 = vpack.c.b16 %v6673, %v6664
    %v7088 = vpack.c.b16 %v6674, %v6665
    %v7089 = vpack.c.b16 %v6675, %v6666
    %v7090 = vpack.c.b16 %v6676, %v6667
    %v7091 = vpack.c.b16 %v6677, %v6668
    %v7092 = vpack.c.b16 %v6678, %v6669
    %v7093 = vpack.c.b16 %v6679, %v6670
    %v7094 = vpack.c.b16 %v6680, %v6671
    %v7095 = vpack.c.b16 %v6681, %v6672
    %v7096 = vpack.c.b16 %v6691, %v6682
    %v7097 = vpack.c.b16 %v6692, %v6683
    %v7098 = vpack.c.b16 %v6693, %v6684
    %v7099 = vpack.c.b16 %v6694, %v6685
    %v7100 = vpack.c.b16 %v6695, %v6686
    %v7101 = vpack.c.b16 %v6696, %v6687
    %v7102 = vpack.c.b16 %v6697, %v6688
    %v7103 = vpack.c.b16 %v6698, %v6689
    %v7104 = vpack.c.b16 %v6699, %v6690
    %v7105 = vpack.c.b16 %v6709, %v6700
    %v7106 = vpack.c.b16 %v6710, %v6701
    %v7107 = vpack.c.b16 %v6711, %v6702
    %v7108 = vpack.c.b16 %v6712, %v6703
    %v7109 = vpack.c.b16 %v6713, %v6704
    %v7110 = vpack.c.b16 %v6714, %v6705
    %v7111 = vpack.c.b16 %v6715, %v6706
    %v7112 = vpack.c.b16 %v6716, %v6707
    %v7113 = vpack.c.b16 %v6717, %v6708
    %v7114 = vpack.c.b16 %v6727, %v6718
    %v7115 = vpack.c.b16 %v6728, %v6719
    %v7116 = vpack.c.b16 %v6729, %v6720
    %v7117 = vpack.c.b16 %v6730, %v6721
    %v7118 = vpack.c.b16 %v6731, %v6722
    %v7119 = vpack.c.b16 %v6732, %v6723
    %v7120 = vpack.c.b16 %v6733, %v6724
    %v7121 = vpack.c.b16 %v6734, %v6725
    %v7122 = vpack.c.b16 %v6735, %v6726
    %v7123 = vpack.c.b16 %v6745, %v6736
    %v7124 = vpack.c.b16 %v6746, %v6737
    %v7125 = vpack.c.b16 %v6747, %v6738
    %v7126 = vpack.c.b16 %v6748, %v6739
    %v7127 = vpack.c.b16 %v6749, %v6740
    %v7128 = vpack.c.b16 %v6750, %v6741
    %v7129 = vpack.c.b16 %v6751, %v6742
    %v7130 = vpack.c.b16 %v6752, %v6743
    %v7131 = vpack.c.b16 %v6753, %v6744
    %v7132 = vpack.c.b16 %v6763, %v6754
    %v7133 = vpack.c.b16 %v6764, %v6755
    %v7134 = vpack.c.b16 %v6765, %v6756
    %v7135 = vpack.c.b16 %v6766, %v6757
    %v7136 = vpack.c.b16 %v6767, %v6758
    %v7137 = vpack.c.b16 %v6768, %v6759
    %v7138 = vpack.c.b16 %v6769, %v6760
    %v7139 = vpack.c.b16 %v6770, %v6761
    %v7140 = vpack.c.b16 %v6771, %v6762
    %v7141 = vpack.c.b16 %v6781, %v6772
    %v7142 = vpack.c.b16 %v6782, %v6773
    %v7143 = vpack.c.b16 %v6783, %v6774
    %v7144 = vpack.c.b16 %v6784, %v6775
    %v7145 = vpack.c.b16 %v6785, %v6776
    %v7146 = vpack.c.b16 %v6786, %v6777
    %v7147 = vpack.c.b16 %v6787, %v6778
    %v7148 = vpack.c.b16 %v6788, %v6779
    %v7149 = vpack.c.b16 %v6789, %v6780
    %v7150 = vpack.c.b16 %v6799, %v6790
    %v7151 = vpack.c.b16 %v6800, %v6791
    %v7152 = vpack.c.b16 %v6801, %v6792
    %v7153 = vpack.c.b16 %v6802, %v6793
    %v7154 = vpack.c.b16 %v6803, %v6794
    %v7155 = vpack.c.b16 %v6804, %v6795
    %v7156 = vpack.c.b16 %v6805, %v6796
    %v7157 = vpack.c.b16 %v6806, %v6797
    %v7158 = vpack.c.b16 %v6807, %v6798
    %v7159 = vpack.c.b16 %v6817, %v6808
    %v7160 = vpack.c.b16 %v6818, %v6809
    %v7161 = vpack.c.b16 %v6819, %v6810
    %v7162 = vpack.c.b16 %v6820, %v6811
    %v7163 = vpack.c.b16 %v6821, %v6812
    %v7164 = vpack.c.b16 %v6822, %v6813
    %v7165 = vpack.c.b16 %v6823, %v6814
    %v7166 = vpack.c.b16 %v6824, %v6815
    %v7167 = vpack.c.b16 %v6825, %v6816
    %v7168 = vpack.c.b16 %v6835, %v6826
    %v7169 = vpack.c.b16 %v6836, %v6827
    %v7170 = vpack.c.b16 %v6837, %v6828
    %v7171 = vpack.c.b16 %v6838, %v6829
    %v7172 = vpack.c.b16 %v6839, %v6830
    %v7173 = vpack.c.b16 %v6840, %v6831
    %v7174 = vpack.c.b16 %v6841, %v6832
    %v7175 = vpack.c.b16 %v6842, %v6833
    %v7176 = vpack.c.b16 %v6843, %v6834
    %v7177 = vpack.c.b16 %v6853, %v6844
    %v7178 = vpack.c.b16 %v6854, %v6845
    %v7179 = vpack.c.b16 %v6855, %v6846
    %v7180 = vpack.c.b16 %v6856, %v6847
    %v7181 = vpack.c.b16 %v6857, %v6848
    %v7182 = vpack.c.b16 %v6858, %v6849
    %v7183 = vpack.c.b16 %v6859, %v6850
    %v7184 = vpack.c.b16 %v6860, %v6851
    %v7185 = vpack.c.b16 %v6861, %v6852
    %v7186 = vpack.c.b16 %v6871, %v6862
    %v7187 = vpack.c.b16 %v6872, %v6863
    %v7188 = vpack.c.b16 %v6873, %v6864
    %v7189 = vpack.c.b16 %v6874, %v6865
    %v7190 = vpack.c.b16 %v6875, %v6866
    %v7191 = vpack.c.b16 %v6876, %v6867
    %v7192 = vpack.c.b16 %v6877, %v6868
    %v7193 = vpack.c.b16 %v6878, %v6869
    %v7194 = vpack.c.b16 %v6879, %v6870
    %v7195 = vpack.c.b16 %v6889, %v6880
    %v7196 = vpack.c.b16 %v6890, %v6881
    %v7197 = vpack.c.b16 %v6891, %v6882
    %v7198 = vpack.c.b16 %v6892, %v6883
    %v7199 = vpack.c.b16 %v6893, %v6884
    %v7200 = vpack.c.b16 %v6894, %v6885
    %v7201 = vpack.c.b16 %v6895, %v6886
    %v7202 = vpack.c.b16 %v6896, %v6887
    %v7203 = vpack.c.b16 %v6897, %v6888
    %v7204 = vpack.c.b16 %v6907, %v6898
    %v7205 = vpack.c.b16 %v6908, %v6899
    %v7206 = vpack.c.b16 %v6909, %v6900
    %v7207 = vpack.c.b16 %v6910, %v6901
    %v7208 = vpack.c.b16 %v6911, %v6902
    %v7209 = vpack.c.b16 %v6912, %v6903
    %v7210 = vpack.c.b16 %v6913, %v6904
    %v7211 = vpack.c.b16 %v6914, %v6905
    %v7212 = vpack.c.b16 %v6915, %v6906
    %v7213 = vpack.c.b16 %v6925, %v6916
    %v7214 = vpack.c.b16 %v6926, %v6917
    %v7215 = vpack.c.b16 %v6927, %v6918
    %v7216 = vpack.c.b16 %v6928, %v6919
    %v7217 = vpack.c.b16 %v6929, %v6920
    %v7218 = vpack.c.b16 %v6930, %v6921
    %v7219 = vpack.c.b16 %v6931, %v6922
    %v7220 = vpack.c.b16 %v6932, %v6923
    %v7221 = vpack.c.b16 %v6933, %v6924
    %v7654 = vunpack.c.l.b16 %v5890
    %v7655 = vunpack.c.l.b16 %v5891
    %v7656 = vunpack.c.l.b16 %v5892
    %v7657 = vunpack.c.l.b16 %v5893
    %v7658 = vunpack.c.l.b16 %v5894
    %v7659 = vunpack.c.l.b16 %v5895
    %v7660 = vunpack.c.l.b16 %v5896
    %v7661 = vunpack.c.l.b16 %v5897
    %v7662 = vunpack.c.l.b16 %v5898
    %v7663 = vunpack.c.l.b16 %v5899
    %v7664 = vunpack.c.l.b16 %v5900
    %v7665 = vunpack.c.l.b16 %v5901
    %v7666 = vunpack.c.l.b16 %v5902
    %v7667 = vunpack.c.l.b16 %v5903
    %v7668 = vunpack.c.l.b16 %v5904
    %v7669 = vunpack.c.l.b16 %v5905
    %v7670 = vunpack.c.l.b16 %v5906
    %v7671 = vunpack.c.l.b16 %v5907
    %v7672 = vunpack.c.l.b16 %v5908
    %v7673 = vunpack.c.l.b16 %v5909
    %v7674 = vunpack.c.l.b16 %v5910
    %v7675 = vunpack.c.l.b16 %v5911
    %v7676 = vunpack.c.l.b16 %v5912
    %v7677 = vunpack.c.l.b16 %v5913
    %v7678 = vunpack.c.l.b16 %v5914
    %v7679 = vunpack.c.l.b16 %v5915
    %v7680 = vunpack.c.l.b16 %v5916
    %v7681 = vunpack.c.l.b16 %v5917
    %v7682 = vunpack.c.l.b16 %v5918
    %v7683 = vunpack.c.l.b16 %v5919
    %v7684 = vunpack.c.l.b16 %v5920
    %v7685 = vunpack.c.l.b16 %v5921
    %v7686 = vunpack.c.l.b16 %v5922
    %v7687 = vunpack.c.l.b16 %v5923
    %v7688 = vunpack.c.l.b16 %v5924
    %v7689 = vunpack.c.l.b16 %v5925
    %v7690 = vunpack.c.l.b16 %v5926
    %v7691 = vunpack.c.l.b16 %v5927
    %v7692 = vunpack.c.l.b16 %v5928
    %v7693 = vunpack.c.l.b16 %v5929
    %v7694 = vunpack.c.l.b16 %v5930
    %v7695 = vunpack.c.l.b16 %v5931
    %v7696 = vunpack.c.l.b16 %v5932
    %v7697 = vunpack.c.l.b16 %v5933
    %v7698 = vunpack.c.l.b16 %v5934
    %v7699 = vunpack.c.l.b16 %v5935
    %v7700 = vunpack.c.l.b16 %v5936
    %v7701 = vunpack.c.l.b16 %v5937
    %v7702 = vunpack.c.l.b16 %v5938
    %v7703 = vunpack.c.l.b16 %v5939
    %v7704 = vunpack.c.l.b16 %v5940
    %v7705 = vunpack.c.l.b16 %v5941
    %v7706 = vunpack.c.l.b16 %v5942
    %v7707 = vunpack.c.l.b16 %v5943
    %v7708 = vunpack.c.l.b16 %v5944
    %v7709 = vunpack.c.l.b16 %v5945
    %v7710 = vunpack.c.l.b16 %v5946
    %v7711 = vunpack.c.l.b16 %v5947
    %v7712 = vunpack.c.l.b16 %v5948
    %v7713 = vunpack.c.l.b16 %v5949
    %v7714 = vunpack.c.l.b16 %v5950
    %v7715 = vunpack.c.l.b16 %v5951
    %v7716 = vunpack.c.l.b16 %v5952
    %v7717 = vunpack.c.l.b16 %v5953
    %v7718 = vunpack.c.l.b16 %v5954
    %v7719 = vunpack.c.l.b16 %v5955
    %v7720 = vunpack.c.l.b16 %v5956
    %v7721 = vunpack.c.l.b16 %v5957
    %v7722 = vunpack.c.l.b16 %v5958
    %v7723 = vunpack.c.l.b16 %v5959
    %v7724 = vunpack.c.l.b16 %v5960
    %v7725 = vunpack.c.l.b16 %v5961
    %v7726 = vunpack.c.l.b16 %v5962
    %v7727 = vunpack.c.l.b16 %v5963
    %v7728 = vunpack.c.l.b16 %v5964
    %v7729 = vunpack.c.l.b16 %v5965
    %v7730 = vunpack.c.l.b16 %v5966
    %v7731 = vunpack.c.l.b16 %v5967
    %v7732 = vunpack.c.l.b16 %v5968
    %v7733 = vunpack.c.l.b16 %v5969
    %v7734 = vunpack.c.l.b16 %v5970
    %v7735 = vunpack.c.l.b16 %v5971
    %v7736 = vunpack.c.l.b16 %v5972
    %v7737 = vunpack.c.l.b16 %v5973
    %v7738 = vunpack.c.l.b16 %v5974
    %v7739 = vunpack.c.l.b16 %v5975
    %v7740 = vunpack.c.l.b16 %v5976
    %v7741 = vunpack.c.l.b16 %v5977
    %v7742 = vunpack.c.l.b16 %v5978
    %v7743 = vunpack.c.l.b16 %v5979
    %v7744 = vunpack.c.l.b16 %v5980
    %v7745 = vunpack.c.l.b16 %v5981
    %v7746 = vunpack.c.l.b16 %v5982
    %v7747 = vunpack.c.l.b16 %v5983
    %v7748 = vunpack.c.l.b16 %v5984
    %v7749 = vunpack.c.l.b16 %v5985
    %v7750 = vunpack.c.l.b16 %v5986
    %v7751 = vunpack.c.l.b16 %v5987
    %v7752 = vunpack.c.l.b16 %v5988
    %v7753 = vunpack.c.l.b16 %v5989
    %v7754 = vunpack.c.l.b16 %v5990
    %v7755 = vunpack.c.l.b16 %v5991
    %v7756 = vunpack.c.l.b16 %v5992
    %v7757 = vunpack.c.l.b16 %v5993
    %v7758 = vunpack.c.l.b16 %v5994
    %v7759 = vunpack.c.l.b16 %v5995
    %v7760 = vunpack.c.l.b16 %v5996
    %v7761 = vunpack.c.l.b16 %v5997
    %v7762 = vunpack.c.l.b16 %v5998
    %v7763 = vunpack.c.l.b16 %v5999
    %v7764 = vunpack.c.l.b16 %v6000
    %v7765 = vunpack.c.l.b16 %v6001
    %v7766 = vunpack.c.l.b16 %v6002
    %v7767 = vunpack.c.l.b16 %v6003
    %v7768 = vunpack.c.l.b16 %v6004
    %v7769 = vunpack.c.l.b16 %v6005
    %v7770 = vunpack.c.l.b16 %v6006
    %v7771 = vunpack.c.l.b16 %v6007
    %v7772 = vunpack.c.l.b16 %v6008
    %v7773 = vunpack.c.l.b16 %v6009
    %v7774 = vunpack.c.l.b16 %v6010
    %v7775 = vunpack.c.l.b16 %v6011
    %v7776 = vunpack.c.l.b16 %v6012
    %v7777 = vunpack.c.l.b16 %v6013
    %v7778 = vunpack.c.l.b16 %v6014
    %v7779 = vunpack.c.l.b16 %v6015
    %v7780 = vunpack.c.l.b16 %v6016
    %v7781 = vunpack.c.l.b16 %v6017
    %v7782 = vunpack.c.l.b16 %v6018
    %v7783 = vunpack.c.l.b16 %v6019
    %v7784 = vunpack.c.l.b16 %v6020
    %v7785 = vunpack.c.l.b16 %v6021
    %v7786 = vunpack.c.l.b16 %v6022
    %v7787 = vunpack.c.l.b16 %v6023
    %v7788 = vunpack.c.l.b16 %v6024
    %v7789 = vunpack.c.l.b16 %v6025
    %v7790 = vunpack.c.l.b16 %v6026
    %v7791 = vunpack.c.l.b16 %v6027
    %v7792 = vunpack.c.l.b16 %v6028
    %v7793 = vunpack.c.l.b16 %v6029
    %v7794 = vunpack.c.l.b16 %v6030
    %v7795 = vunpack.c.l.b16 %v6031
    %v7796 = vunpack.c.l.b16 %v6032
    %v7797 = vunpack.c.l.b16 %v6033
    %v7798 = vpack.c.b16 %v7655, %v7654
    %v7799 = vpack.c.b16 %v7657, %v7656
    %v7800 = vpack.c.b16 %v7659, %v7658
    %v7801 = vpack.c.b16 %v7661, %v7660
    %v7802 = vpack.c.b16 %v7663, %v7662
    %v7803 = vpack.c.b16 %v7665, %v7664
    %v7804 = vpack.c.b16 %v7667, %v7666
    %v7805 = vpack.c.b16 %v7669, %v7668
    %v7806 = vpack.c.b16 %v7671, %v7670
    %v7807 = vpack.c.b16 %v7673, %v7672
    %v7808 = vpack.c.b16 %v7675, %v7674
    %v7809 = vpack.c.b16 %v7677, %v7676
    %v7810 = vpack.c.b16 %v7679, %v7678
    %v7811 = vpack.c.b16 %v7681, %v7680
    %v7812 = vpack.c.b16 %v7683, %v7682
    %v7813 = vpack.c.b16 %v7685, %v7684
    %v7814 = vpack.c.b16 %v7687, %v7686
    %v7815 = vpack.c.b16 %v7689, %v7688
    %v7816 = vpack.c.b16 %v7691, %v7690
    %v7817 = vpack.c.b16 %v7693, %v7692
    %v7818 = vpack.c.b16 %v7695, %v7694
    %v7819 = vpack.c.b16 %v7697, %v7696
    %v7820 = vpack.c.b16 %v7699, %v7698
    %v7821 = vpack.c.b16 %v7701, %v7700
    %v7822 = vpack.c.b16 %v7703, %v7702
    %v7823 = vpack.c.b16 %v7705, %v7704
    %v7824 = vpack.c.b16 %v7707, %v7706
    %v7825 = vpack.c.b16 %v7709, %v7708
    %v7826 = vpack.c.b16 %v7711, %v7710
    %v7827 = vpack.c.b16 %v7713, %v7712
    %v7828 = vpack.c.b16 %v7715, %v7714
    %v7829 = vpack.c.b16 %v7717, %v7716
    %v7830 = vpack.c.b16 %v7719, %v7718
    %v7831 = vpack.c.b16 %v7721, %v7720
    %v7832 = vpack.c.b16 %v7723, %v7722
    %v7833 = vpack.c.b16 %v7725, %v7724
    %v7834 = vpack.c.b16 %v7727, %v7726
    %v7835 = vpack.c.b16 %v7729, %v7728
    %v7836 = vpack.c.b16 %v7731, %v7730
    %v7837 = vpack.c.b16 %v7733, %v7732
    %v7838 = vpack.c.b16 %v7735, %v7734
    %v7839 = vpack.c.b16 %v7737, %v7736
    %v7840 = vpack.c.b16 %v7739, %v7738
    %v7841 = vpack.c.b16 %v7741, %v7740
    %v7842 = vpack.c.b16 %v7743, %v7742
    %v7843 = vpack.c.b16 %v7745, %v7744
    %v7844 = vpack.c.b16 %v7747, %v7746
    %v7845 = vpack.c.b16 %v7749, %v7748
    %v7846 = vpack.c.b16 %v7751, %v7750
    %v7847 = vpack.c.b16 %v7753, %v7752
    %v7848 = vpack.c.b16 %v7755, %v7754
    %v7849 = vpack.c.b16 %v7757, %v7756
    %v7850 = vpack.c.b16 %v7759, %v7758
    %v7851 = vpack.c.b16 %v7761, %v7760
    %v7852 = vpack.c.b16 %v7763, %v7762
    %v7853 = vpack.c.b16 %v7765, %v7764
    %v7854 = vpack.c.b16 %v7767, %v7766
    %v7855 = vpack.c.b16 %v7769, %v7768
    %v7856 = vpack.c.b16 %v7771, %v7770
    %v7857 = vpack.c.b16 %v7773, %v7772
    %v7858 = vpack.c.b16 %v7775, %v7774
    %v7859 = vpack.c.b16 %v7777, %v7776
    %v7860 = vpack.c.b16 %v7779, %v7778
    %v7861 = vpack.c.b16 %v7781, %v7780
    %v7862 = vpack.c.b16 %v7783, %v7782
    %v7863 = vpack.c.b16 %v7785, %v7784
    %v7864 = vpack.c.b16 %v7787, %v7786
    %v7865 = vpack.c.b16 %v7789, %v7788
    %v7866 = vpack.c.b16 %v7791, %v7790
    %v7867 = vpack.c.b16 %v7793, %v7792
    %v7868 = vpack.c.b16 %v7795, %v7794
    %v7869 = vpack.c.b16 %v7797, %v7796
    %7942 = vmatpush.bf16.msra.mxu0 %v7805
    %7943 = vmatpush.bf16.msra.mxu0 %v7804
    %7944 = vmatpush.bf16.msra.mxu0 %v7803
    %7945 = vmatpush.bf16.msra.mxu0 %v7802
    %7946 = vmatpush.bf16.msra.mxu0 %v7801
    %7947 = vmatpush.bf16.msra.mxu0 %v7800
    %7948 = vmatpush.bf16.msra.mxu0 %v7799
    %7949 = vmatpush.bf16.msra.mxu0 %v7798
    %7950 = vmatmul.bf16.gmra.mxu0 %v6934
    %v7951 = vpop.f32.mrf.mxu0
    %v7952 = vadd.f32 %v6036, %v7951
    %v7953 = vpop.f32.mrf.mxu0
    %v7954 = vadd.f32 %v6036, %v7953
    %7955 = vmatmul.bf16.gmra.mxu0 %v6943
    %v7956 = vpop.f32.mrf.mxu0
    %v7957 = vadd.f32 %v6036, %v7956
    %v7958 = vpop.f32.mrf.mxu0
    %v7959 = vadd.f32 %v6036, %v7958
    %7960 = vmatmul.bf16.gmra.mxu0 %v6952
    %v7961 = vpop.f32.mrf.mxu0
    %v7962 = vadd.f32 %v6036, %v7961
    %v7963 = vpop.f32.mrf.mxu0
    %v7964 = vadd.f32 %v6036, %v7963
    %7965 = vmatmul.bf16.gmra.mxu0 %v6961
    %v7966 = vpop.f32.mrf.mxu0
    %v7967 = vadd.f32 %v6036, %v7966
    %v7968 = vpop.f32.mrf.mxu0
    %v7969 = vadd.f32 %v6036, %v7968
    %7970 = vmatmul.bf16.gmra.mxu0 %v6970
    %v7971 = vpop.f32.mrf.mxu0
    %v7972 = vadd.f32 %v6036, %v7971
    %v7973 = vpop.f32.mrf.mxu0
    %v7974 = vadd.f32 %v6036, %v7973
    %7975 = vmatmul.bf16.gmra.mxu0 %v6979
    %v7976 = vpop.f32.mrf.mxu0
    %v7977 = vadd.f32 %v6036, %v7976
    %v7978 = vpop.f32.mrf.mxu0
    %v7979 = vadd.f32 %v6036, %v7978
    %7980 = vmatmul.bf16.gmra.mxu0 %v6988
    %v7981 = vpop.f32.mrf.mxu0
    %v7982 = vadd.f32 %v6036, %v7981
    %v7983 = vpop.f32.mrf.mxu0
    %v7984 = vadd.f32 %v6036, %v7983
    %7985 = vmatmul.bf16.gmra.mxu0 %v6997
    %v7986 = vpop.f32.mrf.mxu0
    %v7987 = vadd.f32 %v6036, %v7986
    %v7988 = vpop.f32.mrf.mxu0
    %v7989 = vadd.f32 %v6036, %v7988
    %7990 = vmatmul.bf16.gmra.mxu0 %v7006
    %v7991 = vpop.f32.mrf.mxu0
    %v7992 = vadd.f32 %v6036, %v7991
    %v7993 = vpop.f32.mrf.mxu0
    %v7994 = vadd.f32 %v6036, %v7993
    %7995 = vmatmul.bf16.gmra.mxu0 %v7015
    %v7996 = vpop.f32.mrf.mxu0
    %v7997 = vadd.f32 %v6036, %v7996
    %v7998 = vpop.f32.mrf.mxu0
    %v7999 = vadd.f32 %v6036, %v7998
    %8000 = vmatmul.bf16.gmra.mxu0 %v7024
    %v8001 = vpop.f32.mrf.mxu0
    %v8002 = vadd.f32 %v6036, %v8001
    %v8003 = vpop.f32.mrf.mxu0
    %v8004 = vadd.f32 %v6036, %v8003
    %8005 = vmatmul.bf16.gmra.mxu0 %v7033
    %v8006 = vpop.f32.mrf.mxu0
    %v8007 = vadd.f32 %v6036, %v8006
    %v8008 = vpop.f32.mrf.mxu0
    %v8009 = vadd.f32 %v6036, %v8008
    %8010 = vmatmul.bf16.gmra.mxu0 %v7042
    %v8011 = vpop.f32.mrf.mxu0
    %v8012 = vadd.f32 %v6036, %v8011
    %v8013 = vpop.f32.mrf.mxu0
    %v8014 = vadd.f32 %v6036, %v8013
    %8015 = vmatmul.bf16.gmra.mxu0 %v7051
    %v8016 = vpop.f32.mrf.mxu0
    %v8017 = vadd.f32 %v6036, %v8016
    %v8018 = vpop.f32.mrf.mxu0
    %v8019 = vadd.f32 %v6036, %v8018
    %8020 = vmatmul.bf16.gmra.mxu0 %v7060
    %v8021 = vpop.f32.mrf.mxu0
    %v8022 = vadd.f32 %v6036, %v8021
    %v8023 = vpop.f32.mrf.mxu0
    %v8024 = vadd.f32 %v6036, %v8023
    %8025 = vmatmul.bf16.gmra.mxu0 %v7069
    %v8026 = vpop.f32.mrf.mxu0
    %v8027 = vadd.f32 %v6036, %v8026
    %v8028 = vpop.f32.mrf.mxu0
    %v8029 = vadd.f32 %v6036, %v8028
    %8030 = vmatmul.bf16.gmra.mxu0 %v7078
    %v8031 = vpop.f32.mrf.mxu0
    %v8032 = vadd.f32 %v6036, %v8031
    %v8033 = vpop.f32.mrf.mxu0
    %v8034 = vadd.f32 %v6036, %v8033
    %8035 = vmatmul.bf16.gmra.mxu0 %v7087
    %v8036 = vpop.f32.mrf.mxu0
    %v8037 = vadd.f32 %v6036, %v8036
    %v8038 = vpop.f32.mrf.mxu0
    %v8039 = vadd.f32 %v6036, %v8038
    %8040 = vmatmul.bf16.gmra.mxu0 %v7096
    %v8041 = vpop.f32.mrf.mxu0
    %v8042 = vadd.f32 %v6036, %v8041
    %v8043 = vpop.f32.mrf.mxu0
    %v8044 = vadd.f32 %v6036, %v8043
    %8045 = vmatmul.bf16.gmra.mxu0 %v7105
    %v8046 = vpop.f32.mrf.mxu0
    %v8047 = vadd.f32 %v6036, %v8046
    %v8048 = vpop.f32.mrf.mxu0
    %v8049 = vadd.f32 %v6036, %v8048
    %8050 = vmatmul.bf16.gmra.mxu0 %v7114
    %v8051 = vpop.f32.mrf.mxu0
    %v8052 = vadd.f32 %v6036, %v8051
    %v8053 = vpop.f32.mrf.mxu0
    %v8054 = vadd.f32 %v6036, %v8053
    %8055 = vmatmul.bf16.gmra.mxu0 %v7123
    %v8056 = vpop.f32.mrf.mxu0
    %v8057 = vadd.f32 %v6036, %v8056
    %v8058 = vpop.f32.mrf.mxu0
    %v8059 = vadd.f32 %v6036, %v8058
    %8060 = vmatmul.bf16.gmra.mxu0 %v7132
    %v8061 = vpop.f32.mrf.mxu0
    %v8062 = vadd.f32 %v6036, %v8061
    %v8063 = vpop.f32.mrf.mxu0
    %v8064 = vadd.f32 %v6036, %v8063
    %8065 = vmatmul.bf16.gmra.mxu0 %v7141
    %v8066 = vpop.f32.mrf.mxu0
    %v8067 = vadd.f32 %v6036, %v8066
    %v8068 = vpop.f32.mrf.mxu0
    %v8069 = vadd.f32 %v6036, %v8068
    %8070 = vmatmul.bf16.gmra.mxu0 %v7150
    %v8071 = vpop.f32.mrf.mxu0
    %v8072 = vadd.f32 %v6036, %v8071
    %v8073 = vpop.f32.mrf.mxu0
    %v8074 = vadd.f32 %v6036, %v8073
    %8075 = vmatmul.bf16.gmra.mxu0 %v7159
    %v8076 = vpop.f32.mrf.mxu0
    %v8077 = vadd.f32 %v6036, %v8076
    %v8078 = vpop.f32.mrf.mxu0
    %v8079 = vadd.f32 %v6036, %v8078
    %8080 = vmatmul.bf16.gmra.mxu0 %v7168
    %v8081 = vpop.f32.mrf.mxu0
    %v8082 = vadd.f32 %v6036, %v8081
    %v8083 = vpop.f32.mrf.mxu0
    %v8084 = vadd.f32 %v6036, %v8083
    %8085 = vmatmul.bf16.gmra.mxu0 %v7177
    %v8086 = vpop.f32.mrf.mxu0
    %v8087 = vadd.f32 %v6036, %v8086
    %v8088 = vpop.f32.mrf.mxu0
    %v8089 = vadd.f32 %v6036, %v8088
    %8090 = vmatmul.bf16.gmra.mxu0 %v7186
    %v8091 = vpop.f32.mrf.mxu0
    %v8092 = vadd.f32 %v6036, %v8091
    %v8093 = vpop.f32.mrf.mxu0
    %v8094 = vadd.f32 %v6036, %v8093
    %8095 = vmatmul.bf16.gmra.mxu0 %v7195
    %v8096 = vpop.f32.mrf.mxu0
    %v8097 = vadd.f32 %v6036, %v8096
    %v8098 = vpop.f32.mrf.mxu0
    %v8099 = vadd.f32 %v6036, %v8098
    %8100 = vmatmul.bf16.gmra.mxu0 %v7204
    %v8101 = vpop.f32.mrf.mxu0
    %v8102 = vadd.f32 %v6036, %v8101
    %v8103 = vpop.f32.mrf.mxu0
    %v8104 = vadd.f32 %v6036, %v8103
    %8105 = vmatmul.bf16.gmra.mxu0 %v7213
    %v8106 = vpop.f32.mrf.mxu0
    %v8107 = vadd.f32 %v6036, %v8106
    %v8108 = vpop.f32.mrf.mxu0
    %v8109 = vadd.f32 %v6036, %v8108
    %8110 = vdwg.mxu0
    %8111 = vmatpush.bf16.msra.mxu0 %v7813
    %8112 = vmatpush.bf16.msra.mxu0 %v7812
    %8113 = vmatpush.bf16.msra.mxu0 %v7811
    %8114 = vmatpush.bf16.msra.mxu0 %v7810
    %8115 = vmatpush.bf16.msra.mxu0 %v7809
    %8116 = vmatpush.bf16.msra.mxu0 %v7808
    %8117 = vmatpush.bf16.msra.mxu0 %v7807
    %8118 = vmatpush.bf16.msra.mxu0 %v7806
    %8119 = vmatmul.bf16.gmra.mxu0 %v6935
    %v8120 = vpop.f32.mrf.mxu0
    %v8121 = vadd.f32 %v7952, %v8120
    %v8122 = vpop.f32.mrf.mxu0
    %v8123 = vadd.f32 %v7954, %v8122
    %8124 = vmatmul.bf16.gmra.mxu0 %v6944
    %v8125 = vpop.f32.mrf.mxu0
    %v8126 = vadd.f32 %v7957, %v8125
    %v8127 = vpop.f32.mrf.mxu0
    %v8128 = vadd.f32 %v7959, %v8127
    %8129 = vmatmul.bf16.gmra.mxu0 %v6953
    %v8130 = vpop.f32.mrf.mxu0
    %v8131 = vadd.f32 %v7962, %v8130
    %v8132 = vpop.f32.mrf.mxu0
    %v8133 = vadd.f32 %v7964, %v8132
    %8134 = vmatmul.bf16.gmra.mxu0 %v6962
    %v8135 = vpop.f32.mrf.mxu0
    %v8136 = vadd.f32 %v7967, %v8135
    %v8137 = vpop.f32.mrf.mxu0
    %v8138 = vadd.f32 %v7969, %v8137
    %8139 = vmatmul.bf16.gmra.mxu0 %v6971
    %v8140 = vpop.f32.mrf.mxu0
    %v8141 = vadd.f32 %v7972, %v8140
    %v8142 = vpop.f32.mrf.mxu0
    %v8143 = vadd.f32 %v7974, %v8142
    %8144 = vmatmul.bf16.gmra.mxu0 %v6980
    %v8145 = vpop.f32.mrf.mxu0
    %v8146 = vadd.f32 %v7977, %v8145
    %v8147 = vpop.f32.mrf.mxu0
    %v8148 = vadd.f32 %v7979, %v8147
    %8149 = vmatmul.bf16.gmra.mxu0 %v6989
    %v8150 = vpop.f32.mrf.mxu0
    %v8151 = vadd.f32 %v7982, %v8150
    %v8152 = vpop.f32.mrf.mxu0
    %v8153 = vadd.f32 %v7984, %v8152
    %8154 = vmatmul.bf16.gmra.mxu0 %v6998
    %v8155 = vpop.f32.mrf.mxu0
    %v8156 = vadd.f32 %v7987, %v8155
    %v8157 = vpop.f32.mrf.mxu0
    %v8158 = vadd.f32 %v7989, %v8157
    %8159 = vmatmul.bf16.gmra.mxu0 %v7007
    %v8160 = vpop.f32.mrf.mxu0
    %v8161 = vadd.f32 %v7992, %v8160
    %v8162 = vpop.f32.mrf.mxu0
    %v8163 = vadd.f32 %v7994, %v8162
    %8164 = vmatmul.bf16.gmra.mxu0 %v7016
    %v8165 = vpop.f32.mrf.mxu0
    %v8166 = vadd.f32 %v7997, %v8165
    %v8167 = vpop.f32.mrf.mxu0
    %v8168 = vadd.f32 %v7999, %v8167
    %8169 = vmatmul.bf16.gmra.mxu0 %v7025
    %v8170 = vpop.f32.mrf.mxu0
    %v8171 = vadd.f32 %v8002, %v8170
    %v8172 = vpop.f32.mrf.mxu0
    %v8173 = vadd.f32 %v8004, %v8172
    %8174 = vmatmul.bf16.gmra.mxu0 %v7034
    %v8175 = vpop.f32.mrf.mxu0
    %v8176 = vadd.f32 %v8007, %v8175
    %v8177 = vpop.f32.mrf.mxu0
    %v8178 = vadd.f32 %v8009, %v8177
    %8179 = vmatmul.bf16.gmra.mxu0 %v7043
    %v8180 = vpop.f32.mrf.mxu0
    %v8181 = vadd.f32 %v8012, %v8180
    %v8182 = vpop.f32.mrf.mxu0
    %v8183 = vadd.f32 %v8014, %v8182
    %8184 = vmatmul.bf16.gmra.mxu0 %v7052
    %v8185 = vpop.f32.mrf.mxu0
    %v8186 = vadd.f32 %v8017, %v8185
    %v8187 = vpop.f32.mrf.mxu0
    %v8188 = vadd.f32 %v8019, %v8187
    %8189 = vmatmul.bf16.gmra.mxu0 %v7061
    %v8190 = vpop.f32.mrf.mxu0
    %v8191 = vadd.f32 %v8022, %v8190
    %v8192 = vpop.f32.mrf.mxu0
    %v8193 = vadd.f32 %v8024, %v8192
    %8194 = vmatmul.bf16.gmra.mxu0 %v7070
    %v8195 = vpop.f32.mrf.mxu0
    %v8196 = vadd.f32 %v8027, %v8195
    %v8197 = vpop.f32.mrf.mxu0
    %v8198 = vadd.f32 %v8029, %v8197
    %8199 = vmatmul.bf16.gmra.mxu0 %v7079
    %v8200 = vpop.f32.mrf.mxu0
    %v8201 = vadd.f32 %v8032, %v8200
    %v8202 = vpop.f32.mrf.mxu0
    %v8203 = vadd.f32 %v8034, %v8202
    %8204 = vmatmul.bf16.gmra.mxu0 %v7088
    %v8205 = vpop.f32.mrf.mxu0
    %v8206 = vadd.f32 %v8037, %v8205
    %v8207 = vpop.f32.mrf.mxu0
    %v8208 = vadd.f32 %v8039, %v8207
    %8209 = vmatmul.bf16.gmra.mxu0 %v7097
    %v8210 = vpop.f32.mrf.mxu0
    %v8211 = vadd.f32 %v8042, %v8210
    %v8212 = vpop.f32.mrf.mxu0
    %v8213 = vadd.f32 %v8044, %v8212
    %8214 = vmatmul.bf16.gmra.mxu0 %v7106
    %v8215 = vpop.f32.mrf.mxu0
    %v8216 = vadd.f32 %v8047, %v8215
    %v8217 = vpop.f32.mrf.mxu0
    %v8218 = vadd.f32 %v8049, %v8217
    %8219 = vmatmul.bf16.gmra.mxu0 %v7115
    %v8220 = vpop.f32.mrf.mxu0
    %v8221 = vadd.f32 %v8052, %v8220
    %v8222 = vpop.f32.mrf.mxu0
    %v8223 = vadd.f32 %v8054, %v8222
    %8224 = vmatmul.bf16.gmra.mxu0 %v7124
    %v8225 = vpop.f32.mrf.mxu0
    %v8226 = vadd.f32 %v8057, %v8225
    %v8227 = vpop.f32.mrf.mxu0
    %v8228 = vadd.f32 %v8059, %v8227
    %8229 = vmatmul.bf16.gmra.mxu0 %v7133
    %v8230 = vpop.f32.mrf.mxu0
    %v8231 = vadd.f32 %v8062, %v8230
    %v8232 = vpop.f32.mrf.mxu0
    %v8233 = vadd.f32 %v8064, %v8232
    %8234 = vmatmul.bf16.gmra.mxu0 %v7142
    %v8235 = vpop.f32.mrf.mxu0
    %v8236 = vadd.f32 %v8067, %v8235
    %v8237 = vpop.f32.mrf.mxu0
    %v8238 = vadd.f32 %v8069, %v8237
    %8239 = vmatmul.bf16.gmra.mxu0 %v7151
    %v8240 = vpop.f32.mrf.mxu0
    %v8241 = vadd.f32 %v8072, %v8240
    %v8242 = vpop.f32.mrf.mxu0
    %v8243 = vadd.f32 %v8074, %v8242
    %8244 = vmatmul.bf16.gmra.mxu0 %v7160
    %v8245 = vpop.f32.mrf.mxu0
    %v8246 = vadd.f32 %v8077, %v8245
    %v8247 = vpop.f32.mrf.mxu0
    %v8248 = vadd.f32 %v8079, %v8247
    %8249 = vmatmul.bf16.gmra.mxu0 %v7169
    %v8250 = vpop.f32.mrf.mxu0
    %v8251 = vadd.f32 %v8082, %v8250
    %v8252 = vpop.f32.mrf.mxu0
    %v8253 = vadd.f32 %v8084, %v8252
    %8254 = vmatmul.bf16.gmra.mxu0 %v7178
    %v8255 = vpop.f32.mrf.mxu0
    %v8256 = vadd.f32 %v8087, %v8255
    %v8257 = vpop.f32.mrf.mxu0
    %v8258 = vadd.f32 %v8089, %v8257
    %8259 = vmatmul.bf16.gmra.mxu0 %v7187
    %v8260 = vpop.f32.mrf.mxu0
    %v8261 = vadd.f32 %v8092, %v8260
    %v8262 = vpop.f32.mrf.mxu0
    %v8263 = vadd.f32 %v8094, %v8262
    %8264 = vmatmul.bf16.gmra.mxu0 %v7196
    %v8265 = vpop.f32.mrf.mxu0
    %v8266 = vadd.f32 %v8097, %v8265
    %v8267 = vpop.f32.mrf.mxu0
    %v8268 = vadd.f32 %v8099, %v8267
    %8269 = vmatmul.bf16.gmra.mxu0 %v7205
    %v8270 = vpop.f32.mrf.mxu0
    %v8271 = vadd.f32 %v8102, %v8270
    %v8272 = vpop.f32.mrf.mxu0
    %v8273 = vadd.f32 %v8104, %v8272
    %8274 = vmatmul.bf16.gmra.mxu0 %v7214
    %v8275 = vpop.f32.mrf.mxu0
    %v8276 = vadd.f32 %v8107, %v8275
    %v8277 = vpop.f32.mrf.mxu0
    %v8278 = vadd.f32 %v8109, %v8277
    %8279 = vdwg.mxu0
    %8280 = vmatpush.bf16.msra.mxu0 %v7821
    %8281 = vmatpush.bf16.msra.mxu0 %v7820
    %8282 = vmatpush.bf16.msra.mxu0 %v7819
    %8283 = vmatpush.bf16.msra.mxu0 %v7818
    %8284 = vmatpush.bf16.msra.mxu0 %v7817
    %8285 = vmatpush.bf16.msra.mxu0 %v7816
    %8286 = vmatpush.bf16.msra.mxu0 %v7815
    %8287 = vmatpush.bf16.msra.mxu0 %v7814
    %8288 = vmatmul.bf16.gmra.mxu0 %v6936
    %v8289 = vpop.f32.mrf.mxu0
    %v8290 = vadd.f32 %v8121, %v8289
    %v8291 = vpop.f32.mrf.mxu0
    %v8292 = vadd.f32 %v8123, %v8291
    %8293 = vmatmul.bf16.gmra.mxu0 %v6945
    %v8294 = vpop.f32.mrf.mxu0
    %v8295 = vadd.f32 %v8126, %v8294
    %v8296 = vpop.f32.mrf.mxu0
    %v8297 = vadd.f32 %v8128, %v8296
    %8298 = vmatmul.bf16.gmra.mxu0 %v6954
    %v8299 = vpop.f32.mrf.mxu0
    %v8300 = vadd.f32 %v8131, %v8299
    %v8301 = vpop.f32.mrf.mxu0
    %v8302 = vadd.f32 %v8133, %v8301
    %8303 = vmatmul.bf16.gmra.mxu0 %v6963
    %v8304 = vpop.f32.mrf.mxu0
    %v8305 = vadd.f32 %v8136, %v8304
    %v8306 = vpop.f32.mrf.mxu0
    %v8307 = vadd.f32 %v8138, %v8306
    %8308 = vmatmul.bf16.gmra.mxu0 %v6972
    %v8309 = vpop.f32.mrf.mxu0
    %v8310 = vadd.f32 %v8141, %v8309
    %v8311 = vpop.f32.mrf.mxu0
    %v8312 = vadd.f32 %v8143, %v8311
    %8313 = vmatmul.bf16.gmra.mxu0 %v6981
    %v8314 = vpop.f32.mrf.mxu0
    %v8315 = vadd.f32 %v8146, %v8314
    %v8316 = vpop.f32.mrf.mxu0
    %v8317 = vadd.f32 %v8148, %v8316
    %8318 = vmatmul.bf16.gmra.mxu0 %v6990
    %v8319 = vpop.f32.mrf.mxu0
    %v8320 = vadd.f32 %v8151, %v8319
    %v8321 = vpop.f32.mrf.mxu0
    %v8322 = vadd.f32 %v8153, %v8321
    %8323 = vmatmul.bf16.gmra.mxu0 %v6999
    %v8324 = vpop.f32.mrf.mxu0
    %v8325 = vadd.f32 %v8156, %v8324
    %v8326 = vpop.f32.mrf.mxu0
    %v8327 = vadd.f32 %v8158, %v8326
    %8328 = vmatmul.bf16.gmra.mxu0 %v7008
    %v8329 = vpop.f32.mrf.mxu0
    %v8330 = vadd.f32 %v8161, %v8329
    %v8331 = vpop.f32.mrf.mxu0
    %v8332 = vadd.f32 %v8163, %v8331
    %8333 = vmatmul.bf16.gmra.mxu0 %v7017
    %v8334 = vpop.f32.mrf.mxu0
    %v8335 = vadd.f32 %v8166, %v8334
    %v8336 = vpop.f32.mrf.mxu0
    %v8337 = vadd.f32 %v8168, %v8336
    %8338 = vmatmul.bf16.gmra.mxu0 %v7026
    %v8339 = vpop.f32.mrf.mxu0
    %v8340 = vadd.f32 %v8171, %v8339
    %v8341 = vpop.f32.mrf.mxu0
    %v8342 = vadd.f32 %v8173, %v8341
    %8343 = vmatmul.bf16.gmra.mxu0 %v7035
    %v8344 = vpop.f32.mrf.mxu0
    %v8345 = vadd.f32 %v8176, %v8344
    %v8346 = vpop.f32.mrf.mxu0
    %v8347 = vadd.f32 %v8178, %v8346
    %8348 = vmatmul.bf16.gmra.mxu0 %v7044
    %v8349 = vpop.f32.mrf.mxu0
    %v8350 = vadd.f32 %v8181, %v8349
    %v8351 = vpop.f32.mrf.mxu0
    %v8352 = vadd.f32 %v8183, %v8351
    %8353 = vmatmul.bf16.gmra.mxu0 %v7053
    %v8354 = vpop.f32.mrf.mxu0
    %v8355 = vadd.f32 %v8186, %v8354
    %v8356 = vpop.f32.mrf.mxu0
    %v8357 = vadd.f32 %v8188, %v8356
    %8358 = vmatmul.bf16.gmra.mxu0 %v7062
    %v8359 = vpop.f32.mrf.mxu0
    %v8360 = vadd.f32 %v8191, %v8359
    %v8361 = vpop.f32.mrf.mxu0
    %v8362 = vadd.f32 %v8193, %v8361
    %8363 = vmatmul.bf16.gmra.mxu0 %v7071
    %v8364 = vpop.f32.mrf.mxu0
    %v8365 = vadd.f32 %v8196, %v8364
    %v8366 = vpop.f32.mrf.mxu0
    %v8367 = vadd.f32 %v8198, %v8366
    %8368 = vmatmul.bf16.gmra.mxu0 %v7080
    %v8369 = vpop.f32.mrf.mxu0
    %v8370 = vadd.f32 %v8201, %v8369
    %v8371 = vpop.f32.mrf.mxu0
    %v8372 = vadd.f32 %v8203, %v8371
    %8373 = vmatmul.bf16.gmra.mxu0 %v7089
    %v8374 = vpop.f32.mrf.mxu0
    %v8375 = vadd.f32 %v8206, %v8374
    %v8376 = vpop.f32.mrf.mxu0
    %v8377 = vadd.f32 %v8208, %v8376
    %8378 = vmatmul.bf16.gmra.mxu0 %v7098
    %v8379 = vpop.f32.mrf.mxu0
    %v8380 = vadd.f32 %v8211, %v8379
    %v8381 = vpop.f32.mrf.mxu0
    %v8382 = vadd.f32 %v8213, %v8381
    %8383 = vmatmul.bf16.gmra.mxu0 %v7107
    %v8384 = vpop.f32.mrf.mxu0
    %v8385 = vadd.f32 %v8216, %v8384
    %v8386 = vpop.f32.mrf.mxu0
    %v8387 = vadd.f32 %v8218, %v8386
    %8388 = vmatmul.bf16.gmra.mxu0 %v7116
    %v8389 = vpop.f32.mrf.mxu0
    %v8390 = vadd.f32 %v8221, %v8389
    %v8391 = vpop.f32.mrf.mxu0
    %v8392 = vadd.f32 %v8223, %v8391
    %8393 = vmatmul.bf16.gmra.mxu0 %v7125
    %v8394 = vpop.f32.mrf.mxu0
    %v8395 = vadd.f32 %v8226, %v8394
    %v8396 = vpop.f32.mrf.mxu0
    %v8397 = vadd.f32 %v8228, %v8396
    %8398 = vmatmul.bf16.gmra.mxu0 %v7134
    %v8399 = vpop.f32.mrf.mxu0
    %v8400 = vadd.f32 %v8231, %v8399
    %v8401 = vpop.f32.mrf.mxu0
    %v8402 = vadd.f32 %v8233, %v8401
    %8403 = vmatmul.bf16.gmra.mxu0 %v7143
    %v8404 = vpop.f32.mrf.mxu0
    %v8405 = vadd.f32 %v8236, %v8404
    %v8406 = vpop.f32.mrf.mxu0
    %v8407 = vadd.f32 %v8238, %v8406
    %8408 = vmatmul.bf16.gmra.mxu0 %v7152
    %v8409 = vpop.f32.mrf.mxu0
    %v8410 = vadd.f32 %v8241, %v8409
    %v8411 = vpop.f32.mrf.mxu0
    %v8412 = vadd.f32 %v8243, %v8411
    %8413 = vmatmul.bf16.gmra.mxu0 %v7161
    %v8414 = vpop.f32.mrf.mxu0
    %v8415 = vadd.f32 %v8246, %v8414
    %v8416 = vpop.f32.mrf.mxu0
    %v8417 = vadd.f32 %v8248, %v8416
    %8418 = vmatmul.bf16.gmra.mxu0 %v7170
    %v8419 = vpop.f32.mrf.mxu0
    %v8420 = vadd.f32 %v8251, %v8419
    %v8421 = vpop.f32.mrf.mxu0
    %v8422 = vadd.f32 %v8253, %v8421
    %8423 = vmatmul.bf16.gmra.mxu0 %v7179
    %v8424 = vpop.f32.mrf.mxu0
    %v8425 = vadd.f32 %v8256, %v8424
    %v8426 = vpop.f32.mrf.mxu0
    %v8427 = vadd.f32 %v8258, %v8426
    %8428 = vmatmul.bf16.gmra.mxu0 %v7188
    %v8429 = vpop.f32.mrf.mxu0
    %v8430 = vadd.f32 %v8261, %v8429
    %v8431 = vpop.f32.mrf.mxu0
    %v8432 = vadd.f32 %v8263, %v8431
    %8433 = vmatmul.bf16.gmra.mxu0 %v7197
    %v8434 = vpop.f32.mrf.mxu0
    %v8435 = vadd.f32 %v8266, %v8434
    %v8436 = vpop.f32.mrf.mxu0
    %v8437 = vadd.f32 %v8268, %v8436
    %8438 = vmatmul.bf16.gmra.mxu0 %v7206
    %v8439 = vpop.f32.mrf.mxu0
    %v8440 = vadd.f32 %v8271, %v8439
    %v8441 = vpop.f32.mrf.mxu0
    %v8442 = vadd.f32 %v8273, %v8441
    %8443 = vmatmul.bf16.gmra.mxu0 %v7215
    %v8444 = vpop.f32.mrf.mxu0
    %v8445 = vadd.f32 %v8276, %v8444
    %v8446 = vpop.f32.mrf.mxu0
    %v8447 = vadd.f32 %v8278, %v8446
    %8448 = vdwg.mxu0
    %8449 = vmatpush.bf16.msra.mxu0 %v7829
    %8450 = vmatpush.bf16.msra.mxu0 %v7828
    %8451 = vmatpush.bf16.msra.mxu0 %v7827
    %8452 = vmatpush.bf16.msra.mxu0 %v7826
    %8453 = vmatpush.bf16.msra.mxu0 %v7825
    %8454 = vmatpush.bf16.msra.mxu0 %v7824
    %8455 = vmatpush.bf16.msra.mxu0 %v7823
    %8456 = vmatpush.bf16.msra.mxu0 %v7822
    %8457 = vmatmul.bf16.gmra.mxu0 %v6937
    %v8458 = vpop.f32.mrf.mxu0
    %v8459 = vadd.f32 %v8290, %v8458
    %v8460 = vpop.f32.mrf.mxu0
    %v8461 = vadd.f32 %v8292, %v8460
    %8462 = vmatmul.bf16.gmra.mxu0 %v6946
    %v8463 = vpop.f32.mrf.mxu0
    %v8464 = vadd.f32 %v8295, %v8463
    %v8465 = vpop.f32.mrf.mxu0
    %v8466 = vadd.f32 %v8297, %v8465
    %8467 = vmatmul.bf16.gmra.mxu0 %v6955
    %v8468 = vpop.f32.mrf.mxu0
    %v8469 = vadd.f32 %v8300, %v8468
    %v8470 = vpop.f32.mrf.mxu0
    %v8471 = vadd.f32 %v8302, %v8470
    %8472 = vmatmul.bf16.gmra.mxu0 %v6964
    %v8473 = vpop.f32.mrf.mxu0
    %v8474 = vadd.f32 %v8305, %v8473
    %v8475 = vpop.f32.mrf.mxu0
    %v8476 = vadd.f32 %v8307, %v8475
    %8477 = vmatmul.bf16.gmra.mxu0 %v6973
    %v8478 = vpop.f32.mrf.mxu0
    %v8479 = vadd.f32 %v8310, %v8478
    %v8480 = vpop.f32.mrf.mxu0
    %v8481 = vadd.f32 %v8312, %v8480
    %8482 = vmatmul.bf16.gmra.mxu0 %v6982
    %v8483 = vpop.f32.mrf.mxu0
    %v8484 = vadd.f32 %v8315, %v8483
    %v8485 = vpop.f32.mrf.mxu0
    %v8486 = vadd.f32 %v8317, %v8485
    %8487 = vmatmul.bf16.gmra.mxu0 %v6991
    %v8488 = vpop.f32.mrf.mxu0
    %v8489 = vadd.f32 %v8320, %v8488
    %v8490 = vpop.f32.mrf.mxu0
    %v8491 = vadd.f32 %v8322, %v8490
    %8492 = vmatmul.bf16.gmra.mxu0 %v7000
    %v8493 = vpop.f32.mrf.mxu0
    %v8494 = vadd.f32 %v8325, %v8493
    %v8495 = vpop.f32.mrf.mxu0
    %v8496 = vadd.f32 %v8327, %v8495
    %8497 = vmatmul.bf16.gmra.mxu0 %v7009
    %v8498 = vpop.f32.mrf.mxu0
    %v8499 = vadd.f32 %v8330, %v8498
    %v8500 = vpop.f32.mrf.mxu0
    %v8501 = vadd.f32 %v8332, %v8500
    %8502 = vmatmul.bf16.gmra.mxu0 %v7018
    %v8503 = vpop.f32.mrf.mxu0
    %v8504 = vadd.f32 %v8335, %v8503
    %v8505 = vpop.f32.mrf.mxu0
    %v8506 = vadd.f32 %v8337, %v8505
    %8507 = vmatmul.bf16.gmra.mxu0 %v7027
    %v8508 = vpop.f32.mrf.mxu0
    %v8509 = vadd.f32 %v8340, %v8508
    %v8510 = vpop.f32.mrf.mxu0
    %v8511 = vadd.f32 %v8342, %v8510
    %8512 = vmatmul.bf16.gmra.mxu0 %v7036
    %v8513 = vpop.f32.mrf.mxu0
    %v8514 = vadd.f32 %v8345, %v8513
    %v8515 = vpop.f32.mrf.mxu0
    %v8516 = vadd.f32 %v8347, %v8515
    %8517 = vmatmul.bf16.gmra.mxu0 %v7045
    %v8518 = vpop.f32.mrf.mxu0
    %v8519 = vadd.f32 %v8350, %v8518
    %v8520 = vpop.f32.mrf.mxu0
    %v8521 = vadd.f32 %v8352, %v8520
    %8522 = vmatmul.bf16.gmra.mxu0 %v7054
    %v8523 = vpop.f32.mrf.mxu0
    %v8524 = vadd.f32 %v8355, %v8523
    %v8525 = vpop.f32.mrf.mxu0
    %v8526 = vadd.f32 %v8357, %v8525
    %8527 = vmatmul.bf16.gmra.mxu0 %v7063
    %v8528 = vpop.f32.mrf.mxu0
    %v8529 = vadd.f32 %v8360, %v8528
    %v8530 = vpop.f32.mrf.mxu0
    %v8531 = vadd.f32 %v8362, %v8530
    %8532 = vmatmul.bf16.gmra.mxu0 %v7072
    %v8533 = vpop.f32.mrf.mxu0
    %v8534 = vadd.f32 %v8365, %v8533
    %v8535 = vpop.f32.mrf.mxu0
    %v8536 = vadd.f32 %v8367, %v8535
    %8537 = vmatmul.bf16.gmra.mxu0 %v7081
    %v8538 = vpop.f32.mrf.mxu0
    %v8539 = vadd.f32 %v8370, %v8538
    %v8540 = vpop.f32.mrf.mxu0
    %v8541 = vadd.f32 %v8372, %v8540
    %8542 = vmatmul.bf16.gmra.mxu0 %v7090
    %v8543 = vpop.f32.mrf.mxu0
    %v8544 = vadd.f32 %v8375, %v8543
    %v8545 = vpop.f32.mrf.mxu0
    %v8546 = vadd.f32 %v8377, %v8545
    %8547 = vmatmul.bf16.gmra.mxu0 %v7099
    %v8548 = vpop.f32.mrf.mxu0
    %v8549 = vadd.f32 %v8380, %v8548
    %v8550 = vpop.f32.mrf.mxu0
    %v8551 = vadd.f32 %v8382, %v8550
    %8552 = vmatmul.bf16.gmra.mxu0 %v7108
    %v8553 = vpop.f32.mrf.mxu0
    %v8554 = vadd.f32 %v8385, %v8553
    %v8555 = vpop.f32.mrf.mxu0
    %v8556 = vadd.f32 %v8387, %v8555
    %8557 = vmatmul.bf16.gmra.mxu0 %v7117
    %v8558 = vpop.f32.mrf.mxu0
    %v8559 = vadd.f32 %v8390, %v8558
    %v8560 = vpop.f32.mrf.mxu0
    %v8561 = vadd.f32 %v8392, %v8560
    %8562 = vmatmul.bf16.gmra.mxu0 %v7126
    %v8563 = vpop.f32.mrf.mxu0
    %v8564 = vadd.f32 %v8395, %v8563
    %v8565 = vpop.f32.mrf.mxu0
    %v8566 = vadd.f32 %v8397, %v8565
    %8567 = vmatmul.bf16.gmra.mxu0 %v7135
    %v8568 = vpop.f32.mrf.mxu0
    %v8569 = vadd.f32 %v8400, %v8568
    %v8570 = vpop.f32.mrf.mxu0
    %v8571 = vadd.f32 %v8402, %v8570
    %8572 = vmatmul.bf16.gmra.mxu0 %v7144
    %v8573 = vpop.f32.mrf.mxu0
    %v8574 = vadd.f32 %v8405, %v8573
    %v8575 = vpop.f32.mrf.mxu0
    %v8576 = vadd.f32 %v8407, %v8575
    %8577 = vmatmul.bf16.gmra.mxu0 %v7153
    %v8578 = vpop.f32.mrf.mxu0
    %v8579 = vadd.f32 %v8410, %v8578
    %v8580 = vpop.f32.mrf.mxu0
    %v8581 = vadd.f32 %v8412, %v8580
    %8582 = vmatmul.bf16.gmra.mxu0 %v7162
    %v8583 = vpop.f32.mrf.mxu0
    %v8584 = vadd.f32 %v8415, %v8583
    %v8585 = vpop.f32.mrf.mxu0
    %v8586 = vadd.f32 %v8417, %v8585
    %8587 = vmatmul.bf16.gmra.mxu0 %v7171
    %v8588 = vpop.f32.mrf.mxu0
    %v8589 = vadd.f32 %v8420, %v8588
    %v8590 = vpop.f32.mrf.mxu0
    %v8591 = vadd.f32 %v8422, %v8590
    %8592 = vmatmul.bf16.gmra.mxu0 %v7180
    %v8593 = vpop.f32.mrf.mxu0
    %v8594 = vadd.f32 %v8425, %v8593
    %v8595 = vpop.f32.mrf.mxu0
    %v8596 = vadd.f32 %v8427, %v8595
    %8597 = vmatmul.bf16.gmra.mxu0 %v7189
    %v8598 = vpop.f32.mrf.mxu0
    %v8599 = vadd.f32 %v8430, %v8598
    %v8600 = vpop.f32.mrf.mxu0
    %v8601 = vadd.f32 %v8432, %v8600
    %8602 = vmatmul.bf16.gmra.mxu0 %v7198
    %v8603 = vpop.f32.mrf.mxu0
    %v8604 = vadd.f32 %v8435, %v8603
    %v8605 = vpop.f32.mrf.mxu0
    %v8606 = vadd.f32 %v8437, %v8605
    %8607 = vmatmul.bf16.gmra.mxu0 %v7207
    %v8608 = vpop.f32.mrf.mxu0
    %v8609 = vadd.f32 %v8440, %v8608
    %v8610 = vpop.f32.mrf.mxu0
    %v8611 = vadd.f32 %v8442, %v8610
    %8612 = vmatmul.bf16.gmra.mxu0 %v7216
    %v8613 = vpop.f32.mrf.mxu0
    %v8614 = vadd.f32 %v8445, %v8613
    %v8615 = vpop.f32.mrf.mxu0
    %v8616 = vadd.f32 %v8447, %v8615
    %8617 = vdwg.mxu0
    %8618 = vmatpush.bf16.msra.mxu0 %v7837
    %8619 = vmatpush.bf16.msra.mxu0 %v7836
    %8620 = vmatpush.bf16.msra.mxu0 %v7835
    %8621 = vmatpush.bf16.msra.mxu0 %v7834
    %8622 = vmatpush.bf16.msra.mxu0 %v7833
    %8623 = vmatpush.bf16.msra.mxu0 %v7832
    %8624 = vmatpush.bf16.msra.mxu0 %v7831
    %8625 = vmatpush.bf16.msra.mxu0 %v7830
    %8626 = vmatmul.bf16.gmra.mxu0 %v6938
    %v8627 = vpop.f32.mrf.mxu0
    %v8628 = vadd.f32 %v8459, %v8627
    %v8629 = vpop.f32.mrf.mxu0
    %v8630 = vadd.f32 %v8461, %v8629
    %8631 = vmatmul.bf16.gmra.mxu0 %v6947
    %v8632 = vpop.f32.mrf.mxu0
    %v8633 = vadd.f32 %v8464, %v8632
    %v8634 = vpop.f32.mrf.mxu0
    %v8635 = vadd.f32 %v8466, %v8634
    %8636 = vmatmul.bf16.gmra.mxu0 %v6956
    %v8637 = vpop.f32.mrf.mxu0
    %v8638 = vadd.f32 %v8469, %v8637
    %v8639 = vpop.f32.mrf.mxu0
    %v8640 = vadd.f32 %v8471, %v8639
    %8641 = vmatmul.bf16.gmra.mxu0 %v6965
    %v8642 = vpop.f32.mrf.mxu0
    %v8643 = vadd.f32 %v8474, %v8642
    %v8644 = vpop.f32.mrf.mxu0
    %v8645 = vadd.f32 %v8476, %v8644
    %8646 = vmatmul.bf16.gmra.mxu0 %v6974
    %v8647 = vpop.f32.mrf.mxu0
    %v8648 = vadd.f32 %v8479, %v8647
    %v8649 = vpop.f32.mrf.mxu0
    %v8650 = vadd.f32 %v8481, %v8649
    %8651 = vmatmul.bf16.gmra.mxu0 %v6983
    %v8652 = vpop.f32.mrf.mxu0
    %v8653 = vadd.f32 %v8484, %v8652
    %v8654 = vpop.f32.mrf.mxu0
    %v8655 = vadd.f32 %v8486, %v8654
    %8656 = vmatmul.bf16.gmra.mxu0 %v6992
    %v8657 = vpop.f32.mrf.mxu0
    %v8658 = vadd.f32 %v8489, %v8657
    %v8659 = vpop.f32.mrf.mxu0
    %v8660 = vadd.f32 %v8491, %v8659
    %8661 = vmatmul.bf16.gmra.mxu0 %v7001
    %v8662 = vpop.f32.mrf.mxu0
    %v8663 = vadd.f32 %v8494, %v8662
    %v8664 = vpop.f32.mrf.mxu0
    %v8665 = vadd.f32 %v8496, %v8664
    %8666 = vmatmul.bf16.gmra.mxu0 %v7010
    %v8667 = vpop.f32.mrf.mxu0
    %v8668 = vadd.f32 %v8499, %v8667
    %v8669 = vpop.f32.mrf.mxu0
    %v8670 = vadd.f32 %v8501, %v8669
    %8671 = vmatmul.bf16.gmra.mxu0 %v7019
    %v8672 = vpop.f32.mrf.mxu0
    %v8673 = vadd.f32 %v8504, %v8672
    %v8674 = vpop.f32.mrf.mxu0
    %v8675 = vadd.f32 %v8506, %v8674
    %8676 = vmatmul.bf16.gmra.mxu0 %v7028
    %v8677 = vpop.f32.mrf.mxu0
    %v8678 = vadd.f32 %v8509, %v8677
    %v8679 = vpop.f32.mrf.mxu0
    %v8680 = vadd.f32 %v8511, %v8679
    %8681 = vmatmul.bf16.gmra.mxu0 %v7037
    %v8682 = vpop.f32.mrf.mxu0
    %v8683 = vadd.f32 %v8514, %v8682
    %v8684 = vpop.f32.mrf.mxu0
    %v8685 = vadd.f32 %v8516, %v8684
    %8686 = vmatmul.bf16.gmra.mxu0 %v7046
    %v8687 = vpop.f32.mrf.mxu0
    %v8688 = vadd.f32 %v8519, %v8687
    %v8689 = vpop.f32.mrf.mxu0
    %v8690 = vadd.f32 %v8521, %v8689
    %8691 = vmatmul.bf16.gmra.mxu0 %v7055
    %v8692 = vpop.f32.mrf.mxu0
    %v8693 = vadd.f32 %v8524, %v8692
    %v8694 = vpop.f32.mrf.mxu0
    %v8695 = vadd.f32 %v8526, %v8694
    %8696 = vmatmul.bf16.gmra.mxu0 %v7064
    %v8697 = vpop.f32.mrf.mxu0
    %v8698 = vadd.f32 %v8529, %v8697
    %v8699 = vpop.f32.mrf.mxu0
    %v8700 = vadd.f32 %v8531, %v8699
    %8701 = vmatmul.bf16.gmra.mxu0 %v7073
    %v8702 = vpop.f32.mrf.mxu0
    %v8703 = vadd.f32 %v8534, %v8702
    %v8704 = vpop.f32.mrf.mxu0
    %v8705 = vadd.f32 %v8536, %v8704
    %8706 = vmatmul.bf16.gmra.mxu0 %v7082
    %v8707 = vpop.f32.mrf.mxu0
    %v8708 = vadd.f32 %v8539, %v8707
    %v8709 = vpop.f32.mrf.mxu0
    %v8710 = vadd.f32 %v8541, %v8709
    %8711 = vmatmul.bf16.gmra.mxu0 %v7091
    %v8712 = vpop.f32.mrf.mxu0
    %v8713 = vadd.f32 %v8544, %v8712
    %v8714 = vpop.f32.mrf.mxu0
    %v8715 = vadd.f32 %v8546, %v8714
    %8716 = vmatmul.bf16.gmra.mxu0 %v7100
    %v8717 = vpop.f32.mrf.mxu0
    %v8718 = vadd.f32 %v8549, %v8717
    %v8719 = vpop.f32.mrf.mxu0
    %v8720 = vadd.f32 %v8551, %v8719
    %8721 = vmatmul.bf16.gmra.mxu0 %v7109
    %v8722 = vpop.f32.mrf.mxu0
    %v8723 = vadd.f32 %v8554, %v8722
    %v8724 = vpop.f32.mrf.mxu0
    %v8725 = vadd.f32 %v8556, %v8724
    %8726 = vmatmul.bf16.gmra.mxu0 %v7118
    %v8727 = vpop.f32.mrf.mxu0
    %v8728 = vadd.f32 %v8559, %v8727
    %v8729 = vpop.f32.mrf.mxu0
    %v8730 = vadd.f32 %v8561, %v8729
    %8731 = vmatmul.bf16.gmra.mxu0 %v7127
    %v8732 = vpop.f32.mrf.mxu0
    %v8733 = vadd.f32 %v8564, %v8732
    %v8734 = vpop.f32.mrf.mxu0
    %v8735 = vadd.f32 %v8566, %v8734
    %8736 = vmatmul.bf16.gmra.mxu0 %v7136
    %v8737 = vpop.f32.mrf.mxu0
    %v8738 = vadd.f32 %v8569, %v8737
    %v8739 = vpop.f32.mrf.mxu0
    %v8740 = vadd.f32 %v8571, %v8739
    %8741 = vmatmul.bf16.gmra.mxu0 %v7145
    %v8742 = vpop.f32.mrf.mxu0
    %v8743 = vadd.f32 %v8574, %v8742
    %v8744 = vpop.f32.mrf.mxu0
    %v8745 = vadd.f32 %v8576, %v8744
    %8746 = vmatmul.bf16.gmra.mxu0 %v7154
    %v8747 = vpop.f32.mrf.mxu0
    %v8748 = vadd.f32 %v8579, %v8747
    %v8749 = vpop.f32.mrf.mxu0
    %v8750 = vadd.f32 %v8581, %v8749
    %8751 = vmatmul.bf16.gmra.mxu0 %v7163
    %v8752 = vpop.f32.mrf.mxu0
    %v8753 = vadd.f32 %v8584, %v8752
    %v8754 = vpop.f32.mrf.mxu0
    %v8755 = vadd.f32 %v8586, %v8754
    %8756 = vmatmul.bf16.gmra.mxu0 %v7172
    %v8757 = vpop.f32.mrf.mxu0
    %v8758 = vadd.f32 %v8589, %v8757
    %v8759 = vpop.f32.mrf.mxu0
    %v8760 = vadd.f32 %v8591, %v8759
    %8761 = vmatmul.bf16.gmra.mxu0 %v7181
    %v8762 = vpop.f32.mrf.mxu0
    %v8763 = vadd.f32 %v8594, %v8762
    %v8764 = vpop.f32.mrf.mxu0
    %v8765 = vadd.f32 %v8596, %v8764
    %8766 = vmatmul.bf16.gmra.mxu0 %v7190
    %v8767 = vpop.f32.mrf.mxu0
    %v8768 = vadd.f32 %v8599, %v8767
    %v8769 = vpop.f32.mrf.mxu0
    %v8770 = vadd.f32 %v8601, %v8769
    %8771 = vmatmul.bf16.gmra.mxu0 %v7199
    %v8772 = vpop.f32.mrf.mxu0
    %v8773 = vadd.f32 %v8604, %v8772
    %v8774 = vpop.f32.mrf.mxu0
    %v8775 = vadd.f32 %v8606, %v8774
    %8776 = vmatmul.bf16.gmra.mxu0 %v7208
    %v8777 = vpop.f32.mrf.mxu0
    %v8778 = vadd.f32 %v8609, %v8777
    %v8779 = vpop.f32.mrf.mxu0
    %v8780 = vadd.f32 %v8611, %v8779
    %8781 = vmatmul.bf16.gmra.mxu0 %v7217
    %v8782 = vpop.f32.mrf.mxu0
    %v8783 = vadd.f32 %v8614, %v8782
    %v8784 = vpop.f32.mrf.mxu0
    %v8785 = vadd.f32 %v8616, %v8784
    %8786 = vdwg.mxu0
    %8787 = vmatpush.bf16.msra.mxu0 %v7845
    %8788 = vmatpush.bf16.msra.mxu0 %v7844
    %8789 = vmatpush.bf16.msra.mxu0 %v7843
    %8790 = vmatpush.bf16.msra.mxu0 %v7842
    %8791 = vmatpush.bf16.msra.mxu0 %v7841
    %8792 = vmatpush.bf16.msra.mxu0 %v7840
    %8793 = vmatpush.bf16.msra.mxu0 %v7839
    %8794 = vmatpush.bf16.msra.mxu0 %v7838
    %8795 = vmatmul.bf16.gmra.mxu0 %v6939
    %v8796 = vpop.f32.mrf.mxu0
    %v8797 = vadd.f32 %v8628, %v8796
    %v8798 = vpop.f32.mrf.mxu0
    %v8799 = vadd.f32 %v8630, %v8798
    %8800 = vmatmul.bf16.gmra.mxu0 %v6948
    %v8801 = vpop.f32.mrf.mxu0
    %v8802 = vadd.f32 %v8633, %v8801
    %v8803 = vpop.f32.mrf.mxu0
    %v8804 = vadd.f32 %v8635, %v8803
    %8805 = vmatmul.bf16.gmra.mxu0 %v6957
    %v8806 = vpop.f32.mrf.mxu0
    %v8807 = vadd.f32 %v8638, %v8806
    %v8808 = vpop.f32.mrf.mxu0
    %v8809 = vadd.f32 %v8640, %v8808
    %8810 = vmatmul.bf16.gmra.mxu0 %v6966
    %v8811 = vpop.f32.mrf.mxu0
    %v8812 = vadd.f32 %v8643, %v8811
    %v8813 = vpop.f32.mrf.mxu0
    %v8814 = vadd.f32 %v8645, %v8813
    %8815 = vmatmul.bf16.gmra.mxu0 %v6975
    %v8816 = vpop.f32.mrf.mxu0
    %v8817 = vadd.f32 %v8648, %v8816
    %v8818 = vpop.f32.mrf.mxu0
    %v8819 = vadd.f32 %v8650, %v8818
    %8820 = vmatmul.bf16.gmra.mxu0 %v6984
    %v8821 = vpop.f32.mrf.mxu0
    %v8822 = vadd.f32 %v8653, %v8821
    %v8823 = vpop.f32.mrf.mxu0
    %v8824 = vadd.f32 %v8655, %v8823
    %8825 = vmatmul.bf16.gmra.mxu0 %v6993
    %v8826 = vpop.f32.mrf.mxu0
    %v8827 = vadd.f32 %v8658, %v8826
    %v8828 = vpop.f32.mrf.mxu0
    %v8829 = vadd.f32 %v8660, %v8828
    %8830 = vmatmul.bf16.gmra.mxu0 %v7002
    %v8831 = vpop.f32.mrf.mxu0
    %v8832 = vadd.f32 %v8663, %v8831
    %v8833 = vpop.f32.mrf.mxu0
    %v8834 = vadd.f32 %v8665, %v8833
    %8835 = vmatmul.bf16.gmra.mxu0 %v7011
    %v8836 = vpop.f32.mrf.mxu0
    %v8837 = vadd.f32 %v8668, %v8836
    %v8838 = vpop.f32.mrf.mxu0
    %v8839 = vadd.f32 %v8670, %v8838
    %8840 = vmatmul.bf16.gmra.mxu0 %v7020
    %v8841 = vpop.f32.mrf.mxu0
    %v8842 = vadd.f32 %v8673, %v8841
    %v8843 = vpop.f32.mrf.mxu0
    %v8844 = vadd.f32 %v8675, %v8843
    %8845 = vmatmul.bf16.gmra.mxu0 %v7029
    %v8846 = vpop.f32.mrf.mxu0
    %v8847 = vadd.f32 %v8678, %v8846
    %v8848 = vpop.f32.mrf.mxu0
    %v8849 = vadd.f32 %v8680, %v8848
    %8850 = vmatmul.bf16.gmra.mxu0 %v7038
    %v8851 = vpop.f32.mrf.mxu0
    %v8852 = vadd.f32 %v8683, %v8851
    %v8853 = vpop.f32.mrf.mxu0
    %v8854 = vadd.f32 %v8685, %v8853
    %8855 = vmatmul.bf16.gmra.mxu0 %v7047
    %v8856 = vpop.f32.mrf.mxu0
    %v8857 = vadd.f32 %v8688, %v8856
    %v8858 = vpop.f32.mrf.mxu0
    %v8859 = vadd.f32 %v8690, %v8858
    %8860 = vmatmul.bf16.gmra.mxu0 %v7056
    %v8861 = vpop.f32.mrf.mxu0
    %v8862 = vadd.f32 %v8693, %v8861
    %v8863 = vpop.f32.mrf.mxu0
    %v8864 = vadd.f32 %v8695, %v8863
    %8865 = vmatmul.bf16.gmra.mxu0 %v7065
    %v8866 = vpop.f32.mrf.mxu0
    %v8867 = vadd.f32 %v8698, %v8866
    %v8868 = vpop.f32.mrf.mxu0
    %v8869 = vadd.f32 %v8700, %v8868
    %8870 = vmatmul.bf16.gmra.mxu0 %v7074
    %v8871 = vpop.f32.mrf.mxu0
    %v8872 = vadd.f32 %v8703, %v8871
    %v8873 = vpop.f32.mrf.mxu0
    %v8874 = vadd.f32 %v8705, %v8873
    %8875 = vmatmul.bf16.gmra.mxu0 %v7083
    %v8876 = vpop.f32.mrf.mxu0
    %v8877 = vadd.f32 %v8708, %v8876
    %v8878 = vpop.f32.mrf.mxu0
    %v8879 = vadd.f32 %v8710, %v8878
    %8880 = vmatmul.bf16.gmra.mxu0 %v7092
    %v8881 = vpop.f32.mrf.mxu0
    %v8882 = vadd.f32 %v8713, %v8881
    %v8883 = vpop.f32.mrf.mxu0
    %v8884 = vadd.f32 %v8715, %v8883
    %8885 = vmatmul.bf16.gmra.mxu0 %v7101
    %v8886 = vpop.f32.mrf.mxu0
    %v8887 = vadd.f32 %v8718, %v8886
    %v8888 = vpop.f32.mrf.mxu0
    %v8889 = vadd.f32 %v8720, %v8888
    %8890 = vmatmul.bf16.gmra.mxu0 %v7110
    %v8891 = vpop.f32.mrf.mxu0
    %v8892 = vadd.f32 %v8723, %v8891
    %v8893 = vpop.f32.mrf.mxu0
    %v8894 = vadd.f32 %v8725, %v8893
    %8895 = vmatmul.bf16.gmra.mxu0 %v7119
    %v8896 = vpop.f32.mrf.mxu0
    %v8897 = vadd.f32 %v8728, %v8896
    %v8898 = vpop.f32.mrf.mxu0
    %v8899 = vadd.f32 %v8730, %v8898
    %8900 = vmatmul.bf16.gmra.mxu0 %v7128
    %v8901 = vpop.f32.mrf.mxu0
    %v8902 = vadd.f32 %v8733, %v8901
    %v8903 = vpop.f32.mrf.mxu0
    %v8904 = vadd.f32 %v8735, %v8903
    %8905 = vmatmul.bf16.gmra.mxu0 %v7137
    %v8906 = vpop.f32.mrf.mxu0
    %v8907 = vadd.f32 %v8738, %v8906
    %v8908 = vpop.f32.mrf.mxu0
    %v8909 = vadd.f32 %v8740, %v8908
    %8910 = vmatmul.bf16.gmra.mxu0 %v7146
    %v8911 = vpop.f32.mrf.mxu0
    %v8912 = vadd.f32 %v8743, %v8911
    %v8913 = vpop.f32.mrf.mxu0
    %v8914 = vadd.f32 %v8745, %v8913
    %8915 = vmatmul.bf16.gmra.mxu0 %v7155
    %v8916 = vpop.f32.mrf.mxu0
    %v8917 = vadd.f32 %v8748, %v8916
    %v8918 = vpop.f32.mrf.mxu0
    %v8919 = vadd.f32 %v8750, %v8918
    %8920 = vmatmul.bf16.gmra.mxu0 %v7164
    %v8921 = vpop.f32.mrf.mxu0
    %v8922 = vadd.f32 %v8753, %v8921
    %v8923 = vpop.f32.mrf.mxu0
    %v8924 = vadd.f32 %v8755, %v8923
    %8925 = vmatmul.bf16.gmra.mxu0 %v7173
    %v8926 = vpop.f32.mrf.mxu0
    %v8927 = vadd.f32 %v8758, %v8926
    %v8928 = vpop.f32.mrf.mxu0
    %v8929 = vadd.f32 %v8760, %v8928
    %8930 = vmatmul.bf16.gmra.mxu0 %v7182
    %v8931 = vpop.f32.mrf.mxu0
    %v8932 = vadd.f32 %v8763, %v8931
    %v8933 = vpop.f32.mrf.mxu0
    %v8934 = vadd.f32 %v8765, %v8933
    %8935 = vmatmul.bf16.gmra.mxu0 %v7191
    %v8936 = vpop.f32.mrf.mxu0
    %v8937 = vadd.f32 %v8768, %v8936
    %v8938 = vpop.f32.mrf.mxu0
    %v8939 = vadd.f32 %v8770, %v8938
    %8940 = vmatmul.bf16.gmra.mxu0 %v7200
    %v8941 = vpop.f32.mrf.mxu0
    %v8942 = vadd.f32 %v8773, %v8941
    %v8943 = vpop.f32.mrf.mxu0
    %v8944 = vadd.f32 %v8775, %v8943
    %8945 = vmatmul.bf16.gmra.mxu0 %v7209
    %v8946 = vpop.f32.mrf.mxu0
    %v8947 = vadd.f32 %v8778, %v8946
    %v8948 = vpop.f32.mrf.mxu0
    %v8949 = vadd.f32 %v8780, %v8948
    %8950 = vmatmul.bf16.gmra.mxu0 %v7218
    %v8951 = vpop.f32.mrf.mxu0
    %v8952 = vadd.f32 %v8783, %v8951
    %v8953 = vpop.f32.mrf.mxu0
    %v8954 = vadd.f32 %v8785, %v8953
    %8955 = vdwg.mxu0
    %8956 = vmatpush.bf16.msra.mxu0 %v7853
    %8957 = vmatpush.bf16.msra.mxu0 %v7852
    %8958 = vmatpush.bf16.msra.mxu0 %v7851
    %8959 = vmatpush.bf16.msra.mxu0 %v7850
    %8960 = vmatpush.bf16.msra.mxu0 %v7849
    %8961 = vmatpush.bf16.msra.mxu0 %v7848
    %8962 = vmatpush.bf16.msra.mxu0 %v7847
    %8963 = vmatpush.bf16.msra.mxu0 %v7846
    %8964 = vmatmul.bf16.gmra.mxu0 %v6940
    %v8965 = vpop.f32.mrf.mxu0
    %v8966 = vadd.f32 %v8797, %v8965
    %v8967 = vpop.f32.mrf.mxu0
    %v8968 = vadd.f32 %v8799, %v8967
    %8969 = vmatmul.bf16.gmra.mxu0 %v6949
    %v8970 = vpop.f32.mrf.mxu0
    %v8971 = vadd.f32 %v8802, %v8970
    %v8972 = vpop.f32.mrf.mxu0
    %v8973 = vadd.f32 %v8804, %v8972
    %8974 = vmatmul.bf16.gmra.mxu0 %v6958
    %v8975 = vpop.f32.mrf.mxu0
    %v8976 = vadd.f32 %v8807, %v8975
    %v8977 = vpop.f32.mrf.mxu0
    %v8978 = vadd.f32 %v8809, %v8977
    %8979 = vmatmul.bf16.gmra.mxu0 %v6967
    %v8980 = vpop.f32.mrf.mxu0
    %v8981 = vadd.f32 %v8812, %v8980
    %v8982 = vpop.f32.mrf.mxu0
    %v8983 = vadd.f32 %v8814, %v8982
    %8984 = vmatmul.bf16.gmra.mxu0 %v6976
    %v8985 = vpop.f32.mrf.mxu0
    %v8986 = vadd.f32 %v8817, %v8985
    %v8987 = vpop.f32.mrf.mxu0
    %v8988 = vadd.f32 %v8819, %v8987
    %8989 = vmatmul.bf16.gmra.mxu0 %v6985
    %v8990 = vpop.f32.mrf.mxu0
    %v8991 = vadd.f32 %v8822, %v8990
    %v8992 = vpop.f32.mrf.mxu0
    %v8993 = vadd.f32 %v8824, %v8992
    %8994 = vmatmul.bf16.gmra.mxu0 %v6994
    %v8995 = vpop.f32.mrf.mxu0
    %v8996 = vadd.f32 %v8827, %v8995
    %v8997 = vpop.f32.mrf.mxu0
    %v8998 = vadd.f32 %v8829, %v8997
    %8999 = vmatmul.bf16.gmra.mxu0 %v7003
    %v9000 = vpop.f32.mrf.mxu0
    %v9001 = vadd.f32 %v8832, %v9000
    %v9002 = vpop.f32.mrf.mxu0
    %v9003 = vadd.f32 %v8834, %v9002
    %9004 = vmatmul.bf16.gmra.mxu0 %v7012
    %v9005 = vpop.f32.mrf.mxu0
    %v9006 = vadd.f32 %v8837, %v9005
    %v9007 = vpop.f32.mrf.mxu0
    %v9008 = vadd.f32 %v8839, %v9007
    %9009 = vmatmul.bf16.gmra.mxu0 %v7021
    %v9010 = vpop.f32.mrf.mxu0
    %v9011 = vadd.f32 %v8842, %v9010
    %v9012 = vpop.f32.mrf.mxu0
    %v9013 = vadd.f32 %v8844, %v9012
    %9014 = vmatmul.bf16.gmra.mxu0 %v7030
    %v9015 = vpop.f32.mrf.mxu0
    %v9016 = vadd.f32 %v8847, %v9015
    %v9017 = vpop.f32.mrf.mxu0
    %v9018 = vadd.f32 %v8849, %v9017
    %9019 = vmatmul.bf16.gmra.mxu0 %v7039
    %v9020 = vpop.f32.mrf.mxu0
    %v9021 = vadd.f32 %v8852, %v9020
    %v9022 = vpop.f32.mrf.mxu0
    %v9023 = vadd.f32 %v8854, %v9022
    %9024 = vmatmul.bf16.gmra.mxu0 %v7048
    %v9025 = vpop.f32.mrf.mxu0
    %v9026 = vadd.f32 %v8857, %v9025
    %v9027 = vpop.f32.mrf.mxu0
    %v9028 = vadd.f32 %v8859, %v9027
    %9029 = vmatmul.bf16.gmra.mxu0 %v7057
    %v9030 = vpop.f32.mrf.mxu0
    %v9031 = vadd.f32 %v8862, %v9030
    %v9032 = vpop.f32.mrf.mxu0
    %v9033 = vadd.f32 %v8864, %v9032
    %9034 = vmatmul.bf16.gmra.mxu0 %v7066
    %v9035 = vpop.f32.mrf.mxu0
    %v9036 = vadd.f32 %v8867, %v9035
    %v9037 = vpop.f32.mrf.mxu0
    %v9038 = vadd.f32 %v8869, %v9037
    %9039 = vmatmul.bf16.gmra.mxu0 %v7075
    %v9040 = vpop.f32.mrf.mxu0
    %v9041 = vadd.f32 %v8872, %v9040
    %v9042 = vpop.f32.mrf.mxu0
    %v9043 = vadd.f32 %v8874, %v9042
    %9044 = vmatmul.bf16.gmra.mxu0 %v7084
    %v9045 = vpop.f32.mrf.mxu0
    %v9046 = vadd.f32 %v8877, %v9045
    %v9047 = vpop.f32.mrf.mxu0
    %v9048 = vadd.f32 %v8879, %v9047
    %9049 = vmatmul.bf16.gmra.mxu0 %v7093
    %v9050 = vpop.f32.mrf.mxu0
    %v9051 = vadd.f32 %v8882, %v9050
    %v9052 = vpop.f32.mrf.mxu0
    %v9053 = vadd.f32 %v8884, %v9052
    %9054 = vmatmul.bf16.gmra.mxu0 %v7102
    %v9055 = vpop.f32.mrf.mxu0
    %v9056 = vadd.f32 %v8887, %v9055
    %v9057 = vpop.f32.mrf.mxu0
    %v9058 = vadd.f32 %v8889, %v9057
    %9059 = vmatmul.bf16.gmra.mxu0 %v7111
    %v9060 = vpop.f32.mrf.mxu0
    %v9061 = vadd.f32 %v8892, %v9060
    %v9062 = vpop.f32.mrf.mxu0
    %v9063 = vadd.f32 %v8894, %v9062
    %9064 = vmatmul.bf16.gmra.mxu0 %v7120
    %v9065 = vpop.f32.mrf.mxu0
    %v9066 = vadd.f32 %v8897, %v9065
    %v9067 = vpop.f32.mrf.mxu0
    %v9068 = vadd.f32 %v8899, %v9067
    %9069 = vmatmul.bf16.gmra.mxu0 %v7129
    %v9070 = vpop.f32.mrf.mxu0
    %v9071 = vadd.f32 %v8902, %v9070
    %v9072 = vpop.f32.mrf.mxu0
    %v9073 = vadd.f32 %v8904, %v9072
    %9074 = vmatmul.bf16.gmra.mxu0 %v7138
    %v9075 = vpop.f32.mrf.mxu0
    %v9076 = vadd.f32 %v8907, %v9075
    %v9077 = vpop.f32.mrf.mxu0
    %v9078 = vadd.f32 %v8909, %v9077
    %9079 = vmatmul.bf16.gmra.mxu0 %v7147
    %v9080 = vpop.f32.mrf.mxu0
    %v9081 = vadd.f32 %v8912, %v9080
    %v9082 = vpop.f32.mrf.mxu0
    %v9083 = vadd.f32 %v8914, %v9082
    %9084 = vmatmul.bf16.gmra.mxu0 %v7156
    %v9085 = vpop.f32.mrf.mxu0
    %v9086 = vadd.f32 %v8917, %v9085
    %v9087 = vpop.f32.mrf.mxu0
    %v9088 = vadd.f32 %v8919, %v9087
    %9089 = vmatmul.bf16.gmra.mxu0 %v7165
    %v9090 = vpop.f32.mrf.mxu0
    %v9091 = vadd.f32 %v8922, %v9090
    %v9092 = vpop.f32.mrf.mxu0
    %v9093 = vadd.f32 %v8924, %v9092
    %9094 = vmatmul.bf16.gmra.mxu0 %v7174
    %v9095 = vpop.f32.mrf.mxu0
    %v9096 = vadd.f32 %v8927, %v9095
    %v9097 = vpop.f32.mrf.mxu0
    %v9098 = vadd.f32 %v8929, %v9097
    %9099 = vmatmul.bf16.gmra.mxu0 %v7183
    %v9100 = vpop.f32.mrf.mxu0
    %v9101 = vadd.f32 %v8932, %v9100
    %v9102 = vpop.f32.mrf.mxu0
    %v9103 = vadd.f32 %v8934, %v9102
    %9104 = vmatmul.bf16.gmra.mxu0 %v7192
    %v9105 = vpop.f32.mrf.mxu0
    %v9106 = vadd.f32 %v8937, %v9105
    %v9107 = vpop.f32.mrf.mxu0
    %v9108 = vadd.f32 %v8939, %v9107
    %9109 = vmatmul.bf16.gmra.mxu0 %v7201
    %v9110 = vpop.f32.mrf.mxu0
    %v9111 = vadd.f32 %v8942, %v9110
    %v9112 = vpop.f32.mrf.mxu0
    %v9113 = vadd.f32 %v8944, %v9112
    %9114 = vmatmul.bf16.gmra.mxu0 %v7210
    %v9115 = vpop.f32.mrf.mxu0
    %v9116 = vadd.f32 %v8947, %v9115
    %v9117 = vpop.f32.mrf.mxu0
    %v9118 = vadd.f32 %v8949, %v9117
    %9119 = vmatmul.bf16.gmra.mxu0 %v7219
    %v9120 = vpop.f32.mrf.mxu0
    %v9121 = vadd.f32 %v8952, %v9120
    %v9122 = vpop.f32.mrf.mxu0
    %v9123 = vadd.f32 %v8954, %v9122
    %9124 = vdwg.mxu0
    %9125 = vmatpush.bf16.msra.mxu0 %v7861
    %9126 = vmatpush.bf16.msra.mxu0 %v7860
    %9127 = vmatpush.bf16.msra.mxu0 %v7859
    %9128 = vmatpush.bf16.msra.mxu0 %v7858
    %9129 = vmatpush.bf16.msra.mxu0 %v7857
    %9130 = vmatpush.bf16.msra.mxu0 %v7856
    %9131 = vmatpush.bf16.msra.mxu0 %v7855
    %9132 = vmatpush.bf16.msra.mxu0 %v7854
    %9133 = vmatmul.bf16.gmra.mxu0 %v6941
    %v9134 = vpop.f32.mrf.mxu0
    %v9135 = vadd.f32 %v8966, %v9134
    %v9136 = vpop.f32.mrf.mxu0
    %v9137 = vadd.f32 %v8968, %v9136
    %9138 = vmatmul.bf16.gmra.mxu0 %v6950
    %v9139 = vpop.f32.mrf.mxu0
    %v9140 = vadd.f32 %v8971, %v9139
    %v9141 = vpop.f32.mrf.mxu0
    %v9142 = vadd.f32 %v8973, %v9141
    %9143 = vmatmul.bf16.gmra.mxu0 %v6959
    %v9144 = vpop.f32.mrf.mxu0
    %v9145 = vadd.f32 %v8976, %v9144
    %v9146 = vpop.f32.mrf.mxu0
    %v9147 = vadd.f32 %v8978, %v9146
    %9148 = vmatmul.bf16.gmra.mxu0 %v6968
    %v9149 = vpop.f32.mrf.mxu0
    %v9150 = vadd.f32 %v8981, %v9149
    %v9151 = vpop.f32.mrf.mxu0
    %v9152 = vadd.f32 %v8983, %v9151
    %9153 = vmatmul.bf16.gmra.mxu0 %v6977
    %v9154 = vpop.f32.mrf.mxu0
    %v9155 = vadd.f32 %v8986, %v9154
    %v9156 = vpop.f32.mrf.mxu0
    %v9157 = vadd.f32 %v8988, %v9156
    %9158 = vmatmul.bf16.gmra.mxu0 %v6986
    %v9159 = vpop.f32.mrf.mxu0
    %v9160 = vadd.f32 %v8991, %v9159
    %v9161 = vpop.f32.mrf.mxu0
    %v9162 = vadd.f32 %v8993, %v9161
    %9163 = vmatmul.bf16.gmra.mxu0 %v6995
    %v9164 = vpop.f32.mrf.mxu0
    %v9165 = vadd.f32 %v8996, %v9164
    %v9166 = vpop.f32.mrf.mxu0
    %v9167 = vadd.f32 %v8998, %v9166
    %9168 = vmatmul.bf16.gmra.mxu0 %v7004
    %v9169 = vpop.f32.mrf.mxu0
    %v9170 = vadd.f32 %v9001, %v9169
    %v9171 = vpop.f32.mrf.mxu0
    %v9172 = vadd.f32 %v9003, %v9171
    %9173 = vmatmul.bf16.gmra.mxu0 %v7013
    %v9174 = vpop.f32.mrf.mxu0
    %v9175 = vadd.f32 %v9006, %v9174
    %v9176 = vpop.f32.mrf.mxu0
    %v9177 = vadd.f32 %v9008, %v9176
    %9178 = vmatmul.bf16.gmra.mxu0 %v7022
    %v9179 = vpop.f32.mrf.mxu0
    %v9180 = vadd.f32 %v9011, %v9179
    %v9181 = vpop.f32.mrf.mxu0
    %v9182 = vadd.f32 %v9013, %v9181
    %9183 = vmatmul.bf16.gmra.mxu0 %v7031
    %v9184 = vpop.f32.mrf.mxu0
    %v9185 = vadd.f32 %v9016, %v9184
    %v9186 = vpop.f32.mrf.mxu0
    %v9187 = vadd.f32 %v9018, %v9186
    %9188 = vmatmul.bf16.gmra.mxu0 %v7040
    %v9189 = vpop.f32.mrf.mxu0
    %v9190 = vadd.f32 %v9021, %v9189
    %v9191 = vpop.f32.mrf.mxu0
    %v9192 = vadd.f32 %v9023, %v9191
    %9193 = vmatmul.bf16.gmra.mxu0 %v7049
    %v9194 = vpop.f32.mrf.mxu0
    %v9195 = vadd.f32 %v9026, %v9194
    %v9196 = vpop.f32.mrf.mxu0
    %v9197 = vadd.f32 %v9028, %v9196
    %9198 = vmatmul.bf16.gmra.mxu0 %v7058
    %v9199 = vpop.f32.mrf.mxu0
    %v9200 = vadd.f32 %v9031, %v9199
    %v9201 = vpop.f32.mrf.mxu0
    %v9202 = vadd.f32 %v9033, %v9201
    %9203 = vmatmul.bf16.gmra.mxu0 %v7067
    %v9204 = vpop.f32.mrf.mxu0
    %v9205 = vadd.f32 %v9036, %v9204
    %v9206 = vpop.f32.mrf.mxu0
    %v9207 = vadd.f32 %v9038, %v9206
    %9208 = vmatmul.bf16.gmra.mxu0 %v7076
    %v9209 = vpop.f32.mrf.mxu0
    %v9210 = vadd.f32 %v9041, %v9209
    %v9211 = vpop.f32.mrf.mxu0
    %v9212 = vadd.f32 %v9043, %v9211
    %9213 = vmatmul.bf16.gmra.mxu0 %v7085
    %v9214 = vpop.f32.mrf.mxu0
    %v9215 = vadd.f32 %v9046, %v9214
    %v9216 = vpop.f32.mrf.mxu0
    %v9217 = vadd.f32 %v9048, %v9216
    %9218 = vmatmul.bf16.gmra.mxu0 %v7094
    %v9219 = vpop.f32.mrf.mxu0
    %v9220 = vadd.f32 %v9051, %v9219
    %v9221 = vpop.f32.mrf.mxu0
    %v9222 = vadd.f32 %v9053, %v9221
    %9223 = vmatmul.bf16.gmra.mxu0 %v7103
    %v9224 = vpop.f32.mrf.mxu0
    %v9225 = vadd.f32 %v9056, %v9224
    %v9226 = vpop.f32.mrf.mxu0
    %v9227 = vadd.f32 %v9058, %v9226
    %9228 = vmatmul.bf16.gmra.mxu0 %v7112
    %v9229 = vpop.f32.mrf.mxu0
    %v9230 = vadd.f32 %v9061, %v9229
    %v9231 = vpop.f32.mrf.mxu0
    %v9232 = vadd.f32 %v9063, %v9231
    %9233 = vmatmul.bf16.gmra.mxu0 %v7121
    %v9234 = vpop.f32.mrf.mxu0
    %v9235 = vadd.f32 %v9066, %v9234
    %v9236 = vpop.f32.mrf.mxu0
    %v9237 = vadd.f32 %v9068, %v9236
    %9238 = vmatmul.bf16.gmra.mxu0 %v7130
    %v9239 = vpop.f32.mrf.mxu0
    %v9240 = vadd.f32 %v9071, %v9239
    %v9241 = vpop.f32.mrf.mxu0
    %v9242 = vadd.f32 %v9073, %v9241
    %9243 = vmatmul.bf16.gmra.mxu0 %v7139
    %v9244 = vpop.f32.mrf.mxu0
    %v9245 = vadd.f32 %v9076, %v9244
    %v9246 = vpop.f32.mrf.mxu0
    %v9247 = vadd.f32 %v9078, %v9246
    %9248 = vmatmul.bf16.gmra.mxu0 %v7148
    %v9249 = vpop.f32.mrf.mxu0
    %v9250 = vadd.f32 %v9081, %v9249
    %v9251 = vpop.f32.mrf.mxu0
    %v9252 = vadd.f32 %v9083, %v9251
    %9253 = vmatmul.bf16.gmra.mxu0 %v7157
    %v9254 = vpop.f32.mrf.mxu0
    %v9255 = vadd.f32 %v9086, %v9254
    %v9256 = vpop.f32.mrf.mxu0
    %v9257 = vadd.f32 %v9088, %v9256
    %9258 = vmatmul.bf16.gmra.mxu0 %v7166
    %v9259 = vpop.f32.mrf.mxu0
    %v9260 = vadd.f32 %v9091, %v9259
    %v9261 = vpop.f32.mrf.mxu0
    %v9262 = vadd.f32 %v9093, %v9261
    %9263 = vmatmul.bf16.gmra.mxu0 %v7175
    %v9264 = vpop.f32.mrf.mxu0
    %v9265 = vadd.f32 %v9096, %v9264
    %v9266 = vpop.f32.mrf.mxu0
    %v9267 = vadd.f32 %v9098, %v9266
    %9268 = vmatmul.bf16.gmra.mxu0 %v7184
    %v9269 = vpop.f32.mrf.mxu0
    %v9270 = vadd.f32 %v9101, %v9269
    %v9271 = vpop.f32.mrf.mxu0
    %v9272 = vadd.f32 %v9103, %v9271
    %9273 = vmatmul.bf16.gmra.mxu0 %v7193
    %v9274 = vpop.f32.mrf.mxu0
    %v9275 = vadd.f32 %v9106, %v9274
    %v9276 = vpop.f32.mrf.mxu0
    %v9277 = vadd.f32 %v9108, %v9276
    %9278 = vmatmul.bf16.gmra.mxu0 %v7202
    %v9279 = vpop.f32.mrf.mxu0
    %v9280 = vadd.f32 %v9111, %v9279
    %v9281 = vpop.f32.mrf.mxu0
    %v9282 = vadd.f32 %v9113, %v9281
    %9283 = vmatmul.bf16.gmra.mxu0 %v7211
    %v9284 = vpop.f32.mrf.mxu0
    %v9285 = vadd.f32 %v9116, %v9284
    %v9286 = vpop.f32.mrf.mxu0
    %v9287 = vadd.f32 %v9118, %v9286
    %9288 = vmatmul.bf16.gmra.mxu0 %v7220
    %v9289 = vpop.f32.mrf.mxu0
    %v9290 = vadd.f32 %v9121, %v9289
    %v9291 = vpop.f32.mrf.mxu0
    %v9292 = vadd.f32 %v9123, %v9291
    %9293 = vdwg.mxu0
    %9294 = vmatpush.bf16.msra.mxu0 %v7869
    %9295 = vmatpush.bf16.msra.mxu0 %v7868
    %9296 = vmatpush.bf16.msra.mxu0 %v7867
    %9297 = vmatpush.bf16.msra.mxu0 %v7866
    %9298 = vmatpush.bf16.msra.mxu0 %v7865
    %9299 = vmatpush.bf16.msra.mxu0 %v7864
    %9300 = vmatpush.bf16.msra.mxu0 %v7863
    %9301 = vmatpush.bf16.msra.mxu0 %v7862
    %9302 = vmatmul.bf16.gmra.mxu0 %v6942
    %v9303 = vpop.f32.mrf.mxu0
    %v9304 = vadd.f32 %v9135, %v9303
    %v9305 = vpop.f32.mrf.mxu0
    %v9306 = vadd.f32 %v9137, %v9305
    %9307 = vmatmul.bf16.gmra.mxu0 %v6951
    %v9308 = vpop.f32.mrf.mxu0
    %v9309 = vadd.f32 %v9140, %v9308
    %v9310 = vpop.f32.mrf.mxu0
    %v9311 = vadd.f32 %v9142, %v9310
    %9312 = vmatmul.bf16.gmra.mxu0 %v6960
    %v9313 = vpop.f32.mrf.mxu0
    %v9314 = vadd.f32 %v9145, %v9313
    %v9315 = vpop.f32.mrf.mxu0
    %v9316 = vadd.f32 %v9147, %v9315
    %9317 = vmatmul.bf16.gmra.mxu0 %v6969
    %v9318 = vpop.f32.mrf.mxu0
    %v9319 = vadd.f32 %v9150, %v9318
    %v9320 = vpop.f32.mrf.mxu0
    %v9321 = vadd.f32 %v9152, %v9320
    %9322 = vmatmul.bf16.gmra.mxu0 %v6978
    %v9323 = vpop.f32.mrf.mxu0
    %v9324 = vadd.f32 %v9155, %v9323
    %v9325 = vpop.f32.mrf.mxu0
    %v9326 = vadd.f32 %v9157, %v9325
    %9327 = vmatmul.bf16.gmra.mxu0 %v6987
    %v9328 = vpop.f32.mrf.mxu0
    %v9329 = vadd.f32 %v9160, %v9328
    %v9330 = vpop.f32.mrf.mxu0
    %v9331 = vadd.f32 %v9162, %v9330
    %9332 = vmatmul.bf16.gmra.mxu0 %v6996
    %v9333 = vpop.f32.mrf.mxu0
    %v9334 = vadd.f32 %v9165, %v9333
    %v9335 = vpop.f32.mrf.mxu0
    %v9336 = vadd.f32 %v9167, %v9335
    %9337 = vmatmul.bf16.gmra.mxu0 %v7005
    %v9338 = vpop.f32.mrf.mxu0
    %v9339 = vadd.f32 %v9170, %v9338
    %v9340 = vpop.f32.mrf.mxu0
    %v9341 = vadd.f32 %v9172, %v9340
    %9342 = vmatmul.bf16.gmra.mxu0 %v7014
    %v9343 = vpop.f32.mrf.mxu0
    %v9344 = vadd.f32 %v9175, %v9343
    %v9345 = vpop.f32.mrf.mxu0
    %v9346 = vadd.f32 %v9177, %v9345
    %9347 = vmatmul.bf16.gmra.mxu0 %v7023
    %v9348 = vpop.f32.mrf.mxu0
    %v9349 = vadd.f32 %v9180, %v9348
    %v9350 = vpop.f32.mrf.mxu0
    %v9351 = vadd.f32 %v9182, %v9350
    %9352 = vmatmul.bf16.gmra.mxu0 %v7032
    %v9353 = vpop.f32.mrf.mxu0
    %v9354 = vadd.f32 %v9185, %v9353
    %v9355 = vpop.f32.mrf.mxu0
    %v9356 = vadd.f32 %v9187, %v9355
    %9357 = vmatmul.bf16.gmra.mxu0 %v7041
    %v9358 = vpop.f32.mrf.mxu0
    %v9359 = vadd.f32 %v9190, %v9358
    %v9360 = vpop.f32.mrf.mxu0
    %v9361 = vadd.f32 %v9192, %v9360
    %9362 = vmatmul.bf16.gmra.mxu0 %v7050
    %v9363 = vpop.f32.mrf.mxu0
    %v9364 = vadd.f32 %v9195, %v9363
    %v9365 = vpop.f32.mrf.mxu0
    %v9366 = vadd.f32 %v9197, %v9365
    %9367 = vmatmul.bf16.gmra.mxu0 %v7059
    %v9368 = vpop.f32.mrf.mxu0
    %v9369 = vadd.f32 %v9200, %v9368
    %v9370 = vpop.f32.mrf.mxu0
    %v9371 = vadd.f32 %v9202, %v9370
    %9372 = vmatmul.bf16.gmra.mxu0 %v7068
    %v9373 = vpop.f32.mrf.mxu0
    %v9374 = vadd.f32 %v9205, %v9373
    %v9375 = vpop.f32.mrf.mxu0
    %v9376 = vadd.f32 %v9207, %v9375
    %9377 = vmatmul.bf16.gmra.mxu0 %v7077
    %v9378 = vpop.f32.mrf.mxu0
    %v9379 = vadd.f32 %v9210, %v9378
    %v9380 = vpop.f32.mrf.mxu0
    %v9381 = vadd.f32 %v9212, %v9380
    %9382 = vmatmul.bf16.gmra.mxu0 %v7086
    %v9383 = vpop.f32.mrf.mxu0
    %v9384 = vadd.f32 %v9215, %v9383
    %v9385 = vpop.f32.mrf.mxu0
    %v9386 = vadd.f32 %v9217, %v9385
    %9387 = vmatmul.bf16.gmra.mxu0 %v7095
    %v9388 = vpop.f32.mrf.mxu0
    %v9389 = vadd.f32 %v9220, %v9388
    %v9390 = vpop.f32.mrf.mxu0
    %v9391 = vadd.f32 %v9222, %v9390
    %9392 = vmatmul.bf16.gmra.mxu0 %v7104
    %v9393 = vpop.f32.mrf.mxu0
    %v9394 = vadd.f32 %v9225, %v9393
    %v9395 = vpop.f32.mrf.mxu0
    %v9396 = vadd.f32 %v9227, %v9395
    %9397 = vmatmul.bf16.gmra.mxu0 %v7113
    %v9398 = vpop.f32.mrf.mxu0
    %v9399 = vadd.f32 %v9230, %v9398
    %v9400 = vpop.f32.mrf.mxu0
    %v9401 = vadd.f32 %v9232, %v9400
    %9402 = vmatmul.bf16.gmra.mxu0 %v7122
    %v9403 = vpop.f32.mrf.mxu0
    %v9404 = vadd.f32 %v9235, %v9403
    %v9405 = vpop.f32.mrf.mxu0
    %v9406 = vadd.f32 %v9237, %v9405
    %9407 = vmatmul.bf16.gmra.mxu0 %v7131
    %v9408 = vpop.f32.mrf.mxu0
    %v9409 = vadd.f32 %v9240, %v9408
    %v9410 = vpop.f32.mrf.mxu0
    %v9411 = vadd.f32 %v9242, %v9410
    %9412 = vmatmul.bf16.gmra.mxu0 %v7140
    %v9413 = vpop.f32.mrf.mxu0
    %v9414 = vadd.f32 %v9245, %v9413
    %v9415 = vpop.f32.mrf.mxu0
    %v9416 = vadd.f32 %v9247, %v9415
    %9417 = vmatmul.bf16.gmra.mxu0 %v7149
    %v9418 = vpop.f32.mrf.mxu0
    %v9419 = vadd.f32 %v9250, %v9418
    %v9420 = vpop.f32.mrf.mxu0
    %v9421 = vadd.f32 %v9252, %v9420
    %9422 = vmatmul.bf16.gmra.mxu0 %v7158
    %v9423 = vpop.f32.mrf.mxu0
    %v9424 = vadd.f32 %v9255, %v9423
    %v9425 = vpop.f32.mrf.mxu0
    %v9426 = vadd.f32 %v9257, %v9425
    %9427 = vmatmul.bf16.gmra.mxu0 %v7167
    %v9428 = vpop.f32.mrf.mxu0
    %v9429 = vadd.f32 %v9260, %v9428
    %v9430 = vpop.f32.mrf.mxu0
    %v9431 = vadd.f32 %v9262, %v9430
    %9432 = vmatmul.bf16.gmra.mxu0 %v7176
    %v9433 = vpop.f32.mrf.mxu0
    %v9434 = vadd.f32 %v9265, %v9433
    %v9435 = vpop.f32.mrf.mxu0
    %v9436 = vadd.f32 %v9267, %v9435
    %9437 = vmatmul.bf16.gmra.mxu0 %v7185
    %v9438 = vpop.f32.mrf.mxu0
    %v9439 = vadd.f32 %v9270, %v9438
    %v9440 = vpop.f32.mrf.mxu0
    %v9441 = vadd.f32 %v9272, %v9440
    %9442 = vmatmul.bf16.gmra.mxu0 %v7194
    %v9443 = vpop.f32.mrf.mxu0
    %v9444 = vadd.f32 %v9275, %v9443
    %v9445 = vpop.f32.mrf.mxu0
    %v9446 = vadd.f32 %v9277, %v9445
    %9447 = vmatmul.bf16.gmra.mxu0 %v7203
    %v9448 = vpop.f32.mrf.mxu0
    %v9449 = vadd.f32 %v9280, %v9448
    %v9450 = vpop.f32.mrf.mxu0
    %v9451 = vadd.f32 %v9282, %v9450
    %9452 = vmatmul.bf16.gmra.mxu0 %v7212
    %v9453 = vpop.f32.mrf.mxu0
    %v9454 = vadd.f32 %v9285, %v9453
    %v9455 = vpop.f32.mrf.mxu0
    %v9456 = vadd.f32 %v9287, %v9455
    %9457 = vmatmul.bf16.gmra.mxu0 %v7221
    %v9458 = vpop.f32.mrf.mxu0
    %v9459 = vadd.f32 %v9290, %v9458
    %v9460 = vpop.f32.mrf.mxu0
    %v9461 = vadd.f32 %v9292, %v9460
    %9462 = vdwg.mxu0
    %v9463 = vmax.f32 %v9304, 0.0
    %v9464 = vmax.f32 %v9306, 0.0
    %v9465 = vmax.f32 %v9309, 0.0
    %v9466 = vmax.f32 %v9311, 0.0
    %v9467 = vmax.f32 %v9314, 0.0
    %v9468 = vmax.f32 %v9316, 0.0
    %v9469 = vmax.f32 %v9319, 0.0
    %v9470 = vmax.f32 %v9321, 0.0
    %v9471 = vmax.f32 %v9324, 0.0
    %v9472 = vmax.f32 %v9326, 0.0
    %v9473 = vmax.f32 %v9329, 0.0
    %v9474 = vmax.f32 %v9331, 0.0
    %v9475 = vmax.f32 %v9334, 0.0
    %v9476 = vmax.f32 %v9336, 0.0
    %v9477 = vmax.f32 %v9339, 0.0
    %v9478 = vmax.f32 %v9341, 0.0
    %v9479 = vmax.f32 %v9344, 0.0
    %v9480 = vmax.f32 %v9346, 0.0
    %v9481 = vmax.f32 %v9349, 0.0
    %v9482 = vmax.f32 %v9351, 0.0
    %v9483 = vmax.f32 %v9354, 0.0
    %v9484 = vmax.f32 %v9356, 0.0
    %v9485 = vmax.f32 %v9359, 0.0
    %v9486 = vmax.f32 %v9361, 0.0
    %v9487 = vmax.f32 %v9364, 0.0
    %v9488 = vmax.f32 %v9366, 0.0
    %v9489 = vmax.f32 %v9369, 0.0
    %v9490 = vmax.f32 %v9371, 0.0
    %v9491 = vmax.f32 %v9374, 0.0
    %v9492 = vmax.f32 %v9376, 0.0
    %v9493 = vmax.f32 %v9379, 0.0
    %v9494 = vmax.f32 %v9381, 0.0
    %v9495 = vmax.f32 %v9384, 0.0
    %v9496 = vmax.f32 %v9386, 0.0
    %v9497 = vmax.f32 %v9389, 0.0
    %v9498 = vmax.f32 %v9391, 0.0
    %v9499 = vmax.f32 %v9394, 0.0
    %v9500 = vmax.f32 %v9396, 0.0
    %v9501 = vmax.f32 %v9399, 0.0
    %v9502 = vmax.f32 %v9401, 0.0
    %v9503 = vmax.f32 %v9404, 0.0
    %v9504 = vmax.f32 %v9406, 0.0
    %v9505 = vmax.f32 %v9409, 0.0
    %v9506 = vmax.f32 %v9411, 0.0
    %v9507 = vmax.f32 %v9414, 0.0
    %v9508 = vmax.f32 %v9416, 0.0
    %v9509 = vmax.f32 %v9419, 0.0
    %v9510 = vmax.f32 %v9421, 0.0
    %v9511 = vmax.f32 %v9424, 0.0
    %v9512 = vmax.f32 %v9426, 0.0
    %v9513 = vmax.f32 %v9429, 0.0
    %v9514 = vmax.f32 %v9431, 0.0
    %v9515 = vmax.f32 %v9434, 0.0
    %v9516 = vmax.f32 %v9436, 0.0
    %v9517 = vmax.f32 %v9439, 0.0
    %v9518 = vmax.f32 %v9441, 0.0
    %v9519 = vmax.f32 %v9444, 0.0
    %v9520 = vmax.f32 %v9446, 0.0
    %v9521 = vmax.f32 %v9449, 0.0
    %v9522 = vmax.f32 %v9451, 0.0
    %v9523 = vmax.f32 %v9454, 0.0
    %v9524 = vmax.f32 %v9456, 0.0
    %v9525 = vmax.f32 %v9459, 0.0
    %v9526 = vmax.f32 %v9461, 0.0
    %v9527 = vpack.c.bf16 %v9464, %v9463
    %v9528 = vpack.c.bf16 %v9466, %v9465
    %v9529 = vpack.c.bf16 %v9468, %v9467
    %v9530 = vpack.c.bf16 %v9470, %v9469
    %v9531 = vpack.c.bf16 %v9472, %v9471
    %v9532 = vpack.c.bf16 %v9474, %v9473
    %v9533 = vpack.c.bf16 %v9476, %v9475
    %v9534 = vpack.c.bf16 %v9478, %v9477
    %v9535 = vpack.c.bf16 %v9480, %v9479
    %v9536 = vpack.c.bf16 %v9482, %v9481
    %v9537 = vpack.c.bf16 %v9484, %v9483
    %v9538 = vpack.c.bf16 %v9486, %v9485
    %v9539 = vpack.c.bf16 %v9488, %v9487
    %v9540 = vpack.c.bf16 %v9490, %v9489
    %v9541 = vpack.c.bf16 %v9492, %v9491
    %v9542 = vpack.c.bf16 %v9494, %v9493
    %v9543 = vpack.c.bf16 %v9496, %v9495
    %v9544 = vpack.c.bf16 %v9498, %v9497
    %v9545 = vpack.c.bf16 %v9500, %v9499
    %v9546 = vpack.c.bf16 %v9502, %v9501
    %v9547 = vpack.c.bf16 %v9504, %v9503
    %v9548 = vpack.c.bf16 %v9506, %v9505
    %v9549 = vpack.c.bf16 %v9508, %v9507
    %v9550 = vpack.c.bf16 %v9510, %v9509
    %v9551 = vpack.c.bf16 %v9512, %v9511
    %v9552 = vpack.c.bf16 %v9514, %v9513
    %v9553 = vpack.c.bf16 %v9516, %v9515
    %v9554 = vpack.c.bf16 %v9518, %v9517
    %v9555 = vpack.c.bf16 %v9520, %v9519
    %v9556 = vpack.c.bf16 %v9522, %v9521
    %v9557 = vpack.c.bf16 %v9524, %v9523
    %v9558 = vpack.c.bf16 %v9526, %v9525
    %v9559 = vld [vmem:[%s7] sm:$0xf]
    %v9560 = vld [vmem:[%s7 + $0x4] sm:$0xf]
    %v9561 = vld [vmem:[%s7 + $0x8] sm:$0xf]
    %v9562 = vld [vmem:[%s7 + $0xc] sm:$0xf]
    %v9563 = vld [vmem:[%s7 + $0x10] sm:$0xf]
    %v9564 = vld [vmem:[%s7 + $0x14] sm:$0xf]
    %v9565 = vld [vmem:[%s7 + $0x18] sm:$0xf]
    %v9566 = vld [vmem:[%s7 + $0x1c] sm:$0xf]
    %v9567 = vld [vmem:[%s7 + $0x20] sm:$0xf]
    %v9568 = vld [vmem:[%s7 + $0x24] sm:$0xf]
    %v9569 = vld [vmem:[%s7 + $0x28] sm:$0xf]
    %v9570 = vld [vmem:[%s7 + $0x2c] sm:$0xf]
    %v9571 = vld [vmem:[%s7 + $0x30] sm:$0xf]
    %v9572 = vld [vmem:[%s7 + $0x34] sm:$0xf]
    %v9573 = vld [vmem:[%s7 + $0x38] sm:$0xf]
    %v9574 = vld [vmem:[%s7 + $0x3c] sm:$0xf]
    %v9575 = vld [vmem:[%s8] sm:$0x1]
    %v9577 = vperm.slane %v9575, 0
    %v9595 = vunpack.c.l.b16 %v9559
    %v9596 = vunpack.c.l.b16 %v9560
    %v9597 = vunpack.c.l.b16 %v9561
    %v9598 = vunpack.c.l.b16 %v9562
    %v9599 = vunpack.c.l.b16 %v9563
    %v9600 = vunpack.c.l.b16 %v9564
    %v9601 = vunpack.c.l.b16 %v9565
    %v9602 = vunpack.c.l.b16 %v9566
    %v9603 = vunpack.c.l.b16 %v9567
    %v9604 = vunpack.c.l.b16 %v9568
    %v9605 = vunpack.c.l.b16 %v9569
    %v9606 = vunpack.c.l.b16 %v9570
    %v9607 = vunpack.c.l.b16 %v9571
    %v9608 = vunpack.c.l.b16 %v9572
    %v9609 = vunpack.c.l.b16 %v9573
    %v9610 = vunpack.c.l.b16 %v9574
    %v9611 = vpack.c.b16 %v9596, %v9595
    %v9612 = vpack.c.b16 %v9598, %v9597
    %v9613 = vpack.c.b16 %v9600, %v9599
    %v9614 = vpack.c.b16 %v9602, %v9601
    %v9615 = vpack.c.b16 %v9604, %v9603
    %v9616 = vpack.c.b16 %v9606, %v9605
    %v9617 = vpack.c.b16 %v9608, %v9607
    %v9618 = vpack.c.b16 %v9610, %v9609
    %9627 = vmatpush.bf16.msra.mxu0 %v9618
    %9628 = vmatpush.bf16.msra.mxu0 %v9617
    %9629 = vmatpush.bf16.msra.mxu0 %v9616
    %9630 = vmatpush.bf16.msra.mxu0 %v9615
    %9631 = vmatpush.bf16.msra.mxu0 %v9614
    %9632 = vmatpush.bf16.msra.mxu0 %v9613
    %9633 = vmatpush.bf16.msra.mxu0 %v9612
    %9634 = vmatpush.bf16.msra.mxu0 %v9611
    %9635 = vmatmul.bf16.gmra.mxu0 %v9527
    %v9636 = vpop.f32.mrf.mxu0
    %v9637 = vadd.f32 %v9577, %v9636
    %v9638 = vpop.f32.mrf.mxu0
    %v9639 = vadd.f32 %v9577, %v9638
    %9640 = vmatmul.bf16.gmra.mxu0 %v9528
    %v9641 = vpop.f32.mrf.mxu0
    %v9642 = vadd.f32 %v9577, %v9641
    %v9643 = vpop.f32.mrf.mxu0
    %v9644 = vadd.f32 %v9577, %v9643
    %9645 = vmatmul.bf16.gmra.mxu0 %v9529
    %v9646 = vpop.f32.mrf.mxu0
    %v9647 = vadd.f32 %v9577, %v9646
    %v9648 = vpop.f32.mrf.mxu0
    %v9649 = vadd.f32 %v9577, %v9648
    %9650 = vmatmul.bf16.gmra.mxu0 %v9530
    %v9651 = vpop.f32.mrf.mxu0
    %v9652 = vadd.f32 %v9577, %v9651
    %v9653 = vpop.f32.mrf.mxu0
    %v9654 = vadd.f32 %v9577, %v9653
    %9655 = vmatmul.bf16.gmra.mxu0 %v9531
    %v9656 = vpop.f32.mrf.mxu0
    %v9657 = vadd.f32 %v9577, %v9656
    %v9658 = vpop.f32.mrf.mxu0
    %v9659 = vadd.f32 %v9577, %v9658
    %9660 = vmatmul.bf16.gmra.mxu0 %v9532
    %v9661 = vpop.f32.mrf.mxu0
    %v9662 = vadd.f32 %v9577, %v9661
    %v9663 = vpop.f32.mrf.mxu0
    %v9664 = vadd.f32 %v9577, %v9663
    %9665 = vmatmul.bf16.gmra.mxu0 %v9533
    %v9666 = vpop.f32.mrf.mxu0
    %v9667 = vadd.f32 %v9577, %v9666
    %v9668 = vpop.f32.mrf.mxu0
    %v9669 = vadd.f32 %v9577, %v9668
    %9670 = vmatmul.bf16.gmra.mxu0 %v9534
    %v9671 = vpop.f32.mrf.mxu0
    %v9672 = vadd.f32 %v9577, %v9671
    %v9673 = vpop.f32.mrf.mxu0
    %v9674 = vadd.f32 %v9577, %v9673
    %9675 = vmatmul.bf16.gmra.mxu0 %v9535
    %v9676 = vpop.f32.mrf.mxu0
    %v9677 = vadd.f32 %v9577, %v9676
    %v9678 = vpop.f32.mrf.mxu0
    %v9679 = vadd.f32 %v9577, %v9678
    %9680 = vmatmul.bf16.gmra.mxu0 %v9536
    %v9681 = vpop.f32.mrf.mxu0
    %v9682 = vadd.f32 %v9577, %v9681
    %v9683 = vpop.f32.mrf.mxu0
    %v9684 = vadd.f32 %v9577, %v9683
    %9685 = vmatmul.bf16.gmra.mxu0 %v9537
    %v9686 = vpop.f32.mrf.mxu0
    %v9687 = vadd.f32 %v9577, %v9686
    %v9688 = vpop.f32.mrf.mxu0
    %v9689 = vadd.f32 %v9577, %v9688
    %9690 = vmatmul.bf16.gmra.mxu0 %v9538
    %v9691 = vpop.f32.mrf.mxu0
    %v9692 = vadd.f32 %v9577, %v9691
    %v9693 = vpop.f32.mrf.mxu0
    %v9694 = vadd.f32 %v9577, %v9693
    %9695 = vmatmul.bf16.gmra.mxu0 %v9539
    %v9696 = vpop.f32.mrf.mxu0
    %v9697 = vadd.f32 %v9577, %v9696
    %v9698 = vpop.f32.mrf.mxu0
    %v9699 = vadd.f32 %v9577, %v9698
    %9700 = vmatmul.bf16.gmra.mxu0 %v9540
    %v9701 = vpop.f32.mrf.mxu0
    %v9702 = vadd.f32 %v9577, %v9701
    %v9703 = vpop.f32.mrf.mxu0
    %v9704 = vadd.f32 %v9577, %v9703
    %9705 = vmatmul.bf16.gmra.mxu0 %v9541
    %v9706 = vpop.f32.mrf.mxu0
    %v9707 = vadd.f32 %v9577, %v9706
    %v9708 = vpop.f32.mrf.mxu0
    %v9709 = vadd.f32 %v9577, %v9708
    %9710 = vmatmul.bf16.gmra.mxu0 %v9542
    %v9711 = vpop.f32.mrf.mxu0
    %v9712 = vadd.f32 %v9577, %v9711
    %v9713 = vpop.f32.mrf.mxu0
    %v9714 = vadd.f32 %v9577, %v9713
    %9715 = vmatmul.bf16.gmra.mxu0 %v9543
    %v9716 = vpop.f32.mrf.mxu0
    %v9717 = vadd.f32 %v9577, %v9716
    %v9718 = vpop.f32.mrf.mxu0
    %v9719 = vadd.f32 %v9577, %v9718
    %9720 = vmatmul.bf16.gmra.mxu0 %v9544
    %v9721 = vpop.f32.mrf.mxu0
    %v9722 = vadd.f32 %v9577, %v9721
    %v9723 = vpop.f32.mrf.mxu0
    %v9724 = vadd.f32 %v9577, %v9723
    %9725 = vmatmul.bf16.gmra.mxu0 %v9545
    %v9726 = vpop.f32.mrf.mxu0
    %v9727 = vadd.f32 %v9577, %v9726
    %v9728 = vpop.f32.mrf.mxu0
    %v9729 = vadd.f32 %v9577, %v9728
    %9730 = vmatmul.bf16.gmra.mxu0 %v9546
    %v9731 = vpop.f32.mrf.mxu0
    %v9732 = vadd.f32 %v9577, %v9731
    %v9733 = vpop.f32.mrf.mxu0
    %v9734 = vadd.f32 %v9577, %v9733
    %9735 = vmatmul.bf16.gmra.mxu0 %v9547
    %v9736 = vpop.f32.mrf.mxu0
    %v9737 = vadd.f32 %v9577, %v9736
    %v9738 = vpop.f32.mrf.mxu0
    %v9739 = vadd.f32 %v9577, %v9738
    %9740 = vmatmul.bf16.gmra.mxu0 %v9548
    %v9741 = vpop.f32.mrf.mxu0
    %v9742 = vadd.f32 %v9577, %v9741
    %v9743 = vpop.f32.mrf.mxu0
    %v9744 = vadd.f32 %v9577, %v9743
    %9745 = vmatmul.bf16.gmra.mxu0 %v9549
    %v9746 = vpop.f32.mrf.mxu0
    %v9747 = vadd.f32 %v9577, %v9746
    %v9748 = vpop.f32.mrf.mxu0
    %v9749 = vadd.f32 %v9577, %v9748
    %9750 = vmatmul.bf16.gmra.mxu0 %v9550
    %v9751 = vpop.f32.mrf.mxu0
    %v9752 = vadd.f32 %v9577, %v9751
    %v9753 = vpop.f32.mrf.mxu0
    %v9754 = vadd.f32 %v9577, %v9753
    %9755 = vmatmul.bf16.gmra.mxu0 %v9551
    %v9756 = vpop.f32.mrf.mxu0
    %v9757 = vadd.f32 %v9577, %v9756
    %v9758 = vpop.f32.mrf.mxu0
    %v9759 = vadd.f32 %v9577, %v9758
    %9760 = vmatmul.bf16.gmra.mxu0 %v9552
    %v9761 = vpop.f32.mrf.mxu0
    %v9762 = vadd.f32 %v9577, %v9761
    %v9763 = vpop.f32.mrf.mxu0
    %v9764 = vadd.f32 %v9577, %v9763
    %9765 = vmatmul.bf16.gmra.mxu0 %v9553
    %v9766 = vpop.f32.mrf.mxu0
    %v9767 = vadd.f32 %v9577, %v9766
    %v9768 = vpop.f32.mrf.mxu0
    %v9769 = vadd.f32 %v9577, %v9768
    %9770 = vmatmul.bf16.gmra.mxu0 %v9554
    %v9771 = vpop.f32.mrf.mxu0
    %v9772 = vadd.f32 %v9577, %v9771
    %v9773 = vpop.f32.mrf.mxu0
    %v9774 = vadd.f32 %v9577, %v9773
    %9775 = vmatmul.bf16.gmra.mxu0 %v9555
    %v9776 = vpop.f32.mrf.mxu0
    %v9777 = vadd.f32 %v9577, %v9776
    %v9778 = vpop.f32.mrf.mxu0
    %v9779 = vadd.f32 %v9577, %v9778
    %9780 = vmatmul.bf16.gmra.mxu0 %v9556
    %v9781 = vpop.f32.mrf.mxu0
    %v9782 = vadd.f32 %v9577, %v9781
    %v9783 = vpop.f32.mrf.mxu0
    %v9784 = vadd.f32 %v9577, %v9783
    %9785 = vmatmul.bf16.gmra.mxu0 %v9557
    %v9786 = vpop.f32.mrf.mxu0
    %v9787 = vadd.f32 %v9577, %v9786
    %v9788 = vpop.f32.mrf.mxu0
    %v9789 = vadd.f32 %v9577, %v9788
    %9790 = vmatmul.bf16.gmra.mxu0 %v9558
    %v9791 = vpop.f32.mrf.mxu0
    %v9792 = vadd.f32 %v9577, %v9791
    %v9793 = vpop.f32.mrf.mxu0
    %v9794 = vadd.f32 %v9577, %v9793
    %9795 = vdwg.mxu0
    %v9796 = vld [vmem:[#allocation3] sm:$0xff]
    %v9797 = vld [vmem:[#allocation3 + $0x8] sm:$0xff]
    %v9798 = vld [vmem:[#allocation3 + $0x10] sm:$0xff]
    %v9799 = vld [vmem:[#allocation3 + $0x18] sm:$0xff]
    %v9800 = vld [vmem:[#allocation3 + $0x20] sm:$0xff]
    %v9801 = vld [vmem:[#allocation3 + $0x28] sm:$0xff]
    %v9802 = vld [vmem:[#allocation3 + $0x30] sm:$0xff]
    %v9803 = vld [vmem:[#allocation3 + $0x38] sm:$0xff]
    %v9804 = vld [vmem:[#allocation3 + $0x40] sm:$0xff]
    %v9805 = vld [vmem:[#allocation3 + $0x48] sm:$0xff]
    %v9806 = vld [vmem:[#allocation3 + $0x50] sm:$0xff]
    %v9807 = vld [vmem:[#allocation3 + $0x58] sm:$0xff]
    %v9808 = vld [vmem:[#allocation3 + $0x60] sm:$0xff]
    %v9809 = vld [vmem:[#allocation3 + $0x68] sm:$0xff]
    %v9810 = vld [vmem:[#allocation3 + $0x70] sm:$0xff]
    %v9811 = vld [vmem:[#allocation3 + $0x78] sm:$0xff]
    %v9812 = vld [vmem:[#allocation3 + $0x80] sm:$0xff]
    %v9813 = vld [vmem:[#allocation3 + $0x88] sm:$0xff]
    %v9814 = vld [vmem:[#allocation3 + $0x90] sm:$0xff]
    %v9815 = vld [vmem:[#allocation3 + $0x98] sm:$0xff]
    %v9816 = vld [vmem:[#allocation3 + $0xa0] sm:$0xff]
    %v9817 = vld [vmem:[#allocation3 + $0xa8] sm:$0xff]
    %v9818 = vld [vmem:[#allocation3 + $0xb0] sm:$0xff]
    %v9819 = vld [vmem:[#allocation3 + $0xb8] sm:$0xff]
    %v9820 = vld [vmem:[#allocation3 + $0xc0] sm:$0xff]
    %v9821 = vld [vmem:[#allocation3 + $0xc8] sm:$0xff]
    %v9822 = vld [vmem:[#allocation3 + $0xd0] sm:$0xff]
    %v9823 = vld [vmem:[#allocation3 + $0xd8] sm:$0xff]
    %v9824 = vld [vmem:[#allocation3 + $0xe0] sm:$0xff]
    %v9825 = vld [vmem:[#allocation3 + $0xe8] sm:$0xff]
    %v9826 = vld [vmem:[#allocation3 + $0xf0] sm:$0xff]
    %v9827 = vld [vmem:[#allocation3 + $0xf8] sm:$0xff]
    %v9828 = vld [vmem:[#allocation3 + $0x100] sm:$0xff]
    %v9829 = vld [vmem:[#allocation3 + $0x108] sm:$0xff]
    %v9830 = vld [vmem:[#allocation3 + $0x110] sm:$0xff]
    %v9831 = vld [vmem:[#allocation3 + $0x118] sm:$0xff]
    %v9832 = vld [vmem:[#allocation3 + $0x120] sm:$0xff]
    %v9833 = vld [vmem:[#allocation3 + $0x128] sm:$0xff]
    %v9834 = vld [vmem:[#allocation3 + $0x130] sm:$0xff]
    %v9835 = vld [vmem:[#allocation3 + $0x138] sm:$0xff]
    %v9836 = vld [vmem:[#allocation3 + $0x140] sm:$0xff]
    %v9837 = vld [vmem:[#allocation3 + $0x148] sm:$0xff]
    %v9838 = vld [vmem:[#allocation3 + $0x150] sm:$0xff]
    %v9839 = vld [vmem:[#allocation3 + $0x158] sm:$0xff]
    %v9840 = vld [vmem:[#allocation3 + $0x160] sm:$0xff]
    %v9841 = vld [vmem:[#allocation3 + $0x168] sm:$0xff]
    %v9842 = vld [vmem:[#allocation3 + $0x170] sm:$0xff]
    %v9843 = vld [vmem:[#allocation3 + $0x178] sm:$0xff]
    %v9844 = vld [vmem:[#allocation3 + $0x180] sm:$0xff]
    %v9845 = vld [vmem:[#allocation3 + $0x188] sm:$0xff]
    %v9846 = vld [vmem:[#allocation3 + $0x190] sm:$0xff]
    %v9847 = vld [vmem:[#allocation3 + $0x198] sm:$0xff]
    %v9848 = vld [vmem:[#allocation3 + $0x1a0] sm:$0xff]
    %v9849 = vld [vmem:[#allocation3 + $0x1a8] sm:$0xff]
    %v9850 = vld [vmem:[#allocation3 + $0x1b0] sm:$0xff]
    %v9851 = vld [vmem:[#allocation3 + $0x1b8] sm:$0xff]
    %v9852 = vld [vmem:[#allocation3 + $0x1c0] sm:$0xff]
    %v9853 = vld [vmem:[#allocation3 + $0x1c8] sm:$0xff]
    %v9854 = vld [vmem:[#allocation3 + $0x1d0] sm:$0xff]
    %v9855 = vld [vmem:[#allocation3 + $0x1d8] sm:$0xff]
    %v9856 = vld [vmem:[#allocation3 + $0x1e0] sm:$0xff]
    %v9857 = vld [vmem:[#allocation3 + $0x1e8] sm:$0xff]
    %v9858 = vld [vmem:[#allocation3 + $0x1f0] sm:$0xff]
    %v9859 = vld [vmem:[#allocation3 + $0x1f8] sm:$0xff]
    %v9860 = vadd.f32 %v9637, %v9796
    %v9861 = vadd.f32 %v9639, %v9797
    %v9862 = vadd.f32 %v9642, %v9798
    %v9863 = vadd.f32 %v9644, %v9799
    %v9864 = vadd.f32 %v9647, %v9800
    %v9865 = vadd.f32 %v9649, %v9801
    %v9866 = vadd.f32 %v9652, %v9802
    %v9867 = vadd.f32 %v9654, %v9803
    %v9868 = vadd.f32 %v9657, %v9804
    %v9869 = vadd.f32 %v9659, %v9805
    %v9870 = vadd.f32 %v9662, %v9806
    %v9871 = vadd.f32 %v9664, %v9807
    %v9872 = vadd.f32 %v9667, %v9808
    %v9873 = vadd.f32 %v9669, %v9809
    %v9874 = vadd.f32 %v9672, %v9810
    %v9875 = vadd.f32 %v9674, %v9811
    %v9876 = vadd.f32 %v9677, %v9812
    %v9877 = vadd.f32 %v9679, %v9813
    %v9878 = vadd.f32 %v9682, %v9814
    %v9879 = vadd.f32 %v9684, %v9815
    %v9880 = vadd.f32 %v9687, %v9816
    %v9881 = vadd.f32 %v9689, %v9817
    %v9882 = vadd.f32 %v9692, %v9818
    %v9883 = vadd.f32 %v9694, %v9819
    %v9884 = vadd.f32 %v9697, %v9820
    %v9885 = vadd.f32 %v9699, %v9821
    %v9886 = vadd.f32 %v9702, %v9822
    %v9887 = vadd.f32 %v9704, %v9823
    %v9888 = vadd.f32 %v9707, %v9824
    %v9889 = vadd.f32 %v9709, %v9825
    %v9890 = vadd.f32 %v9712, %v9826
    %v9891 = vadd.f32 %v9714, %v9827
    %v9892 = vadd.f32 %v9717, %v9828
    %v9893 = vadd.f32 %v9719, %v9829
    %v9894 = vadd.f32 %v9722, %v9830
    %v9895 = vadd.f32 %v9724, %v9831
    %v9896 = vadd.f32 %v9727, %v9832
    %v9897 = vadd.f32 %v9729, %v9833
    %v9898 = vadd.f32 %v9732, %v9834
    %v9899 = vadd.f32 %v9734, %v9835
    %v9900 = vadd.f32 %v9737, %v9836
    %v9901 = vadd.f32 %v9739, %v9837
    %v9902 = vadd.f32 %v9742, %v9838
    %v9903 = vadd.f32 %v9744, %v9839
    %v9904 = vadd.f32 %v9747, %v9840
    %v9905 = vadd.f32 %v9749, %v9841
    %v9906 = vadd.f32 %v9752, %v9842
    %v9907 = vadd.f32 %v9754, %v9843
    %v9908 = vadd.f32 %v9757, %v9844
    %v9909 = vadd.f32 %v9759, %v9845
    %v9910 = vadd.f32 %v9762, %v9846
    %v9911 = vadd.f32 %v9764, %v9847
    %v9912 = vadd.f32 %v9767, %v9848
    %v9913 = vadd.f32 %v9769, %v9849
    %v9914 = vadd.f32 %v9772, %v9850
    %v9915 = vadd.f32 %v9774, %v9851
    %v9916 = vadd.f32 %v9777, %v9852
    %v9917 = vadd.f32 %v9779, %v9853
    %v9918 = vadd.f32 %v9782, %v9854
    %v9919 = vadd.f32 %v9784, %v9855
    %v9920 = vadd.f32 %v9787, %v9856
    %v9921 = vadd.f32 %v9789, %v9857
    %v9922 = vadd.f32 %v9792, %v9858
    %v9923 = vadd.f32 %v9794, %v9859
    %v9924 = vmax.f32 %v9860, 0.0
    %v9925 = vmax.f32 %v9861, 0.0
    %v9926 = vmax.f32 %v9862, 0.0
    %v9927 = vmax.f32 %v9863, 0.0
    %v9928 = vmax.f32 %v9864, 0.0
    %v9929 = vmax.f32 %v9865, 0.0
    %v9930 = vmax.f32 %v9866, 0.0
    %v9931 = vmax.f32 %v9867, 0.0
    %v9932 = vmax.f32 %v9868, 0.0
    %v9933 = vmax.f32 %v9869, 0.0
    %v9934 = vmax.f32 %v9870, 0.0
    %v9935 = vmax.f32 %v9871, 0.0
    %v9936 = vmax.f32 %v9872, 0.0
    %v9937 = vmax.f32 %v9873, 0.0
    %v9938 = vmax.f32 %v9874, 0.0
    %v9939 = vmax.f32 %v9875, 0.0
    %v9940 = vmax.f32 %v9876, 0.0
    %v9941 = vmax.f32 %v9877, 0.0
    %v9942 = vmax.f32 %v9878, 0.0
    %v9943 = vmax.f32 %v9879, 0.0
    %v9944 = vmax.f32 %v9880, 0.0
    %v9945 = vmax.f32 %v9881, 0.0
    %v9946 = vmax.f32 %v9882, 0.0
    %v9947 = vmax.f32 %v9883, 0.0
    %v9948 = vmax.f32 %v9884, 0.0
    %v9949 = vmax.f32 %v9885, 0.0
    %v9950 = vmax.f32 %v9886, 0.0
    %v9951 = vmax.f32 %v9887, 0.0
    %v9952 = vmax.f32 %v9888, 0.0
    %v9953 = vmax.f32 %v9889, 0.0
    %v9954 = vmax.f32 %v9890, 0.0
    %v9955 = vmax.f32 %v9891, 0.0
    %v9956 = vmax.f32 %v9892, 0.0
    %v9957 = vmax.f32 %v9893, 0.0
    %v9958 = vmax.f32 %v9894, 0.0
    %v9959 = vmax.f32 %v9895, 0.0
    %v9960 = vmax.f32 %v9896, 0.0
    %v9961 = vmax.f32 %v9897, 0.0
    %v9962 = vmax.f32 %v9898, 0.0
    %v9963 = vmax.f32 %v9899, 0.0
    %v9964 = vmax.f32 %v9900, 0.0
    %v9965 = vmax.f32 %v9901, 0.0
    %v9966 = vmax.f32 %v9902, 0.0
    %v9967 = vmax.f32 %v9903, 0.0
    %v9968 = vmax.f32 %v9904, 0.0
    %v9969 = vmax.f32 %v9905, 0.0
    %v9970 = vmax.f32 %v9906, 0.0
    %v9971 = vmax.f32 %v9907, 0.0
    %v9972 = vmax.f32 %v9908, 0.0
    %v9973 = vmax.f32 %v9909, 0.0
    %v9974 = vmax.f32 %v9910, 0.0
    %v9975 = vmax.f32 %v9911, 0.0
    %v9976 = vmax.f32 %v9912, 0.0
    %v9977 = vmax.f32 %v9913, 0.0
    %v9978 = vmax.f32 %v9914, 0.0
    %v9979 = vmax.f32 %v9915, 0.0
    %v9980 = vmax.f32 %v9916, 0.0
    %v9981 = vmax.f32 %v9917, 0.0
    %v9982 = vmax.f32 %v9918, 0.0
    %v9983 = vmax.f32 %v9919, 0.0
    %v9984 = vmax.f32 %v9920, 0.0
    %v9985 = vmax.f32 %v9921, 0.0
    %v9986 = vmax.f32 %v9922, 0.0
    %v9987 = vmax.f32 %v9923, 0.0
    %9988 = vst [vmem:[#allocation6] sm:$0xff] %v9924
    %9989 = vst [vmem:[#allocation6 + $0x8] sm:$0xff] %v9925
    %9990 = vst [vmem:[#allocation6 + $0x10] sm:$0xff] %v9926
    %9991 = vst [vmem:[#allocation6 + $0x18] sm:$0xff] %v9927
    %9992 = vst [vmem:[#allocation6 + $0x20] sm:$0xff] %v9928
    %9993 = vst [vmem:[#allocation6 + $0x28] sm:$0xff] %v9929
    %9994 = vst [vmem:[#allocation6 + $0x30] sm:$0xff] %v9930
    %9995 = vst [vmem:[#allocation6 + $0x38] sm:$0xff] %v9931
    %9996 = vst [vmem:[#allocation6 + $0x40] sm:$0xff] %v9932
    %9997 = vst [vmem:[#allocation6 + $0x48] sm:$0xff] %v9933
    %9998 = vst [vmem:[#allocation6 + $0x50] sm:$0xff] %v9934
    %9999 = vst [vmem:[#allocation6 + $0x58] sm:$0xff] %v9935
    %10000 = vst [vmem:[#allocation6 + $0x60] sm:$0xff] %v9936
    %10001 = vst [vmem:[#allocation6 + $0x68] sm:$0xff] %v9937
    %10002 = vst [vmem:[#allocation6 + $0x70] sm:$0xff] %v9938
    %10003 = vst [vmem:[#allocation6 + $0x78] sm:$0xff] %v9939
    %10004 = vst [vmem:[#allocation6 + $0x80] sm:$0xff] %v9940
    %10005 = vst [vmem:[#allocation6 + $0x88] sm:$0xff] %v9941
    %10006 = vst [vmem:[#allocation6 + $0x90] sm:$0xff] %v9942
    %10007 = vst [vmem:[#allocation6 + $0x98] sm:$0xff] %v9943
    %10008 = vst [vmem:[#allocation6 + $0xa0] sm:$0xff] %v9944
    %10009 = vst [vmem:[#allocation6 + $0xa8] sm:$0xff] %v9945
    %10010 = vst [vmem:[#allocation6 + $0xb0] sm:$0xff] %v9946
    %10011 = vst [vmem:[#allocation6 + $0xb8] sm:$0xff] %v9947
    %10012 = vst [vmem:[#allocation6 + $0xc0] sm:$0xff] %v9948
    %10013 = vst [vmem:[#allocation6 + $0xc8] sm:$0xff] %v9949
    %10014 = vst [vmem:[#allocation6 + $0xd0] sm:$0xff] %v9950
    %10015 = vst [vmem:[#allocation6 + $0xd8] sm:$0xff] %v9951
    %10016 = vst [vmem:[#allocation6 + $0xe0] sm:$0xff] %v9952
    %10017 = vst [vmem:[#allocation6 + $0xe8] sm:$0xff] %v9953
    %10018 = vst [vmem:[#allocation6 + $0xf0] sm:$0xff] %v9954
    %10019 = vst [vmem:[#allocation6 + $0xf8] sm:$0xff] %v9955
    %10020 = vst [vmem:[#allocation6 + $0x100] sm:$0xff] %v9956
    %10021 = vst [vmem:[#allocation6 + $0x108] sm:$0xff] %v9957
    %10022 = vst [vmem:[#allocation6 + $0x110] sm:$0xff] %v9958
    %10023 = vst [vmem:[#allocation6 + $0x118] sm:$0xff] %v9959
    %10024 = vst [vmem:[#allocation6 + $0x120] sm:$0xff] %v9960
    %10025 = vst [vmem:[#allocation6 + $0x128] sm:$0xff] %v9961
    %10026 = vst [vmem:[#allocation6 + $0x130] sm:$0xff] %v9962
    %10027 = vst [vmem:[#allocation6 + $0x138] sm:$0xff] %v9963
    %10028 = vst [vmem:[#allocation6 + $0x140] sm:$0xff] %v9964
    %10029 = vst [vmem:[#allocation6 + $0x148] sm:$0xff] %v9965
    %10030 = vst [vmem:[#allocation6 + $0x150] sm:$0xff] %v9966
    %10031 = vst [vmem:[#allocation6 + $0x158] sm:$0xff] %v9967
    %10032 = vst [vmem:[#allocation6 + $0x160] sm:$0xff] %v9968
    %10033 = vst [vmem:[#allocation6 + $0x168] sm:$0xff] %v9969
    %10034 = vst [vmem:[#allocation6 + $0x170] sm:$0xff] %v9970
    %10035 = vst [vmem:[#allocation6 + $0x178] sm:$0xff] %v9971
    %10036 = vst [vmem:[#allocation6 + $0x180] sm:$0xff] %v9972
    %10037 = vst [vmem:[#allocation6 + $0x188] sm:$0xff] %v9973
    %10038 = vst [vmem:[#allocation6 + $0x190] sm:$0xff] %v9974
    %10039 = vst [vmem:[#allocation6 + $0x198] sm:$0xff] %v9975
    %10040 = vst [vmem:[#allocation6 + $0x1a0] sm:$0xff] %v9976
    %10041 = vst [vmem:[#allocation6 + $0x1a8] sm:$0xff] %v9977
    %10042 = vst [vmem:[#allocation6 + $0x1b0] sm:$0xff] %v9978
    %10043 = vst [vmem:[#allocation6 + $0x1b8] sm:$0xff] %v9979
    %10044 = vst [vmem:[#allocation6 + $0x1c0] sm:$0xff] %v9980
    %10045 = vst [vmem:[#allocation6 + $0x1c8] sm:$0xff] %v9981
    %10046 = vst [vmem:[#allocation6 + $0x1d0] sm:$0xff] %v9982
    %10047 = vst [vmem:[#allocation6 + $0x1d8] sm:$0xff] %v9983
    %10048 = vst [vmem:[#allocation6 + $0x1e0] sm:$0xff] %v9984
    %10049 = vst [vmem:[#allocation6 + $0x1e8] sm:$0xff] %v9985
    %10050 = vst [vmem:[#allocation6 + $0x1f0] sm:$0xff] %v9986
    %10051 = vst [vmem:[#allocation6 + $0x1f8] sm:$0xff] %v9987
    // Predicated region
    $region42: #{tpu_custom_call.1} parent=1 // pred_check
      _
    $region43: #{tpu_custom_call.1} parent=1 // pred_check_branch
      %10053 = sbr.rel (0) target = $region45
    $region44: #{tpu_custom_call.1} parent=1 // pred_region
      %10055 = vsyncadd [#allocation5], 0
      %s10056 = sshll.u32 [#allocation6], 4
      %s10057 = int_to_ptr.vmem [resolvable:$true] %s10056
      %s10058 = sshll.u32 %s9, 4
      %s10059 = int_to_ptr.hbm [resolvable:$true] %s10058
      %10064 = dma.vmem_to_hbm [thread:$0]  %s10057, 8192, %s10059, [#allocation5], 128, 128, 8
    $region45: #{tpu_custom_call.1} parent=1 // pred_fallthru
      _
    // Predicated region
    $region46: #{tpu_custom_call.1} parent=1 // pred_check
      _
    $region47: #{tpu_custom_call.1} parent=1 // pred_check_branch
      %10066 = sbr.rel (0) target = $region49
    $region48: #{tpu_custom_call.1} parent=1 // pred_region
      %10068 = dma.done [#allocation5], 8192
    $region49: #{tpu_custom_call.1} parent=1 // pred_fallthru
      _
    %10069 = vsyncpa [#allocation4], 1
    %10070 = vsyncpa [#allocation5], 1

</llo_original>
